<compile_context>
chip_gen: v7x
topology: tpu7x:2x2x1
jax: 0.10.0
libtpu: 0.0.40
codegen_flags: <defaults>
</compile_context>

<pallas_src>
import functools

import jax
import jax.numpy as jnp
from jax import lax
from jax.experimental import pallas as pl
from jax.experimental.pallas import tpu as pltpu


TILE = 512            # adjacency tile (rows and contraction), multiple of 128
EDGE_TILE = 512       # edge-score tile along the lane axis
VMEM_LIMIT = 32 * 1024 * 1024


def _round_up(x, m):
    return (x + m - 1) // m * m


# ----------------------------------------------------------------------------
# Kernel 1a: item update  h_item' = (A^T @ h_user) * inv_deg_item
# grid = (I_tiles, U_tiles) ; contraction over U is the last ("arbitrary") axis.
# ----------------------------------------------------------------------------
def _agg_item_kernel(adj_ref, hu_ref, invdeg_ref, out_ref, acc_ref):
    @pl.when(pl.program_id(1) == 0)
    def _():
        acc_ref[...] = jnp.zeros_like(acc_ref)

    adj = adj_ref[...].astype(jnp.float32)          # [TK_u, TM_i]  (bf16 -> f32)
    # Contract over U (dim 0 of both) directly on the MXU -- no materialized transpose.
    acc_ref[...] += lax.dot_general(
        adj, hu_ref[...],
        dimension_numbers=(((0,), (0,)), ((), ())),
        preferred_element_type=jnp.float32)          # [TM_i, D]

    @pl.when(pl.program_id(1) == pl.num_programs(1) - 1)
    def _():
        out_ref[...] = acc_ref[...] * invdeg_ref[...]


def agg_item(adj, h_user, inv_deg_item, *, tile=TILE):
    u_pad, i_pad = adj.shape
    d = h_user.shape[1]
    grid = (i_pad // tile, u_pad // tile)
    return pl.pallas_call(
        _agg_item_kernel,
        out_shape=jax.ShapeDtypeStruct((i_pad, d), jnp.float32),
        grid_spec=pltpu.PrefetchScalarGridSpec(
            num_scalar_prefetch=0,
            grid=grid,
            in_specs=[
                pl.BlockSpec((tile, tile), lambda i, k: (k, i)),   # adj  [U, I]
                pl.BlockSpec((tile, d),    lambda i, k: (k, 0)),   # h_user
                pl.BlockSpec((tile, 1),    lambda i, k: (i, 0)),   # inv_deg_item
            ],
            out_specs=pl.BlockSpec((tile, d), lambda i, k: (i, 0)),
            scratch_shapes=[pltpu.VMEM((tile, d), jnp.float32)],
        ),
        compiler_params=pltpu.CompilerParams(
            dimension_semantics=("parallel", "arbitrary"),
            vmem_limit_bytes=VMEM_LIMIT),
    )(adj, h_user, inv_deg_item)


# ----------------------------------------------------------------------------
# Kernel 1b: user update  h_user' = (A @ h_item) * inv_deg_user
# grid = (U_tiles, I_tiles) ; contraction over I is the last ("arbitrary") axis.
# ----------------------------------------------------------------------------
def _agg_user_kernel(adj_ref, hi_ref, invdeg_ref, out_ref, acc_ref):
    @pl.when(pl.program_id(1) == 0)
    def _():
        acc_ref[...] = jnp.zeros_like(acc_ref)

    adj = adj_ref[...].astype(jnp.float32)          # [TM_u, TK_i]
    acc_ref[...] += jnp.dot(adj, hi_ref[...],
                            preferred_element_type=jnp.float32)   # [TM_u, D]

    @pl.when(pl.program_id(1) == pl.num_programs(1) - 1)
    def _():
        out_ref[...] = acc_ref[...] * invdeg_ref[...]


def agg_user(adj, h_item, inv_deg_user, *, tile=TILE):
    u_pad, i_pad = adj.shape
    d = h_item.shape[1]
    grid = (u_pad // tile, i_pad // tile)
    return pl.pallas_call(
        _agg_user_kernel,
        out_shape=jax.ShapeDtypeStruct((u_pad, d), jnp.float32),
        grid_spec=pltpu.PrefetchScalarGridSpec(
            num_scalar_prefetch=0,
            grid=grid,
            in_specs=[
                pl.BlockSpec((tile, tile), lambda m, k: (m, k)),   # adj  [U, I]
                pl.BlockSpec((tile, d),    lambda m, k: (k, 0)),   # h_item
                pl.BlockSpec((tile, 1),    lambda m, k: (m, 0)),   # inv_deg_user
            ],
            out_specs=pl.BlockSpec((tile, d), lambda m, k: (m, 0)),
            scratch_shapes=[pltpu.VMEM((tile, d), jnp.float32)],
        ),
        compiler_params=pltpu.CompilerParams(
            dimension_semantics=("parallel", "arbitrary"),
            vmem_limit_bytes=VMEM_LIMIT),
    )(adj, h_item, inv_deg_user)


# ----------------------------------------------------------------------------
# Kernel 2: HeteroDotProductPredictor (fn.u_dot_v): per-edge dot product.
# Inputs come in transposed ([D, E]) so the reduction is a sublane reduce and the
# output is a lane-dense [1, E] row (no masked last-dim-1 stores).
# ----------------------------------------------------------------------------
def _edge_dot_kernel(ut_ref, vt_ref, out_ref):
    out_ref[...] = jnp.sum(ut_ref[...] * vt_ref[...], axis=0, keepdims=True)


def edge_scores(h_user, h_item, src, dst, *, edge_tile=EDGE_TILE):
    u = h_user[src]                                   # [E, D_pad]  (XLA gather)
    v = h_item[dst]
    e, d = u.shape
    e_pad = _round_up(e, edge_tile)
    u = jnp.pad(u, ((0, e_pad - e), (0, 0)))
    v = jnp.pad(v, ((0, e_pad - e), (0, 0)))
    ut = u.T                                          # [D_pad, E_pad]
    vt = v.T
    row = pl.pallas_call(
        _edge_dot_kernel,
        out_shape=jax.ShapeDtypeStruct((1, e_pad), jnp.float32),
        grid_spec=pltpu.PrefetchScalarGridSpec(
            num_scalar_prefetch=0,
            grid=(e_pad // edge_tile,),
            in_specs=[
                pl.BlockSpec((d, edge_tile), lambda t: (0, t)),
                pl.BlockSpec((d, edge_tile), lambda t: (0, t)),
            ],
            out_specs=pl.BlockSpec((1, edge_tile), lambda t: (0, t)),
        ),
        compiler_params=pltpu.CompilerParams(
            dimension_semantics=("parallel",),
            vmem_limit_bytes=VMEM_LIMIT),
    )(ut, vt)
    return row[0, :e].reshape(e, 1)


# ----------------------------------------------------------------------------
# Fused jitted forward: layer_num propagation layers + pos/neg edge scoring.
# ----------------------------------------------------------------------------
@functools.partial(jax.jit, static_argnames=("layer_num", "tile"))
def _forward_impl(adj, inv_du, inv_di, h_user, h_item,
                  pos_src, pos_dst, neg_src, neg_dst, *, layer_num, tile):
    for _ in range(layer_num):
        # Both directions read the SAME input h (matching get_embedding()).
        new_item = agg_item(adj, h_user, inv_di, tile=tile)
        new_user = agg_user(adj, h_item, inv_du, tile=tile)
        h_user, h_item = new_user, new_item
    score_pos = edge_scores(h_user, h_item, pos_src, pos_dst)
    score_neg = edge_scores(h_user, h_item, neg_src, neg_dst)
    return score_pos, score_neg


# ----------------------------------------------------------------------------
# Model: parameters, get_embedding, forward
# ----------------------------------------------------------------------------
class BaseGraphModelJAX:
    def __init__(self, key, num_users, num_items, hid_dim, layer_num, adj, tile=TILE):
        ku, ki = jax.random.split(key)
        self.num_users = num_users
        self.num_items = num_items
        self.hid_dim = hid_dim
        self.layer_num = layer_num
        self.tile = tile

        # torch.randn equivalents (unpadded "parameters").
        self.user_embedding = jax.random.normal(ku, (num_users, hid_dim), jnp.float32)
        self.item_embedding = jax.random.normal(ki, (num_items, hid_dim), jnp.float32)

        # Static adjacency: precompute degree reciprocals once, pad to tile multiples,
        # and store the adjacency in bf16 (0/1 values are exact) to halve HBM traffic.
        adj_f32 = adj.astype(jnp.float32)
        u, i = adj_f32.shape
        u_pad = _round_up(u, tile)
        i_pad = _round_up(i, tile)
        d_pad = _round_up(hid_dim, 128)
        self.u_pad, self.i_pad, self.d_pad = u_pad, i_pad, d_pad

        inv_du = 1.0 / jnp.maximum(adj_f32.sum(axis=1, keepdims=True), 1.0)   # [U,1]
        inv_di = 1.0 / jnp.maximum(adj_f32.sum(axis=0)[:, None], 1.0)          # [I,1]

        self.adj = jnp.pad(adj_f32, ((0, u_pad - u), (0, i_pad - i))).astype(jnp.bfloat16)
        self.inv_deg_user = jnp.pad(inv_du, ((0, u_pad - u), (0, 0)))
        self.inv_deg_item = jnp.pad(inv_di, ((0, i_pad - i), (0, 0)))

        # Lane-dense, zero-padded working copies of the embeddings.
        self._user0 = jnp.pad(self.user_embedding,
                              ((0, u_pad - u), (0, d_pad - hid_dim)))
        self._item0 = jnp.pad(self.item_embedding,
                              ((0, i_pad - i), (0, d_pad - hid_dim)))

    def get_embedding(self):
        h_user, h_item = self._user0, self._item0
        for _ in range(self.layer_num):
            new_item = agg_item(self.adj, h_user, self.inv_deg_item, tile=self.tile)
            new_user = agg_user(self.adj, h_item, self.inv_deg_user, tile=self.tile)
            h_user, h_item = new_user, new_item
        return {"user": h_user[:self.num_users, :self.hid_dim],
                "item": h_item[:self.num_items, :self.hid_dim]}

    def forward(self, pos_edges, neg_edges):
        # pos_edges / neg_edges: (src_user_idx[E], dst_item_idx[E]) of etype 'rate'.
        return _forward_impl(self.adj, self.inv_deg_user, self.inv_deg_item,
                             self._user0, self._item0,
                             pos_edges[0], pos_edges[1],
                             neg_edges[0], neg_edges[1],
                             layer_num=self.layer_num, tile=self.tile)


if __name__ == "__main__":
    key = jax.random.PRNGKey(0)
    k_adj, k_param, k_pos_s, k_pos_d, k_neg_s, k_neg_d = jax.random.split(key, 6)

    NUM_USERS, NUM_ITEMS, HID_DIM, LAYERS, E = 16, 24, 32, 2, 8

    # Synthetic bipartite train graph (dense adjacency).
    adj = jax.random.bernoulli(k_adj, p=0.25, shape=(NUM_USERS, NUM_ITEMS)).astype(jnp.float32)

    # Positive / negative 'rate' edge lists.
    pos_edges = (
        jax.random.randint(k_pos_s, (E,), 0, NUM_USERS),
        jax.random.randint(k_pos_d, (E,), 0, NUM_ITEMS),
    )
    neg_edges = (
        jax.random.randint(k_neg_s, (E,), 0, NUM_USERS),
        jax.random.randint(k_neg_d, (E,), 0, NUM_ITEMS),
    )

    model = BaseGraphModelJAX(k_param, NUM_USERS, NUM_ITEMS, HID_DIM, LAYERS, adj)

    score_pos, score_neg = model.forward(pos_edges, neg_edges)
    jax.block_until_ready((score_pos, score_neg))

    assert score_pos.shape == (E, 1) and score_neg.shape == (E, 1)
    assert score_pos.dtype == jnp.float32

    # Pure-JAX reference check of the whole forward (original, unpadded shapes).
    hu, hi = model.user_embedding, model.item_embedding
    for _ in range(LAYERS):
        new_i = (adj.T @ hu) / jnp.maximum(adj.sum(0)[:, None], 1.0)
        new_u = (adj @ hi) / jnp.maximum(adj.sum(1)[:, None], 1.0)
        hu, hi = new_u, new_i
    ref_pos = jnp.sum(hu[pos_edges[0]] * hi[pos_edges[1]], axis=-1, keepdims=True)
    ref_neg = jnp.sum(hu[neg_edges[0]] * hi[neg_edges[1]], axis=-1, keepdims=True)
    assert jnp.allclose(score_pos, ref_pos, atol=1e-4, rtol=1e-4)
    assert jnp.allclose(score_neg, ref_neg, atol=1e-4, rtol=1e-4)

    print("KERNEL_OK")
</pallas_src>

<mosaic_0001>
module attributes {stable_mosaic.version = 11 : i64} {
  func.func @_agg_item_kernel(%arg0: i32, %arg1: i32, %arg2: memref<512x512xbf16, #tpu.memory_space<vmem>>, %arg3: memref<512x128xf32, #tpu.memory_space<vmem>>, %arg4: memref<512x1xf32, #tpu.memory_space<vmem>>, %arg5: memref<512x128xf32, #tpu.memory_space<vmem>>, %arg6: memref<512x128xf32, #tpu.memory_space<vmem>>) attributes {dimension_semantics = [#tpu.dimension_semantics<parallel>, #tpu.dimension_semantics<arbitrary>], iteration_bounds = array<i64: 1, 1>, scalar_prefetch = 0 : i64, scratch_operands = 1 : i64, tpu.core_type = #tpu.core_type<tc>, window_params = [{transform_indices = @transform_0, window_bounds = array<i64: 512, 512>}, {transform_indices = @transform_1, window_bounds = array<i64: 512, 128>}, {transform_indices = @transform_2, window_bounds = array<i64: 512, 1>}, {transform_indices = @transform_3, window_bounds = array<i64: 512, 128>}]} {
    %c0_i32 = arith.constant 0 : i32
    %0 = arith.cmpi eq, %arg1, %c0_i32 : i32
    %1 = arith.extui %0 : i1 to i32
    %c0_i32_0 = arith.constant 0 : i32
    %2 = arith.cmpi ne, %1, %c0_i32_0 : i32
    scf.if %2 {
      %cst_10 = arith.constant 0.000000e+00 : f32
      %13 = vector.broadcast %cst_10 : f32 to vector<512x128xf32>
      %c0_11 = arith.constant 0 : index
      %c0_12 = arith.constant 0 : index
      %14 = vector.load %arg6[%c0_11, %c0_12] : memref<512x128xf32, #tpu.memory_space<vmem>>, vector<512x128xf32>
      tpu.vector_store %arg6[%c0_11, %c0_12], %13 {strides = array<i32>} : memref<512x128xf32, #tpu.memory_space<vmem>>, vector<512x128xf32>,
    } else {
    }
    %c0 = arith.constant 0 : index
    %c0_1 = arith.constant 0 : index
    %3 = vector.load %arg2[%c0, %c0_1] : memref<512x512xbf16, #tpu.memory_space<vmem>>, vector<512x512xbf16>
    %4 = arith.extf %3 : vector<512x512xbf16> to vector<512x512xf32>
    %c0_2 = arith.constant 0 : index
    %c0_3 = arith.constant 0 : index
    %5 = vector.load %arg6[%c0_2, %c0_3] : memref<512x128xf32, #tpu.memory_space<vmem>>, vector<512x128xf32>
    %c0_4 = arith.constant 0 : index
    %c0_5 = arith.constant 0 : index
    %6 = vector.load %arg3[%c0_4, %c0_5] : memref<512x128xf32, #tpu.memory_space<vmem>>, vector<512x128xf32>
    %cst = arith.constant dense<0.000000e+00> : vector<512x128xf32>
    %7 = tpu.matmul %4, %6, %cst {dimension_numbers = #tpu.dot_dimension_numbers<[0], [0], [1], [1], [0, 1, 1, 1], [], []>} : vector<512x512xf32>, vector<512x128xf32>, vector<512x128xf32> -> vector<512x128xf32>
    %8 = arith.addf %5, %7 : vector<512x128xf32>
    %c0_6 = arith.constant 0 : index
    %c0_7 = arith.constant 0 : index
    %9 = vector.load %arg6[%c0_6, %c0_7] : memref<512x128xf32, #tpu.memory_space<vmem>>, vector<512x128xf32>
    tpu.vector_store %arg6[%c0_6, %c0_7], %8 {strides = array<i32>} : memref<512x128xf32, #tpu.memory_space<vmem>>, vector<512x128xf32>,
    %c0_i32_8 = arith.constant 0 : i32
    %10 = arith.cmpi eq, %arg1, %c0_i32_8 : i32
    %11 = arith.extui %10 : i1 to i32
    %c0_i32_9 = arith.constant 0 : i32
    %12 = arith.cmpi ne, %11, %c0_i32_9 : i32
    scf.if %12 {
      %c0_10 = arith.constant 0 : index
      %c0_11 = arith.constant 0 : index
      %13 = vector.load %arg6[%c0_10, %c0_11] : memref<512x128xf32, #tpu.memory_space<vmem>>, vector<512x128xf32>
      %c0_12 = arith.constant 0 : index
      %c0_13 = arith.constant 0 : index
      %14 = vector.load %arg4[%c0_12, %c0_13] : memref<512x1xf32, #tpu.memory_space<vmem>>, vector<512x1xf32>
      %15 = vector.broadcast %14 : vector<512x1xf32> to vector<512x128xf32>
      %16 = arith.mulf %13, %15 : vector<512x128xf32>
      %c0_14 = arith.constant 0 : index
      %c0_15 = arith.constant 0 : index
      %17 = vector.load %arg5[%c0_14, %c0_15] : memref<512x128xf32, #tpu.memory_space<vmem>>, vector<512x128xf32>
      tpu.vector_store %arg5[%c0_14, %c0_15], %16 {strides = array<i32>} : memref<512x128xf32, #tpu.memory_space<vmem>>, vector<512x128xf32>,
    } else {
    }
    return
  }
  func.func @transform_0(%arg0: i32, %arg1: i32) -> (i32, i32) {
    %c0_i32 = arith.constant 0 : i32
    return %arg1, %arg0 : i32, i32
  }
  func.func @transform_1(%arg0: i32, %arg1: i32) -> (i32, i32) {
    %c0_i32 = arith.constant 0 : i32
    %c0_i32_0 = arith.constant 0 : i32
    return %arg1, %c0_i32 : i32, i32
  }
  func.func @transform_2(%arg0: i32, %arg1: i32) -> (i32, i32) {
    %c0_i32 = arith.constant 0 : i32
    %c0_i32_0 = arith.constant 0 : i32
    return %arg0, %c0_i32 : i32, i32
  }
  func.func @transform_3(%arg0: i32, %arg1: i32) -> (i32, i32) {
    %c0_i32 = arith.constant 0 : i32
    %c0_i32_0 = arith.constant 0 : i32
    return %arg0, %c0_i32 : i32, i32
  }
}

module attributes {stable_mosaic.version = 11 : i64} {
  func.func @_agg_user_kernel(%arg0: i32, %arg1: i32, %arg2: memref<512x512xbf16, #tpu.memory_space<vmem>>, %arg3: memref<512x128xf32, #tpu.memory_space<vmem>>, %arg4: memref<512x1xf32, #tpu.memory_space<vmem>>, %arg5: memref<512x128xf32, #tpu.memory_space<vmem>>, %arg6: memref<512x128xf32, #tpu.memory_space<vmem>>) attributes {dimension_semantics = [#tpu.dimension_semantics<parallel>, #tpu.dimension_semantics<arbitrary>], iteration_bounds = array<i64: 1, 1>, scalar_prefetch = 0 : i64, scratch_operands = 1 : i64, tpu.core_type = #tpu.core_type<tc>, window_params = [{transform_indices = @transform_0, window_bounds = array<i64: 512, 512>}, {transform_indices = @transform_1, window_bounds = array<i64: 512, 128>}, {transform_indices = @transform_2, window_bounds = array<i64: 512, 1>}, {transform_indices = @transform_3, window_bounds = array<i64: 512, 128>}]} {
    %c0_i32 = arith.constant 0 : i32
    %0 = arith.cmpi eq, %arg1, %c0_i32 : i32
    %1 = arith.extui %0 : i1 to i32
    %c0_i32_0 = arith.constant 0 : i32
    %2 = arith.cmpi ne, %1, %c0_i32_0 : i32
    scf.if %2 {
      %cst_10 = arith.constant 0.000000e+00 : f32
      %13 = vector.broadcast %cst_10 : f32 to vector<512x128xf32>
      %c0_11 = arith.constant 0 : index
      %c0_12 = arith.constant 0 : index
      %14 = vector.load %arg6[%c0_11, %c0_12] : memref<512x128xf32, #tpu.memory_space<vmem>>, vector<512x128xf32>
      tpu.vector_store %arg6[%c0_11, %c0_12], %13 {strides = array<i32>} : memref<512x128xf32, #tpu.memory_space<vmem>>, vector<512x128xf32>,
    } else {
    }
    %c0 = arith.constant 0 : index
    %c0_1 = arith.constant 0 : index
    %3 = vector.load %arg2[%c0, %c0_1] : memref<512x512xbf16, #tpu.memory_space<vmem>>, vector<512x512xbf16>
    %4 = arith.extf %3 : vector<512x512xbf16> to vector<512x512xf32>
    %c0_2 = arith.constant 0 : index
    %c0_3 = arith.constant 0 : index
    %5 = vector.load %arg6[%c0_2, %c0_3] : memref<512x128xf32, #tpu.memory_space<vmem>>, vector<512x128xf32>
    %c0_4 = arith.constant 0 : index
    %c0_5 = arith.constant 0 : index
    %6 = vector.load %arg3[%c0_4, %c0_5] : memref<512x128xf32, #tpu.memory_space<vmem>>, vector<512x128xf32>
    %cst = arith.constant dense<0.000000e+00> : vector<512x128xf32>
    %7 = tpu.matmul %4, %6, %cst {dimension_numbers = #tpu.dot_dimension_numbers<[1], [0], [0], [1], [0, 0, 1, 1], [], []>} : vector<512x512xf32>, vector<512x128xf32>, vector<512x128xf32> -> vector<512x128xf32>
    %8 = arith.addf %5, %7 : vector<512x128xf32>
    %c0_6 = arith.constant 0 : index
    %c0_7 = arith.constant 0 : index
    %9 = vector.load %arg6[%c0_6, %c0_7] : memref<512x128xf32, #tpu.memory_space<vmem>>, vector<512x128xf32>
    tpu.vector_store %arg6[%c0_6, %c0_7], %8 {strides = array<i32>} : memref<512x128xf32, #tpu.memory_space<vmem>>, vector<512x128xf32>,
    %c0_i32_8 = arith.constant 0 : i32
    %10 = arith.cmpi eq, %arg1, %c0_i32_8 : i32
    %11 = arith.extui %10 : i1 to i32
    %c0_i32_9 = arith.constant 0 : i32
    %12 = arith.cmpi ne, %11, %c0_i32_9 : i32
    scf.if %12 {
      %c0_10 = arith.constant 0 : index
      %c0_11 = arith.constant 0 : index
      %13 = vector.load %arg6[%c0_10, %c0_11] : memref<512x128xf32, #tpu.memory_space<vmem>>, vector<512x128xf32>
      %c0_12 = arith.constant 0 : index
      %c0_13 = arith.constant 0 : index
      %14 = vector.load %arg4[%c0_12, %c0_13] : memref<512x1xf32, #tpu.memory_space<vmem>>, vector<512x1xf32>
      %15 = vector.broadcast %14 : vector<512x1xf32> to vector<512x128xf32>
      %16 = arith.mulf %13, %15 : vector<512x128xf32>
      %c0_14 = arith.constant 0 : index
      %c0_15 = arith.constant 0 : index
      %17 = vector.load %arg5[%c0_14, %c0_15] : memref<512x128xf32, #tpu.memory_space<vmem>>, vector<512x128xf32>
      tpu.vector_store %arg5[%c0_14, %c0_15], %16 {strides = array<i32>} : memref<512x128xf32, #tpu.memory_space<vmem>>, vector<512x128xf32>,
    } else {
    }
    return
  }
  func.func @transform_0(%arg0: i32, %arg1: i32) -> (i32, i32) {
    %c0_i32 = arith.constant 0 : i32
    return %arg0, %arg1 : i32, i32
  }
  func.func @transform_1(%arg0: i32, %arg1: i32) -> (i32, i32) {
    %c0_i32 = arith.constant 0 : i32
    %c0_i32_0 = arith.constant 0 : i32
    return %arg1, %c0_i32 : i32, i32
  }
  func.func @transform_2(%arg0: i32, %arg1: i32) -> (i32, i32) {
    %c0_i32 = arith.constant 0 : i32
    %c0_i32_0 = arith.constant 0 : i32
    return %arg0, %c0_i32 : i32, i32
  }
  func.func @transform_3(%arg0: i32, %arg1: i32) -> (i32, i32) {
    %c0_i32 = arith.constant 0 : i32
    %c0_i32_0 = arith.constant 0 : i32
    return %arg0, %c0_i32 : i32, i32
  }
}

module attributes {stable_mosaic.version = 11 : i64} {
  func.func @_agg_item_kernel(%arg0: i32, %arg1: i32, %arg2: memref<512x512xbf16, #tpu.memory_space<vmem>>, %arg3: memref<512x128xf32, #tpu.memory_space<vmem>>, %arg4: memref<512x1xf32, #tpu.memory_space<vmem>>, %arg5: memref<512x128xf32, #tpu.memory_space<vmem>>, %arg6: memref<512x128xf32, #tpu.memory_space<vmem>>) attributes {dimension_semantics = [#tpu.dimension_semantics<parallel>, #tpu.dimension_semantics<arbitrary>], iteration_bounds = array<i64: 1, 1>, scalar_prefetch = 0 : i64, scratch_operands = 1 : i64, tpu.core_type = #tpu.core_type<tc>, window_params = [{transform_indices = @transform_0, window_bounds = array<i64: 512, 512>}, {transform_indices = @transform_1, window_bounds = array<i64: 512, 128>}, {transform_indices = @transform_2, window_bounds = array<i64: 512, 1>}, {transform_indices = @transform_3, window_bounds = array<i64: 512, 128>}]} {
    %c0_i32 = arith.constant 0 : i32
    %0 = arith.cmpi eq, %arg1, %c0_i32 : i32
    %1 = arith.extui %0 : i1 to i32
    %c0_i32_0 = arith.constant 0 : i32
    %2 = arith.cmpi ne, %1, %c0_i32_0 : i32
    scf.if %2 {
      %cst_10 = arith.constant 0.000000e+00 : f32
      %13 = vector.broadcast %cst_10 : f32 to vector<512x128xf32>
      %c0_11 = arith.constant 0 : index
      %c0_12 = arith.constant 0 : index
      %14 = vector.load %arg6[%c0_11, %c0_12] : memref<512x128xf32, #tpu.memory_space<vmem>>, vector<512x128xf32>
      tpu.vector_store %arg6[%c0_11, %c0_12], %13 {strides = array<i32>} : memref<512x128xf32, #tpu.memory_space<vmem>>, vector<512x128xf32>,
    } else {
    }
    %c0 = arith.constant 0 : index
    %c0_1 = arith.constant 0 : index
    %3 = vector.load %arg2[%c0, %c0_1] : memref<512x512xbf16, #tpu.memory_space<vmem>>, vector<512x512xbf16>
    %4 = arith.extf %3 : vector<512x512xbf16> to vector<512x512xf32>
    %c0_2 = arith.constant 0 : index
    %c0_3 = arith.constant 0 : index
    %5 = vector.load %arg6[%c0_2, %c0_3] : memref<512x128xf32, #tpu.memory_space<vmem>>, vector<512x128xf32>
    %c0_4 = arith.constant 0 : index
    %c0_5 = arith.constant 0 : index
    %6 = vector.load %arg3[%c0_4, %c0_5] : memref<512x128xf32, #tpu.memory_space<vmem>>, vector<512x128xf32>
    %cst = arith.constant dense<0.000000e+00> : vector<512x128xf32>
    %7 = tpu.matmul %4, %6, %cst {dimension_numbers = #tpu.dot_dimension_numbers<[0], [0], [1], [1], [0, 1, 1, 1], [], []>} : vector<512x512xf32>, vector<512x128xf32>, vector<512x128xf32> -> vector<512x128xf32>
    %8 = arith.addf %5, %7 : vector<512x128xf32>
    %c0_6 = arith.constant 0 : index
    %c0_7 = arith.constant 0 : index
    %9 = vector.load %arg6[%c0_6, %c0_7] : memref<512x128xf32, #tpu.memory_space<vmem>>, vector<512x128xf32>
    tpu.vector_store %arg6[%c0_6, %c0_7], %8 {strides = array<i32>} : memref<512x128xf32, #tpu.memory_space<vmem>>, vector<512x128xf32>,
    %c0_i32_8 = arith.constant 0 : i32
    %10 = arith.cmpi eq, %arg1, %c0_i32_8 : i32
    %11 = arith.extui %10 : i1 to i32
    %c0_i32_9 = arith.constant 0 : i32
    %12 = arith.cmpi ne, %11, %c0_i32_9 : i32
    scf.if %12 {
      %c0_10 = arith.constant 0 : index
      %c0_11 = arith.constant 0 : index
      %13 = vector.load %arg6[%c0_10, %c0_11] : memref<512x128xf32, #tpu.memory_space<vmem>>, vector<512x128xf32>
      %c0_12 = arith.constant 0 : index
      %c0_13 = arith.constant 0 : index
      %14 = vector.load %arg4[%c0_12, %c0_13] : memref<512x1xf32, #tpu.memory_space<vmem>>, vector<512x1xf32>
      %15 = vector.broadcast %14 : vector<512x1xf32> to vector<512x128xf32>
      %16 = arith.mulf %13, %15 : vector<512x128xf32>
      %c0_14 = arith.constant 0 : index
      %c0_15 = arith.constant 0 : index
      %17 = vector.load %arg5[%c0_14, %c0_15] : memref<512x128xf32, #tpu.memory_space<vmem>>, vector<512x128xf32>
      tpu.vector_store %arg5[%c0_14, %c0_15], %16 {strides = array<i32>} : memref<512x128xf32, #tpu.memory_space<vmem>>, vector<512x128xf32>,
    } else {
    }
    return
  }
  func.func @transform_0(%arg0: i32, %arg1: i32) -> (i32, i32) {
    %c0_i32 = arith.constant 0 : i32
    return %arg1, %arg0 : i32, i32
  }
  func.func @transform_1(%arg0: i32, %arg1: i32) -> (i32, i32) {
    %c0_i32 = arith.constant 0 : i32
    %c0_i32_0 = arith.constant 0 : i32
    return %arg1, %c0_i32 : i32, i32
  }
  func.func @transform_2(%arg0: i32, %arg1: i32) -> (i32, i32) {
    %c0_i32 = arith.constant 0 : i32
    %c0_i32_0 = arith.constant 0 : i32
    return %arg0, %c0_i32 : i32, i32
  }
  func.func @transform_3(%arg0: i32, %arg1: i32) -> (i32, i32) {
    %c0_i32 = arith.constant 0 : i32
    %c0_i32_0 = arith.constant 0 : i32
    return %arg0, %c0_i32 : i32, i32
  }
}

module attributes {stable_mosaic.version = 11 : i64} {
  func.func @_edge_dot_kernel(%arg0: i32, %arg1: memref<128x512xf32, #tpu.memory_space<vmem>>, %arg2: memref<128x512xf32, #tpu.memory_space<vmem>>, %arg3: memref<1x512xf32, #tpu.memory_space<vmem>>) attributes {dimension_semantics = [#tpu.dimension_semantics<parallel>], iteration_bounds = array<i64: 1>, scalar_prefetch = 0 : i64, scratch_operands = 0 : i64, tpu.core_type = #tpu.core_type<tc>, window_params = [{transform_indices = @transform_0, window_bounds = array<i64: 128, 512>}, {transform_indices = @transform_1, window_bounds = array<i64: 128, 512>}, {transform_indices = @transform_2, window_bounds = array<i64: 1, 512>}]} {
    %c0 = arith.constant 0 : index
    %c0_0 = arith.constant 0 : index
    %0 = vector.load %arg1[%c0, %c0_0] : memref<128x512xf32, #tpu.memory_space<vmem>>, vector<128x512xf32>
    %c0_1 = arith.constant 0 : index
    %c0_2 = arith.constant 0 : index
    %1 = vector.load %arg2[%c0_1, %c0_2] : memref<128x512xf32, #tpu.memory_space<vmem>>, vector<128x512xf32>
    %2 = arith.mulf %0, %1 : vector<128x512xf32>
    %cst = arith.constant dense<0.000000e+00> : vector<512xf32>
    %3 = vector.multi_reduction <add>, %2, %cst [0] : vector<128x512xf32> to vector<512xf32>
    %4 = vector.shape_cast %3 : vector<512xf32> to vector<1x512xf32>
    %c0_3 = arith.constant 0 : index
    %c0_4 = arith.constant 0 : index
    %5 = vector.load %arg3[%c0_3, %c0_4] : memref<1x512xf32, #tpu.memory_space<vmem>>, vector<1x512xf32>
    tpu.vector_store %arg3[%c0_3, %c0_4], %4 {strides = array<i32>} : memref<1x512xf32, #tpu.memory_space<vmem>>, vector<1x512xf32>,
    return
  }
  func.func @transform_0(%arg0: i32) -> (i32, i32) {
    %c0_i32 = arith.constant 0 : i32
    %c0_i32_0 = arith.constant 0 : i32
    return %c0_i32, %arg0 : i32, i32
  }
  func.func @transform_1(%arg0: i32) -> (i32, i32) {
    %c0_i32 = arith.constant 0 : i32
    %c0_i32_0 = arith.constant 0 : i32
    return %c0_i32, %arg0 : i32, i32
  }
  func.func @transform_2(%arg0: i32) -> (i32, i32) {
    %c0_i32 = arith.constant 0 : i32
    %c0_i32_0 = arith.constant 0 : i32
    return %c0_i32, %arg0 : i32, i32
  }
}

</mosaic_0001>

<llo_original>
// kernel: _forward_impl.11
$region0: #{_forward_impl.11}
  #allocation0 [shape = 'u32[]', space=smem, size = 0x4, offset = 0x4, fixed_abs, tag = 'smem constant byte address 0x4 - core index']
  #allocation1 [shape = 'u32[144,128]{1,0:T(1,128)}', space=vmem, size = 0x12000, scoped, tag = 'internal scratch']
  %s0 = inlined_call_operand.vmem [shape: f32[128,512], index: 0, kind: input, shape index: {}]
  %s1 = inlined_call_operand.vmem [shape: f32[128,512], index: 1, kind: input, shape index: {}]
  %s2 = inlined_call_operand.vmem [shape: f32[1,512], index: 2, kind: output, shape index: {}]
  %s3 = sld [smem:[#allocation0]]
  $region18: #{_forward_impl.11} parent=0
    _
  %s5 = ssub.s32 1, %s3
  %s6 = scalar_select 0, %s5, %s3
  // Predicated region
  $region2: #{_forward_impl.11} parent=0 // pred_check
    _
  $region3: #{_forward_impl.11} parent=0 // pred_check_branch
    %8 = sbr.rel (0) target = $region5
  $region4: #{_forward_impl.11} parent=0 // pred_region
    _
  $region5: #{_forward_impl.11} parent=0 // pred_fallthru
    _
  // Predicated region
  $region6: #{_forward_impl.11} parent=0 // pred_check
    _
  $region7: #{_forward_impl.11} parent=0 // pred_check_branch
    %10 = sbr.rel (0) target = $region9
  $region8: #{_forward_impl.11} parent=0 // pred_region
    _
  $region9: #{_forward_impl.11} parent=0 // pred_fallthru
    _
  %v11 = vld [vmem:[%s0] sm:$0xff]
  %v12 = vld [vmem:[%s0 + $0x8] sm:$0xff]
  %v13 = vld [vmem:[%s0 + $0x10] sm:$0xff]
  %v14 = vld [vmem:[%s0 + $0x18] sm:$0xff]
  %v15 = vld [vmem:[%s0 + $0x20] sm:$0xff]
  %v16 = vld [vmem:[%s0 + $0x28] sm:$0xff]
  %v17 = vld [vmem:[%s0 + $0x30] sm:$0xff]
  %v18 = vld [vmem:[%s0 + $0x38] sm:$0xff]
  %v19 = vld [vmem:[%s0 + $0x40] sm:$0xff]
  %v20 = vld [vmem:[%s0 + $0x48] sm:$0xff]
  %v21 = vld [vmem:[%s0 + $0x50] sm:$0xff]
  %v22 = vld [vmem:[%s0 + $0x58] sm:$0xff]
  %v23 = vld [vmem:[%s0 + $0x60] sm:$0xff]
  %v24 = vld [vmem:[%s0 + $0x68] sm:$0xff]
  %v25 = vld [vmem:[%s0 + $0x70] sm:$0xff]
  %v26 = vld [vmem:[%s0 + $0x78] sm:$0xff]
  %v27 = vld [vmem:[%s0 + $0x80] sm:$0xff]
  %v28 = vld [vmem:[%s0 + $0x88] sm:$0xff]
  %v29 = vld [vmem:[%s0 + $0x90] sm:$0xff]
  %v30 = vld [vmem:[%s0 + $0x98] sm:$0xff]
  %v31 = vld [vmem:[%s0 + $0xa0] sm:$0xff]
  %v32 = vld [vmem:[%s0 + $0xa8] sm:$0xff]
  %v33 = vld [vmem:[%s0 + $0xb0] sm:$0xff]
  %v34 = vld [vmem:[%s0 + $0xb8] sm:$0xff]
  %v35 = vld [vmem:[%s0 + $0xc0] sm:$0xff]
  %v36 = vld [vmem:[%s0 + $0xc8] sm:$0xff]
  %v37 = vld [vmem:[%s0 + $0xd0] sm:$0xff]
  %v38 = vld [vmem:[%s0 + $0xd8] sm:$0xff]
  %v39 = vld [vmem:[%s0 + $0xe0] sm:$0xff]
  %v40 = vld [vmem:[%s0 + $0xe8] sm:$0xff]
  %v41 = vld [vmem:[%s0 + $0xf0] sm:$0xff]
  %v42 = vld [vmem:[%s0 + $0xf8] sm:$0xff]
  %v43 = vld [vmem:[%s0 + $0x100] sm:$0xff]
  %v44 = vld [vmem:[%s0 + $0x108] sm:$0xff]
  %v45 = vld [vmem:[%s0 + $0x110] sm:$0xff]
  %v46 = vld [vmem:[%s0 + $0x118] sm:$0xff]
  %v47 = vld [vmem:[%s0 + $0x120] sm:$0xff]
  %v48 = vld [vmem:[%s0 + $0x128] sm:$0xff]
  %v49 = vld [vmem:[%s0 + $0x130] sm:$0xff]
  %v50 = vld [vmem:[%s0 + $0x138] sm:$0xff]
  %v51 = vld [vmem:[%s0 + $0x140] sm:$0xff]
  %v52 = vld [vmem:[%s0 + $0x148] sm:$0xff]
  %v53 = vld [vmem:[%s0 + $0x150] sm:$0xff]
  %v54 = vld [vmem:[%s0 + $0x158] sm:$0xff]
  %v55 = vld [vmem:[%s0 + $0x160] sm:$0xff]
  %v56 = vld [vmem:[%s0 + $0x168] sm:$0xff]
  %v57 = vld [vmem:[%s0 + $0x170] sm:$0xff]
  %v58 = vld [vmem:[%s0 + $0x178] sm:$0xff]
  %v59 = vld [vmem:[%s0 + $0x180] sm:$0xff]
  %v60 = vld [vmem:[%s0 + $0x188] sm:$0xff]
  %v61 = vld [vmem:[%s0 + $0x190] sm:$0xff]
  %v62 = vld [vmem:[%s0 + $0x198] sm:$0xff]
  %v63 = vld [vmem:[%s0 + $0x1a0] sm:$0xff]
  %v64 = vld [vmem:[%s0 + $0x1a8] sm:$0xff]
  %v65 = vld [vmem:[%s0 + $0x1b0] sm:$0xff]
  %v66 = vld [vmem:[%s0 + $0x1b8] sm:$0xff]
  %v67 = vld [vmem:[%s0 + $0x1c0] sm:$0xff]
  %v68 = vld [vmem:[%s0 + $0x1c8] sm:$0xff]
  %v69 = vld [vmem:[%s0 + $0x1d0] sm:$0xff]
  %v70 = vld [vmem:[%s0 + $0x1d8] sm:$0xff]
  %v71 = vld [vmem:[%s0 + $0x1e0] sm:$0xff]
  %v72 = vld [vmem:[%s0 + $0x1e8] sm:$0xff]
  %v73 = vld [vmem:[%s0 + $0x1f0] sm:$0xff]
  %v74 = vld [vmem:[%s0 + $0x1f8] sm:$0xff]
  %v75 = vld [vmem:[%s1] sm:$0xff]
  %v76 = vld [vmem:[%s1 + $0x8] sm:$0xff]
  %v77 = vld [vmem:[%s1 + $0x10] sm:$0xff]
  %v78 = vld [vmem:[%s1 + $0x18] sm:$0xff]
  %v79 = vld [vmem:[%s1 + $0x20] sm:$0xff]
  %v80 = vld [vmem:[%s1 + $0x28] sm:$0xff]
  %v81 = vld [vmem:[%s1 + $0x30] sm:$0xff]
  %v82 = vld [vmem:[%s1 + $0x38] sm:$0xff]
  %v83 = vld [vmem:[%s1 + $0x40] sm:$0xff]
  %v84 = vld [vmem:[%s1 + $0x48] sm:$0xff]
  %v85 = vld [vmem:[%s1 + $0x50] sm:$0xff]
  %v86 = vld [vmem:[%s1 + $0x58] sm:$0xff]
  %v87 = vld [vmem:[%s1 + $0x60] sm:$0xff]
  %v88 = vld [vmem:[%s1 + $0x68] sm:$0xff]
  %v89 = vld [vmem:[%s1 + $0x70] sm:$0xff]
  %v90 = vld [vmem:[%s1 + $0x78] sm:$0xff]
  %v91 = vld [vmem:[%s1 + $0x80] sm:$0xff]
  %v92 = vld [vmem:[%s1 + $0x88] sm:$0xff]
  %v93 = vld [vmem:[%s1 + $0x90] sm:$0xff]
  %v94 = vld [vmem:[%s1 + $0x98] sm:$0xff]
  %v95 = vld [vmem:[%s1 + $0xa0] sm:$0xff]
  %v96 = vld [vmem:[%s1 + $0xa8] sm:$0xff]
  %v97 = vld [vmem:[%s1 + $0xb0] sm:$0xff]
  %v98 = vld [vmem:[%s1 + $0xb8] sm:$0xff]
  %v99 = vld [vmem:[%s1 + $0xc0] sm:$0xff]
  %v100 = vld [vmem:[%s1 + $0xc8] sm:$0xff]
  %v101 = vld [vmem:[%s1 + $0xd0] sm:$0xff]
  %v102 = vld [vmem:[%s1 + $0xd8] sm:$0xff]
  %v103 = vld [vmem:[%s1 + $0xe0] sm:$0xff]
  %v104 = vld [vmem:[%s1 + $0xe8] sm:$0xff]
  %v105 = vld [vmem:[%s1 + $0xf0] sm:$0xff]
  %v106 = vld [vmem:[%s1 + $0xf8] sm:$0xff]
  %v107 = vld [vmem:[%s1 + $0x100] sm:$0xff]
  %v108 = vld [vmem:[%s1 + $0x108] sm:$0xff]
  %v109 = vld [vmem:[%s1 + $0x110] sm:$0xff]
  %v110 = vld [vmem:[%s1 + $0x118] sm:$0xff]
  %v111 = vld [vmem:[%s1 + $0x120] sm:$0xff]
  %v112 = vld [vmem:[%s1 + $0x128] sm:$0xff]
  %v113 = vld [vmem:[%s1 + $0x130] sm:$0xff]
  %v114 = vld [vmem:[%s1 + $0x138] sm:$0xff]
  %v115 = vld [vmem:[%s1 + $0x140] sm:$0xff]
  %v116 = vld [vmem:[%s1 + $0x148] sm:$0xff]
  %v117 = vld [vmem:[%s1 + $0x150] sm:$0xff]
  %v118 = vld [vmem:[%s1 + $0x158] sm:$0xff]
  %v119 = vld [vmem:[%s1 + $0x160] sm:$0xff]
  %v120 = vld [vmem:[%s1 + $0x168] sm:$0xff]
  %v121 = vld [vmem:[%s1 + $0x170] sm:$0xff]
  %v122 = vld [vmem:[%s1 + $0x178] sm:$0xff]
  %v123 = vld [vmem:[%s1 + $0x180] sm:$0xff]
  %v124 = vld [vmem:[%s1 + $0x188] sm:$0xff]
  %v125 = vld [vmem:[%s1 + $0x190] sm:$0xff]
  %v126 = vld [vmem:[%s1 + $0x198] sm:$0xff]
  %v127 = vld [vmem:[%s1 + $0x1a0] sm:$0xff]
  %v128 = vld [vmem:[%s1 + $0x1a8] sm:$0xff]
  %v129 = vld [vmem:[%s1 + $0x1b0] sm:$0xff]
  %v130 = vld [vmem:[%s1 + $0x1b8] sm:$0xff]
  %v131 = vld [vmem:[%s1 + $0x1c0] sm:$0xff]
  %v132 = vld [vmem:[%s1 + $0x1c8] sm:$0xff]
  %v133 = vld [vmem:[%s1 + $0x1d0] sm:$0xff]
  %v134 = vld [vmem:[%s1 + $0x1d8] sm:$0xff]
  %v135 = vld [vmem:[%s1 + $0x1e0] sm:$0xff]
  %v136 = vld [vmem:[%s1 + $0x1e8] sm:$0xff]
  %v137 = vld [vmem:[%s1 + $0x1f0] sm:$0xff]
  %v138 = vld [vmem:[%s1 + $0x1f8] sm:$0xff]
  %v139 = vmul.f32 %v11, %v75
  %v140 = vmul.f32 %v12, %v76
  %v141 = vmul.f32 %v13, %v77
  %v142 = vmul.f32 %v14, %v78
  %v143 = vmul.f32 %v15, %v79
  %v144 = vmul.f32 %v16, %v80
  %v145 = vmul.f32 %v17, %v81
  %v146 = vmul.f32 %v18, %v82
  %v147 = vmul.f32 %v19, %v83
  %v148 = vmul.f32 %v20, %v84
  %v149 = vmul.f32 %v21, %v85
  %v150 = vmul.f32 %v22, %v86
  %v151 = vmul.f32 %v23, %v87
  %v152 = vmul.f32 %v24, %v88
  %v153 = vmul.f32 %v25, %v89
  %v154 = vmul.f32 %v26, %v90
  %v155 = vmul.f32 %v27, %v91
  %v156 = vmul.f32 %v28, %v92
  %v157 = vmul.f32 %v29, %v93
  %v158 = vmul.f32 %v30, %v94
  %v159 = vmul.f32 %v31, %v95
  %v160 = vmul.f32 %v32, %v96
  %v161 = vmul.f32 %v33, %v97
  %v162 = vmul.f32 %v34, %v98
  %v163 = vmul.f32 %v35, %v99
  %v164 = vmul.f32 %v36, %v100
  %v165 = vmul.f32 %v37, %v101
  %v166 = vmul.f32 %v38, %v102
  %v167 = vmul.f32 %v39, %v103
  %v168 = vmul.f32 %v40, %v104
  %v169 = vmul.f32 %v41, %v105
  %v170 = vmul.f32 %v42, %v106
  %v171 = vmul.f32 %v43, %v107
  %v172 = vmul.f32 %v44, %v108
  %v173 = vmul.f32 %v45, %v109
  %v174 = vmul.f32 %v46, %v110
  %v175 = vmul.f32 %v47, %v111
  %v176 = vmul.f32 %v48, %v112
  %v177 = vmul.f32 %v49, %v113
  %v178 = vmul.f32 %v50, %v114
  %v179 = vmul.f32 %v51, %v115
  %v180 = vmul.f32 %v52, %v116
  %v181 = vmul.f32 %v53, %v117
  %v182 = vmul.f32 %v54, %v118
  %v183 = vmul.f32 %v55, %v119
  %v184 = vmul.f32 %v56, %v120
  %v185 = vmul.f32 %v57, %v121
  %v186 = vmul.f32 %v58, %v122
  %v187 = vmul.f32 %v59, %v123
  %v188 = vmul.f32 %v60, %v124
  %v189 = vmul.f32 %v61, %v125
  %v190 = vmul.f32 %v62, %v126
  %v191 = vmul.f32 %v63, %v127
  %v192 = vmul.f32 %v64, %v128
  %v193 = vmul.f32 %v65, %v129
  %v194 = vmul.f32 %v66, %v130
  %v195 = vmul.f32 %v67, %v131
  %v196 = vmul.f32 %v68, %v132
  %v197 = vmul.f32 %v69, %v133
  %v198 = vmul.f32 %v70, %v134
  %v199 = vmul.f32 %v71, %v135
  %v200 = vmul.f32 %v72, %v136
  %v201 = vmul.f32 %v73, %v137
  %v202 = vmul.f32 %v74, %v138
  %v203 = vadd.f32 %v139, %v143
  %v204 = vadd.f32 %v203, %v147
  %v205 = vadd.f32 %v204, %v151
  %v206 = vadd.f32 %v205, %v155
  %v207 = vadd.f32 %v206, %v159
  %v208 = vadd.f32 %v207, %v163
  %v209 = vadd.f32 %v208, %v167
  %v210 = vadd.f32 %v209, %v171
  %v211 = vadd.f32 %v210, %v175
  %v212 = vadd.f32 %v211, %v179
  %v213 = vadd.f32 %v212, %v183
  %v214 = vadd.f32 %v213, %v187
  %v215 = vadd.f32 %v214, %v191
  %v216 = vadd.f32 %v215, %v195
  %v217 = vadd.f32 %v216, %v199
  %v218 = vrot.slane %v217, 4
  %v219 = vadd.f32 %v217, %v218
  %v220 = vrot.slane %v219, 2
  %v221 = vadd.f32 %v219, %v220
  %v222 = vrot.slane %v221, 1
  %v223 = vadd.f32 %v221, %v222
  %v224 = vadd.f32 %v140, %v144
  %v225 = vadd.f32 %v224, %v148
  %v226 = vadd.f32 %v225, %v152
  %v227 = vadd.f32 %v226, %v156
  %v228 = vadd.f32 %v227, %v160
  %v229 = vadd.f32 %v228, %v164
  %v230 = vadd.f32 %v229, %v168
  %v231 = vadd.f32 %v230, %v172
  %v232 = vadd.f32 %v231, %v176
  %v233 = vadd.f32 %v232, %v180
  %v234 = vadd.f32 %v233, %v184
  %v235 = vadd.f32 %v234, %v188
  %v236 = vadd.f32 %v235, %v192
  %v237 = vadd.f32 %v236, %v196
  %v238 = vadd.f32 %v237, %v200
  %v239 = vrot.slane %v238, 4
  %v240 = vadd.f32 %v238, %v239
  %v241 = vrot.slane %v240, 2
  %v242 = vadd.f32 %v240, %v241
  %v243 = vrot.slane %v242, 1
  %v244 = vadd.f32 %v242, %v243
  %v245 = vadd.f32 %v141, %v145
  %v246 = vadd.f32 %v245, %v149
  %v247 = vadd.f32 %v246, %v153
  %v248 = vadd.f32 %v247, %v157
  %v249 = vadd.f32 %v248, %v161
  %v250 = vadd.f32 %v249, %v165
  %v251 = vadd.f32 %v250, %v169
  %v252 = vadd.f32 %v251, %v173
  %v253 = vadd.f32 %v252, %v177
  %v254 = vadd.f32 %v253, %v181
  %v255 = vadd.f32 %v254, %v185
  %v256 = vadd.f32 %v255, %v189
  %v257 = vadd.f32 %v256, %v193
  %v258 = vadd.f32 %v257, %v197
  %v259 = vadd.f32 %v258, %v201
  %v260 = vrot.slane %v259, 4
  %v261 = vadd.f32 %v259, %v260
  %v262 = vrot.slane %v261, 2
  %v263 = vadd.f32 %v261, %v262
  %v264 = vrot.slane %v263, 1
  %v265 = vadd.f32 %v263, %v264
  %v266 = vadd.f32 %v142, %v146
  %v267 = vadd.f32 %v266, %v150
  %v268 = vadd.f32 %v267, %v154
  %v269 = vadd.f32 %v268, %v158
  %v270 = vadd.f32 %v269, %v162
  %v271 = vadd.f32 %v270, %v166
  %v272 = vadd.f32 %v271, %v170
  %v273 = vadd.f32 %v272, %v174
  %v274 = vadd.f32 %v273, %v178
  %v275 = vadd.f32 %v274, %v182
  %v276 = vadd.f32 %v275, %v186
  %v277 = vadd.f32 %v276, %v190
  %v278 = vadd.f32 %v277, %v194
  %v279 = vadd.f32 %v278, %v198
  %v280 = vadd.f32 %v279, %v202
  %v281 = vrot.slane %v280, 4
  %v282 = vadd.f32 %v280, %v281
  %v283 = vrot.slane %v282, 2
  %v284 = vadd.f32 %v282, %v283
  %v285 = vrot.slane %v284, 1
  %v286 = vadd.f32 %v284, %v285
  %v291 = vcombine.low %v223, %v244
  %v292 = vcombine.low %v265, %v286
  %v294 = vunpack.c.l.s4 1966171168
  %v295 = vunpack.c.0.s8 %v294
  %v296 = vlaneseq
  %v297 = vshrl.u32 %v296, 7
  %v298 = vsub.s32 %v295, %v297
  %v299 = vrot.slane %v291, %v298
  %v301 = vunpack.c.l.s4 1966171168
  %v302 = vunpack.c.0.s8 %v301
  %v303 = vlaneseq
  %v304 = vshrl.u32 %v303, 7
  %v305 = vsub.s32 %v302, %v304
  %v306 = vrot.slane %v292, %v305
  %v307 = vcombine.low %v299, %v306
  %v309 = vunpack.c.l.s4 1966171168
  %v310 = vunpack.c.0.s8 %v309
  %v311 = vlaneseq
  %v312 = vshrl.u32 %v311, 7
  %v313 = vsub.s32 %v310, %v312
  %v314 = vrot.slane %v307, %v313
  %v316 = vlaneseq
  %vm317 = vcmp.ge.s32.totalorder %v316, 0
  %vm318 = vcmp.lt.s32.totalorder %v316, 512
  %vm319 = vmand %vm317, %vm318
  %320 = vst.msk [vmem:[%s2] sm:$0xf] %vm319, %v314
  // Predicated region
  $region10: #{_forward_impl.11} parent=0 // pred_check
    _
  $region11: #{_forward_impl.11} parent=0 // pred_check_branch
    %322 = sbr.rel (0) target = $region13
  $region12: #{_forward_impl.11} parent=0 // pred_region
    _
  $region13: #{_forward_impl.11} parent=0 // pred_fallthru
    _
  // Predicated region
  $region14: #{_forward_impl.11} parent=0 // pred_check
    _
  $region15: #{_forward_impl.11} parent=0 // pred_check_branch
    %324 = sbr.rel (0) target = $region17
  $region16: #{_forward_impl.11} parent=0 // pred_region
    _
  $region17: #{_forward_impl.11} parent=0 // pred_fallthru
    _

// kernel: _forward_impl.9
$region0: #{_forward_impl.9}
  #allocation0 [shape = 'u32[]', space=smem, size = 0x4, offset = 0x4, fixed_abs, tag = 'smem constant byte address 0x4 - core index']
  #allocation1 [shape = 'u32[144,128]{1,0:T(1,128)}', space=vmem, size = 0x12000, scoped, tag = 'internal scratch']
  #allocation2 [shape = 'f32[512,128]{1,0:T(8,128)}', space=vmem, size = 0x40000, scoped, tag = 'scratch operand']
  %s0 = inlined_call_operand.vmem [shape: bf16[512,512], index: 0, kind: input, shape index: {}]
  %s1 = inlined_call_operand.vmem [shape: f32[512,128], index: 1, kind: input, shape index: {}]
  %s2 = inlined_call_operand.vmem [shape: f32[512,1], index: 2, kind: input, shape index: {}]
  %s3 = inlined_call_operand.vmem [shape: f32[512,128], index: 3, kind: output, shape index: {}]
  %s4 = sld [smem:[#allocation0]]
  $region30: #{_forward_impl.9} parent=0
    _
  %s6 = ssub.s32 1, %s4
  %s7 = scalar_select 0, %s6, %s4
  // Predicated region
  $region2: #{_forward_impl.9} parent=0 // pred_check
    _
  $region3: #{_forward_impl.9} parent=0 // pred_check_branch
    %9 = sbr.rel (0) target = $region5
  $region4: #{_forward_impl.9} parent=0 // pred_region
    _
  $region5: #{_forward_impl.9} parent=0 // pred_fallthru
    _
  // Predicated region
  $region6: #{_forward_impl.9} parent=0 // pred_check
    _
  $region7: #{_forward_impl.9} parent=0 // pred_check_branch
    %11 = sbr.rel (0) target = $region9
  $region8: #{_forward_impl.9} parent=0 // pred_region
    _
  $region9: #{_forward_impl.9} parent=0 // pred_fallthru
    _
  // Predicated region
  $region10: #{_forward_impl.9} parent=0 // pred_check
    _
  $region11: #{_forward_impl.9} parent=0 // pred_check_branch
    %13 = sbr.rel (0) target = $region13
  $region12: #{_forward_impl.9} parent=0 // pred_region
    _
  $region13: #{_forward_impl.9} parent=0 // pred_fallthru
    _
  %p14 = scmp.eq.s32.totalorder 0, 0
  // Predicated region
  $region14: #{_forward_impl.9} parent=0 // pred_check
    %p15 = pneg %p14
  $region15: #{_forward_impl.9} parent=0 // pred_check_branch
    %17 = sbr.rel (%p15) target = $region17
  $region16: #{_forward_impl.9} parent=0 // pred_region
    %18 = vst [vmem:[#allocation2] sm:$0xff] 0.0
    %19 = vst [vmem:[#allocation2 + $0x8] sm:$0xff] 0.0
    %20 = vst [vmem:[#allocation2 + $0x10] sm:$0xff] 0.0
    %21 = vst [vmem:[#allocation2 + $0x18] sm:$0xff] 0.0
    %22 = vst [vmem:[#allocation2 + $0x20] sm:$0xff] 0.0
    %23 = vst [vmem:[#allocation2 + $0x28] sm:$0xff] 0.0
    %24 = vst [vmem:[#allocation2 + $0x30] sm:$0xff] 0.0
    %25 = vst [vmem:[#allocation2 + $0x38] sm:$0xff] 0.0
    %26 = vst [vmem:[#allocation2 + $0x40] sm:$0xff] 0.0
    %27 = vst [vmem:[#allocation2 + $0x48] sm:$0xff] 0.0
    %28 = vst [vmem:[#allocation2 + $0x50] sm:$0xff] 0.0
    %29 = vst [vmem:[#allocation2 + $0x58] sm:$0xff] 0.0
    %30 = vst [vmem:[#allocation2 + $0x60] sm:$0xff] 0.0
    %31 = vst [vmem:[#allocation2 + $0x68] sm:$0xff] 0.0
    %32 = vst [vmem:[#allocation2 + $0x70] sm:$0xff] 0.0
    %33 = vst [vmem:[#allocation2 + $0x78] sm:$0xff] 0.0
    %34 = vst [vmem:[#allocation2 + $0x80] sm:$0xff] 0.0
    %35 = vst [vmem:[#allocation2 + $0x88] sm:$0xff] 0.0
    %36 = vst [vmem:[#allocation2 + $0x90] sm:$0xff] 0.0
    %37 = vst [vmem:[#allocation2 + $0x98] sm:$0xff] 0.0
    %38 = vst [vmem:[#allocation2 + $0xa0] sm:$0xff] 0.0
    %39 = vst [vmem:[#allocation2 + $0xa8] sm:$0xff] 0.0
    %40 = vst [vmem:[#allocation2 + $0xb0] sm:$0xff] 0.0
    %41 = vst [vmem:[#allocation2 + $0xb8] sm:$0xff] 0.0
    %42 = vst [vmem:[#allocation2 + $0xc0] sm:$0xff] 0.0
    %43 = vst [vmem:[#allocation2 + $0xc8] sm:$0xff] 0.0
    %44 = vst [vmem:[#allocation2 + $0xd0] sm:$0xff] 0.0
    %45 = vst [vmem:[#allocation2 + $0xd8] sm:$0xff] 0.0
    %46 = vst [vmem:[#allocation2 + $0xe0] sm:$0xff] 0.0
    %47 = vst [vmem:[#allocation2 + $0xe8] sm:$0xff] 0.0
    %48 = vst [vmem:[#allocation2 + $0xf0] sm:$0xff] 0.0
    %49 = vst [vmem:[#allocation2 + $0xf8] sm:$0xff] 0.0
    %50 = vst [vmem:[#allocation2 + $0x100] sm:$0xff] 0.0
    %51 = vst [vmem:[#allocation2 + $0x108] sm:$0xff] 0.0
    %52 = vst [vmem:[#allocation2 + $0x110] sm:$0xff] 0.0
    %53 = vst [vmem:[#allocation2 + $0x118] sm:$0xff] 0.0
    %54 = vst [vmem:[#allocation2 + $0x120] sm:$0xff] 0.0
    %55 = vst [vmem:[#allocation2 + $0x128] sm:$0xff] 0.0
    %56 = vst [vmem:[#allocation2 + $0x130] sm:$0xff] 0.0
    %57 = vst [vmem:[#allocation2 + $0x138] sm:$0xff] 0.0
    %58 = vst [vmem:[#allocation2 + $0x140] sm:$0xff] 0.0
    %59 = vst [vmem:[#allocation2 + $0x148] sm:$0xff] 0.0
    %60 = vst [vmem:[#allocation2 + $0x150] sm:$0xff] 0.0
    %61 = vst [vmem:[#allocation2 + $0x158] sm:$0xff] 0.0
    %62 = vst [vmem:[#allocation2 + $0x160] sm:$0xff] 0.0
    %63 = vst [vmem:[#allocation2 + $0x168] sm:$0xff] 0.0
    %64 = vst [vmem:[#allocation2 + $0x170] sm:$0xff] 0.0
    %65 = vst [vmem:[#allocation2 + $0x178] sm:$0xff] 0.0
    %66 = vst [vmem:[#allocation2 + $0x180] sm:$0xff] 0.0
    %67 = vst [vmem:[#allocation2 + $0x188] sm:$0xff] 0.0
    %68 = vst [vmem:[#allocation2 + $0x190] sm:$0xff] 0.0
    %69 = vst [vmem:[#allocation2 + $0x198] sm:$0xff] 0.0
    %70 = vst [vmem:[#allocation2 + $0x1a0] sm:$0xff] 0.0
    %71 = vst [vmem:[#allocation2 + $0x1a8] sm:$0xff] 0.0
    %72 = vst [vmem:[#allocation2 + $0x1b0] sm:$0xff] 0.0
    %73 = vst [vmem:[#allocation2 + $0x1b8] sm:$0xff] 0.0
    %74 = vst [vmem:[#allocation2 + $0x1c0] sm:$0xff] 0.0
    %75 = vst [vmem:[#allocation2 + $0x1c8] sm:$0xff] 0.0
    %76 = vst [vmem:[#allocation2 + $0x1d0] sm:$0xff] 0.0
    %77 = vst [vmem:[#allocation2 + $0x1d8] sm:$0xff] 0.0
    %78 = vst [vmem:[#allocation2 + $0x1e0] sm:$0xff] 0.0
    %79 = vst [vmem:[#allocation2 + $0x1e8] sm:$0xff] 0.0
    %80 = vst [vmem:[#allocation2 + $0x1f0] sm:$0xff] 0.0
    %81 = vst [vmem:[#allocation2 + $0x1f8] sm:$0xff] 0.0
  $region17: #{_forward_impl.9} parent=0 // pred_fallthru
    _
  %v82 = vld [vmem:[%s0] sm:$0xff]
  %v83 = vld [vmem:[%s0 + $0x8] sm:$0xff]
  %v84 = vld [vmem:[%s0 + $0x10] sm:$0xff]
  %v85 = vld [vmem:[%s0 + $0x18] sm:$0xff]
  %v86 = vld [vmem:[%s0 + $0x20] sm:$0xff]
  %v87 = vld [vmem:[%s0 + $0x28] sm:$0xff]
  %v88 = vld [vmem:[%s0 + $0x30] sm:$0xff]
  %v89 = vld [vmem:[%s0 + $0x38] sm:$0xff]
  %v90 = vld [vmem:[%s0 + $0x40] sm:$0xff]
  %v91 = vld [vmem:[%s0 + $0x48] sm:$0xff]
  %v92 = vld [vmem:[%s0 + $0x50] sm:$0xff]
  %v93 = vld [vmem:[%s0 + $0x58] sm:$0xff]
  %v94 = vld [vmem:[%s0 + $0x60] sm:$0xff]
  %v95 = vld [vmem:[%s0 + $0x68] sm:$0xff]
  %v96 = vld [vmem:[%s0 + $0x70] sm:$0xff]
  %v97 = vld [vmem:[%s0 + $0x78] sm:$0xff]
  %v98 = vld [vmem:[%s0 + $0x80] sm:$0xff]
  %v99 = vld [vmem:[%s0 + $0x88] sm:$0xff]
  %v100 = vld [vmem:[%s0 + $0x90] sm:$0xff]
  %v101 = vld [vmem:[%s0 + $0x98] sm:$0xff]
  %v102 = vld [vmem:[%s0 + $0xa0] sm:$0xff]
  %v103 = vld [vmem:[%s0 + $0xa8] sm:$0xff]
  %v104 = vld [vmem:[%s0 + $0xb0] sm:$0xff]
  %v105 = vld [vmem:[%s0 + $0xb8] sm:$0xff]
  %v106 = vld [vmem:[%s0 + $0xc0] sm:$0xff]
  %v107 = vld [vmem:[%s0 + $0xc8] sm:$0xff]
  %v108 = vld [vmem:[%s0 + $0xd0] sm:$0xff]
  %v109 = vld [vmem:[%s0 + $0xd8] sm:$0xff]
  %v110 = vld [vmem:[%s0 + $0xe0] sm:$0xff]
  %v111 = vld [vmem:[%s0 + $0xe8] sm:$0xff]
  %v112 = vld [vmem:[%s0 + $0xf0] sm:$0xff]
  %v113 = vld [vmem:[%s0 + $0xf8] sm:$0xff]
  %v114 = vld [vmem:[%s0 + $0x100] sm:$0xff]
  %v115 = vld [vmem:[%s0 + $0x108] sm:$0xff]
  %v116 = vld [vmem:[%s0 + $0x110] sm:$0xff]
  %v117 = vld [vmem:[%s0 + $0x118] sm:$0xff]
  %v118 = vld [vmem:[%s0 + $0x120] sm:$0xff]
  %v119 = vld [vmem:[%s0 + $0x128] sm:$0xff]
  %v120 = vld [vmem:[%s0 + $0x130] sm:$0xff]
  %v121 = vld [vmem:[%s0 + $0x138] sm:$0xff]
  %v122 = vld [vmem:[%s0 + $0x140] sm:$0xff]
  %v123 = vld [vmem:[%s0 + $0x148] sm:$0xff]
  %v124 = vld [vmem:[%s0 + $0x150] sm:$0xff]
  %v125 = vld [vmem:[%s0 + $0x158] sm:$0xff]
  %v126 = vld [vmem:[%s0 + $0x160] sm:$0xff]
  %v127 = vld [vmem:[%s0 + $0x168] sm:$0xff]
  %v128 = vld [vmem:[%s0 + $0x170] sm:$0xff]
  %v129 = vld [vmem:[%s0 + $0x178] sm:$0xff]
  %v130 = vld [vmem:[%s0 + $0x180] sm:$0xff]
  %v131 = vld [vmem:[%s0 + $0x188] sm:$0xff]
  %v132 = vld [vmem:[%s0 + $0x190] sm:$0xff]
  %v133 = vld [vmem:[%s0 + $0x198] sm:$0xff]
  %v134 = vld [vmem:[%s0 + $0x1a0] sm:$0xff]
  %v135 = vld [vmem:[%s0 + $0x1a8] sm:$0xff]
  %v136 = vld [vmem:[%s0 + $0x1b0] sm:$0xff]
  %v137 = vld [vmem:[%s0 + $0x1b8] sm:$0xff]
  %v138 = vld [vmem:[%s0 + $0x1c0] sm:$0xff]
  %v139 = vld [vmem:[%s0 + $0x1c8] sm:$0xff]
  %v140 = vld [vmem:[%s0 + $0x1d0] sm:$0xff]
  %v141 = vld [vmem:[%s0 + $0x1d8] sm:$0xff]
  %v142 = vld [vmem:[%s0 + $0x1e0] sm:$0xff]
  %v143 = vld [vmem:[%s0 + $0x1e8] sm:$0xff]
  %v144 = vld [vmem:[%s0 + $0x1f0] sm:$0xff]
  %v145 = vld [vmem:[%s0 + $0x1f8] sm:$0xff]
  %v146 = vld [vmem:[%s0 + $0x200] sm:$0xff]
  %v147 = vld [vmem:[%s0 + $0x208] sm:$0xff]
  %v148 = vld [vmem:[%s0 + $0x210] sm:$0xff]
  %v149 = vld [vmem:[%s0 + $0x218] sm:$0xff]
  %v150 = vld [vmem:[%s0 + $0x220] sm:$0xff]
  %v151 = vld [vmem:[%s0 + $0x228] sm:$0xff]
  %v152 = vld [vmem:[%s0 + $0x230] sm:$0xff]
  %v153 = vld [vmem:[%s0 + $0x238] sm:$0xff]
  %v154 = vld [vmem:[%s0 + $0x240] sm:$0xff]
  %v155 = vld [vmem:[%s0 + $0x248] sm:$0xff]
  %v156 = vld [vmem:[%s0 + $0x250] sm:$0xff]
  %v157 = vld [vmem:[%s0 + $0x258] sm:$0xff]
  %v158 = vld [vmem:[%s0 + $0x260] sm:$0xff]
  %v159 = vld [vmem:[%s0 + $0x268] sm:$0xff]
  %v160 = vld [vmem:[%s0 + $0x270] sm:$0xff]
  %v161 = vld [vmem:[%s0 + $0x278] sm:$0xff]
  %v162 = vld [vmem:[%s0 + $0x280] sm:$0xff]
  %v163 = vld [vmem:[%s0 + $0x288] sm:$0xff]
  %v164 = vld [vmem:[%s0 + $0x290] sm:$0xff]
  %v165 = vld [vmem:[%s0 + $0x298] sm:$0xff]
  %v166 = vld [vmem:[%s0 + $0x2a0] sm:$0xff]
  %v167 = vld [vmem:[%s0 + $0x2a8] sm:$0xff]
  %v168 = vld [vmem:[%s0 + $0x2b0] sm:$0xff]
  %v169 = vld [vmem:[%s0 + $0x2b8] sm:$0xff]
  %v170 = vld [vmem:[%s0 + $0x2c0] sm:$0xff]
  %v171 = vld [vmem:[%s0 + $0x2c8] sm:$0xff]
  %v172 = vld [vmem:[%s0 + $0x2d0] sm:$0xff]
  %v173 = vld [vmem:[%s0 + $0x2d8] sm:$0xff]
  %v174 = vld [vmem:[%s0 + $0x2e0] sm:$0xff]
  %v175 = vld [vmem:[%s0 + $0x2e8] sm:$0xff]
  %v176 = vld [vmem:[%s0 + $0x2f0] sm:$0xff]
  %v177 = vld [vmem:[%s0 + $0x2f8] sm:$0xff]
  %v178 = vld [vmem:[%s0 + $0x300] sm:$0xff]
  %v179 = vld [vmem:[%s0 + $0x308] sm:$0xff]
  %v180 = vld [vmem:[%s0 + $0x310] sm:$0xff]
  %v181 = vld [vmem:[%s0 + $0x318] sm:$0xff]
  %v182 = vld [vmem:[%s0 + $0x320] sm:$0xff]
  %v183 = vld [vmem:[%s0 + $0x328] sm:$0xff]
  %v184 = vld [vmem:[%s0 + $0x330] sm:$0xff]
  %v185 = vld [vmem:[%s0 + $0x338] sm:$0xff]
  %v186 = vld [vmem:[%s0 + $0x340] sm:$0xff]
  %v187 = vld [vmem:[%s0 + $0x348] sm:$0xff]
  %v188 = vld [vmem:[%s0 + $0x350] sm:$0xff]
  %v189 = vld [vmem:[%s0 + $0x358] sm:$0xff]
  %v190 = vld [vmem:[%s0 + $0x360] sm:$0xff]
  %v191 = vld [vmem:[%s0 + $0x368] sm:$0xff]
  %v192 = vld [vmem:[%s0 + $0x370] sm:$0xff]
  %v193 = vld [vmem:[%s0 + $0x378] sm:$0xff]
  %v194 = vld [vmem:[%s0 + $0x380] sm:$0xff]
  %v195 = vld [vmem:[%s0 + $0x388] sm:$0xff]
  %v196 = vld [vmem:[%s0 + $0x390] sm:$0xff]
  %v197 = vld [vmem:[%s0 + $0x398] sm:$0xff]
  %v198 = vld [vmem:[%s0 + $0x3a0] sm:$0xff]
  %v199 = vld [vmem:[%s0 + $0x3a8] sm:$0xff]
  %v200 = vld [vmem:[%s0 + $0x3b0] sm:$0xff]
  %v201 = vld [vmem:[%s0 + $0x3b8] sm:$0xff]
  %v202 = vld [vmem:[%s0 + $0x3c0] sm:$0xff]
  %v203 = vld [vmem:[%s0 + $0x3c8] sm:$0xff]
  %v204 = vld [vmem:[%s0 + $0x3d0] sm:$0xff]
  %v205 = vld [vmem:[%s0 + $0x3d8] sm:$0xff]
  %v206 = vld [vmem:[%s0 + $0x3e0] sm:$0xff]
  %v207 = vld [vmem:[%s0 + $0x3e8] sm:$0xff]
  %v208 = vld [vmem:[%s0 + $0x3f0] sm:$0xff]
  %v209 = vld [vmem:[%s0 + $0x3f8] sm:$0xff]
  %v210 = vunpack.c.l.bf16 %v82
  %v211 = vunpack.c.h.bf16 %v82
  %v212 = vunpack.c.l.bf16 %v83
  %v213 = vunpack.c.h.bf16 %v83
  %v214 = vunpack.c.l.bf16 %v84
  %v215 = vunpack.c.h.bf16 %v84
  %v216 = vunpack.c.l.bf16 %v85
  %v217 = vunpack.c.h.bf16 %v85
  %v218 = vunpack.c.l.bf16 %v86
  %v219 = vunpack.c.h.bf16 %v86
  %v220 = vunpack.c.l.bf16 %v87
  %v221 = vunpack.c.h.bf16 %v87
  %v222 = vunpack.c.l.bf16 %v88
  %v223 = vunpack.c.h.bf16 %v88
  %v224 = vunpack.c.l.bf16 %v89
  %v225 = vunpack.c.h.bf16 %v89
  %v226 = vunpack.c.l.bf16 %v90
  %v227 = vunpack.c.h.bf16 %v90
  %v228 = vunpack.c.l.bf16 %v91
  %v229 = vunpack.c.h.bf16 %v91
  %v230 = vunpack.c.l.bf16 %v92
  %v231 = vunpack.c.h.bf16 %v92
  %v232 = vunpack.c.l.bf16 %v93
  %v233 = vunpack.c.h.bf16 %v93
  %v234 = vunpack.c.l.bf16 %v94
  %v235 = vunpack.c.h.bf16 %v94
  %v236 = vunpack.c.l.bf16 %v95
  %v237 = vunpack.c.h.bf16 %v95
  %v238 = vunpack.c.l.bf16 %v96
  %v239 = vunpack.c.h.bf16 %v96
  %v240 = vunpack.c.l.bf16 %v97
  %v241 = vunpack.c.h.bf16 %v97
  %v242 = vunpack.c.l.bf16 %v98
  %v243 = vunpack.c.h.bf16 %v98
  %v244 = vunpack.c.l.bf16 %v99
  %v245 = vunpack.c.h.bf16 %v99
  %v246 = vunpack.c.l.bf16 %v100
  %v247 = vunpack.c.h.bf16 %v100
  %v248 = vunpack.c.l.bf16 %v101
  %v249 = vunpack.c.h.bf16 %v101
  %v250 = vunpack.c.l.bf16 %v102
  %v251 = vunpack.c.h.bf16 %v102
  %v252 = vunpack.c.l.bf16 %v103
  %v253 = vunpack.c.h.bf16 %v103
  %v254 = vunpack.c.l.bf16 %v104
  %v255 = vunpack.c.h.bf16 %v104
  %v256 = vunpack.c.l.bf16 %v105
  %v257 = vunpack.c.h.bf16 %v105
  %v258 = vunpack.c.l.bf16 %v106
  %v259 = vunpack.c.h.bf16 %v106
  %v260 = vunpack.c.l.bf16 %v107
  %v261 = vunpack.c.h.bf16 %v107
  %v262 = vunpack.c.l.bf16 %v108
  %v263 = vunpack.c.h.bf16 %v108
  %v264 = vunpack.c.l.bf16 %v109
  %v265 = vunpack.c.h.bf16 %v109
  %v266 = vunpack.c.l.bf16 %v110
  %v267 = vunpack.c.h.bf16 %v110
  %v268 = vunpack.c.l.bf16 %v111
  %v269 = vunpack.c.h.bf16 %v111
  %v270 = vunpack.c.l.bf16 %v112
  %v271 = vunpack.c.h.bf16 %v112
  %v272 = vunpack.c.l.bf16 %v113
  %v273 = vunpack.c.h.bf16 %v113
  %v274 = vunpack.c.l.bf16 %v114
  %v275 = vunpack.c.h.bf16 %v114
  %v276 = vunpack.c.l.bf16 %v115
  %v277 = vunpack.c.h.bf16 %v115
  %v278 = vunpack.c.l.bf16 %v116
  %v279 = vunpack.c.h.bf16 %v116
  %v280 = vunpack.c.l.bf16 %v117
  %v281 = vunpack.c.h.bf16 %v117
  %v282 = vunpack.c.l.bf16 %v118
  %v283 = vunpack.c.h.bf16 %v118
  %v284 = vunpack.c.l.bf16 %v119
  %v285 = vunpack.c.h.bf16 %v119
  %v286 = vunpack.c.l.bf16 %v120
  %v287 = vunpack.c.h.bf16 %v120
  %v288 = vunpack.c.l.bf16 %v121
  %v289 = vunpack.c.h.bf16 %v121
  %v290 = vunpack.c.l.bf16 %v122
  %v291 = vunpack.c.h.bf16 %v122
  %v292 = vunpack.c.l.bf16 %v123
  %v293 = vunpack.c.h.bf16 %v123
  %v294 = vunpack.c.l.bf16 %v124
  %v295 = vunpack.c.h.bf16 %v124
  %v296 = vunpack.c.l.bf16 %v125
  %v297 = vunpack.c.h.bf16 %v125
  %v298 = vunpack.c.l.bf16 %v126
  %v299 = vunpack.c.h.bf16 %v126
  %v300 = vunpack.c.l.bf16 %v127
  %v301 = vunpack.c.h.bf16 %v127
  %v302 = vunpack.c.l.bf16 %v128
  %v303 = vunpack.c.h.bf16 %v128
  %v304 = vunpack.c.l.bf16 %v129
  %v305 = vunpack.c.h.bf16 %v129
  %v306 = vunpack.c.l.bf16 %v130
  %v307 = vunpack.c.h.bf16 %v130
  %v308 = vunpack.c.l.bf16 %v131
  %v309 = vunpack.c.h.bf16 %v131
  %v310 = vunpack.c.l.bf16 %v132
  %v311 = vunpack.c.h.bf16 %v132
  %v312 = vunpack.c.l.bf16 %v133
  %v313 = vunpack.c.h.bf16 %v133
  %v314 = vunpack.c.l.bf16 %v134
  %v315 = vunpack.c.h.bf16 %v134
  %v316 = vunpack.c.l.bf16 %v135
  %v317 = vunpack.c.h.bf16 %v135
  %v318 = vunpack.c.l.bf16 %v136
  %v319 = vunpack.c.h.bf16 %v136
  %v320 = vunpack.c.l.bf16 %v137
  %v321 = vunpack.c.h.bf16 %v137
  %v322 = vunpack.c.l.bf16 %v138
  %v323 = vunpack.c.h.bf16 %v138
  %v324 = vunpack.c.l.bf16 %v139
  %v325 = vunpack.c.h.bf16 %v139
  %v326 = vunpack.c.l.bf16 %v140
  %v327 = vunpack.c.h.bf16 %v140
  %v328 = vunpack.c.l.bf16 %v141
  %v329 = vunpack.c.h.bf16 %v141
  %v330 = vunpack.c.l.bf16 %v142
  %v331 = vunpack.c.h.bf16 %v142
  %v332 = vunpack.c.l.bf16 %v143
  %v333 = vunpack.c.h.bf16 %v143
  %v334 = vunpack.c.l.bf16 %v144
  %v335 = vunpack.c.h.bf16 %v144
  %v336 = vunpack.c.l.bf16 %v145
  %v337 = vunpack.c.h.bf16 %v145
  %v338 = vunpack.c.l.bf16 %v146
  %v339 = vunpack.c.h.bf16 %v146
  %v340 = vunpack.c.l.bf16 %v147
  %v341 = vunpack.c.h.bf16 %v147
  %v342 = vunpack.c.l.bf16 %v148
  %v343 = vunpack.c.h.bf16 %v148
  %v344 = vunpack.c.l.bf16 %v149
  %v345 = vunpack.c.h.bf16 %v149
  %v346 = vunpack.c.l.bf16 %v150
  %v347 = vunpack.c.h.bf16 %v150
  %v348 = vunpack.c.l.bf16 %v151
  %v349 = vunpack.c.h.bf16 %v151
  %v350 = vunpack.c.l.bf16 %v152
  %v351 = vunpack.c.h.bf16 %v152
  %v352 = vunpack.c.l.bf16 %v153
  %v353 = vunpack.c.h.bf16 %v153
  %v354 = vunpack.c.l.bf16 %v154
  %v355 = vunpack.c.h.bf16 %v154
  %v356 = vunpack.c.l.bf16 %v155
  %v357 = vunpack.c.h.bf16 %v155
  %v358 = vunpack.c.l.bf16 %v156
  %v359 = vunpack.c.h.bf16 %v156
  %v360 = vunpack.c.l.bf16 %v157
  %v361 = vunpack.c.h.bf16 %v157
  %v362 = vunpack.c.l.bf16 %v158
  %v363 = vunpack.c.h.bf16 %v158
  %v364 = vunpack.c.l.bf16 %v159
  %v365 = vunpack.c.h.bf16 %v159
  %v366 = vunpack.c.l.bf16 %v160
  %v367 = vunpack.c.h.bf16 %v160
  %v368 = vunpack.c.l.bf16 %v161
  %v369 = vunpack.c.h.bf16 %v161
  %v370 = vunpack.c.l.bf16 %v162
  %v371 = vunpack.c.h.bf16 %v162
  %v372 = vunpack.c.l.bf16 %v163
  %v373 = vunpack.c.h.bf16 %v163
  %v374 = vunpack.c.l.bf16 %v164
  %v375 = vunpack.c.h.bf16 %v164
  %v376 = vunpack.c.l.bf16 %v165
  %v377 = vunpack.c.h.bf16 %v165
  %v378 = vunpack.c.l.bf16 %v166
  %v379 = vunpack.c.h.bf16 %v166
  %v380 = vunpack.c.l.bf16 %v167
  %v381 = vunpack.c.h.bf16 %v167
  %v382 = vunpack.c.l.bf16 %v168
  %v383 = vunpack.c.h.bf16 %v168
  %v384 = vunpack.c.l.bf16 %v169
  %v385 = vunpack.c.h.bf16 %v169
  %v386 = vunpack.c.l.bf16 %v170
  %v387 = vunpack.c.h.bf16 %v170
  %v388 = vunpack.c.l.bf16 %v171
  %v389 = vunpack.c.h.bf16 %v171
  %v390 = vunpack.c.l.bf16 %v172
  %v391 = vunpack.c.h.bf16 %v172
  %v392 = vunpack.c.l.bf16 %v173
  %v393 = vunpack.c.h.bf16 %v173
  %v394 = vunpack.c.l.bf16 %v174
  %v395 = vunpack.c.h.bf16 %v174
  %v396 = vunpack.c.l.bf16 %v175
  %v397 = vunpack.c.h.bf16 %v175
  %v398 = vunpack.c.l.bf16 %v176
  %v399 = vunpack.c.h.bf16 %v176
  %v400 = vunpack.c.l.bf16 %v177
  %v401 = vunpack.c.h.bf16 %v177
  %v402 = vunpack.c.l.bf16 %v178
  %v403 = vunpack.c.h.bf16 %v178
  %v404 = vunpack.c.l.bf16 %v179
  %v405 = vunpack.c.h.bf16 %v179
  %v406 = vunpack.c.l.bf16 %v180
  %v407 = vunpack.c.h.bf16 %v180
  %v408 = vunpack.c.l.bf16 %v181
  %v409 = vunpack.c.h.bf16 %v181
  %v410 = vunpack.c.l.bf16 %v182
  %v411 = vunpack.c.h.bf16 %v182
  %v412 = vunpack.c.l.bf16 %v183
  %v413 = vunpack.c.h.bf16 %v183
  %v414 = vunpack.c.l.bf16 %v184
  %v415 = vunpack.c.h.bf16 %v184
  %v416 = vunpack.c.l.bf16 %v185
  %v417 = vunpack.c.h.bf16 %v185
  %v418 = vunpack.c.l.bf16 %v186
  %v419 = vunpack.c.h.bf16 %v186
  %v420 = vunpack.c.l.bf16 %v187
  %v421 = vunpack.c.h.bf16 %v187
  %v422 = vunpack.c.l.bf16 %v188
  %v423 = vunpack.c.h.bf16 %v188
  %v424 = vunpack.c.l.bf16 %v189
  %v425 = vunpack.c.h.bf16 %v189
  %v426 = vunpack.c.l.bf16 %v190
  %v427 = vunpack.c.h.bf16 %v190
  %v428 = vunpack.c.l.bf16 %v191
  %v429 = vunpack.c.h.bf16 %v191
  %v430 = vunpack.c.l.bf16 %v192
  %v431 = vunpack.c.h.bf16 %v192
  %v432 = vunpack.c.l.bf16 %v193
  %v433 = vunpack.c.h.bf16 %v193
  %v434 = vunpack.c.l.bf16 %v194
  %v435 = vunpack.c.h.bf16 %v194
  %v436 = vunpack.c.l.bf16 %v195
  %v437 = vunpack.c.h.bf16 %v195
  %v438 = vunpack.c.l.bf16 %v196
  %v439 = vunpack.c.h.bf16 %v196
  %v440 = vunpack.c.l.bf16 %v197
  %v441 = vunpack.c.h.bf16 %v197
  %v442 = vunpack.c.l.bf16 %v198
  %v443 = vunpack.c.h.bf16 %v198
  %v444 = vunpack.c.l.bf16 %v199
  %v445 = vunpack.c.h.bf16 %v199
  %v446 = vunpack.c.l.bf16 %v200
  %v447 = vunpack.c.h.bf16 %v200
  %v448 = vunpack.c.l.bf16 %v201
  %v449 = vunpack.c.h.bf16 %v201
  %v450 = vunpack.c.l.bf16 %v202
  %v451 = vunpack.c.h.bf16 %v202
  %v452 = vunpack.c.l.bf16 %v203
  %v453 = vunpack.c.h.bf16 %v203
  %v454 = vunpack.c.l.bf16 %v204
  %v455 = vunpack.c.h.bf16 %v204
  %v456 = vunpack.c.l.bf16 %v205
  %v457 = vunpack.c.h.bf16 %v205
  %v458 = vunpack.c.l.bf16 %v206
  %v459 = vunpack.c.h.bf16 %v206
  %v460 = vunpack.c.l.bf16 %v207
  %v461 = vunpack.c.h.bf16 %v207
  %v462 = vunpack.c.l.bf16 %v208
  %v463 = vunpack.c.h.bf16 %v208
  %v464 = vunpack.c.l.bf16 %v209
  %v465 = vunpack.c.h.bf16 %v209
  %v466 = vld [vmem:[#allocation2] sm:$0xff]
  %v467 = vld [vmem:[#allocation2 + $0x8] sm:$0xff]
  %v468 = vld [vmem:[#allocation2 + $0x10] sm:$0xff]
  %v469 = vld [vmem:[#allocation2 + $0x18] sm:$0xff]
  %v470 = vld [vmem:[#allocation2 + $0x20] sm:$0xff]
  %v471 = vld [vmem:[#allocation2 + $0x28] sm:$0xff]
  %v472 = vld [vmem:[#allocation2 + $0x30] sm:$0xff]
  %v473 = vld [vmem:[#allocation2 + $0x38] sm:$0xff]
  %v474 = vld [vmem:[#allocation2 + $0x40] sm:$0xff]
  %v475 = vld [vmem:[#allocation2 + $0x48] sm:$0xff]
  %v476 = vld [vmem:[#allocation2 + $0x50] sm:$0xff]
  %v477 = vld [vmem:[#allocation2 + $0x58] sm:$0xff]
  %v478 = vld [vmem:[#allocation2 + $0x60] sm:$0xff]
  %v479 = vld [vmem:[#allocation2 + $0x68] sm:$0xff]
  %v480 = vld [vmem:[#allocation2 + $0x70] sm:$0xff]
  %v481 = vld [vmem:[#allocation2 + $0x78] sm:$0xff]
  %v482 = vld [vmem:[#allocation2 + $0x80] sm:$0xff]
  %v483 = vld [vmem:[#allocation2 + $0x88] sm:$0xff]
  %v484 = vld [vmem:[#allocation2 + $0x90] sm:$0xff]
  %v485 = vld [vmem:[#allocation2 + $0x98] sm:$0xff]
  %v486 = vld [vmem:[#allocation2 + $0xa0] sm:$0xff]
  %v487 = vld [vmem:[#allocation2 + $0xa8] sm:$0xff]
  %v488 = vld [vmem:[#allocation2 + $0xb0] sm:$0xff]
  %v489 = vld [vmem:[#allocation2 + $0xb8] sm:$0xff]
  %v490 = vld [vmem:[#allocation2 + $0xc0] sm:$0xff]
  %v491 = vld [vmem:[#allocation2 + $0xc8] sm:$0xff]
  %v492 = vld [vmem:[#allocation2 + $0xd0] sm:$0xff]
  %v493 = vld [vmem:[#allocation2 + $0xd8] sm:$0xff]
  %v494 = vld [vmem:[#allocation2 + $0xe0] sm:$0xff]
  %v495 = vld [vmem:[#allocation2 + $0xe8] sm:$0xff]
  %v496 = vld [vmem:[#allocation2 + $0xf0] sm:$0xff]
  %v497 = vld [vmem:[#allocation2 + $0xf8] sm:$0xff]
  %v498 = vld [vmem:[#allocation2 + $0x100] sm:$0xff]
  %v499 = vld [vmem:[#allocation2 + $0x108] sm:$0xff]
  %v500 = vld [vmem:[#allocation2 + $0x110] sm:$0xff]
  %v501 = vld [vmem:[#allocation2 + $0x118] sm:$0xff]
  %v502 = vld [vmem:[#allocation2 + $0x120] sm:$0xff]
  %v503 = vld [vmem:[#allocation2 + $0x128] sm:$0xff]
  %v504 = vld [vmem:[#allocation2 + $0x130] sm:$0xff]
  %v505 = vld [vmem:[#allocation2 + $0x138] sm:$0xff]
  %v506 = vld [vmem:[#allocation2 + $0x140] sm:$0xff]
  %v507 = vld [vmem:[#allocation2 + $0x148] sm:$0xff]
  %v508 = vld [vmem:[#allocation2 + $0x150] sm:$0xff]
  %v509 = vld [vmem:[#allocation2 + $0x158] sm:$0xff]
  %v510 = vld [vmem:[#allocation2 + $0x160] sm:$0xff]
  %v511 = vld [vmem:[#allocation2 + $0x168] sm:$0xff]
  %v512 = vld [vmem:[#allocation2 + $0x170] sm:$0xff]
  %v513 = vld [vmem:[#allocation2 + $0x178] sm:$0xff]
  %v514 = vld [vmem:[#allocation2 + $0x180] sm:$0xff]
  %v515 = vld [vmem:[#allocation2 + $0x188] sm:$0xff]
  %v516 = vld [vmem:[#allocation2 + $0x190] sm:$0xff]
  %v517 = vld [vmem:[#allocation2 + $0x198] sm:$0xff]
  %v518 = vld [vmem:[#allocation2 + $0x1a0] sm:$0xff]
  %v519 = vld [vmem:[#allocation2 + $0x1a8] sm:$0xff]
  %v520 = vld [vmem:[#allocation2 + $0x1b0] sm:$0xff]
  %v521 = vld [vmem:[#allocation2 + $0x1b8] sm:$0xff]
  %v522 = vld [vmem:[#allocation2 + $0x1c0] sm:$0xff]
  %v523 = vld [vmem:[#allocation2 + $0x1c8] sm:$0xff]
  %v524 = vld [vmem:[#allocation2 + $0x1d0] sm:$0xff]
  %v525 = vld [vmem:[#allocation2 + $0x1d8] sm:$0xff]
  %v526 = vld [vmem:[#allocation2 + $0x1e0] sm:$0xff]
  %v527 = vld [vmem:[#allocation2 + $0x1e8] sm:$0xff]
  %v528 = vld [vmem:[#allocation2 + $0x1f0] sm:$0xff]
  %v529 = vld [vmem:[#allocation2 + $0x1f8] sm:$0xff]
  %v530 = vld [vmem:[%s1] sm:$0xff]
  %v531 = vld [vmem:[%s1 + $0x8] sm:$0xff]
  %v532 = vld [vmem:[%s1 + $0x10] sm:$0xff]
  %v533 = vld [vmem:[%s1 + $0x18] sm:$0xff]
  %v534 = vld [vmem:[%s1 + $0x20] sm:$0xff]
  %v535 = vld [vmem:[%s1 + $0x28] sm:$0xff]
  %v536 = vld [vmem:[%s1 + $0x30] sm:$0xff]
  %v537 = vld [vmem:[%s1 + $0x38] sm:$0xff]
  %v538 = vld [vmem:[%s1 + $0x40] sm:$0xff]
  %v539 = vld [vmem:[%s1 + $0x48] sm:$0xff]
  %v540 = vld [vmem:[%s1 + $0x50] sm:$0xff]
  %v541 = vld [vmem:[%s1 + $0x58] sm:$0xff]
  %v542 = vld [vmem:[%s1 + $0x60] sm:$0xff]
  %v543 = vld [vmem:[%s1 + $0x68] sm:$0xff]
  %v544 = vld [vmem:[%s1 + $0x70] sm:$0xff]
  %v545 = vld [vmem:[%s1 + $0x78] sm:$0xff]
  %v546 = vld [vmem:[%s1 + $0x80] sm:$0xff]
  %v547 = vld [vmem:[%s1 + $0x88] sm:$0xff]
  %v548 = vld [vmem:[%s1 + $0x90] sm:$0xff]
  %v549 = vld [vmem:[%s1 + $0x98] sm:$0xff]
  %v550 = vld [vmem:[%s1 + $0xa0] sm:$0xff]
  %v551 = vld [vmem:[%s1 + $0xa8] sm:$0xff]
  %v552 = vld [vmem:[%s1 + $0xb0] sm:$0xff]
  %v553 = vld [vmem:[%s1 + $0xb8] sm:$0xff]
  %v554 = vld [vmem:[%s1 + $0xc0] sm:$0xff]
  %v555 = vld [vmem:[%s1 + $0xc8] sm:$0xff]
  %v556 = vld [vmem:[%s1 + $0xd0] sm:$0xff]
  %v557 = vld [vmem:[%s1 + $0xd8] sm:$0xff]
  %v558 = vld [vmem:[%s1 + $0xe0] sm:$0xff]
  %v559 = vld [vmem:[%s1 + $0xe8] sm:$0xff]
  %v560 = vld [vmem:[%s1 + $0xf0] sm:$0xff]
  %v561 = vld [vmem:[%s1 + $0xf8] sm:$0xff]
  %v562 = vld [vmem:[%s1 + $0x100] sm:$0xff]
  %v563 = vld [vmem:[%s1 + $0x108] sm:$0xff]
  %v564 = vld [vmem:[%s1 + $0x110] sm:$0xff]
  %v565 = vld [vmem:[%s1 + $0x118] sm:$0xff]
  %v566 = vld [vmem:[%s1 + $0x120] sm:$0xff]
  %v567 = vld [vmem:[%s1 + $0x128] sm:$0xff]
  %v568 = vld [vmem:[%s1 + $0x130] sm:$0xff]
  %v569 = vld [vmem:[%s1 + $0x138] sm:$0xff]
  %v570 = vld [vmem:[%s1 + $0x140] sm:$0xff]
  %v571 = vld [vmem:[%s1 + $0x148] sm:$0xff]
  %v572 = vld [vmem:[%s1 + $0x150] sm:$0xff]
  %v573 = vld [vmem:[%s1 + $0x158] sm:$0xff]
  %v574 = vld [vmem:[%s1 + $0x160] sm:$0xff]
  %v575 = vld [vmem:[%s1 + $0x168] sm:$0xff]
  %v576 = vld [vmem:[%s1 + $0x170] sm:$0xff]
  %v577 = vld [vmem:[%s1 + $0x178] sm:$0xff]
  %v578 = vld [vmem:[%s1 + $0x180] sm:$0xff]
  %v579 = vld [vmem:[%s1 + $0x188] sm:$0xff]
  %v580 = vld [vmem:[%s1 + $0x190] sm:$0xff]
  %v581 = vld [vmem:[%s1 + $0x198] sm:$0xff]
  %v582 = vld [vmem:[%s1 + $0x1a0] sm:$0xff]
  %v583 = vld [vmem:[%s1 + $0x1a8] sm:$0xff]
  %v584 = vld [vmem:[%s1 + $0x1b0] sm:$0xff]
  %v585 = vld [vmem:[%s1 + $0x1b8] sm:$0xff]
  %v586 = vld [vmem:[%s1 + $0x1c0] sm:$0xff]
  %v587 = vld [vmem:[%s1 + $0x1c8] sm:$0xff]
  %v588 = vld [vmem:[%s1 + $0x1d0] sm:$0xff]
  %v589 = vld [vmem:[%s1 + $0x1d8] sm:$0xff]
  %v590 = vld [vmem:[%s1 + $0x1e0] sm:$0xff]
  %v591 = vld [vmem:[%s1 + $0x1e8] sm:$0xff]
  %v592 = vld [vmem:[%s1 + $0x1f0] sm:$0xff]
  %v593 = vld [vmem:[%s1 + $0x1f8] sm:$0xff]
  %594 = vmatprep.subr.mxu0 0.0
  %595 = vmatpush1.msra.mxu0 %v530
  %596 = vmatprep.subr.mxu0 0.0
  %597 = vmatpush1.msra.mxu0 %v531
  %598 = vmatprep.subr.mxu0 0.0
  %599 = vmatpush1.msra.mxu0 %v532
  %600 = vmatprep.subr.mxu0 0.0
  %601 = vmatpush1.msra.mxu0 %v533
  %602 = vmatprep.subr.mxu0 0.0
  %603 = vmatpush1.msra.mxu0 %v534
  %604 = vmatprep.subr.mxu0 0.0
  %605 = vmatpush1.msra.mxu0 %v535
  %606 = vmatprep.subr.mxu0 0.0
  %607 = vmatpush1.msra.mxu0 %v536
  %608 = vmatprep.subr.mxu0 0.0
  %609 = vmatpush1.msra.mxu0 %v537
  %610 = vmatprep.subr.mxu0 0.0
  %611 = vmatpush1.msra.mxu0 %v538
  %612 = vmatprep.subr.mxu0 0.0
  %613 = vmatpush1.msra.mxu0 %v539
  %614 = vmatprep.subr.mxu0 0.0
  %615 = vmatpush1.msra.mxu0 %v540
  %616 = vmatprep.subr.mxu0 0.0
  %617 = vmatpush1.msra.mxu0 %v541
  %618 = vmatprep.subr.mxu0 0.0
  %619 = vmatpush1.msra.mxu0 %v542
  %620 = vmatprep.subr.mxu0 0.0
  %621 = vmatpush1.msra.mxu0 %v543
  %622 = vmatprep.subr.mxu0 0.0
  %623 = vmatpush1.msra.mxu0 %v544
  %624 = vmatprep.subr.mxu0 0.0
  %625 = vmatpush1.msra.mxu0 %v545
  %626 = vmatprep.subr.mxu0 0.0
  %627 = vmatpush1.msra.mxu0 %v546
  %628 = vmatprep.subr.mxu0 0.0
  %629 = vmatpush1.msra.mxu0 %v547
  %630 = vmatprep.subr.mxu0 0.0
  %631 = vmatpush1.msra.mxu0 %v548
  %632 = vmatprep.subr.mxu0 0.0
  %633 = vmatpush1.msra.mxu0 %v549
  %634 = vmatprep.subr.mxu0 0.0
  %635 = vmatpush1.msra.mxu0 %v550
  %636 = vmatprep.subr.mxu0 0.0
  %637 = vmatpush1.msra.mxu0 %v551
  %638 = vmatprep.subr.mxu0 0.0
  %639 = vmatpush1.msra.mxu0 %v552
  %640 = vmatprep.subr.mxu0 0.0
  %641 = vmatpush1.msra.mxu0 %v553
  %642 = vmatprep.subr.mxu0 0.0
  %643 = vmatpush1.msra.mxu0 %v554
  %644 = vmatprep.subr.mxu0 0.0
  %645 = vmatpush1.msra.mxu0 %v555
  %646 = vmatprep.subr.mxu0 0.0
  %647 = vmatpush1.msra.mxu0 %v556
  %648 = vmatprep.subr.mxu0 0.0
  %649 = vmatpush1.msra.mxu0 %v557
  %650 = vmatprep.subr.mxu0 0.0
  %651 = vmatpush1.msra.mxu0 %v558
  %652 = vmatprep.subr.mxu0 0.0
  %653 = vmatpush1.msra.mxu0 %v559
  %654 = vmatprep.subr.mxu0 0.0
  %655 = vmatpush1.msra.mxu0 %v560
  %656 = vmatprep.subr.mxu0 0.0
  %657 = vmatpush1.msra.mxu0 %v561
  %658 = vmatprep.mubr.f32.mxu0 %v211
  %659 = vmatmul.mubr.f32.gmra.mrb[0].mxu0 %v210
  %v660 = vpop.f32.mrb[0].mxu0
  %v661 = vadd.f32 0.0, %v660
  %v662 = vpop.f32.mrb[0].mxu0
  %663 = vmatprep.mubr.f32.mxu0 %v215
  %664 = vmatmul.mubr.f32.gmra.mrb[0].mxu0 %v214
  %v665 = vpop.f32.mrb[0].mxu0
  %v666 = vadd.f32 0.0, %v665
  %v667 = vpop.f32.mrb[0].mxu0
  %668 = vmatprep.mubr.f32.mxu0 %v219
  %669 = vmatmul.mubr.f32.gmra.mrb[0].mxu0 %v218
  %v670 = vpop.f32.mrb[0].mxu0
  %v671 = vadd.f32 0.0, %v670
  %v672 = vpop.f32.mrb[0].mxu0
  %673 = vmatprep.mubr.f32.mxu0 %v223
  %674 = vmatmul.mubr.f32.gmra.mrb[0].mxu0 %v222
  %v675 = vpop.f32.mrb[0].mxu0
  %v676 = vadd.f32 0.0, %v675
  %v677 = vpop.f32.mrb[0].mxu0
  %678 = vmatprep.mubr.f32.mxu0 %v227
  %679 = vmatmul.mubr.f32.gmra.mrb[0].mxu0 %v226
  %v680 = vpop.f32.mrb[0].mxu0
  %v681 = vadd.f32 0.0, %v680
  %v682 = vpop.f32.mrb[0].mxu0
  %683 = vmatprep.mubr.f32.mxu0 %v231
  %684 = vmatmul.mubr.f32.gmra.mrb[0].mxu0 %v230
  %v685 = vpop.f32.mrb[0].mxu0
  %v686 = vadd.f32 0.0, %v685
  %v687 = vpop.f32.mrb[0].mxu0
  %688 = vmatprep.mubr.f32.mxu0 %v235
  %689 = vmatmul.mubr.f32.gmra.mrb[0].mxu0 %v234
  %v690 = vpop.f32.mrb[0].mxu0
  %v691 = vadd.f32 0.0, %v690
  %v692 = vpop.f32.mrb[0].mxu0
  %693 = vmatprep.mubr.f32.mxu0 %v239
  %694 = vmatmul.mubr.f32.gmra.mrb[0].mxu0 %v238
  %v695 = vpop.f32.mrb[0].mxu0
  %v696 = vadd.f32 0.0, %v695
  %v697 = vpop.f32.mrb[0].mxu0
  %698 = vmatprep.mubr.f32.mxu0 %v243
  %699 = vmatmul.mubr.f32.gmra.mrb[0].mxu0 %v242
  %v700 = vpop.f32.mrb[0].mxu0
  %v701 = vadd.f32 0.0, %v700
  %v702 = vpop.f32.mrb[0].mxu0
  %703 = vmatprep.mubr.f32.mxu0 %v247
  %704 = vmatmul.mubr.f32.gmra.mrb[0].mxu0 %v246
  %v705 = vpop.f32.mrb[0].mxu0
  %v706 = vadd.f32 0.0, %v705
  %v707 = vpop.f32.mrb[0].mxu0
  %708 = vmatprep.mubr.f32.mxu0 %v251
  %709 = vmatmul.mubr.f32.gmra.mrb[0].mxu0 %v250
  %v710 = vpop.f32.mrb[0].mxu0
  %v711 = vadd.f32 0.0, %v710
  %v712 = vpop.f32.mrb[0].mxu0
  %713 = vmatprep.mubr.f32.mxu0 %v255
  %714 = vmatmul.mubr.f32.gmra.mrb[0].mxu0 %v254
  %v715 = vpop.f32.mrb[0].mxu0
  %v716 = vadd.f32 0.0, %v715
  %v717 = vpop.f32.mrb[0].mxu0
  %718 = vmatprep.mubr.f32.mxu0 %v259
  %719 = vmatmul.mubr.f32.gmra.mrb[0].mxu0 %v258
  %v720 = vpop.f32.mrb[0].mxu0
  %v721 = vadd.f32 0.0, %v720
  %v722 = vpop.f32.mrb[0].mxu0
  %723 = vmatprep.mubr.f32.mxu0 %v263
  %724 = vmatmul.mubr.f32.gmra.mrb[0].mxu0 %v262
  %v725 = vpop.f32.mrb[0].mxu0
  %v726 = vadd.f32 0.0, %v725
  %v727 = vpop.f32.mrb[0].mxu0
  %728 = vmatprep.mubr.f32.mxu0 %v267
  %729 = vmatmul.mubr.f32.gmra.mrb[0].mxu0 %v266
  %v730 = vpop.f32.mrb[0].mxu0
  %v731 = vadd.f32 0.0, %v730
  %v732 = vpop.f32.mrb[0].mxu0
  %733 = vmatprep.mubr.f32.mxu0 %v271
  %734 = vmatmul.mubr.f32.gmra.mrb[0].mxu0 %v270
  %v735 = vpop.f32.mrb[0].mxu0
  %v736 = vadd.f32 0.0, %v735
  %v737 = vpop.f32.mrb[0].mxu0
  %738 = vmatprep.mubr.f32.mxu0 %v275
  %739 = vmatmul.mubr.f32.gmra.mrb[0].mxu0 %v274
  %v740 = vpop.f32.mrb[0].mxu0
  %v741 = vadd.f32 0.0, %v740
  %v742 = vpop.f32.mrb[0].mxu0
  %743 = vmatprep.mubr.f32.mxu0 %v279
  %744 = vmatmul.mubr.f32.gmra.mrb[0].mxu0 %v278
  %v745 = vpop.f32.mrb[0].mxu0
  %v746 = vadd.f32 0.0, %v745
  %v747 = vpop.f32.mrb[0].mxu0
  %748 = vmatprep.mubr.f32.mxu0 %v283
  %749 = vmatmul.mubr.f32.gmra.mrb[0].mxu0 %v282
  %v750 = vpop.f32.mrb[0].mxu0
  %v751 = vadd.f32 0.0, %v750
  %v752 = vpop.f32.mrb[0].mxu0
  %753 = vmatprep.mubr.f32.mxu0 %v287
  %754 = vmatmul.mubr.f32.gmra.mrb[0].mxu0 %v286
  %v755 = vpop.f32.mrb[0].mxu0
  %v756 = vadd.f32 0.0, %v755
  %v757 = vpop.f32.mrb[0].mxu0
  %758 = vmatprep.mubr.f32.mxu0 %v291
  %759 = vmatmul.mubr.f32.gmra.mrb[0].mxu0 %v290
  %v760 = vpop.f32.mrb[0].mxu0
  %v761 = vadd.f32 0.0, %v760
  %v762 = vpop.f32.mrb[0].mxu0
  %763 = vmatprep.mubr.f32.mxu0 %v295
  %764 = vmatmul.mubr.f32.gmra.mrb[0].mxu0 %v294
  %v765 = vpop.f32.mrb[0].mxu0
  %v766 = vadd.f32 0.0, %v765
  %v767 = vpop.f32.mrb[0].mxu0
  %768 = vmatprep.mubr.f32.mxu0 %v299
  %769 = vmatmul.mubr.f32.gmra.mrb[0].mxu0 %v298
  %v770 = vpop.f32.mrb[0].mxu0
  %v771 = vadd.f32 0.0, %v770
  %v772 = vpop.f32.mrb[0].mxu0
  %773 = vmatprep.mubr.f32.mxu0 %v303
  %774 = vmatmul.mubr.f32.gmra.mrb[0].mxu0 %v302
  %v775 = vpop.f32.mrb[0].mxu0
  %v776 = vadd.f32 0.0, %v775
  %v777 = vpop.f32.mrb[0].mxu0
  %778 = vmatprep.mubr.f32.mxu0 %v307
  %779 = vmatmul.mubr.f32.gmra.mrb[0].mxu0 %v306
  %v780 = vpop.f32.mrb[0].mxu0
  %v781 = vadd.f32 0.0, %v780
  %v782 = vpop.f32.mrb[0].mxu0
  %783 = vmatprep.mubr.f32.mxu0 %v311
  %784 = vmatmul.mubr.f32.gmra.mrb[0].mxu0 %v310
  %v785 = vpop.f32.mrb[0].mxu0
  %v786 = vadd.f32 0.0, %v785
  %v787 = vpop.f32.mrb[0].mxu0
  %788 = vmatprep.mubr.f32.mxu0 %v315
  %789 = vmatmul.mubr.f32.gmra.mrb[0].mxu0 %v314
  %v790 = vpop.f32.mrb[0].mxu0
  %v791 = vadd.f32 0.0, %v790
  %v792 = vpop.f32.mrb[0].mxu0
  %793 = vmatprep.mubr.f32.mxu0 %v319
  %794 = vmatmul.mubr.f32.gmra.mrb[0].mxu0 %v318
  %v795 = vpop.f32.mrb[0].mxu0
  %v796 = vadd.f32 0.0, %v795
  %v797 = vpop.f32.mrb[0].mxu0
  %798 = vmatprep.mubr.f32.mxu0 %v323
  %799 = vmatmul.mubr.f32.gmra.mrb[0].mxu0 %v322
  %v800 = vpop.f32.mrb[0].mxu0
  %v801 = vadd.f32 0.0, %v800
  %v802 = vpop.f32.mrb[0].mxu0
  %803 = vmatprep.mubr.f32.mxu0 %v327
  %804 = vmatmul.mubr.f32.gmra.mrb[0].mxu0 %v326
  %v805 = vpop.f32.mrb[0].mxu0
  %v806 = vadd.f32 0.0, %v805
  %v807 = vpop.f32.mrb[0].mxu0
  %808 = vmatprep.mubr.f32.mxu0 %v331
  %809 = vmatmul.mubr.f32.gmra.mrb[0].mxu0 %v330
  %v810 = vpop.f32.mrb[0].mxu0
  %v811 = vadd.f32 0.0, %v810
  %v812 = vpop.f32.mrb[0].mxu0
  %813 = vmatprep.mubr.f32.mxu0 %v335
  %814 = vmatmul.mubr.f32.gmra.mrb[0].mxu0 %v334
  %v815 = vpop.f32.mrb[0].mxu0
  %v816 = vadd.f32 0.0, %v815
  %v817 = vpop.f32.mrb[0].mxu0
  %818 = vmatprep.mubr.f32.mxu0 %v339
  %819 = vmatmul.mubr.f32.gmra.mrb[0].mxu0 %v338
  %v820 = vpop.f32.mrb[0].mxu0
  %v821 = vadd.f32 0.0, %v820
  %v822 = vpop.f32.mrb[0].mxu0
  %823 = vmatprep.mubr.f32.mxu0 %v343
  %824 = vmatmul.mubr.f32.gmra.mrb[0].mxu0 %v342
  %v825 = vpop.f32.mrb[0].mxu0
  %v826 = vadd.f32 0.0, %v825
  %v827 = vpop.f32.mrb[0].mxu0
  %828 = vmatprep.mubr.f32.mxu0 %v347
  %829 = vmatmul.mubr.f32.gmra.mrb[0].mxu0 %v346
  %v830 = vpop.f32.mrb[0].mxu0
  %v831 = vadd.f32 0.0, %v830
  %v832 = vpop.f32.mrb[0].mxu0
  %833 = vmatprep.mubr.f32.mxu0 %v351
  %834 = vmatmul.mubr.f32.gmra.mrb[0].mxu0 %v350
  %v835 = vpop.f32.mrb[0].mxu0
  %v836 = vadd.f32 0.0, %v835
  %v837 = vpop.f32.mrb[0].mxu0
  %838 = vmatprep.mubr.f32.mxu0 %v355
  %839 = vmatmul.mubr.f32.gmra.mrb[0].mxu0 %v354
  %v840 = vpop.f32.mrb[0].mxu0
  %v841 = vadd.f32 0.0, %v840
  %v842 = vpop.f32.mrb[0].mxu0
  %843 = vmatprep.mubr.f32.mxu0 %v359
  %844 = vmatmul.mubr.f32.gmra.mrb[0].mxu0 %v358
  %v845 = vpop.f32.mrb[0].mxu0
  %v846 = vadd.f32 0.0, %v845
  %v847 = vpop.f32.mrb[0].mxu0
  %848 = vmatprep.mubr.f32.mxu0 %v363
  %849 = vmatmul.mubr.f32.gmra.mrb[0].mxu0 %v362
  %v850 = vpop.f32.mrb[0].mxu0
  %v851 = vadd.f32 0.0, %v850
  %v852 = vpop.f32.mrb[0].mxu0
  %853 = vmatprep.mubr.f32.mxu0 %v367
  %854 = vmatmul.mubr.f32.gmra.mrb[0].mxu0 %v366
  %v855 = vpop.f32.mrb[0].mxu0
  %v856 = vadd.f32 0.0, %v855
  %v857 = vpop.f32.mrb[0].mxu0
  %858 = vmatprep.mubr.f32.mxu0 %v371
  %859 = vmatmul.mubr.f32.gmra.mrb[0].mxu0 %v370
  %v860 = vpop.f32.mrb[0].mxu0
  %v861 = vadd.f32 0.0, %v860
  %v862 = vpop.f32.mrb[0].mxu0
  %863 = vmatprep.mubr.f32.mxu0 %v375
  %864 = vmatmul.mubr.f32.gmra.mrb[0].mxu0 %v374
  %v865 = vpop.f32.mrb[0].mxu0
  %v866 = vadd.f32 0.0, %v865
  %v867 = vpop.f32.mrb[0].mxu0
  %868 = vmatprep.mubr.f32.mxu0 %v379
  %869 = vmatmul.mubr.f32.gmra.mrb[0].mxu0 %v378
  %v870 = vpop.f32.mrb[0].mxu0
  %v871 = vadd.f32 0.0, %v870
  %v872 = vpop.f32.mrb[0].mxu0
  %873 = vmatprep.mubr.f32.mxu0 %v383
  %874 = vmatmul.mubr.f32.gmra.mrb[0].mxu0 %v382
  %v875 = vpop.f32.mrb[0].mxu0
  %v876 = vadd.f32 0.0, %v875
  %v877 = vpop.f32.mrb[0].mxu0
  %878 = vmatprep.mubr.f32.mxu0 %v387
  %879 = vmatmul.mubr.f32.gmra.mrb[0].mxu0 %v386
  %v880 = vpop.f32.mrb[0].mxu0
  %v881 = vadd.f32 0.0, %v880
  %v882 = vpop.f32.mrb[0].mxu0
  %883 = vmatprep.mubr.f32.mxu0 %v391
  %884 = vmatmul.mubr.f32.gmra.mrb[0].mxu0 %v390
  %v885 = vpop.f32.mrb[0].mxu0
  %v886 = vadd.f32 0.0, %v885
  %v887 = vpop.f32.mrb[0].mxu0
  %888 = vmatprep.mubr.f32.mxu0 %v395
  %889 = vmatmul.mubr.f32.gmra.mrb[0].mxu0 %v394
  %v890 = vpop.f32.mrb[0].mxu0
  %v891 = vadd.f32 0.0, %v890
  %v892 = vpop.f32.mrb[0].mxu0
  %893 = vmatprep.mubr.f32.mxu0 %v399
  %894 = vmatmul.mubr.f32.gmra.mrb[0].mxu0 %v398
  %v895 = vpop.f32.mrb[0].mxu0
  %v896 = vadd.f32 0.0, %v895
  %v897 = vpop.f32.mrb[0].mxu0
  %898 = vmatprep.mubr.f32.mxu0 %v403
  %899 = vmatmul.mubr.f32.gmra.mrb[0].mxu0 %v402
  %v900 = vpop.f32.mrb[0].mxu0
  %v901 = vadd.f32 0.0, %v900
  %v902 = vpop.f32.mrb[0].mxu0
  %903 = vmatprep.mubr.f32.mxu0 %v407
  %904 = vmatmul.mubr.f32.gmra.mrb[0].mxu0 %v406
  %v905 = vpop.f32.mrb[0].mxu0
  %v906 = vadd.f32 0.0, %v905
  %v907 = vpop.f32.mrb[0].mxu0
  %908 = vmatprep.mubr.f32.mxu0 %v411
  %909 = vmatmul.mubr.f32.gmra.mrb[0].mxu0 %v410
  %v910 = vpop.f32.mrb[0].mxu0
  %v911 = vadd.f32 0.0, %v910
  %v912 = vpop.f32.mrb[0].mxu0
  %913 = vmatprep.mubr.f32.mxu0 %v415
  %914 = vmatmul.mubr.f32.gmra.mrb[0].mxu0 %v414
  %v915 = vpop.f32.mrb[0].mxu0
  %v916 = vadd.f32 0.0, %v915
  %v917 = vpop.f32.mrb[0].mxu0
  %918 = vmatprep.mubr.f32.mxu0 %v419
  %919 = vmatmul.mubr.f32.gmra.mrb[0].mxu0 %v418
  %v920 = vpop.f32.mrb[0].mxu0
  %v921 = vadd.f32 0.0, %v920
  %v922 = vpop.f32.mrb[0].mxu0
  %923 = vmatprep.mubr.f32.mxu0 %v423
  %924 = vmatmul.mubr.f32.gmra.mrb[0].mxu0 %v422
  %v925 = vpop.f32.mrb[0].mxu0
  %v926 = vadd.f32 0.0, %v925
  %v927 = vpop.f32.mrb[0].mxu0
  %928 = vmatprep.mubr.f32.mxu0 %v427
  %929 = vmatmul.mubr.f32.gmra.mrb[0].mxu0 %v426
  %v930 = vpop.f32.mrb[0].mxu0
  %v931 = vadd.f32 0.0, %v930
  %v932 = vpop.f32.mrb[0].mxu0
  %933 = vmatprep.mubr.f32.mxu0 %v431
  %934 = vmatmul.mubr.f32.gmra.mrb[0].mxu0 %v430
  %v935 = vpop.f32.mrb[0].mxu0
  %v936 = vadd.f32 0.0, %v935
  %v937 = vpop.f32.mrb[0].mxu0
  %938 = vmatprep.mubr.f32.mxu0 %v435
  %939 = vmatmul.mubr.f32.gmra.mrb[0].mxu0 %v434
  %v940 = vpop.f32.mrb[0].mxu0
  %v941 = vadd.f32 0.0, %v940
  %v942 = vpop.f32.mrb[0].mxu0
  %943 = vmatprep.mubr.f32.mxu0 %v439
  %944 = vmatmul.mubr.f32.gmra.mrb[0].mxu0 %v438
  %v945 = vpop.f32.mrb[0].mxu0
  %v946 = vadd.f32 0.0, %v945
  %v947 = vpop.f32.mrb[0].mxu0
  %948 = vmatprep.mubr.f32.mxu0 %v443
  %949 = vmatmul.mubr.f32.gmra.mrb[0].mxu0 %v442
  %v950 = vpop.f32.mrb[0].mxu0
  %v951 = vadd.f32 0.0, %v950
  %v952 = vpop.f32.mrb[0].mxu0
  %953 = vmatprep.mubr.f32.mxu0 %v447
  %954 = vmatmul.mubr.f32.gmra.mrb[0].mxu0 %v446
  %v955 = vpop.f32.mrb[0].mxu0
  %v956 = vadd.f32 0.0, %v955
  %v957 = vpop.f32.mrb[0].mxu0
  %958 = vmatprep.mubr.f32.mxu0 %v451
  %959 = vmatmul.mubr.f32.gmra.mrb[0].mxu0 %v450
  %v960 = vpop.f32.mrb[0].mxu0
  %v961 = vadd.f32 0.0, %v960
  %v962 = vpop.f32.mrb[0].mxu0
  %963 = vmatprep.mubr.f32.mxu0 %v455
  %964 = vmatmul.mubr.f32.gmra.mrb[0].mxu0 %v454
  %v965 = vpop.f32.mrb[0].mxu0
  %v966 = vadd.f32 0.0, %v965
  %v967 = vpop.f32.mrb[0].mxu0
  %968 = vmatprep.mubr.f32.mxu0 %v459
  %969 = vmatmul.mubr.f32.gmra.mrb[0].mxu0 %v458
  %v970 = vpop.f32.mrb[0].mxu0
  %v971 = vadd.f32 0.0, %v970
  %v972 = vpop.f32.mrb[0].mxu0
  %973 = vmatprep.mubr.f32.mxu0 %v463
  %974 = vmatmul.mubr.f32.gmra.mrb[0].mxu0 %v462
  %v975 = vpop.f32.mrb[0].mxu0
  %v976 = vadd.f32 0.0, %v975
  %v977 = vpop.f32.mrb[0].mxu0
  %978 = vdwg.mxu0
  %979 = vmatprep.subr.mxu0 0.0
  %980 = vmatpush1.msra.mxu0 %v562
  %981 = vmatprep.subr.mxu0 0.0
  %982 = vmatpush1.msra.mxu0 %v563
  %983 = vmatprep.subr.mxu0 0.0
  %984 = vmatpush1.msra.mxu0 %v564
  %985 = vmatprep.subr.mxu0 0.0
  %986 = vmatpush1.msra.mxu0 %v565
  %987 = vmatprep.subr.mxu0 0.0
  %988 = vmatpush1.msra.mxu0 %v566
  %989 = vmatprep.subr.mxu0 0.0
  %990 = vmatpush1.msra.mxu0 %v567
  %991 = vmatprep.subr.mxu0 0.0
  %992 = vmatpush1.msra.mxu0 %v568
  %993 = vmatprep.subr.mxu0 0.0
  %994 = vmatpush1.msra.mxu0 %v569
  %995 = vmatprep.subr.mxu0 0.0
  %996 = vmatpush1.msra.mxu0 %v570
  %997 = vmatprep.subr.mxu0 0.0
  %998 = vmatpush1.msra.mxu0 %v571
  %999 = vmatprep.subr.mxu0 0.0
  %1000 = vmatpush1.msra.mxu0 %v572
  %1001 = vmatprep.subr.mxu0 0.0
  %1002 = vmatpush1.msra.mxu0 %v573
  %1003 = vmatprep.subr.mxu0 0.0
  %1004 = vmatpush1.msra.mxu0 %v574
  %1005 = vmatprep.subr.mxu0 0.0
  %1006 = vmatpush1.msra.mxu0 %v575
  %1007 = vmatprep.subr.mxu0 0.0
  %1008 = vmatpush1.msra.mxu0 %v576
  %1009 = vmatprep.subr.mxu0 0.0
  %1010 = vmatpush1.msra.mxu0 %v577
  %1011 = vmatprep.subr.mxu0 0.0
  %1012 = vmatpush1.msra.mxu0 %v578
  %1013 = vmatprep.subr.mxu0 0.0
  %1014 = vmatpush1.msra.mxu0 %v579
  %1015 = vmatprep.subr.mxu0 0.0
  %1016 = vmatpush1.msra.mxu0 %v580
  %1017 = vmatprep.subr.mxu0 0.0
  %1018 = vmatpush1.msra.mxu0 %v581
  %1019 = vmatprep.subr.mxu0 0.0
  %1020 = vmatpush1.msra.mxu0 %v582
  %1021 = vmatprep.subr.mxu0 0.0
  %1022 = vmatpush1.msra.mxu0 %v583
  %1023 = vmatprep.subr.mxu0 0.0
  %1024 = vmatpush1.msra.mxu0 %v584
  %1025 = vmatprep.subr.mxu0 0.0
  %1026 = vmatpush1.msra.mxu0 %v585
  %1027 = vmatprep.subr.mxu0 0.0
  %1028 = vmatpush1.msra.mxu0 %v586
  %1029 = vmatprep.subr.mxu0 0.0
  %1030 = vmatpush1.msra.mxu0 %v587
  %1031 = vmatprep.subr.mxu0 0.0
  %1032 = vmatpush1.msra.mxu0 %v588
  %1033 = vmatprep.subr.mxu0 0.0
  %1034 = vmatpush1.msra.mxu0 %v589
  %1035 = vmatprep.subr.mxu0 0.0
  %1036 = vmatpush1.msra.mxu0 %v590
  %1037 = vmatprep.subr.mxu0 0.0
  %1038 = vmatpush1.msra.mxu0 %v591
  %1039 = vmatprep.subr.mxu0 0.0
  %1040 = vmatpush1.msra.mxu0 %v592
  %1041 = vmatprep.subr.mxu0 0.0
  %1042 = vmatpush1.msra.mxu0 %v593
  %1043 = vmatprep.mubr.f32.mxu0 %v213
  %1044 = vmatmul.mubr.f32.gmra.mrb[0].mxu0 %v212
  %v1045 = vpop.f32.mrb[0].mxu0
  %v1046 = vadd.f32 %v661, %v1045
  %v1047 = vpop.f32.mrb[0].mxu0
  %1048 = vmatprep.mubr.f32.mxu0 %v217
  %1049 = vmatmul.mubr.f32.gmra.mrb[0].mxu0 %v216
  %v1050 = vpop.f32.mrb[0].mxu0
  %v1051 = vadd.f32 %v666, %v1050
  %v1052 = vpop.f32.mrb[0].mxu0
  %1053 = vmatprep.mubr.f32.mxu0 %v221
  %1054 = vmatmul.mubr.f32.gmra.mrb[0].mxu0 %v220
  %v1055 = vpop.f32.mrb[0].mxu0
  %v1056 = vadd.f32 %v671, %v1055
  %v1057 = vpop.f32.mrb[0].mxu0
  %1058 = vmatprep.mubr.f32.mxu0 %v225
  %1059 = vmatmul.mubr.f32.gmra.mrb[0].mxu0 %v224
  %v1060 = vpop.f32.mrb[0].mxu0
  %v1061 = vadd.f32 %v676, %v1060
  %v1062 = vpop.f32.mrb[0].mxu0
  %1063 = vmatprep.mubr.f32.mxu0 %v229
  %1064 = vmatmul.mubr.f32.gmra.mrb[0].mxu0 %v228
  %v1065 = vpop.f32.mrb[0].mxu0
  %v1066 = vadd.f32 %v681, %v1065
  %v1067 = vpop.f32.mrb[0].mxu0
  %1068 = vmatprep.mubr.f32.mxu0 %v233
  %1069 = vmatmul.mubr.f32.gmra.mrb[0].mxu0 %v232
  %v1070 = vpop.f32.mrb[0].mxu0
  %v1071 = vadd.f32 %v686, %v1070
  %v1072 = vpop.f32.mrb[0].mxu0
  %1073 = vmatprep.mubr.f32.mxu0 %v237
  %1074 = vmatmul.mubr.f32.gmra.mrb[0].mxu0 %v236
  %v1075 = vpop.f32.mrb[0].mxu0
  %v1076 = vadd.f32 %v691, %v1075
  %v1077 = vpop.f32.mrb[0].mxu0
  %1078 = vmatprep.mubr.f32.mxu0 %v241
  %1079 = vmatmul.mubr.f32.gmra.mrb[0].mxu0 %v240
  %v1080 = vpop.f32.mrb[0].mxu0
  %v1081 = vadd.f32 %v696, %v1080
  %v1082 = vpop.f32.mrb[0].mxu0
  %1083 = vmatprep.mubr.f32.mxu0 %v245
  %1084 = vmatmul.mubr.f32.gmra.mrb[0].mxu0 %v244
  %v1085 = vpop.f32.mrb[0].mxu0
  %v1086 = vadd.f32 %v701, %v1085
  %v1087 = vpop.f32.mrb[0].mxu0
  %1088 = vmatprep.mubr.f32.mxu0 %v249
  %1089 = vmatmul.mubr.f32.gmra.mrb[0].mxu0 %v248
  %v1090 = vpop.f32.mrb[0].mxu0
  %v1091 = vadd.f32 %v706, %v1090
  %v1092 = vpop.f32.mrb[0].mxu0
  %1093 = vmatprep.mubr.f32.mxu0 %v253
  %1094 = vmatmul.mubr.f32.gmra.mrb[0].mxu0 %v252
  %v1095 = vpop.f32.mrb[0].mxu0
  %v1096 = vadd.f32 %v711, %v1095
  %v1097 = vpop.f32.mrb[0].mxu0
  %1098 = vmatprep.mubr.f32.mxu0 %v257
  %1099 = vmatmul.mubr.f32.gmra.mrb[0].mxu0 %v256
  %v1100 = vpop.f32.mrb[0].mxu0
  %v1101 = vadd.f32 %v716, %v1100
  %v1102 = vpop.f32.mrb[0].mxu0
  %1103 = vmatprep.mubr.f32.mxu0 %v261
  %1104 = vmatmul.mubr.f32.gmra.mrb[0].mxu0 %v260
  %v1105 = vpop.f32.mrb[0].mxu0
  %v1106 = vadd.f32 %v721, %v1105
  %v1107 = vpop.f32.mrb[0].mxu0
  %1108 = vmatprep.mubr.f32.mxu0 %v265
  %1109 = vmatmul.mubr.f32.gmra.mrb[0].mxu0 %v264
  %v1110 = vpop.f32.mrb[0].mxu0
  %v1111 = vadd.f32 %v726, %v1110
  %v1112 = vpop.f32.mrb[0].mxu0
  %1113 = vmatprep.mubr.f32.mxu0 %v269
  %1114 = vmatmul.mubr.f32.gmra.mrb[0].mxu0 %v268
  %v1115 = vpop.f32.mrb[0].mxu0
  %v1116 = vadd.f32 %v731, %v1115
  %v1117 = vpop.f32.mrb[0].mxu0
  %1118 = vmatprep.mubr.f32.mxu0 %v273
  %1119 = vmatmul.mubr.f32.gmra.mrb[0].mxu0 %v272
  %v1120 = vpop.f32.mrb[0].mxu0
  %v1121 = vadd.f32 %v736, %v1120
  %v1122 = vpop.f32.mrb[0].mxu0
  %1123 = vmatprep.mubr.f32.mxu0 %v277
  %1124 = vmatmul.mubr.f32.gmra.mrb[0].mxu0 %v276
  %v1125 = vpop.f32.mrb[0].mxu0
  %v1126 = vadd.f32 %v741, %v1125
  %v1127 = vpop.f32.mrb[0].mxu0
  %1128 = vmatprep.mubr.f32.mxu0 %v281
  %1129 = vmatmul.mubr.f32.gmra.mrb[0].mxu0 %v280
  %v1130 = vpop.f32.mrb[0].mxu0
  %v1131 = vadd.f32 %v746, %v1130
  %v1132 = vpop.f32.mrb[0].mxu0
  %1133 = vmatprep.mubr.f32.mxu0 %v285
  %1134 = vmatmul.mubr.f32.gmra.mrb[0].mxu0 %v284
  %v1135 = vpop.f32.mrb[0].mxu0
  %v1136 = vadd.f32 %v751, %v1135
  %v1137 = vpop.f32.mrb[0].mxu0
  %1138 = vmatprep.mubr.f32.mxu0 %v289
  %1139 = vmatmul.mubr.f32.gmra.mrb[0].mxu0 %v288
  %v1140 = vpop.f32.mrb[0].mxu0
  %v1141 = vadd.f32 %v756, %v1140
  %v1142 = vpop.f32.mrb[0].mxu0
  %1143 = vmatprep.mubr.f32.mxu0 %v293
  %1144 = vmatmul.mubr.f32.gmra.mrb[0].mxu0 %v292
  %v1145 = vpop.f32.mrb[0].mxu0
  %v1146 = vadd.f32 %v761, %v1145
  %v1147 = vpop.f32.mrb[0].mxu0
  %1148 = vmatprep.mubr.f32.mxu0 %v297
  %1149 = vmatmul.mubr.f32.gmra.mrb[0].mxu0 %v296
  %v1150 = vpop.f32.mrb[0].mxu0
  %v1151 = vadd.f32 %v766, %v1150
  %v1152 = vpop.f32.mrb[0].mxu0
  %1153 = vmatprep.mubr.f32.mxu0 %v301
  %1154 = vmatmul.mubr.f32.gmra.mrb[0].mxu0 %v300
  %v1155 = vpop.f32.mrb[0].mxu0
  %v1156 = vadd.f32 %v771, %v1155
  %v1157 = vpop.f32.mrb[0].mxu0
  %1158 = vmatprep.mubr.f32.mxu0 %v305
  %1159 = vmatmul.mubr.f32.gmra.mrb[0].mxu0 %v304
  %v1160 = vpop.f32.mrb[0].mxu0
  %v1161 = vadd.f32 %v776, %v1160
  %v1162 = vpop.f32.mrb[0].mxu0
  %1163 = vmatprep.mubr.f32.mxu0 %v309
  %1164 = vmatmul.mubr.f32.gmra.mrb[0].mxu0 %v308
  %v1165 = vpop.f32.mrb[0].mxu0
  %v1166 = vadd.f32 %v781, %v1165
  %v1167 = vpop.f32.mrb[0].mxu0
  %1168 = vmatprep.mubr.f32.mxu0 %v313
  %1169 = vmatmul.mubr.f32.gmra.mrb[0].mxu0 %v312
  %v1170 = vpop.f32.mrb[0].mxu0
  %v1171 = vadd.f32 %v786, %v1170
  %v1172 = vpop.f32.mrb[0].mxu0
  %1173 = vmatprep.mubr.f32.mxu0 %v317
  %1174 = vmatmul.mubr.f32.gmra.mrb[0].mxu0 %v316
  %v1175 = vpop.f32.mrb[0].mxu0
  %v1176 = vadd.f32 %v791, %v1175
  %v1177 = vpop.f32.mrb[0].mxu0
  %1178 = vmatprep.mubr.f32.mxu0 %v321
  %1179 = vmatmul.mubr.f32.gmra.mrb[0].mxu0 %v320
  %v1180 = vpop.f32.mrb[0].mxu0
  %v1181 = vadd.f32 %v796, %v1180
  %v1182 = vpop.f32.mrb[0].mxu0
  %1183 = vmatprep.mubr.f32.mxu0 %v325
  %1184 = vmatmul.mubr.f32.gmra.mrb[0].mxu0 %v324
  %v1185 = vpop.f32.mrb[0].mxu0
  %v1186 = vadd.f32 %v801, %v1185
  %v1187 = vpop.f32.mrb[0].mxu0
  %1188 = vmatprep.mubr.f32.mxu0 %v329
  %1189 = vmatmul.mubr.f32.gmra.mrb[0].mxu0 %v328
  %v1190 = vpop.f32.mrb[0].mxu0
  %v1191 = vadd.f32 %v806, %v1190
  %v1192 = vpop.f32.mrb[0].mxu0
  %1193 = vmatprep.mubr.f32.mxu0 %v333
  %1194 = vmatmul.mubr.f32.gmra.mrb[0].mxu0 %v332
  %v1195 = vpop.f32.mrb[0].mxu0
  %v1196 = vadd.f32 %v811, %v1195
  %v1197 = vpop.f32.mrb[0].mxu0
  %1198 = vmatprep.mubr.f32.mxu0 %v337
  %1199 = vmatmul.mubr.f32.gmra.mrb[0].mxu0 %v336
  %v1200 = vpop.f32.mrb[0].mxu0
  %v1201 = vadd.f32 %v816, %v1200
  %v1202 = vpop.f32.mrb[0].mxu0
  %1203 = vmatprep.mubr.f32.mxu0 %v341
  %1204 = vmatmul.mubr.f32.gmra.mrb[0].mxu0 %v340
  %v1205 = vpop.f32.mrb[0].mxu0
  %v1206 = vadd.f32 %v821, %v1205
  %v1207 = vpop.f32.mrb[0].mxu0
  %1208 = vmatprep.mubr.f32.mxu0 %v345
  %1209 = vmatmul.mubr.f32.gmra.mrb[0].mxu0 %v344
  %v1210 = vpop.f32.mrb[0].mxu0
  %v1211 = vadd.f32 %v826, %v1210
  %v1212 = vpop.f32.mrb[0].mxu0
  %1213 = vmatprep.mubr.f32.mxu0 %v349
  %1214 = vmatmul.mubr.f32.gmra.mrb[0].mxu0 %v348
  %v1215 = vpop.f32.mrb[0].mxu0
  %v1216 = vadd.f32 %v831, %v1215
  %v1217 = vpop.f32.mrb[0].mxu0
  %1218 = vmatprep.mubr.f32.mxu0 %v353
  %1219 = vmatmul.mubr.f32.gmra.mrb[0].mxu0 %v352
  %v1220 = vpop.f32.mrb[0].mxu0
  %v1221 = vadd.f32 %v836, %v1220
  %v1222 = vpop.f32.mrb[0].mxu0
  %1223 = vmatprep.mubr.f32.mxu0 %v357
  %1224 = vmatmul.mubr.f32.gmra.mrb[0].mxu0 %v356
  %v1225 = vpop.f32.mrb[0].mxu0
  %v1226 = vadd.f32 %v841, %v1225
  %v1227 = vpop.f32.mrb[0].mxu0
  %1228 = vmatprep.mubr.f32.mxu0 %v361
  %1229 = vmatmul.mubr.f32.gmra.mrb[0].mxu0 %v360
  %v1230 = vpop.f32.mrb[0].mxu0
  %v1231 = vadd.f32 %v846, %v1230
  %v1232 = vpop.f32.mrb[0].mxu0
  %1233 = vmatprep.mubr.f32.mxu0 %v365
  %1234 = vmatmul.mubr.f32.gmra.mrb[0].mxu0 %v364
  %v1235 = vpop.f32.mrb[0].mxu0
  %v1236 = vadd.f32 %v851, %v1235
  %v1237 = vpop.f32.mrb[0].mxu0
  %1238 = vmatprep.mubr.f32.mxu0 %v369
  %1239 = vmatmul.mubr.f32.gmra.mrb[0].mxu0 %v368
  %v1240 = vpop.f32.mrb[0].mxu0
  %v1241 = vadd.f32 %v856, %v1240
  %v1242 = vpop.f32.mrb[0].mxu0
  %1243 = vmatprep.mubr.f32.mxu0 %v373
  %1244 = vmatmul.mubr.f32.gmra.mrb[0].mxu0 %v372
  %v1245 = vpop.f32.mrb[0].mxu0
  %v1246 = vadd.f32 %v861, %v1245
  %v1247 = vpop.f32.mrb[0].mxu0
  %1248 = vmatprep.mubr.f32.mxu0 %v377
  %1249 = vmatmul.mubr.f32.gmra.mrb[0].mxu0 %v376
  %v1250 = vpop.f32.mrb[0].mxu0
  %v1251 = vadd.f32 %v866, %v1250
  %v1252 = vpop.f32.mrb[0].mxu0
  %1253 = vmatprep.mubr.f32.mxu0 %v381
  %1254 = vmatmul.mubr.f32.gmra.mrb[0].mxu0 %v380
  %v1255 = vpop.f32.mrb[0].mxu0
  %v1256 = vadd.f32 %v871, %v1255
  %v1257 = vpop.f32.mrb[0].mxu0
  %1258 = vmatprep.mubr.f32.mxu0 %v385
  %1259 = vmatmul.mubr.f32.gmra.mrb[0].mxu0 %v384
  %v1260 = vpop.f32.mrb[0].mxu0
  %v1261 = vadd.f32 %v876, %v1260
  %v1262 = vpop.f32.mrb[0].mxu0
  %1263 = vmatprep.mubr.f32.mxu0 %v389
  %1264 = vmatmul.mubr.f32.gmra.mrb[0].mxu0 %v388
  %v1265 = vpop.f32.mrb[0].mxu0
  %v1266 = vadd.f32 %v881, %v1265
  %v1267 = vpop.f32.mrb[0].mxu0
  %1268 = vmatprep.mubr.f32.mxu0 %v393
  %1269 = vmatmul.mubr.f32.gmra.mrb[0].mxu0 %v392
  %v1270 = vpop.f32.mrb[0].mxu0
  %v1271 = vadd.f32 %v886, %v1270
  %v1272 = vpop.f32.mrb[0].mxu0
  %1273 = vmatprep.mubr.f32.mxu0 %v397
  %1274 = vmatmul.mubr.f32.gmra.mrb[0].mxu0 %v396
  %v1275 = vpop.f32.mrb[0].mxu0
  %v1276 = vadd.f32 %v891, %v1275
  %v1277 = vpop.f32.mrb[0].mxu0
  %1278 = vmatprep.mubr.f32.mxu0 %v401
  %1279 = vmatmul.mubr.f32.gmra.mrb[0].mxu0 %v400
  %v1280 = vpop.f32.mrb[0].mxu0
  %v1281 = vadd.f32 %v896, %v1280
  %v1282 = vpop.f32.mrb[0].mxu0
  %1283 = vmatprep.mubr.f32.mxu0 %v405
  %1284 = vmatmul.mubr.f32.gmra.mrb[0].mxu0 %v404
  %v1285 = vpop.f32.mrb[0].mxu0
  %v1286 = vadd.f32 %v901, %v1285
  %v1287 = vpop.f32.mrb[0].mxu0
  %1288 = vmatprep.mubr.f32.mxu0 %v409
  %1289 = vmatmul.mubr.f32.gmra.mrb[0].mxu0 %v408
  %v1290 = vpop.f32.mrb[0].mxu0
  %v1291 = vadd.f32 %v906, %v1290
  %v1292 = vpop.f32.mrb[0].mxu0
  %1293 = vmatprep.mubr.f32.mxu0 %v413
  %1294 = vmatmul.mubr.f32.gmra.mrb[0].mxu0 %v412
  %v1295 = vpop.f32.mrb[0].mxu0
  %v1296 = vadd.f32 %v911, %v1295
  %v1297 = vpop.f32.mrb[0].mxu0
  %1298 = vmatprep.mubr.f32.mxu0 %v417
  %1299 = vmatmul.mubr.f32.gmra.mrb[0].mxu0 %v416
  %v1300 = vpop.f32.mrb[0].mxu0
  %v1301 = vadd.f32 %v916, %v1300
  %v1302 = vpop.f32.mrb[0].mxu0
  %1303 = vmatprep.mubr.f32.mxu0 %v421
  %1304 = vmatmul.mubr.f32.gmra.mrb[0].mxu0 %v420
  %v1305 = vpop.f32.mrb[0].mxu0
  %v1306 = vadd.f32 %v921, %v1305
  %v1307 = vpop.f32.mrb[0].mxu0
  %1308 = vmatprep.mubr.f32.mxu0 %v425
  %1309 = vmatmul.mubr.f32.gmra.mrb[0].mxu0 %v424
  %v1310 = vpop.f32.mrb[0].mxu0
  %v1311 = vadd.f32 %v926, %v1310
  %v1312 = vpop.f32.mrb[0].mxu0
  %1313 = vmatprep.mubr.f32.mxu0 %v429
  %1314 = vmatmul.mubr.f32.gmra.mrb[0].mxu0 %v428
  %v1315 = vpop.f32.mrb[0].mxu0
  %v1316 = vadd.f32 %v931, %v1315
  %v1317 = vpop.f32.mrb[0].mxu0
  %1318 = vmatprep.mubr.f32.mxu0 %v433
  %1319 = vmatmul.mubr.f32.gmra.mrb[0].mxu0 %v432
  %v1320 = vpop.f32.mrb[0].mxu0
  %v1321 = vadd.f32 %v936, %v1320
  %v1322 = vpop.f32.mrb[0].mxu0
  %1323 = vmatprep.mubr.f32.mxu0 %v437
  %1324 = vmatmul.mubr.f32.gmra.mrb[0].mxu0 %v436
  %v1325 = vpop.f32.mrb[0].mxu0
  %v1326 = vadd.f32 %v941, %v1325
  %v1327 = vpop.f32.mrb[0].mxu0
  %1328 = vmatprep.mubr.f32.mxu0 %v441
  %1329 = vmatmul.mubr.f32.gmra.mrb[0].mxu0 %v440
  %v1330 = vpop.f32.mrb[0].mxu0
  %v1331 = vadd.f32 %v946, %v1330
  %v1332 = vpop.f32.mrb[0].mxu0
  %1333 = vmatprep.mubr.f32.mxu0 %v445
  %1334 = vmatmul.mubr.f32.gmra.mrb[0].mxu0 %v444
  %v1335 = vpop.f32.mrb[0].mxu0
  %v1336 = vadd.f32 %v951, %v1335
  %v1337 = vpop.f32.mrb[0].mxu0
  %1338 = vmatprep.mubr.f32.mxu0 %v449
  %1339 = vmatmul.mubr.f32.gmra.mrb[0].mxu0 %v448
  %v1340 = vpop.f32.mrb[0].mxu0
  %v1341 = vadd.f32 %v956, %v1340
  %v1342 = vpop.f32.mrb[0].mxu0
  %1343 = vmatprep.mubr.f32.mxu0 %v453
  %1344 = vmatmul.mubr.f32.gmra.mrb[0].mxu0 %v452
  %v1345 = vpop.f32.mrb[0].mxu0
  %v1346 = vadd.f32 %v961, %v1345
  %v1347 = vpop.f32.mrb[0].mxu0
  %1348 = vmatprep.mubr.f32.mxu0 %v457
  %1349 = vmatmul.mubr.f32.gmra.mrb[0].mxu0 %v456
  %v1350 = vpop.f32.mrb[0].mxu0
  %v1351 = vadd.f32 %v966, %v1350
  %v1352 = vpop.f32.mrb[0].mxu0
  %1353 = vmatprep.mubr.f32.mxu0 %v461
  %1354 = vmatmul.mubr.f32.gmra.mrb[0].mxu0 %v460
  %v1355 = vpop.f32.mrb[0].mxu0
  %v1356 = vadd.f32 %v971, %v1355
  %v1357 = vpop.f32.mrb[0].mxu0
  %1358 = vmatprep.mubr.f32.mxu0 %v465
  %1359 = vmatmul.mubr.f32.gmra.mrb[0].mxu0 %v464
  %v1360 = vpop.f32.mrb[0].mxu0
  %v1361 = vadd.f32 %v976, %v1360
  %v1362 = vpop.f32.mrb[0].mxu0
  %1363 = vdwg.mxu0
  %v1364 = vadd.f32 %v466, %v1046
  %v1365 = vadd.f32 %v467, %v1051
  %v1366 = vadd.f32 %v468, %v1056
  %v1367 = vadd.f32 %v469, %v1061
  %v1368 = vadd.f32 %v470, %v1066
  %v1369 = vadd.f32 %v471, %v1071
  %v1370 = vadd.f32 %v472, %v1076
  %v1371 = vadd.f32 %v473, %v1081
  %v1372 = vadd.f32 %v474, %v1086
  %v1373 = vadd.f32 %v475, %v1091
  %v1374 = vadd.f32 %v476, %v1096
  %v1375 = vadd.f32 %v477, %v1101
  %v1376 = vadd.f32 %v478, %v1106
  %v1377 = vadd.f32 %v479, %v1111
  %v1378 = vadd.f32 %v480, %v1116
  %v1379 = vadd.f32 %v481, %v1121
  %v1380 = vadd.f32 %v482, %v1126
  %v1381 = vadd.f32 %v483, %v1131
  %v1382 = vadd.f32 %v484, %v1136
  %v1383 = vadd.f32 %v485, %v1141
  %v1384 = vadd.f32 %v486, %v1146
  %v1385 = vadd.f32 %v487, %v1151
  %v1386 = vadd.f32 %v488, %v1156
  %v1387 = vadd.f32 %v489, %v1161
  %v1388 = vadd.f32 %v490, %v1166
  %v1389 = vadd.f32 %v491, %v1171
  %v1390 = vadd.f32 %v492, %v1176
  %v1391 = vadd.f32 %v493, %v1181
  %v1392 = vadd.f32 %v494, %v1186
  %v1393 = vadd.f32 %v495, %v1191
  %v1394 = vadd.f32 %v496, %v1196
  %v1395 = vadd.f32 %v497, %v1201
  %v1396 = vadd.f32 %v498, %v1206
  %v1397 = vadd.f32 %v499, %v1211
  %v1398 = vadd.f32 %v500, %v1216
  %v1399 = vadd.f32 %v501, %v1221
  %v1400 = vadd.f32 %v502, %v1226
  %v1401 = vadd.f32 %v503, %v1231
  %v1402 = vadd.f32 %v504, %v1236
  %v1403 = vadd.f32 %v505, %v1241
  %v1404 = vadd.f32 %v506, %v1246
  %v1405 = vadd.f32 %v507, %v1251
  %v1406 = vadd.f32 %v508, %v1256
  %v1407 = vadd.f32 %v509, %v1261
  %v1408 = vadd.f32 %v510, %v1266
  %v1409 = vadd.f32 %v511, %v1271
  %v1410 = vadd.f32 %v512, %v1276
  %v1411 = vadd.f32 %v513, %v1281
  %v1412 = vadd.f32 %v514, %v1286
  %v1413 = vadd.f32 %v515, %v1291
  %v1414 = vadd.f32 %v516, %v1296
  %v1415 = vadd.f32 %v517, %v1301
  %v1416 = vadd.f32 %v518, %v1306
  %v1417 = vadd.f32 %v519, %v1311
  %v1418 = vadd.f32 %v520, %v1316
  %v1419 = vadd.f32 %v521, %v1321
  %v1420 = vadd.f32 %v522, %v1326
  %v1421 = vadd.f32 %v523, %v1331
  %v1422 = vadd.f32 %v524, %v1336
  %v1423 = vadd.f32 %v525, %v1341
  %v1424 = vadd.f32 %v526, %v1346
  %v1425 = vadd.f32 %v527, %v1351
  %v1426 = vadd.f32 %v528, %v1356
  %v1427 = vadd.f32 %v529, %v1361
  %1428 = vst [vmem:[#allocation2] sm:$0xff] %v1364
  %1429 = vst [vmem:[#allocation2 + $0x8] sm:$0xff] %v1365
  %1430 = vst [vmem:[#allocation2 + $0x10] sm:$0xff] %v1366
  %1431 = vst [vmem:[#allocation2 + $0x18] sm:$0xff] %v1367
  %1432 = vst [vmem:[#allocation2 + $0x20] sm:$0xff] %v1368
  %1433 = vst [vmem:[#allocation2 + $0x28] sm:$0xff] %v1369
  %1434 = vst [vmem:[#allocation2 + $0x30] sm:$0xff] %v1370
  %1435 = vst [vmem:[#allocation2 + $0x38] sm:$0xff] %v1371
  %1436 = vst [vmem:[#allocation2 + $0x40] sm:$0xff] %v1372
  %1437 = vst [vmem:[#allocation2 + $0x48] sm:$0xff] %v1373
  %1438 = vst [vmem:[#allocation2 + $0x50] sm:$0xff] %v1374
  %1439 = vst [vmem:[#allocation2 + $0x58] sm:$0xff] %v1375
  %1440 = vst [vmem:[#allocation2 + $0x60] sm:$0xff] %v1376
  %1441 = vst [vmem:[#allocation2 + $0x68] sm:$0xff] %v1377
  %1442 = vst [vmem:[#allocation2 + $0x70] sm:$0xff] %v1378
  %1443 = vst [vmem:[#allocation2 + $0x78] sm:$0xff] %v1379
  %1444 = vst [vmem:[#allocation2 + $0x80] sm:$0xff] %v1380
  %1445 = vst [vmem:[#allocation2 + $0x88] sm:$0xff] %v1381
  %1446 = vst [vmem:[#allocation2 + $0x90] sm:$0xff] %v1382
  %1447 = vst [vmem:[#allocation2 + $0x98] sm:$0xff] %v1383
  %1448 = vst [vmem:[#allocation2 + $0xa0] sm:$0xff] %v1384
  %1449 = vst [vmem:[#allocation2 + $0xa8] sm:$0xff] %v1385
  %1450 = vst [vmem:[#allocation2 + $0xb0] sm:$0xff] %v1386
  %1451 = vst [vmem:[#allocation2 + $0xb8] sm:$0xff] %v1387
  %1452 = vst [vmem:[#allocation2 + $0xc0] sm:$0xff] %v1388
  %1453 = vst [vmem:[#allocation2 + $0xc8] sm:$0xff] %v1389
  %1454 = vst [vmem:[#allocation2 + $0xd0] sm:$0xff] %v1390
  %1455 = vst [vmem:[#allocation2 + $0xd8] sm:$0xff] %v1391
  %1456 = vst [vmem:[#allocation2 + $0xe0] sm:$0xff] %v1392
  %1457 = vst [vmem:[#allocation2 + $0xe8] sm:$0xff] %v1393
  %1458 = vst [vmem:[#allocation2 + $0xf0] sm:$0xff] %v1394
  %1459 = vst [vmem:[#allocation2 + $0xf8] sm:$0xff] %v1395
  %1460 = vst [vmem:[#allocation2 + $0x100] sm:$0xff] %v1396
  %1461 = vst [vmem:[#allocation2 + $0x108] sm:$0xff] %v1397
  %1462 = vst [vmem:[#allocation2 + $0x110] sm:$0xff] %v1398
  %1463 = vst [vmem:[#allocation2 + $0x118] sm:$0xff] %v1399
  %1464 = vst [vmem:[#allocation2 + $0x120] sm:$0xff] %v1400
  %1465 = vst [vmem:[#allocation2 + $0x128] sm:$0xff] %v1401
  %1466 = vst [vmem:[#allocation2 + $0x130] sm:$0xff] %v1402
  %1467 = vst [vmem:[#allocation2 + $0x138] sm:$0xff] %v1403
  %1468 = vst [vmem:[#allocation2 + $0x140] sm:$0xff] %v1404
  %1469 = vst [vmem:[#allocation2 + $0x148] sm:$0xff] %v1405
  %1470 = vst [vmem:[#allocation2 + $0x150] sm:$0xff] %v1406
  %1471 = vst [vmem:[#allocation2 + $0x158] sm:$0xff] %v1407
  %1472 = vst [vmem:[#allocation2 + $0x160] sm:$0xff] %v1408
  %1473 = vst [vmem:[#allocation2 + $0x168] sm:$0xff] %v1409
  %1474 = vst [vmem:[#allocation2 + $0x170] sm:$0xff] %v1410
  %1475 = vst [vmem:[#allocation2 + $0x178] sm:$0xff] %v1411
  %1476 = vst [vmem:[#allocation2 + $0x180] sm:$0xff] %v1412
  %1477 = vst [vmem:[#allocation2 + $0x188] sm:$0xff] %v1413
  %1478 = vst [vmem:[#allocation2 + $0x190] sm:$0xff] %v1414
  %1479 = vst [vmem:[#allocation2 + $0x198] sm:$0xff] %v1415
  %1480 = vst [vmem:[#allocation2 + $0x1a0] sm:$0xff] %v1416
  %1481 = vst [vmem:[#allocation2 + $0x1a8] sm:$0xff] %v1417
  %1482 = vst [vmem:[#allocation2 + $0x1b0] sm:$0xff] %v1418
  %1483 = vst [vmem:[#allocation2 + $0x1b8] sm:$0xff] %v1419
  %1484 = vst [vmem:[#allocation2 + $0x1c0] sm:$0xff] %v1420
  %1485 = vst [vmem:[#allocation2 + $0x1c8] sm:$0xff] %v1421
  %1486 = vst [vmem:[#allocation2 + $0x1d0] sm:$0xff] %v1422
  %1487 = vst [vmem:[#allocation2 + $0x1d8] sm:$0xff] %v1423
  %1488 = vst [vmem:[#allocation2 + $0x1e0] sm:$0xff] %v1424
  %1489 = vst [vmem:[#allocation2 + $0x1e8] sm:$0xff] %v1425
  %1490 = vst [vmem:[#allocation2 + $0x1f0] sm:$0xff] %v1426
  %1491 = vst [vmem:[#allocation2 + $0x1f8] sm:$0xff] %v1427
  // Predicated region
  $region18: #{_forward_impl.9} parent=0 // pred_check
    %p1492 = pneg %p14
  $region19: #{_forward_impl.9} parent=0 // pred_check_branch
    %1494 = sbr.rel (%p1492) target = $region21
  $region20: #{_forward_impl.9} parent=0 // pred_region
    %v1495 = vld [vmem:[#allocation2] sm:$0xff]
    %v1496 = vld [vmem:[#allocation2 + $0x8] sm:$0xff]
    %v1497 = vld [vmem:[#allocation2 + $0x10] sm:$0xff]
    %v1498 = vld [vmem:[#allocation2 + $0x18] sm:$0xff]
    %v1499 = vld [vmem:[#allocation2 + $0x20] sm:$0xff]
    %v1500 = vld [vmem:[#allocation2 + $0x28] sm:$0xff]
    %v1501 = vld [vmem:[#allocation2 + $0x30] sm:$0xff]
    %v1502 = vld [vmem:[#allocation2 + $0x38] sm:$0xff]
    %v1503 = vld [vmem:[#allocation2 + $0x40] sm:$0xff]
    %v1504 = vld [vmem:[#allocation2 + $0x48] sm:$0xff]
    %v1505 = vld [vmem:[#allocation2 + $0x50] sm:$0xff]
    %v1506 = vld [vmem:[#allocation2 + $0x58] sm:$0xff]
    %v1507 = vld [vmem:[#allocation2 + $0x60] sm:$0xff]
    %v1508 = vld [vmem:[#allocation2 + $0x68] sm:$0xff]
    %v1509 = vld [vmem:[#allocation2 + $0x70] sm:$0xff]
    %v1510 = vld [vmem:[#allocation2 + $0x78] sm:$0xff]
    %v1511 = vld [vmem:[#allocation2 + $0x80] sm:$0xff]
    %v1512 = vld [vmem:[#allocation2 + $0x88] sm:$0xff]
    %v1513 = vld [vmem:[#allocation2 + $0x90] sm:$0xff]
    %v1514 = vld [vmem:[#allocation2 + $0x98] sm:$0xff]
    %v1515 = vld [vmem:[#allocation2 + $0xa0] sm:$0xff]
    %v1516 = vld [vmem:[#allocation2 + $0xa8] sm:$0xff]
    %v1517 = vld [vmem:[#allocation2 + $0xb0] sm:$0xff]
    %v1518 = vld [vmem:[#allocation2 + $0xb8] sm:$0xff]
    %v1519 = vld [vmem:[#allocation2 + $0xc0] sm:$0xff]
    %v1520 = vld [vmem:[#allocation2 + $0xc8] sm:$0xff]
    %v1521 = vld [vmem:[#allocation2 + $0xd0] sm:$0xff]
    %v1522 = vld [vmem:[#allocation2 + $0xd8] sm:$0xff]
    %v1523 = vld [vmem:[#allocation2 + $0xe0] sm:$0xff]
    %v1524 = vld [vmem:[#allocation2 + $0xe8] sm:$0xff]
    %v1525 = vld [vmem:[#allocation2 + $0xf0] sm:$0xff]
    %v1526 = vld [vmem:[#allocation2 + $0xf8] sm:$0xff]
    %v1527 = vld [vmem:[#allocation2 + $0x100] sm:$0xff]
    %v1528 = vld [vmem:[#allocation2 + $0x108] sm:$0xff]
    %v1529 = vld [vmem:[#allocation2 + $0x110] sm:$0xff]
    %v1530 = vld [vmem:[#allocation2 + $0x118] sm:$0xff]
    %v1531 = vld [vmem:[#allocation2 + $0x120] sm:$0xff]
    %v1532 = vld [vmem:[#allocation2 + $0x128] sm:$0xff]
    %v1533 = vld [vmem:[#allocation2 + $0x130] sm:$0xff]
    %v1534 = vld [vmem:[#allocation2 + $0x138] sm:$0xff]
    %v1535 = vld [vmem:[#allocation2 + $0x140] sm:$0xff]
    %v1536 = vld [vmem:[#allocation2 + $0x148] sm:$0xff]
    %v1537 = vld [vmem:[#allocation2 + $0x150] sm:$0xff]
    %v1538 = vld [vmem:[#allocation2 + $0x158] sm:$0xff]
    %v1539 = vld [vmem:[#allocation2 + $0x160] sm:$0xff]
    %v1540 = vld [vmem:[#allocation2 + $0x168] sm:$0xff]
    %v1541 = vld [vmem:[#allocation2 + $0x170] sm:$0xff]
    %v1542 = vld [vmem:[#allocation2 + $0x178] sm:$0xff]
    %v1543 = vld [vmem:[#allocation2 + $0x180] sm:$0xff]
    %v1544 = vld [vmem:[#allocation2 + $0x188] sm:$0xff]
    %v1545 = vld [vmem:[#allocation2 + $0x190] sm:$0xff]
    %v1546 = vld [vmem:[#allocation2 + $0x198] sm:$0xff]
    %v1547 = vld [vmem:[#allocation2 + $0x1a0] sm:$0xff]
    %v1548 = vld [vmem:[#allocation2 + $0x1a8] sm:$0xff]
    %v1549 = vld [vmem:[#allocation2 + $0x1b0] sm:$0xff]
    %v1550 = vld [vmem:[#allocation2 + $0x1b8] sm:$0xff]
    %v1551 = vld [vmem:[#allocation2 + $0x1c0] sm:$0xff]
    %v1552 = vld [vmem:[#allocation2 + $0x1c8] sm:$0xff]
    %v1553 = vld [vmem:[#allocation2 + $0x1d0] sm:$0xff]
    %v1554 = vld [vmem:[#allocation2 + $0x1d8] sm:$0xff]
    %v1555 = vld [vmem:[#allocation2 + $0x1e0] sm:$0xff]
    %v1556 = vld [vmem:[#allocation2 + $0x1e8] sm:$0xff]
    %v1557 = vld [vmem:[#allocation2 + $0x1f0] sm:$0xff]
    %v1558 = vld [vmem:[#allocation2 + $0x1f8] sm:$0xff]
    %v1559 = vld [vmem:[%s2] sm:$0xff]
    %v1560 = vld [vmem:[%s2 + $0x8] sm:$0xff]
    %v1561 = vld [vmem:[%s2 + $0x10] sm:$0xff]
    %v1562 = vld [vmem:[%s2 + $0x18] sm:$0xff]
    %v1563 = vld [vmem:[%s2 + $0x20] sm:$0xff]
    %v1564 = vld [vmem:[%s2 + $0x28] sm:$0xff]
    %v1565 = vld [vmem:[%s2 + $0x30] sm:$0xff]
    %v1566 = vld [vmem:[%s2 + $0x38] sm:$0xff]
    %v1567 = vld [vmem:[%s2 + $0x40] sm:$0xff]
    %v1568 = vld [vmem:[%s2 + $0x48] sm:$0xff]
    %v1569 = vld [vmem:[%s2 + $0x50] sm:$0xff]
    %v1570 = vld [vmem:[%s2 + $0x58] sm:$0xff]
    %v1571 = vld [vmem:[%s2 + $0x60] sm:$0xff]
    %v1572 = vld [vmem:[%s2 + $0x68] sm:$0xff]
    %v1573 = vld [vmem:[%s2 + $0x70] sm:$0xff]
    %v1574 = vld [vmem:[%s2 + $0x78] sm:$0xff]
    %v1575 = vld [vmem:[%s2 + $0x80] sm:$0xff]
    %v1576 = vld [vmem:[%s2 + $0x88] sm:$0xff]
    %v1577 = vld [vmem:[%s2 + $0x90] sm:$0xff]
    %v1578 = vld [vmem:[%s2 + $0x98] sm:$0xff]
    %v1579 = vld [vmem:[%s2 + $0xa0] sm:$0xff]
    %v1580 = vld [vmem:[%s2 + $0xa8] sm:$0xff]
    %v1581 = vld [vmem:[%s2 + $0xb0] sm:$0xff]
    %v1582 = vld [vmem:[%s2 + $0xb8] sm:$0xff]
    %v1583 = vld [vmem:[%s2 + $0xc0] sm:$0xff]
    %v1584 = vld [vmem:[%s2 + $0xc8] sm:$0xff]
    %v1585 = vld [vmem:[%s2 + $0xd0] sm:$0xff]
    %v1586 = vld [vmem:[%s2 + $0xd8] sm:$0xff]
    %v1587 = vld [vmem:[%s2 + $0xe0] sm:$0xff]
    %v1588 = vld [vmem:[%s2 + $0xe8] sm:$0xff]
    %v1589 = vld [vmem:[%s2 + $0xf0] sm:$0xff]
    %v1590 = vld [vmem:[%s2 + $0xf8] sm:$0xff]
    %v1591 = vld [vmem:[%s2 + $0x100] sm:$0xff]
    %v1592 = vld [vmem:[%s2 + $0x108] sm:$0xff]
    %v1593 = vld [vmem:[%s2 + $0x110] sm:$0xff]
    %v1594 = vld [vmem:[%s2 + $0x118] sm:$0xff]
    %v1595 = vld [vmem:[%s2 + $0x120] sm:$0xff]
    %v1596 = vld [vmem:[%s2 + $0x128] sm:$0xff]
    %v1597 = vld [vmem:[%s2 + $0x130] sm:$0xff]
    %v1598 = vld [vmem:[%s2 + $0x138] sm:$0xff]
    %v1599 = vld [vmem:[%s2 + $0x140] sm:$0xff]
    %v1600 = vld [vmem:[%s2 + $0x148] sm:$0xff]
    %v1601 = vld [vmem:[%s2 + $0x150] sm:$0xff]
    %v1602 = vld [vmem:[%s2 + $0x158] sm:$0xff]
    %v1603 = vld [vmem:[%s2 + $0x160] sm:$0xff]
    %v1604 = vld [vmem:[%s2 + $0x168] sm:$0xff]
    %v1605 = vld [vmem:[%s2 + $0x170] sm:$0xff]
    %v1606 = vld [vmem:[%s2 + $0x178] sm:$0xff]
    %v1607 = vld [vmem:[%s2 + $0x180] sm:$0xff]
    %v1608 = vld [vmem:[%s2 + $0x188] sm:$0xff]
    %v1609 = vld [vmem:[%s2 + $0x190] sm:$0xff]
    %v1610 = vld [vmem:[%s2 + $0x198] sm:$0xff]
    %v1611 = vld [vmem:[%s2 + $0x1a0] sm:$0xff]
    %v1612 = vld [vmem:[%s2 + $0x1a8] sm:$0xff]
    %v1613 = vld [vmem:[%s2 + $0x1b0] sm:$0xff]
    %v1614 = vld [vmem:[%s2 + $0x1b8] sm:$0xff]
    %v1615 = vld [vmem:[%s2 + $0x1c0] sm:$0xff]
    %v1616 = vld [vmem:[%s2 + $0x1c8] sm:$0xff]
    %v1617 = vld [vmem:[%s2 + $0x1d0] sm:$0xff]
    %v1618 = vld [vmem:[%s2 + $0x1d8] sm:$0xff]
    %v1619 = vld [vmem:[%s2 + $0x1e0] sm:$0xff]
    %v1620 = vld [vmem:[%s2 + $0x1e8] sm:$0xff]
    %v1621 = vld [vmem:[%s2 + $0x1f0] sm:$0xff]
    %v1622 = vld [vmem:[%s2 + $0x1f8] sm:$0xff]
    %1624 = vset.pattern.permute.xlu0 0
    %1625 = vperm.xlu0 %1624, %v1559
    %v1626 = vpop.permute.xlu0 %1625
    %1629 = vset.pattern.permute.xlu0 0
    %1630 = vperm.xlu0 %1629, %v1560
    %v1631 = vpop.permute.xlu0 %1630
    %1634 = vset.pattern.permute.xlu0 0
    %1635 = vperm.xlu0 %1634, %v1561
    %v1636 = vpop.permute.xlu0 %1635
    %1639 = vset.pattern.permute.xlu0 0
    %1640 = vperm.xlu0 %1639, %v1562
    %v1641 = vpop.permute.xlu0 %1640
    %1644 = vset.pattern.permute.xlu0 0
    %1645 = vperm.xlu0 %1644, %v1563
    %v1646 = vpop.permute.xlu0 %1645
    %1649 = vset.pattern.permute.xlu0 0
    %1650 = vperm.xlu0 %1649, %v1564
    %v1651 = vpop.permute.xlu0 %1650
    %1654 = vset.pattern.permute.xlu0 0
    %1655 = vperm.xlu0 %1654, %v1565
    %v1656 = vpop.permute.xlu0 %1655
    %1659 = vset.pattern.permute.xlu0 0
    %1660 = vperm.xlu0 %1659, %v1566
    %v1661 = vpop.permute.xlu0 %1660
    %1664 = vset.pattern.permute.xlu0 0
    %1665 = vperm.xlu0 %1664, %v1567
    %v1666 = vpop.permute.xlu0 %1665
    %1669 = vset.pattern.permute.xlu0 0
    %1670 = vperm.xlu0 %1669, %v1568
    %v1671 = vpop.permute.xlu0 %1670
    %1674 = vset.pattern.permute.xlu0 0
    %1675 = vperm.xlu0 %1674, %v1569
    %v1676 = vpop.permute.xlu0 %1675
    %1679 = vset.pattern.permute.xlu0 0
    %1680 = vperm.xlu0 %1679, %v1570
    %v1681 = vpop.permute.xlu0 %1680
    %1684 = vset.pattern.permute.xlu0 0
    %1685 = vperm.xlu0 %1684, %v1571
    %v1686 = vpop.permute.xlu0 %1685
    %1689 = vset.pattern.permute.xlu0 0
    %1690 = vperm.xlu0 %1689, %v1572
    %v1691 = vpop.permute.xlu0 %1690
    %1694 = vset.pattern.permute.xlu0 0
    %1695 = vperm.xlu0 %1694, %v1573
    %v1696 = vpop.permute.xlu0 %1695
    %1699 = vset.pattern.permute.xlu0 0
    %1700 = vperm.xlu0 %1699, %v1574
    %v1701 = vpop.permute.xlu0 %1700
    %1704 = vset.pattern.permute.xlu0 0
    %1705 = vperm.xlu0 %1704, %v1575
    %v1706 = vpop.permute.xlu0 %1705
    %1709 = vset.pattern.permute.xlu0 0
    %1710 = vperm.xlu0 %1709, %v1576
    %v1711 = vpop.permute.xlu0 %1710
    %1714 = vset.pattern.permute.xlu0 0
    %1715 = vperm.xlu0 %1714, %v1577
    %v1716 = vpop.permute.xlu0 %1715
    %1719 = vset.pattern.permute.xlu0 0
    %1720 = vperm.xlu0 %1719, %v1578
    %v1721 = vpop.permute.xlu0 %1720
    %1724 = vset.pattern.permute.xlu0 0
    %1725 = vperm.xlu0 %1724, %v1579
    %v1726 = vpop.permute.xlu0 %1725
    %1729 = vset.pattern.permute.xlu0 0
    %1730 = vperm.xlu0 %1729, %v1580
    %v1731 = vpop.permute.xlu0 %1730
    %1734 = vset.pattern.permute.xlu0 0
    %1735 = vperm.xlu0 %1734, %v1581
    %v1736 = vpop.permute.xlu0 %1735
    %1739 = vset.pattern.permute.xlu0 0
    %1740 = vperm.xlu0 %1739, %v1582
    %v1741 = vpop.permute.xlu0 %1740
    %1744 = vset.pattern.permute.xlu0 0
    %1745 = vperm.xlu0 %1744, %v1583
    %v1746 = vpop.permute.xlu0 %1745
    %1749 = vset.pattern.permute.xlu0 0
    %1750 = vperm.xlu0 %1749, %v1584
    %v1751 = vpop.permute.xlu0 %1750
    %1754 = vset.pattern.permute.xlu0 0
    %1755 = vperm.xlu0 %1754, %v1585
    %v1756 = vpop.permute.xlu0 %1755
    %1759 = vset.pattern.permute.xlu0 0
    %1760 = vperm.xlu0 %1759, %v1586
    %v1761 = vpop.permute.xlu0 %1760
    %1764 = vset.pattern.permute.xlu0 0
    %1765 = vperm.xlu0 %1764, %v1587
    %v1766 = vpop.permute.xlu0 %1765
    %1769 = vset.pattern.permute.xlu0 0
    %1770 = vperm.xlu0 %1769, %v1588
    %v1771 = vpop.permute.xlu0 %1770
    %1774 = vset.pattern.permute.xlu0 0
    %1775 = vperm.xlu0 %1774, %v1589
    %v1776 = vpop.permute.xlu0 %1775
    %1779 = vset.pattern.permute.xlu0 0
    %1780 = vperm.xlu0 %1779, %v1590
    %v1781 = vpop.permute.xlu0 %1780
    %1784 = vset.pattern.permute.xlu0 0
    %1785 = vperm.xlu0 %1784, %v1591
    %v1786 = vpop.permute.xlu0 %1785
    %1789 = vset.pattern.permute.xlu0 0
    %1790 = vperm.xlu0 %1789, %v1592
    %v1791 = vpop.permute.xlu0 %1790
    %1794 = vset.pattern.permute.xlu0 0
    %1795 = vperm.xlu0 %1794, %v1593
    %v1796 = vpop.permute.xlu0 %1795
    %1799 = vset.pattern.permute.xlu0 0
    %1800 = vperm.xlu0 %1799, %v1594
    %v1801 = vpop.permute.xlu0 %1800
    %1804 = vset.pattern.permute.xlu0 0
    %1805 = vperm.xlu0 %1804, %v1595
    %v1806 = vpop.permute.xlu0 %1805
    %1809 = vset.pattern.permute.xlu0 0
    %1810 = vperm.xlu0 %1809, %v1596
    %v1811 = vpop.permute.xlu0 %1810
    %1814 = vset.pattern.permute.xlu0 0
    %1815 = vperm.xlu0 %1814, %v1597
    %v1816 = vpop.permute.xlu0 %1815
    %1819 = vset.pattern.permute.xlu0 0
    %1820 = vperm.xlu0 %1819, %v1598
    %v1821 = vpop.permute.xlu0 %1820
    %1824 = vset.pattern.permute.xlu0 0
    %1825 = vperm.xlu0 %1824, %v1599
    %v1826 = vpop.permute.xlu0 %1825
    %1829 = vset.pattern.permute.xlu0 0
    %1830 = vperm.xlu0 %1829, %v1600
    %v1831 = vpop.permute.xlu0 %1830
    %1834 = vset.pattern.permute.xlu0 0
    %1835 = vperm.xlu0 %1834, %v1601
    %v1836 = vpop.permute.xlu0 %1835
    %1839 = vset.pattern.permute.xlu0 0
    %1840 = vperm.xlu0 %1839, %v1602
    %v1841 = vpop.permute.xlu0 %1840
    %1844 = vset.pattern.permute.xlu0 0
    %1845 = vperm.xlu0 %1844, %v1603
    %v1846 = vpop.permute.xlu0 %1845
    %1849 = vset.pattern.permute.xlu0 0
    %1850 = vperm.xlu0 %1849, %v1604
    %v1851 = vpop.permute.xlu0 %1850
    %1854 = vset.pattern.permute.xlu0 0
    %1855 = vperm.xlu0 %1854, %v1605
    %v1856 = vpop.permute.xlu0 %1855
    %1859 = vset.pattern.permute.xlu0 0
    %1860 = vperm.xlu0 %1859, %v1606
    %v1861 = vpop.permute.xlu0 %1860
    %1864 = vset.pattern.permute.xlu0 0
    %1865 = vperm.xlu0 %1864, %v1607
    %v1866 = vpop.permute.xlu0 %1865
    %1869 = vset.pattern.permute.xlu0 0
    %1870 = vperm.xlu0 %1869, %v1608
    %v1871 = vpop.permute.xlu0 %1870
    %1874 = vset.pattern.permute.xlu0 0
    %1875 = vperm.xlu0 %1874, %v1609
    %v1876 = vpop.permute.xlu0 %1875
    %1879 = vset.pattern.permute.xlu0 0
    %1880 = vperm.xlu0 %1879, %v1610
    %v1881 = vpop.permute.xlu0 %1880
    %1884 = vset.pattern.permute.xlu0 0
    %1885 = vperm.xlu0 %1884, %v1611
    %v1886 = vpop.permute.xlu0 %1885
    %1889 = vset.pattern.permute.xlu0 0
    %1890 = vperm.xlu0 %1889, %v1612
    %v1891 = vpop.permute.xlu0 %1890
    %1894 = vset.pattern.permute.xlu0 0
    %1895 = vperm.xlu0 %1894, %v1613
    %v1896 = vpop.permute.xlu0 %1895
    %1899 = vset.pattern.permute.xlu0 0
    %1900 = vperm.xlu0 %1899, %v1614
    %v1901 = vpop.permute.xlu0 %1900
    %1904 = vset.pattern.permute.xlu0 0
    %1905 = vperm.xlu0 %1904, %v1615
    %v1906 = vpop.permute.xlu0 %1905
    %1909 = vset.pattern.permute.xlu0 0
    %1910 = vperm.xlu0 %1909, %v1616
    %v1911 = vpop.permute.xlu0 %1910
    %1914 = vset.pattern.permute.xlu0 0
    %1915 = vperm.xlu0 %1914, %v1617
    %v1916 = vpop.permute.xlu0 %1915
    %1919 = vset.pattern.permute.xlu0 0
    %1920 = vperm.xlu0 %1919, %v1618
    %v1921 = vpop.permute.xlu0 %1920
    %1924 = vset.pattern.permute.xlu0 0
    %1925 = vperm.xlu0 %1924, %v1619
    %v1926 = vpop.permute.xlu0 %1925
    %1929 = vset.pattern.permute.xlu0 0
    %1930 = vperm.xlu0 %1929, %v1620
    %v1931 = vpop.permute.xlu0 %1930
    %1934 = vset.pattern.permute.xlu0 0
    %1935 = vperm.xlu0 %1934, %v1621
    %v1936 = vpop.permute.xlu0 %1935
    %1939 = vset.pattern.permute.xlu0 0
    %1940 = vperm.xlu0 %1939, %v1622
    %v1941 = vpop.permute.xlu0 %1940
    %v1943 = vmul.f32 %v1495, %v1626
    %v1944 = vmul.f32 %v1496, %v1631
    %v1945 = vmul.f32 %v1497, %v1636
    %v1946 = vmul.f32 %v1498, %v1641
    %v1947 = vmul.f32 %v1499, %v1646
    %v1948 = vmul.f32 %v1500, %v1651
    %v1949 = vmul.f32 %v1501, %v1656
    %v1950 = vmul.f32 %v1502, %v1661
    %v1951 = vmul.f32 %v1503, %v1666
    %v1952 = vmul.f32 %v1504, %v1671
    %v1953 = vmul.f32 %v1505, %v1676
    %v1954 = vmul.f32 %v1506, %v1681
    %v1955 = vmul.f32 %v1507, %v1686
    %v1956 = vmul.f32 %v1508, %v1691
    %v1957 = vmul.f32 %v1509, %v1696
    %v1958 = vmul.f32 %v1510, %v1701
    %v1959 = vmul.f32 %v1511, %v1706
    %v1960 = vmul.f32 %v1512, %v1711
    %v1961 = vmul.f32 %v1513, %v1716
    %v1962 = vmul.f32 %v1514, %v1721
    %v1963 = vmul.f32 %v1515, %v1726
    %v1964 = vmul.f32 %v1516, %v1731
    %v1965 = vmul.f32 %v1517, %v1736
    %v1966 = vmul.f32 %v1518, %v1741
    %v1967 = vmul.f32 %v1519, %v1746
    %v1968 = vmul.f32 %v1520, %v1751
    %v1969 = vmul.f32 %v1521, %v1756
    %v1970 = vmul.f32 %v1522, %v1761
    %v1971 = vmul.f32 %v1523, %v1766
    %v1972 = vmul.f32 %v1524, %v1771
    %v1973 = vmul.f32 %v1525, %v1776
    %v1974 = vmul.f32 %v1526, %v1781
    %v1975 = vmul.f32 %v1527, %v1786
    %v1976 = vmul.f32 %v1528, %v1791
    %v1977 = vmul.f32 %v1529, %v1796
    %v1978 = vmul.f32 %v1530, %v1801
    %v1979 = vmul.f32 %v1531, %v1806
    %v1980 = vmul.f32 %v1532, %v1811
    %v1981 = vmul.f32 %v1533, %v1816
    %v1982 = vmul.f32 %v1534, %v1821
    %v1983 = vmul.f32 %v1535, %v1826
    %v1984 = vmul.f32 %v1536, %v1831
    %v1985 = vmul.f32 %v1537, %v1836
    %v1986 = vmul.f32 %v1538, %v1841
    %v1987 = vmul.f32 %v1539, %v1846
    %v1988 = vmul.f32 %v1540, %v1851
    %v1989 = vmul.f32 %v1541, %v1856
    %v1990 = vmul.f32 %v1542, %v1861
    %v1991 = vmul.f32 %v1543, %v1866
    %v1992 = vmul.f32 %v1544, %v1871
    %v1993 = vmul.f32 %v1545, %v1876
    %v1994 = vmul.f32 %v1546, %v1881
    %v1995 = vmul.f32 %v1547, %v1886
    %v1996 = vmul.f32 %v1548, %v1891
    %v1997 = vmul.f32 %v1549, %v1896
    %v1998 = vmul.f32 %v1550, %v1901
    %v1999 = vmul.f32 %v1551, %v1906
    %v2000 = vmul.f32 %v1552, %v1911
    %v2001 = vmul.f32 %v1553, %v1916
    %v2002 = vmul.f32 %v1554, %v1921
    %v2003 = vmul.f32 %v1555, %v1926
    %v2004 = vmul.f32 %v1556, %v1931
    %v2005 = vmul.f32 %v1557, %v1936
    %v2006 = vmul.f32 %v1558, %v1941
    %2007 = vst [vmem:[%s3] sm:$0xff] %v1943
    %2008 = vst [vmem:[%s3 + $0x8] sm:$0xff] %v1944
    %2009 = vst [vmem:[%s3 + $0x10] sm:$0xff] %v1945
    %2010 = vst [vmem:[%s3 + $0x18] sm:$0xff] %v1946
    %2011 = vst [vmem:[%s3 + $0x20] sm:$0xff] %v1947
    %2012 = vst [vmem:[%s3 + $0x28] sm:$0xff] %v1948
    %2013 = vst [vmem:[%s3 + $0x30] sm:$0xff] %v1949
    %2014 = vst [vmem:[%s3 + $0x38] sm:$0xff] %v1950
    %2015 = vst [vmem:[%s3 + $0x40] sm:$0xff] %v1951
    %2016 = vst [vmem:[%s3 + $0x48] sm:$0xff] %v1952
    %2017 = vst [vmem:[%s3 + $0x50] sm:$0xff] %v1953
    %2018 = vst [vmem:[%s3 + $0x58] sm:$0xff] %v1954
    %2019 = vst [vmem:[%s3 + $0x60] sm:$0xff] %v1955
    %2020 = vst [vmem:[%s3 + $0x68] sm:$0xff] %v1956
    %2021 = vst [vmem:[%s3 + $0x70] sm:$0xff] %v1957
    %2022 = vst [vmem:[%s3 + $0x78] sm:$0xff] %v1958
    %2023 = vst [vmem:[%s3 + $0x80] sm:$0xff] %v1959
    %2024 = vst [vmem:[%s3 + $0x88] sm:$0xff] %v1960
    %2025 = vst [vmem:[%s3 + $0x90] sm:$0xff] %v1961
    %2026 = vst [vmem:[%s3 + $0x98] sm:$0xff] %v1962
    %2027 = vst [vmem:[%s3 + $0xa0] sm:$0xff] %v1963
    %2028 = vst [vmem:[%s3 + $0xa8] sm:$0xff] %v1964
    %2029 = vst [vmem:[%s3 + $0xb0] sm:$0xff] %v1965
    %2030 = vst [vmem:[%s3 + $0xb8] sm:$0xff] %v1966
    %2031 = vst [vmem:[%s3 + $0xc0] sm:$0xff] %v1967
    %2032 = vst [vmem:[%s3 + $0xc8] sm:$0xff] %v1968
    %2033 = vst [vmem:[%s3 + $0xd0] sm:$0xff] %v1969
    %2034 = vst [vmem:[%s3 + $0xd8] sm:$0xff] %v1970
    %2035 = vst [vmem:[%s3 + $0xe0] sm:$0xff] %v1971
    %2036 = vst [vmem:[%s3 + $0xe8] sm:$0xff] %v1972
    %2037 = vst [vmem:[%s3 + $0xf0] sm:$0xff] %v1973
    %2038 = vst [vmem:[%s3 + $0xf8] sm:$0xff] %v1974
    %2039 = vst [vmem:[%s3 + $0x100] sm:$0xff] %v1975
    %2040 = vst [vmem:[%s3 + $0x108] sm:$0xff] %v1976
    %2041 = vst [vmem:[%s3 + $0x110] sm:$0xff] %v1977
    %2042 = vst [vmem:[%s3 + $0x118] sm:$0xff] %v1978
    %2043 = vst [vmem:[%s3 + $0x120] sm:$0xff] %v1979
    %2044 = vst [vmem:[%s3 + $0x128] sm:$0xff] %v1980
    %2045 = vst [vmem:[%s3 + $0x130] sm:$0xff] %v1981
    %2046 = vst [vmem:[%s3 + $0x138] sm:$0xff] %v1982
    %2047 = vst [vmem:[%s3 + $0x140] sm:$0xff] %v1983
    %2048 = vst [vmem:[%s3 + $0x148] sm:$0xff] %v1984
    %2049 = vst [vmem:[%s3 + $0x150] sm:$0xff] %v1985
    %2050 = vst [vmem:[%s3 + $0x158] sm:$0xff] %v1986
    %2051 = vst [vmem:[%s3 + $0x160] sm:$0xff] %v1987
    %2052 = vst [vmem:[%s3 + $0x168] sm:$0xff] %v1988
    %2053 = vst [vmem:[%s3 + $0x170] sm:$0xff] %v1989
    %2054 = vst [vmem:[%s3 + $0x178] sm:$0xff] %v1990
    %2055 = vst [vmem:[%s3 + $0x180] sm:$0xff] %v1991
    %2056 = vst [vmem:[%s3 + $0x188] sm:$0xff] %v1992
    %2057 = vst [vmem:[%s3 + $0x190] sm:$0xff] %v1993
    %2058 = vst [vmem:[%s3 + $0x198] sm:$0xff] %v1994
    %2059 = vst [vmem:[%s3 + $0x1a0] sm:$0xff] %v1995
    %2060 = vst [vmem:[%s3 + $0x1a8] sm:$0xff] %v1996
    %2061 = vst [vmem:[%s3 + $0x1b0] sm:$0xff] %v1997
    %2062 = vst [vmem:[%s3 + $0x1b8] sm:$0xff] %v1998
    %2063 = vst [vmem:[%s3 + $0x1c0] sm:$0xff] %v1999
    %2064 = vst [vmem:[%s3 + $0x1c8] sm:$0xff] %v2000
    %2065 = vst [vmem:[%s3 + $0x1d0] sm:$0xff] %v2001
    %2066 = vst [vmem:[%s3 + $0x1d8] sm:$0xff] %v2002
    %2067 = vst [vmem:[%s3 + $0x1e0] sm:$0xff] %v2003
    %2068 = vst [vmem:[%s3 + $0x1e8] sm:$0xff] %v2004
    %2069 = vst [vmem:[%s3 + $0x1f0] sm:$0xff] %v2005
    %2070 = vst [vmem:[%s3 + $0x1f8] sm:$0xff] %v2006
  $region21: #{_forward_impl.9} parent=0 // pred_fallthru
    _
  // Predicated region
  $region22: #{_forward_impl.9} parent=0 // pred_check
    _
  $region23: #{_forward_impl.9} parent=0 // pred_check_branch
    %2072 = sbr.rel (0) target = $region25
  $region24: #{_forward_impl.9} parent=0 // pred_region
    _
  $region25: #{_forward_impl.9} parent=0 // pred_fallthru
    _
  // Predicated region
  $region26: #{_forward_impl.9} parent=0 // pred_check
    _
  $region27: #{_forward_impl.9} parent=0 // pred_check_branch
    %2074 = sbr.rel (0) target = $region29
  $region28: #{_forward_impl.9} parent=0 // pred_region
    _
  $region29: #{_forward_impl.9} parent=0 // pred_fallthru
    _

// kernel: _forward_impl.6
$region0: #{_forward_impl.6}
  #allocation0 [shape = 'u32[]', space=smem, size = 0x4, offset = 0x4, fixed_abs, tag = 'smem constant byte address 0x4 - core index']
  #allocation1 [shape = 'u32[144,128]{1,0:T(1,128)}', space=vmem, size = 0x12000, scoped, tag = 'internal scratch']
  #allocation2 [shape = 'f32[512,128]{1,0:T(8,128)}', space=vmem, size = 0x40000, scoped, tag = 'scratch operand']
  %s0 = inlined_call_operand.vmem [shape: bf16[512,512], index: 0, kind: input, shape index: {}]
  %s1 = inlined_call_operand.hbm [shape: f32[512,128], index: 1, kind: input, shape index: {}]
  %s2 = inlined_call_operand.vmem [shape: f32[512,1], index: 2, kind: input, shape index: {}]
  %s3 = inlined_call_operand.vmem [shape: f32[512,128], index: 3, kind: output, shape index: {}]
  %s4 = sld [smem:[#allocation0]]
  $region34: #{_forward_impl.6} parent=0
    _
  %s6 = ssub.s32 1, %s4
  %s7 = scalar_select 0, %s6, %s4
  $region1: #{_forward_impl.6} parent=0
    #allocation3 [shape = 'u8[262144]{0}', space=vmem, size = 0x40000, scoped, tag = 'input window, operand 1, single buffered']
    #allocation4 [shape = 's32[1]{0}', space=sflag, size = 0x4, scoped, tag = 'scoped memory for _forward_impl.6']
    %8 = vsyncpa [#allocation4], 0
    // Predicated region
    $region2: #{_forward_impl.6} parent=1 // pred_check
      _
    $region3: #{_forward_impl.6} parent=1 // pred_check_branch
      %10 = sbr.rel (0) target = $region5
    $region4: #{_forward_impl.6} parent=1 // pred_region
      _
    $region5: #{_forward_impl.6} parent=1 // pred_fallthru
      _
    // Predicated region
    $region6: #{_forward_impl.6} parent=1 // pred_check
      _
    $region7: #{_forward_impl.6} parent=1 // pred_check_branch
      %12 = sbr.rel (0) target = $region9
    $region8: #{_forward_impl.6} parent=1 // pred_region
      %s14 = ssub.s32 8192, 8192
      %15 = vsyncadd [#allocation4], %s14
      %s16 = sshll.u32 [#allocation3], 4
      %s17 = int_to_ptr.vmem [resolvable:$true] %s16
      %22 = dma.hbm_to_vmem [thread:$0]  %s1, 8192, %s17, [#allocation4], 128, 128, 8
    $region9: #{_forward_impl.6} parent=1 // pred_fallthru
      _
    // Predicated region
    $region10: #{_forward_impl.6} parent=1 // pred_check
      _
    $region11: #{_forward_impl.6} parent=1 // pred_check_branch
      %24 = sbr.rel (0) target = $region13
    $region12: #{_forward_impl.6} parent=1 // pred_region
      _
    $region13: #{_forward_impl.6} parent=1 // pred_fallthru
      _
    // Predicated region
    $region14: #{_forward_impl.6} parent=1 // pred_check
      _
    $region15: #{_forward_impl.6} parent=1 // pred_check_branch
      %26 = sbr.rel (0) target = $region17
    $region16: #{_forward_impl.6} parent=1 // pred_region
      %27 = dma.done [#allocation4], 8192
    $region17: #{_forward_impl.6} parent=1 // pred_fallthru
      _
    %p28 = scmp.eq.s32.totalorder 0, 0
    // Predicated region
    $region18: #{_forward_impl.6} parent=1 // pred_check
      %p29 = pneg %p28
    $region19: #{_forward_impl.6} parent=1 // pred_check_branch
      %31 = sbr.rel (%p29) target = $region21
    $region20: #{_forward_impl.6} parent=1 // pred_region
      %32 = vst [vmem:[#allocation2] sm:$0xff] 0.0
      %33 = vst [vmem:[#allocation2 + $0x8] sm:$0xff] 0.0
      %34 = vst [vmem:[#allocation2 + $0x10] sm:$0xff] 0.0
      %35 = vst [vmem:[#allocation2 + $0x18] sm:$0xff] 0.0
      %36 = vst [vmem:[#allocation2 + $0x20] sm:$0xff] 0.0
      %37 = vst [vmem:[#allocation2 + $0x28] sm:$0xff] 0.0
      %38 = vst [vmem:[#allocation2 + $0x30] sm:$0xff] 0.0
      %39 = vst [vmem:[#allocation2 + $0x38] sm:$0xff] 0.0
      %40 = vst [vmem:[#allocation2 + $0x40] sm:$0xff] 0.0
      %41 = vst [vmem:[#allocation2 + $0x48] sm:$0xff] 0.0
      %42 = vst [vmem:[#allocation2 + $0x50] sm:$0xff] 0.0
      %43 = vst [vmem:[#allocation2 + $0x58] sm:$0xff] 0.0
      %44 = vst [vmem:[#allocation2 + $0x60] sm:$0xff] 0.0
      %45 = vst [vmem:[#allocation2 + $0x68] sm:$0xff] 0.0
      %46 = vst [vmem:[#allocation2 + $0x70] sm:$0xff] 0.0
      %47 = vst [vmem:[#allocation2 + $0x78] sm:$0xff] 0.0
      %48 = vst [vmem:[#allocation2 + $0x80] sm:$0xff] 0.0
      %49 = vst [vmem:[#allocation2 + $0x88] sm:$0xff] 0.0
      %50 = vst [vmem:[#allocation2 + $0x90] sm:$0xff] 0.0
      %51 = vst [vmem:[#allocation2 + $0x98] sm:$0xff] 0.0
      %52 = vst [vmem:[#allocation2 + $0xa0] sm:$0xff] 0.0
      %53 = vst [vmem:[#allocation2 + $0xa8] sm:$0xff] 0.0
      %54 = vst [vmem:[#allocation2 + $0xb0] sm:$0xff] 0.0
      %55 = vst [vmem:[#allocation2 + $0xb8] sm:$0xff] 0.0
      %56 = vst [vmem:[#allocation2 + $0xc0] sm:$0xff] 0.0
      %57 = vst [vmem:[#allocation2 + $0xc8] sm:$0xff] 0.0
      %58 = vst [vmem:[#allocation2 + $0xd0] sm:$0xff] 0.0
      %59 = vst [vmem:[#allocation2 + $0xd8] sm:$0xff] 0.0
      %60 = vst [vmem:[#allocation2 + $0xe0] sm:$0xff] 0.0
      %61 = vst [vmem:[#allocation2 + $0xe8] sm:$0xff] 0.0
      %62 = vst [vmem:[#allocation2 + $0xf0] sm:$0xff] 0.0
      %63 = vst [vmem:[#allocation2 + $0xf8] sm:$0xff] 0.0
      %64 = vst [vmem:[#allocation2 + $0x100] sm:$0xff] 0.0
      %65 = vst [vmem:[#allocation2 + $0x108] sm:$0xff] 0.0
      %66 = vst [vmem:[#allocation2 + $0x110] sm:$0xff] 0.0
      %67 = vst [vmem:[#allocation2 + $0x118] sm:$0xff] 0.0
      %68 = vst [vmem:[#allocation2 + $0x120] sm:$0xff] 0.0
      %69 = vst [vmem:[#allocation2 + $0x128] sm:$0xff] 0.0
      %70 = vst [vmem:[#allocation2 + $0x130] sm:$0xff] 0.0
      %71 = vst [vmem:[#allocation2 + $0x138] sm:$0xff] 0.0
      %72 = vst [vmem:[#allocation2 + $0x140] sm:$0xff] 0.0
      %73 = vst [vmem:[#allocation2 + $0x148] sm:$0xff] 0.0
      %74 = vst [vmem:[#allocation2 + $0x150] sm:$0xff] 0.0
      %75 = vst [vmem:[#allocation2 + $0x158] sm:$0xff] 0.0
      %76 = vst [vmem:[#allocation2 + $0x160] sm:$0xff] 0.0
      %77 = vst [vmem:[#allocation2 + $0x168] sm:$0xff] 0.0
      %78 = vst [vmem:[#allocation2 + $0x170] sm:$0xff] 0.0
      %79 = vst [vmem:[#allocation2 + $0x178] sm:$0xff] 0.0
      %80 = vst [vmem:[#allocation2 + $0x180] sm:$0xff] 0.0
      %81 = vst [vmem:[#allocation2 + $0x188] sm:$0xff] 0.0
      %82 = vst [vmem:[#allocation2 + $0x190] sm:$0xff] 0.0
      %83 = vst [vmem:[#allocation2 + $0x198] sm:$0xff] 0.0
      %84 = vst [vmem:[#allocation2 + $0x1a0] sm:$0xff] 0.0
      %85 = vst [vmem:[#allocation2 + $0x1a8] sm:$0xff] 0.0
      %86 = vst [vmem:[#allocation2 + $0x1b0] sm:$0xff] 0.0
      %87 = vst [vmem:[#allocation2 + $0x1b8] sm:$0xff] 0.0
      %88 = vst [vmem:[#allocation2 + $0x1c0] sm:$0xff] 0.0
      %89 = vst [vmem:[#allocation2 + $0x1c8] sm:$0xff] 0.0
      %90 = vst [vmem:[#allocation2 + $0x1d0] sm:$0xff] 0.0
      %91 = vst [vmem:[#allocation2 + $0x1d8] sm:$0xff] 0.0
      %92 = vst [vmem:[#allocation2 + $0x1e0] sm:$0xff] 0.0
      %93 = vst [vmem:[#allocation2 + $0x1e8] sm:$0xff] 0.0
      %94 = vst [vmem:[#allocation2 + $0x1f0] sm:$0xff] 0.0
      %95 = vst [vmem:[#allocation2 + $0x1f8] sm:$0xff] 0.0
    $region21: #{_forward_impl.6} parent=1 // pred_fallthru
      _
    %v96 = vld [vmem:[%s0] sm:$0xff]
    %v97 = vld [vmem:[%s0 + $0x8] sm:$0xff]
    %v98 = vld [vmem:[%s0 + $0x10] sm:$0xff]
    %v99 = vld [vmem:[%s0 + $0x18] sm:$0xff]
    %v100 = vld [vmem:[%s0 + $0x20] sm:$0xff]
    %v101 = vld [vmem:[%s0 + $0x28] sm:$0xff]
    %v102 = vld [vmem:[%s0 + $0x30] sm:$0xff]
    %v103 = vld [vmem:[%s0 + $0x38] sm:$0xff]
    %v104 = vld [vmem:[%s0 + $0x40] sm:$0xff]
    %v105 = vld [vmem:[%s0 + $0x48] sm:$0xff]
    %v106 = vld [vmem:[%s0 + $0x50] sm:$0xff]
    %v107 = vld [vmem:[%s0 + $0x58] sm:$0xff]
    %v108 = vld [vmem:[%s0 + $0x60] sm:$0xff]
    %v109 = vld [vmem:[%s0 + $0x68] sm:$0xff]
    %v110 = vld [vmem:[%s0 + $0x70] sm:$0xff]
    %v111 = vld [vmem:[%s0 + $0x78] sm:$0xff]
    %v112 = vld [vmem:[%s0 + $0x80] sm:$0xff]
    %v113 = vld [vmem:[%s0 + $0x88] sm:$0xff]
    %v114 = vld [vmem:[%s0 + $0x90] sm:$0xff]
    %v115 = vld [vmem:[%s0 + $0x98] sm:$0xff]
    %v116 = vld [vmem:[%s0 + $0xa0] sm:$0xff]
    %v117 = vld [vmem:[%s0 + $0xa8] sm:$0xff]
    %v118 = vld [vmem:[%s0 + $0xb0] sm:$0xff]
    %v119 = vld [vmem:[%s0 + $0xb8] sm:$0xff]
    %v120 = vld [vmem:[%s0 + $0xc0] sm:$0xff]
    %v121 = vld [vmem:[%s0 + $0xc8] sm:$0xff]
    %v122 = vld [vmem:[%s0 + $0xd0] sm:$0xff]
    %v123 = vld [vmem:[%s0 + $0xd8] sm:$0xff]
    %v124 = vld [vmem:[%s0 + $0xe0] sm:$0xff]
    %v125 = vld [vmem:[%s0 + $0xe8] sm:$0xff]
    %v126 = vld [vmem:[%s0 + $0xf0] sm:$0xff]
    %v127 = vld [vmem:[%s0 + $0xf8] sm:$0xff]
    %v128 = vld [vmem:[%s0 + $0x100] sm:$0xff]
    %v129 = vld [vmem:[%s0 + $0x108] sm:$0xff]
    %v130 = vld [vmem:[%s0 + $0x110] sm:$0xff]
    %v131 = vld [vmem:[%s0 + $0x118] sm:$0xff]
    %v132 = vld [vmem:[%s0 + $0x120] sm:$0xff]
    %v133 = vld [vmem:[%s0 + $0x128] sm:$0xff]
    %v134 = vld [vmem:[%s0 + $0x130] sm:$0xff]
    %v135 = vld [vmem:[%s0 + $0x138] sm:$0xff]
    %v136 = vld [vmem:[%s0 + $0x140] sm:$0xff]
    %v137 = vld [vmem:[%s0 + $0x148] sm:$0xff]
    %v138 = vld [vmem:[%s0 + $0x150] sm:$0xff]
    %v139 = vld [vmem:[%s0 + $0x158] sm:$0xff]
    %v140 = vld [vmem:[%s0 + $0x160] sm:$0xff]
    %v141 = vld [vmem:[%s0 + $0x168] sm:$0xff]
    %v142 = vld [vmem:[%s0 + $0x170] sm:$0xff]
    %v143 = vld [vmem:[%s0 + $0x178] sm:$0xff]
    %v144 = vld [vmem:[%s0 + $0x180] sm:$0xff]
    %v145 = vld [vmem:[%s0 + $0x188] sm:$0xff]
    %v146 = vld [vmem:[%s0 + $0x190] sm:$0xff]
    %v147 = vld [vmem:[%s0 + $0x198] sm:$0xff]
    %v148 = vld [vmem:[%s0 + $0x1a0] sm:$0xff]
    %v149 = vld [vmem:[%s0 + $0x1a8] sm:$0xff]
    %v150 = vld [vmem:[%s0 + $0x1b0] sm:$0xff]
    %v151 = vld [vmem:[%s0 + $0x1b8] sm:$0xff]
    %v152 = vld [vmem:[%s0 + $0x1c0] sm:$0xff]
    %v153 = vld [vmem:[%s0 + $0x1c8] sm:$0xff]
    %v154 = vld [vmem:[%s0 + $0x1d0] sm:$0xff]
    %v155 = vld [vmem:[%s0 + $0x1d8] sm:$0xff]
    %v156 = vld [vmem:[%s0 + $0x1e0] sm:$0xff]
    %v157 = vld [vmem:[%s0 + $0x1e8] sm:$0xff]
    %v158 = vld [vmem:[%s0 + $0x1f0] sm:$0xff]
    %v159 = vld [vmem:[%s0 + $0x1f8] sm:$0xff]
    %v160 = vld [vmem:[%s0 + $0x200] sm:$0xff]
    %v161 = vld [vmem:[%s0 + $0x208] sm:$0xff]
    %v162 = vld [vmem:[%s0 + $0x210] sm:$0xff]
    %v163 = vld [vmem:[%s0 + $0x218] sm:$0xff]
    %v164 = vld [vmem:[%s0 + $0x220] sm:$0xff]
    %v165 = vld [vmem:[%s0 + $0x228] sm:$0xff]
    %v166 = vld [vmem:[%s0 + $0x230] sm:$0xff]
    %v167 = vld [vmem:[%s0 + $0x238] sm:$0xff]
    %v168 = vld [vmem:[%s0 + $0x240] sm:$0xff]
    %v169 = vld [vmem:[%s0 + $0x248] sm:$0xff]
    %v170 = vld [vmem:[%s0 + $0x250] sm:$0xff]
    %v171 = vld [vmem:[%s0 + $0x258] sm:$0xff]
    %v172 = vld [vmem:[%s0 + $0x260] sm:$0xff]
    %v173 = vld [vmem:[%s0 + $0x268] sm:$0xff]
    %v174 = vld [vmem:[%s0 + $0x270] sm:$0xff]
    %v175 = vld [vmem:[%s0 + $0x278] sm:$0xff]
    %v176 = vld [vmem:[%s0 + $0x280] sm:$0xff]
    %v177 = vld [vmem:[%s0 + $0x288] sm:$0xff]
    %v178 = vld [vmem:[%s0 + $0x290] sm:$0xff]
    %v179 = vld [vmem:[%s0 + $0x298] sm:$0xff]
    %v180 = vld [vmem:[%s0 + $0x2a0] sm:$0xff]
    %v181 = vld [vmem:[%s0 + $0x2a8] sm:$0xff]
    %v182 = vld [vmem:[%s0 + $0x2b0] sm:$0xff]
    %v183 = vld [vmem:[%s0 + $0x2b8] sm:$0xff]
    %v184 = vld [vmem:[%s0 + $0x2c0] sm:$0xff]
    %v185 = vld [vmem:[%s0 + $0x2c8] sm:$0xff]
    %v186 = vld [vmem:[%s0 + $0x2d0] sm:$0xff]
    %v187 = vld [vmem:[%s0 + $0x2d8] sm:$0xff]
    %v188 = vld [vmem:[%s0 + $0x2e0] sm:$0xff]
    %v189 = vld [vmem:[%s0 + $0x2e8] sm:$0xff]
    %v190 = vld [vmem:[%s0 + $0x2f0] sm:$0xff]
    %v191 = vld [vmem:[%s0 + $0x2f8] sm:$0xff]
    %v192 = vld [vmem:[%s0 + $0x300] sm:$0xff]
    %v193 = vld [vmem:[%s0 + $0x308] sm:$0xff]
    %v194 = vld [vmem:[%s0 + $0x310] sm:$0xff]
    %v195 = vld [vmem:[%s0 + $0x318] sm:$0xff]
    %v196 = vld [vmem:[%s0 + $0x320] sm:$0xff]
    %v197 = vld [vmem:[%s0 + $0x328] sm:$0xff]
    %v198 = vld [vmem:[%s0 + $0x330] sm:$0xff]
    %v199 = vld [vmem:[%s0 + $0x338] sm:$0xff]
    %v200 = vld [vmem:[%s0 + $0x340] sm:$0xff]
    %v201 = vld [vmem:[%s0 + $0x348] sm:$0xff]
    %v202 = vld [vmem:[%s0 + $0x350] sm:$0xff]
    %v203 = vld [vmem:[%s0 + $0x358] sm:$0xff]
    %v204 = vld [vmem:[%s0 + $0x360] sm:$0xff]
    %v205 = vld [vmem:[%s0 + $0x368] sm:$0xff]
    %v206 = vld [vmem:[%s0 + $0x370] sm:$0xff]
    %v207 = vld [vmem:[%s0 + $0x378] sm:$0xff]
    %v208 = vld [vmem:[%s0 + $0x380] sm:$0xff]
    %v209 = vld [vmem:[%s0 + $0x388] sm:$0xff]
    %v210 = vld [vmem:[%s0 + $0x390] sm:$0xff]
    %v211 = vld [vmem:[%s0 + $0x398] sm:$0xff]
    %v212 = vld [vmem:[%s0 + $0x3a0] sm:$0xff]
    %v213 = vld [vmem:[%s0 + $0x3a8] sm:$0xff]
    %v214 = vld [vmem:[%s0 + $0x3b0] sm:$0xff]
    %v215 = vld [vmem:[%s0 + $0x3b8] sm:$0xff]
    %v216 = vld [vmem:[%s0 + $0x3c0] sm:$0xff]
    %v217 = vld [vmem:[%s0 + $0x3c8] sm:$0xff]
    %v218 = vld [vmem:[%s0 + $0x3d0] sm:$0xff]
    %v219 = vld [vmem:[%s0 + $0x3d8] sm:$0xff]
    %v220 = vld [vmem:[%s0 + $0x3e0] sm:$0xff]
    %v221 = vld [vmem:[%s0 + $0x3e8] sm:$0xff]
    %v222 = vld [vmem:[%s0 + $0x3f0] sm:$0xff]
    %v223 = vld [vmem:[%s0 + $0x3f8] sm:$0xff]
    %v224 = vunpack.c.l.bf16 %v96
    %v225 = vunpack.c.h.bf16 %v96
    %v226 = vunpack.c.l.bf16 %v97
    %v227 = vunpack.c.h.bf16 %v97
    %v228 = vunpack.c.l.bf16 %v98
    %v229 = vunpack.c.h.bf16 %v98
    %v230 = vunpack.c.l.bf16 %v99
    %v231 = vunpack.c.h.bf16 %v99
    %v232 = vunpack.c.l.bf16 %v100
    %v233 = vunpack.c.h.bf16 %v100
    %v234 = vunpack.c.l.bf16 %v101
    %v235 = vunpack.c.h.bf16 %v101
    %v236 = vunpack.c.l.bf16 %v102
    %v237 = vunpack.c.h.bf16 %v102
    %v238 = vunpack.c.l.bf16 %v103
    %v239 = vunpack.c.h.bf16 %v103
    %v240 = vunpack.c.l.bf16 %v104
    %v241 = vunpack.c.h.bf16 %v104
    %v242 = vunpack.c.l.bf16 %v105
    %v243 = vunpack.c.h.bf16 %v105
    %v244 = vunpack.c.l.bf16 %v106
    %v245 = vunpack.c.h.bf16 %v106
    %v246 = vunpack.c.l.bf16 %v107
    %v247 = vunpack.c.h.bf16 %v107
    %v248 = vunpack.c.l.bf16 %v108
    %v249 = vunpack.c.h.bf16 %v108
    %v250 = vunpack.c.l.bf16 %v109
    %v251 = vunpack.c.h.bf16 %v109
    %v252 = vunpack.c.l.bf16 %v110
    %v253 = vunpack.c.h.bf16 %v110
    %v254 = vunpack.c.l.bf16 %v111
    %v255 = vunpack.c.h.bf16 %v111
    %v256 = vunpack.c.l.bf16 %v112
    %v257 = vunpack.c.h.bf16 %v112
    %v258 = vunpack.c.l.bf16 %v113
    %v259 = vunpack.c.h.bf16 %v113
    %v260 = vunpack.c.l.bf16 %v114
    %v261 = vunpack.c.h.bf16 %v114
    %v262 = vunpack.c.l.bf16 %v115
    %v263 = vunpack.c.h.bf16 %v115
    %v264 = vunpack.c.l.bf16 %v116
    %v265 = vunpack.c.h.bf16 %v116
    %v266 = vunpack.c.l.bf16 %v117
    %v267 = vunpack.c.h.bf16 %v117
    %v268 = vunpack.c.l.bf16 %v118
    %v269 = vunpack.c.h.bf16 %v118
    %v270 = vunpack.c.l.bf16 %v119
    %v271 = vunpack.c.h.bf16 %v119
    %v272 = vunpack.c.l.bf16 %v120
    %v273 = vunpack.c.h.bf16 %v120
    %v274 = vunpack.c.l.bf16 %v121
    %v275 = vunpack.c.h.bf16 %v121
    %v276 = vunpack.c.l.bf16 %v122
    %v277 = vunpack.c.h.bf16 %v122
    %v278 = vunpack.c.l.bf16 %v123
    %v279 = vunpack.c.h.bf16 %v123
    %v280 = vunpack.c.l.bf16 %v124
    %v281 = vunpack.c.h.bf16 %v124
    %v282 = vunpack.c.l.bf16 %v125
    %v283 = vunpack.c.h.bf16 %v125
    %v284 = vunpack.c.l.bf16 %v126
    %v285 = vunpack.c.h.bf16 %v126
    %v286 = vunpack.c.l.bf16 %v127
    %v287 = vunpack.c.h.bf16 %v127
    %v288 = vunpack.c.l.bf16 %v128
    %v289 = vunpack.c.h.bf16 %v128
    %v290 = vunpack.c.l.bf16 %v129
    %v291 = vunpack.c.h.bf16 %v129
    %v292 = vunpack.c.l.bf16 %v130
    %v293 = vunpack.c.h.bf16 %v130
    %v294 = vunpack.c.l.bf16 %v131
    %v295 = vunpack.c.h.bf16 %v131
    %v296 = vunpack.c.l.bf16 %v132
    %v297 = vunpack.c.h.bf16 %v132
    %v298 = vunpack.c.l.bf16 %v133
    %v299 = vunpack.c.h.bf16 %v133
    %v300 = vunpack.c.l.bf16 %v134
    %v301 = vunpack.c.h.bf16 %v134
    %v302 = vunpack.c.l.bf16 %v135
    %v303 = vunpack.c.h.bf16 %v135
    %v304 = vunpack.c.l.bf16 %v136
    %v305 = vunpack.c.h.bf16 %v136
    %v306 = vunpack.c.l.bf16 %v137
    %v307 = vunpack.c.h.bf16 %v137
    %v308 = vunpack.c.l.bf16 %v138
    %v309 = vunpack.c.h.bf16 %v138
    %v310 = vunpack.c.l.bf16 %v139
    %v311 = vunpack.c.h.bf16 %v139
    %v312 = vunpack.c.l.bf16 %v140
    %v313 = vunpack.c.h.bf16 %v140
    %v314 = vunpack.c.l.bf16 %v141
    %v315 = vunpack.c.h.bf16 %v141
    %v316 = vunpack.c.l.bf16 %v142
    %v317 = vunpack.c.h.bf16 %v142
    %v318 = vunpack.c.l.bf16 %v143
    %v319 = vunpack.c.h.bf16 %v143
    %v320 = vunpack.c.l.bf16 %v144
    %v321 = vunpack.c.h.bf16 %v144
    %v322 = vunpack.c.l.bf16 %v145
    %v323 = vunpack.c.h.bf16 %v145
    %v324 = vunpack.c.l.bf16 %v146
    %v325 = vunpack.c.h.bf16 %v146
    %v326 = vunpack.c.l.bf16 %v147
    %v327 = vunpack.c.h.bf16 %v147
    %v328 = vunpack.c.l.bf16 %v148
    %v329 = vunpack.c.h.bf16 %v148
    %v330 = vunpack.c.l.bf16 %v149
    %v331 = vunpack.c.h.bf16 %v149
    %v332 = vunpack.c.l.bf16 %v150
    %v333 = vunpack.c.h.bf16 %v150
    %v334 = vunpack.c.l.bf16 %v151
    %v335 = vunpack.c.h.bf16 %v151
    %v336 = vunpack.c.l.bf16 %v152
    %v337 = vunpack.c.h.bf16 %v152
    %v338 = vunpack.c.l.bf16 %v153
    %v339 = vunpack.c.h.bf16 %v153
    %v340 = vunpack.c.l.bf16 %v154
    %v341 = vunpack.c.h.bf16 %v154
    %v342 = vunpack.c.l.bf16 %v155
    %v343 = vunpack.c.h.bf16 %v155
    %v344 = vunpack.c.l.bf16 %v156
    %v345 = vunpack.c.h.bf16 %v156
    %v346 = vunpack.c.l.bf16 %v157
    %v347 = vunpack.c.h.bf16 %v157
    %v348 = vunpack.c.l.bf16 %v158
    %v349 = vunpack.c.h.bf16 %v158
    %v350 = vunpack.c.l.bf16 %v159
    %v351 = vunpack.c.h.bf16 %v159
    %v352 = vunpack.c.l.bf16 %v160
    %v353 = vunpack.c.h.bf16 %v160
    %v354 = vunpack.c.l.bf16 %v161
    %v355 = vunpack.c.h.bf16 %v161
    %v356 = vunpack.c.l.bf16 %v162
    %v357 = vunpack.c.h.bf16 %v162
    %v358 = vunpack.c.l.bf16 %v163
    %v359 = vunpack.c.h.bf16 %v163
    %v360 = vunpack.c.l.bf16 %v164
    %v361 = vunpack.c.h.bf16 %v164
    %v362 = vunpack.c.l.bf16 %v165
    %v363 = vunpack.c.h.bf16 %v165
    %v364 = vunpack.c.l.bf16 %v166
    %v365 = vunpack.c.h.bf16 %v166
    %v366 = vunpack.c.l.bf16 %v167
    %v367 = vunpack.c.h.bf16 %v167
    %v368 = vunpack.c.l.bf16 %v168
    %v369 = vunpack.c.h.bf16 %v168
    %v370 = vunpack.c.l.bf16 %v169
    %v371 = vunpack.c.h.bf16 %v169
    %v372 = vunpack.c.l.bf16 %v170
    %v373 = vunpack.c.h.bf16 %v170
    %v374 = vunpack.c.l.bf16 %v171
    %v375 = vunpack.c.h.bf16 %v171
    %v376 = vunpack.c.l.bf16 %v172
    %v377 = vunpack.c.h.bf16 %v172
    %v378 = vunpack.c.l.bf16 %v173
    %v379 = vunpack.c.h.bf16 %v173
    %v380 = vunpack.c.l.bf16 %v174
    %v381 = vunpack.c.h.bf16 %v174
    %v382 = vunpack.c.l.bf16 %v175
    %v383 = vunpack.c.h.bf16 %v175
    %v384 = vunpack.c.l.bf16 %v176
    %v385 = vunpack.c.h.bf16 %v176
    %v386 = vunpack.c.l.bf16 %v177
    %v387 = vunpack.c.h.bf16 %v177
    %v388 = vunpack.c.l.bf16 %v178
    %v389 = vunpack.c.h.bf16 %v178
    %v390 = vunpack.c.l.bf16 %v179
    %v391 = vunpack.c.h.bf16 %v179
    %v392 = vunpack.c.l.bf16 %v180
    %v393 = vunpack.c.h.bf16 %v180
    %v394 = vunpack.c.l.bf16 %v181
    %v395 = vunpack.c.h.bf16 %v181
    %v396 = vunpack.c.l.bf16 %v182
    %v397 = vunpack.c.h.bf16 %v182
    %v398 = vunpack.c.l.bf16 %v183
    %v399 = vunpack.c.h.bf16 %v183
    %v400 = vunpack.c.l.bf16 %v184
    %v401 = vunpack.c.h.bf16 %v184
    %v402 = vunpack.c.l.bf16 %v185
    %v403 = vunpack.c.h.bf16 %v185
    %v404 = vunpack.c.l.bf16 %v186
    %v405 = vunpack.c.h.bf16 %v186
    %v406 = vunpack.c.l.bf16 %v187
    %v407 = vunpack.c.h.bf16 %v187
    %v408 = vunpack.c.l.bf16 %v188
    %v409 = vunpack.c.h.bf16 %v188
    %v410 = vunpack.c.l.bf16 %v189
    %v411 = vunpack.c.h.bf16 %v189
    %v412 = vunpack.c.l.bf16 %v190
    %v413 = vunpack.c.h.bf16 %v190
    %v414 = vunpack.c.l.bf16 %v191
    %v415 = vunpack.c.h.bf16 %v191
    %v416 = vunpack.c.l.bf16 %v192
    %v417 = vunpack.c.h.bf16 %v192
    %v418 = vunpack.c.l.bf16 %v193
    %v419 = vunpack.c.h.bf16 %v193
    %v420 = vunpack.c.l.bf16 %v194
    %v421 = vunpack.c.h.bf16 %v194
    %v422 = vunpack.c.l.bf16 %v195
    %v423 = vunpack.c.h.bf16 %v195
    %v424 = vunpack.c.l.bf16 %v196
    %v425 = vunpack.c.h.bf16 %v196
    %v426 = vunpack.c.l.bf16 %v197
    %v427 = vunpack.c.h.bf16 %v197
    %v428 = vunpack.c.l.bf16 %v198
    %v429 = vunpack.c.h.bf16 %v198
    %v430 = vunpack.c.l.bf16 %v199
    %v431 = vunpack.c.h.bf16 %v199
    %v432 = vunpack.c.l.bf16 %v200
    %v433 = vunpack.c.h.bf16 %v200
    %v434 = vunpack.c.l.bf16 %v201
    %v435 = vunpack.c.h.bf16 %v201
    %v436 = vunpack.c.l.bf16 %v202
    %v437 = vunpack.c.h.bf16 %v202
    %v438 = vunpack.c.l.bf16 %v203
    %v439 = vunpack.c.h.bf16 %v203
    %v440 = vunpack.c.l.bf16 %v204
    %v441 = vunpack.c.h.bf16 %v204
    %v442 = vunpack.c.l.bf16 %v205
    %v443 = vunpack.c.h.bf16 %v205
    %v444 = vunpack.c.l.bf16 %v206
    %v445 = vunpack.c.h.bf16 %v206
    %v446 = vunpack.c.l.bf16 %v207
    %v447 = vunpack.c.h.bf16 %v207
    %v448 = vunpack.c.l.bf16 %v208
    %v449 = vunpack.c.h.bf16 %v208
    %v450 = vunpack.c.l.bf16 %v209
    %v451 = vunpack.c.h.bf16 %v209
    %v452 = vunpack.c.l.bf16 %v210
    %v453 = vunpack.c.h.bf16 %v210
    %v454 = vunpack.c.l.bf16 %v211
    %v455 = vunpack.c.h.bf16 %v211
    %v456 = vunpack.c.l.bf16 %v212
    %v457 = vunpack.c.h.bf16 %v212
    %v458 = vunpack.c.l.bf16 %v213
    %v459 = vunpack.c.h.bf16 %v213
    %v460 = vunpack.c.l.bf16 %v214
    %v461 = vunpack.c.h.bf16 %v214
    %v462 = vunpack.c.l.bf16 %v215
    %v463 = vunpack.c.h.bf16 %v215
    %v464 = vunpack.c.l.bf16 %v216
    %v465 = vunpack.c.h.bf16 %v216
    %v466 = vunpack.c.l.bf16 %v217
    %v467 = vunpack.c.h.bf16 %v217
    %v468 = vunpack.c.l.bf16 %v218
    %v469 = vunpack.c.h.bf16 %v218
    %v470 = vunpack.c.l.bf16 %v219
    %v471 = vunpack.c.h.bf16 %v219
    %v472 = vunpack.c.l.bf16 %v220
    %v473 = vunpack.c.h.bf16 %v220
    %v474 = vunpack.c.l.bf16 %v221
    %v475 = vunpack.c.h.bf16 %v221
    %v476 = vunpack.c.l.bf16 %v222
    %v477 = vunpack.c.h.bf16 %v222
    %v478 = vunpack.c.l.bf16 %v223
    %v479 = vunpack.c.h.bf16 %v223
    %v480 = vld [vmem:[#allocation2] sm:$0xff]
    %v481 = vld [vmem:[#allocation2 + $0x8] sm:$0xff]
    %v482 = vld [vmem:[#allocation2 + $0x10] sm:$0xff]
    %v483 = vld [vmem:[#allocation2 + $0x18] sm:$0xff]
    %v484 = vld [vmem:[#allocation2 + $0x20] sm:$0xff]
    %v485 = vld [vmem:[#allocation2 + $0x28] sm:$0xff]
    %v486 = vld [vmem:[#allocation2 + $0x30] sm:$0xff]
    %v487 = vld [vmem:[#allocation2 + $0x38] sm:$0xff]
    %v488 = vld [vmem:[#allocation2 + $0x40] sm:$0xff]
    %v489 = vld [vmem:[#allocation2 + $0x48] sm:$0xff]
    %v490 = vld [vmem:[#allocation2 + $0x50] sm:$0xff]
    %v491 = vld [vmem:[#allocation2 + $0x58] sm:$0xff]
    %v492 = vld [vmem:[#allocation2 + $0x60] sm:$0xff]
    %v493 = vld [vmem:[#allocation2 + $0x68] sm:$0xff]
    %v494 = vld [vmem:[#allocation2 + $0x70] sm:$0xff]
    %v495 = vld [vmem:[#allocation2 + $0x78] sm:$0xff]
    %v496 = vld [vmem:[#allocation2 + $0x80] sm:$0xff]
    %v497 = vld [vmem:[#allocation2 + $0x88] sm:$0xff]
    %v498 = vld [vmem:[#allocation2 + $0x90] sm:$0xff]
    %v499 = vld [vmem:[#allocation2 + $0x98] sm:$0xff]
    %v500 = vld [vmem:[#allocation2 + $0xa0] sm:$0xff]
    %v501 = vld [vmem:[#allocation2 + $0xa8] sm:$0xff]
    %v502 = vld [vmem:[#allocation2 + $0xb0] sm:$0xff]
    %v503 = vld [vmem:[#allocation2 + $0xb8] sm:$0xff]
    %v504 = vld [vmem:[#allocation2 + $0xc0] sm:$0xff]
    %v505 = vld [vmem:[#allocation2 + $0xc8] sm:$0xff]
    %v506 = vld [vmem:[#allocation2 + $0xd0] sm:$0xff]
    %v507 = vld [vmem:[#allocation2 + $0xd8] sm:$0xff]
    %v508 = vld [vmem:[#allocation2 + $0xe0] sm:$0xff]
    %v509 = vld [vmem:[#allocation2 + $0xe8] sm:$0xff]
    %v510 = vld [vmem:[#allocation2 + $0xf0] sm:$0xff]
    %v511 = vld [vmem:[#allocation2 + $0xf8] sm:$0xff]
    %v512 = vld [vmem:[#allocation2 + $0x100] sm:$0xff]
    %v513 = vld [vmem:[#allocation2 + $0x108] sm:$0xff]
    %v514 = vld [vmem:[#allocation2 + $0x110] sm:$0xff]
    %v515 = vld [vmem:[#allocation2 + $0x118] sm:$0xff]
    %v516 = vld [vmem:[#allocation2 + $0x120] sm:$0xff]
    %v517 = vld [vmem:[#allocation2 + $0x128] sm:$0xff]
    %v518 = vld [vmem:[#allocation2 + $0x130] sm:$0xff]
    %v519 = vld [vmem:[#allocation2 + $0x138] sm:$0xff]
    %v520 = vld [vmem:[#allocation2 + $0x140] sm:$0xff]
    %v521 = vld [vmem:[#allocation2 + $0x148] sm:$0xff]
    %v522 = vld [vmem:[#allocation2 + $0x150] sm:$0xff]
    %v523 = vld [vmem:[#allocation2 + $0x158] sm:$0xff]
    %v524 = vld [vmem:[#allocation2 + $0x160] sm:$0xff]
    %v525 = vld [vmem:[#allocation2 + $0x168] sm:$0xff]
    %v526 = vld [vmem:[#allocation2 + $0x170] sm:$0xff]
    %v527 = vld [vmem:[#allocation2 + $0x178] sm:$0xff]
    %v528 = vld [vmem:[#allocation2 + $0x180] sm:$0xff]
    %v529 = vld [vmem:[#allocation2 + $0x188] sm:$0xff]
    %v530 = vld [vmem:[#allocation2 + $0x190] sm:$0xff]
    %v531 = vld [vmem:[#allocation2 + $0x198] sm:$0xff]
    %v532 = vld [vmem:[#allocation2 + $0x1a0] sm:$0xff]
    %v533 = vld [vmem:[#allocation2 + $0x1a8] sm:$0xff]
    %v534 = vld [vmem:[#allocation2 + $0x1b0] sm:$0xff]
    %v535 = vld [vmem:[#allocation2 + $0x1b8] sm:$0xff]
    %v536 = vld [vmem:[#allocation2 + $0x1c0] sm:$0xff]
    %v537 = vld [vmem:[#allocation2 + $0x1c8] sm:$0xff]
    %v538 = vld [vmem:[#allocation2 + $0x1d0] sm:$0xff]
    %v539 = vld [vmem:[#allocation2 + $0x1d8] sm:$0xff]
    %v540 = vld [vmem:[#allocation2 + $0x1e0] sm:$0xff]
    %v541 = vld [vmem:[#allocation2 + $0x1e8] sm:$0xff]
    %v542 = vld [vmem:[#allocation2 + $0x1f0] sm:$0xff]
    %v543 = vld [vmem:[#allocation2 + $0x1f8] sm:$0xff]
    %v544 = vld [vmem:[#allocation3] sm:$0xff]
    %v545 = vld [vmem:[#allocation3 + $0x8] sm:$0xff]
    %v546 = vld [vmem:[#allocation3 + $0x10] sm:$0xff]
    %v547 = vld [vmem:[#allocation3 + $0x18] sm:$0xff]
    %v548 = vld [vmem:[#allocation3 + $0x20] sm:$0xff]
    %v549 = vld [vmem:[#allocation3 + $0x28] sm:$0xff]
    %v550 = vld [vmem:[#allocation3 + $0x30] sm:$0xff]
    %v551 = vld [vmem:[#allocation3 + $0x38] sm:$0xff]
    %v552 = vld [vmem:[#allocation3 + $0x40] sm:$0xff]
    %v553 = vld [vmem:[#allocation3 + $0x48] sm:$0xff]
    %v554 = vld [vmem:[#allocation3 + $0x50] sm:$0xff]
    %v555 = vld [vmem:[#allocation3 + $0x58] sm:$0xff]
    %v556 = vld [vmem:[#allocation3 + $0x60] sm:$0xff]
    %v557 = vld [vmem:[#allocation3 + $0x68] sm:$0xff]
    %v558 = vld [vmem:[#allocation3 + $0x70] sm:$0xff]
    %v559 = vld [vmem:[#allocation3 + $0x78] sm:$0xff]
    %v560 = vld [vmem:[#allocation3 + $0x80] sm:$0xff]
    %v561 = vld [vmem:[#allocation3 + $0x88] sm:$0xff]
    %v562 = vld [vmem:[#allocation3 + $0x90] sm:$0xff]
    %v563 = vld [vmem:[#allocation3 + $0x98] sm:$0xff]
    %v564 = vld [vmem:[#allocation3 + $0xa0] sm:$0xff]
    %v565 = vld [vmem:[#allocation3 + $0xa8] sm:$0xff]
    %v566 = vld [vmem:[#allocation3 + $0xb0] sm:$0xff]
    %v567 = vld [vmem:[#allocation3 + $0xb8] sm:$0xff]
    %v568 = vld [vmem:[#allocation3 + $0xc0] sm:$0xff]
    %v569 = vld [vmem:[#allocation3 + $0xc8] sm:$0xff]
    %v570 = vld [vmem:[#allocation3 + $0xd0] sm:$0xff]
    %v571 = vld [vmem:[#allocation3 + $0xd8] sm:$0xff]
    %v572 = vld [vmem:[#allocation3 + $0xe0] sm:$0xff]
    %v573 = vld [vmem:[#allocation3 + $0xe8] sm:$0xff]
    %v574 = vld [vmem:[#allocation3 + $0xf0] sm:$0xff]
    %v575 = vld [vmem:[#allocation3 + $0xf8] sm:$0xff]
    %v576 = vld [vmem:[#allocation3 + $0x100] sm:$0xff]
    %v577 = vld [vmem:[#allocation3 + $0x108] sm:$0xff]
    %v578 = vld [vmem:[#allocation3 + $0x110] sm:$0xff]
    %v579 = vld [vmem:[#allocation3 + $0x118] sm:$0xff]
    %v580 = vld [vmem:[#allocation3 + $0x120] sm:$0xff]
    %v581 = vld [vmem:[#allocation3 + $0x128] sm:$0xff]
    %v582 = vld [vmem:[#allocation3 + $0x130] sm:$0xff]
    %v583 = vld [vmem:[#allocation3 + $0x138] sm:$0xff]
    %v584 = vld [vmem:[#allocation3 + $0x140] sm:$0xff]
    %v585 = vld [vmem:[#allocation3 + $0x148] sm:$0xff]
    %v586 = vld [vmem:[#allocation3 + $0x150] sm:$0xff]
    %v587 = vld [vmem:[#allocation3 + $0x158] sm:$0xff]
    %v588 = vld [vmem:[#allocation3 + $0x160] sm:$0xff]
    %v589 = vld [vmem:[#allocation3 + $0x168] sm:$0xff]
    %v590 = vld [vmem:[#allocation3 + $0x170] sm:$0xff]
    %v591 = vld [vmem:[#allocation3 + $0x178] sm:$0xff]
    %v592 = vld [vmem:[#allocation3 + $0x180] sm:$0xff]
    %v593 = vld [vmem:[#allocation3 + $0x188] sm:$0xff]
    %v594 = vld [vmem:[#allocation3 + $0x190] sm:$0xff]
    %v595 = vld [vmem:[#allocation3 + $0x198] sm:$0xff]
    %v596 = vld [vmem:[#allocation3 + $0x1a0] sm:$0xff]
    %v597 = vld [vmem:[#allocation3 + $0x1a8] sm:$0xff]
    %v598 = vld [vmem:[#allocation3 + $0x1b0] sm:$0xff]
    %v599 = vld [vmem:[#allocation3 + $0x1b8] sm:$0xff]
    %v600 = vld [vmem:[#allocation3 + $0x1c0] sm:$0xff]
    %v601 = vld [vmem:[#allocation3 + $0x1c8] sm:$0xff]
    %v602 = vld [vmem:[#allocation3 + $0x1d0] sm:$0xff]
    %v603 = vld [vmem:[#allocation3 + $0x1d8] sm:$0xff]
    %v604 = vld [vmem:[#allocation3 + $0x1e0] sm:$0xff]
    %v605 = vld [vmem:[#allocation3 + $0x1e8] sm:$0xff]
    %v606 = vld [vmem:[#allocation3 + $0x1f0] sm:$0xff]
    %v607 = vld [vmem:[#allocation3 + $0x1f8] sm:$0xff]
    %608 = vxpose.xlu0.b32.start [1/16] %v224, 128
    %609 = vxpose.xlu0.b32.cont [2/16] %v228, 128
    %610 = vxpose.xlu0.b32.cont [3/16] %v232, 128
    %611 = vxpose.xlu0.b32.cont [4/16] %v236, 128
    %612 = vxpose.xlu0.b32.cont [5/16] %v240, 128
    %613 = vxpose.xlu0.b32.cont [6/16] %v244, 128
    %614 = vxpose.xlu0.b32.cont [7/16] %v248, 128
    %615 = vxpose.xlu0.b32.cont [8/16] %v252, 128
    %616 = vxpose.xlu0.b32.cont [9/16] %v256, 128
    %617 = vxpose.xlu0.b32.cont [10/16] %v260, 128
    %618 = vxpose.xlu0.b32.cont [11/16] %v264, 128
    %619 = vxpose.xlu0.b32.cont [12/16] %v268, 128
    %620 = vxpose.xlu0.b32.cont [13/16] %v272, 128
    %621 = vxpose.xlu0.b32.cont [14/16] %v276, 128
    %622 = vxpose.xlu0.b32.cont [15/16] %v280, 128
    %623 = vxpose.xlu0.b32.end [16/16] %v284, 128
    %v624 = vpop.trf.xlu0
    %v625 = vpop.trf.xlu0
    %v626 = vpop.trf.xlu0
    %v627 = vpop.trf.xlu0
    %v628 = vpop.trf.xlu0
    %v629 = vpop.trf.xlu0
    %v630 = vpop.trf.xlu0
    %v631 = vpop.trf.xlu0
    %v632 = vpop.trf.xlu0
    %v633 = vpop.trf.xlu0
    %v634 = vpop.trf.xlu0
    %v635 = vpop.trf.xlu0
    %v636 = vpop.trf.xlu0
    %v637 = vpop.trf.xlu0
    %v638 = vpop.trf.xlu0
    %v639 = vpop.trf.xlu0
    %640 = vxpose.xlu0.b32.start [1/16] %v225, 128
    %641 = vxpose.xlu0.b32.cont [2/16] %v229, 128
    %642 = vxpose.xlu0.b32.cont [3/16] %v233, 128
    %643 = vxpose.xlu0.b32.cont [4/16] %v237, 128
    %644 = vxpose.xlu0.b32.cont [5/16] %v241, 128
    %645 = vxpose.xlu0.b32.cont [6/16] %v245, 128
    %646 = vxpose.xlu0.b32.cont [7/16] %v249, 128
    %647 = vxpose.xlu0.b32.cont [8/16] %v253, 128
    %648 = vxpose.xlu0.b32.cont [9/16] %v257, 128
    %649 = vxpose.xlu0.b32.cont [10/16] %v261, 128
    %650 = vxpose.xlu0.b32.cont [11/16] %v265, 128
    %651 = vxpose.xlu0.b32.cont [12/16] %v269, 128
    %652 = vxpose.xlu0.b32.cont [13/16] %v273, 128
    %653 = vxpose.xlu0.b32.cont [14/16] %v277, 128
    %654 = vxpose.xlu0.b32.cont [15/16] %v281, 128
    %655 = vxpose.xlu0.b32.end [16/16] %v285, 128
    %v656 = vpop.trf.xlu0
    %v657 = vpop.trf.xlu0
    %v658 = vpop.trf.xlu0
    %v659 = vpop.trf.xlu0
    %v660 = vpop.trf.xlu0
    %v661 = vpop.trf.xlu0
    %v662 = vpop.trf.xlu0
    %v663 = vpop.trf.xlu0
    %v664 = vpop.trf.xlu0
    %v665 = vpop.trf.xlu0
    %v666 = vpop.trf.xlu0
    %v667 = vpop.trf.xlu0
    %v668 = vpop.trf.xlu0
    %v669 = vpop.trf.xlu0
    %v670 = vpop.trf.xlu0
    %v671 = vpop.trf.xlu0
    %672 = vxpose.xlu0.b32.start [1/16] %v226, 128
    %673 = vxpose.xlu0.b32.cont [2/16] %v230, 128
    %674 = vxpose.xlu0.b32.cont [3/16] %v234, 128
    %675 = vxpose.xlu0.b32.cont [4/16] %v238, 128
    %676 = vxpose.xlu0.b32.cont [5/16] %v242, 128
    %677 = vxpose.xlu0.b32.cont [6/16] %v246, 128
    %678 = vxpose.xlu0.b32.cont [7/16] %v250, 128
    %679 = vxpose.xlu0.b32.cont [8/16] %v254, 128
    %680 = vxpose.xlu0.b32.cont [9/16] %v258, 128
    %681 = vxpose.xlu0.b32.cont [10/16] %v262, 128
    %682 = vxpose.xlu0.b32.cont [11/16] %v266, 128
    %683 = vxpose.xlu0.b32.cont [12/16] %v270, 128
    %684 = vxpose.xlu0.b32.cont [13/16] %v274, 128
    %685 = vxpose.xlu0.b32.cont [14/16] %v278, 128
    %686 = vxpose.xlu0.b32.cont [15/16] %v282, 128
    %687 = vxpose.xlu0.b32.end [16/16] %v286, 128
    %v688 = vpop.trf.xlu0
    %v689 = vpop.trf.xlu0
    %v690 = vpop.trf.xlu0
    %v691 = vpop.trf.xlu0
    %v692 = vpop.trf.xlu0
    %v693 = vpop.trf.xlu0
    %v694 = vpop.trf.xlu0
    %v695 = vpop.trf.xlu0
    %v696 = vpop.trf.xlu0
    %v697 = vpop.trf.xlu0
    %v698 = vpop.trf.xlu0
    %v699 = vpop.trf.xlu0
    %v700 = vpop.trf.xlu0
    %v701 = vpop.trf.xlu0
    %v702 = vpop.trf.xlu0
    %v703 = vpop.trf.xlu0
    %704 = vxpose.xlu0.b32.start [1/16] %v227, 128
    %705 = vxpose.xlu0.b32.cont [2/16] %v231, 128
    %706 = vxpose.xlu0.b32.cont [3/16] %v235, 128
    %707 = vxpose.xlu0.b32.cont [4/16] %v239, 128
    %708 = vxpose.xlu0.b32.cont [5/16] %v243, 128
    %709 = vxpose.xlu0.b32.cont [6/16] %v247, 128
    %710 = vxpose.xlu0.b32.cont [7/16] %v251, 128
    %711 = vxpose.xlu0.b32.cont [8/16] %v255, 128
    %712 = vxpose.xlu0.b32.cont [9/16] %v259, 128
    %713 = vxpose.xlu0.b32.cont [10/16] %v263, 128
    %714 = vxpose.xlu0.b32.cont [11/16] %v267, 128
    %715 = vxpose.xlu0.b32.cont [12/16] %v271, 128
    %716 = vxpose.xlu0.b32.cont [13/16] %v275, 128
    %717 = vxpose.xlu0.b32.cont [14/16] %v279, 128
    %718 = vxpose.xlu0.b32.cont [15/16] %v283, 128
    %719 = vxpose.xlu0.b32.end [16/16] %v287, 128
    %v720 = vpop.trf.xlu0
    %v721 = vpop.trf.xlu0
    %v722 = vpop.trf.xlu0
    %v723 = vpop.trf.xlu0
    %v724 = vpop.trf.xlu0
    %v725 = vpop.trf.xlu0
    %v726 = vpop.trf.xlu0
    %v727 = vpop.trf.xlu0
    %v728 = vpop.trf.xlu0
    %v729 = vpop.trf.xlu0
    %v730 = vpop.trf.xlu0
    %v731 = vpop.trf.xlu0
    %v732 = vpop.trf.xlu0
    %v733 = vpop.trf.xlu0
    %v734 = vpop.trf.xlu0
    %v735 = vpop.trf.xlu0
    %736 = vxpose.xlu0.b32.start [1/16] %v288, 128
    %737 = vxpose.xlu0.b32.cont [2/16] %v292, 128
    %738 = vxpose.xlu0.b32.cont [3/16] %v296, 128
    %739 = vxpose.xlu0.b32.cont [4/16] %v300, 128
    %740 = vxpose.xlu0.b32.cont [5/16] %v304, 128
    %741 = vxpose.xlu0.b32.cont [6/16] %v308, 128
    %742 = vxpose.xlu0.b32.cont [7/16] %v312, 128
    %743 = vxpose.xlu0.b32.cont [8/16] %v316, 128
    %744 = vxpose.xlu0.b32.cont [9/16] %v320, 128
    %745 = vxpose.xlu0.b32.cont [10/16] %v324, 128
    %746 = vxpose.xlu0.b32.cont [11/16] %v328, 128
    %747 = vxpose.xlu0.b32.cont [12/16] %v332, 128
    %748 = vxpose.xlu0.b32.cont [13/16] %v336, 128
    %749 = vxpose.xlu0.b32.cont [14/16] %v340, 128
    %750 = vxpose.xlu0.b32.cont [15/16] %v344, 128
    %751 = vxpose.xlu0.b32.end [16/16] %v348, 128
    %v752 = vpop.trf.xlu0
    %v753 = vpop.trf.xlu0
    %v754 = vpop.trf.xlu0
    %v755 = vpop.trf.xlu0
    %v756 = vpop.trf.xlu0
    %v757 = vpop.trf.xlu0
    %v758 = vpop.trf.xlu0
    %v759 = vpop.trf.xlu0
    %v760 = vpop.trf.xlu0
    %v761 = vpop.trf.xlu0
    %v762 = vpop.trf.xlu0
    %v763 = vpop.trf.xlu0
    %v764 = vpop.trf.xlu0
    %v765 = vpop.trf.xlu0
    %v766 = vpop.trf.xlu0
    %v767 = vpop.trf.xlu0
    %768 = vxpose.xlu0.b32.start [1/16] %v289, 128
    %769 = vxpose.xlu0.b32.cont [2/16] %v293, 128
    %770 = vxpose.xlu0.b32.cont [3/16] %v297, 128
    %771 = vxpose.xlu0.b32.cont [4/16] %v301, 128
    %772 = vxpose.xlu0.b32.cont [5/16] %v305, 128
    %773 = vxpose.xlu0.b32.cont [6/16] %v309, 128
    %774 = vxpose.xlu0.b32.cont [7/16] %v313, 128
    %775 = vxpose.xlu0.b32.cont [8/16] %v317, 128
    %776 = vxpose.xlu0.b32.cont [9/16] %v321, 128
    %777 = vxpose.xlu0.b32.cont [10/16] %v325, 128
    %778 = vxpose.xlu0.b32.cont [11/16] %v329, 128
    %779 = vxpose.xlu0.b32.cont [12/16] %v333, 128
    %780 = vxpose.xlu0.b32.cont [13/16] %v337, 128
    %781 = vxpose.xlu0.b32.cont [14/16] %v341, 128
    %782 = vxpose.xlu0.b32.cont [15/16] %v345, 128
    %783 = vxpose.xlu0.b32.end [16/16] %v349, 128
    %v784 = vpop.trf.xlu0
    %v785 = vpop.trf.xlu0
    %v786 = vpop.trf.xlu0
    %v787 = vpop.trf.xlu0
    %v788 = vpop.trf.xlu0
    %v789 = vpop.trf.xlu0
    %v790 = vpop.trf.xlu0
    %v791 = vpop.trf.xlu0
    %v792 = vpop.trf.xlu0
    %v793 = vpop.trf.xlu0
    %v794 = vpop.trf.xlu0
    %v795 = vpop.trf.xlu0
    %v796 = vpop.trf.xlu0
    %v797 = vpop.trf.xlu0
    %v798 = vpop.trf.xlu0
    %v799 = vpop.trf.xlu0
    %800 = vxpose.xlu0.b32.start [1/16] %v290, 128
    %801 = vxpose.xlu0.b32.cont [2/16] %v294, 128
    %802 = vxpose.xlu0.b32.cont [3/16] %v298, 128
    %803 = vxpose.xlu0.b32.cont [4/16] %v302, 128
    %804 = vxpose.xlu0.b32.cont [5/16] %v306, 128
    %805 = vxpose.xlu0.b32.cont [6/16] %v310, 128
    %806 = vxpose.xlu0.b32.cont [7/16] %v314, 128
    %807 = vxpose.xlu0.b32.cont [8/16] %v318, 128
    %808 = vxpose.xlu0.b32.cont [9/16] %v322, 128
    %809 = vxpose.xlu0.b32.cont [10/16] %v326, 128
    %810 = vxpose.xlu0.b32.cont [11/16] %v330, 128
    %811 = vxpose.xlu0.b32.cont [12/16] %v334, 128
    %812 = vxpose.xlu0.b32.cont [13/16] %v338, 128
    %813 = vxpose.xlu0.b32.cont [14/16] %v342, 128
    %814 = vxpose.xlu0.b32.cont [15/16] %v346, 128
    %815 = vxpose.xlu0.b32.end [16/16] %v350, 128
    %v816 = vpop.trf.xlu0
    %v817 = vpop.trf.xlu0
    %v818 = vpop.trf.xlu0
    %v819 = vpop.trf.xlu0
    %v820 = vpop.trf.xlu0
    %v821 = vpop.trf.xlu0
    %v822 = vpop.trf.xlu0
    %v823 = vpop.trf.xlu0
    %v824 = vpop.trf.xlu0
    %v825 = vpop.trf.xlu0
    %v826 = vpop.trf.xlu0
    %v827 = vpop.trf.xlu0
    %v828 = vpop.trf.xlu0
    %v829 = vpop.trf.xlu0
    %v830 = vpop.trf.xlu0
    %v831 = vpop.trf.xlu0
    %832 = vxpose.xlu0.b32.start [1/16] %v291, 128
    %833 = vxpose.xlu0.b32.cont [2/16] %v295, 128
    %834 = vxpose.xlu0.b32.cont [3/16] %v299, 128
    %835 = vxpose.xlu0.b32.cont [4/16] %v303, 128
    %836 = vxpose.xlu0.b32.cont [5/16] %v307, 128
    %837 = vxpose.xlu0.b32.cont [6/16] %v311, 128
    %838 = vxpose.xlu0.b32.cont [7/16] %v315, 128
    %839 = vxpose.xlu0.b32.cont [8/16] %v319, 128
    %840 = vxpose.xlu0.b32.cont [9/16] %v323, 128
    %841 = vxpose.xlu0.b32.cont [10/16] %v327, 128
    %842 = vxpose.xlu0.b32.cont [11/16] %v331, 128
    %843 = vxpose.xlu0.b32.cont [12/16] %v335, 128
    %844 = vxpose.xlu0.b32.cont [13/16] %v339, 128
    %845 = vxpose.xlu0.b32.cont [14/16] %v343, 128
    %846 = vxpose.xlu0.b32.cont [15/16] %v347, 128
    %847 = vxpose.xlu0.b32.end [16/16] %v351, 128
    %v848 = vpop.trf.xlu0
    %v849 = vpop.trf.xlu0
    %v850 = vpop.trf.xlu0
    %v851 = vpop.trf.xlu0
    %v852 = vpop.trf.xlu0
    %v853 = vpop.trf.xlu0
    %v854 = vpop.trf.xlu0
    %v855 = vpop.trf.xlu0
    %v856 = vpop.trf.xlu0
    %v857 = vpop.trf.xlu0
    %v858 = vpop.trf.xlu0
    %v859 = vpop.trf.xlu0
    %v860 = vpop.trf.xlu0
    %v861 = vpop.trf.xlu0
    %v862 = vpop.trf.xlu0
    %v863 = vpop.trf.xlu0
    %864 = vxpose.xlu0.b32.start [1/16] %v352, 128
    %865 = vxpose.xlu0.b32.cont [2/16] %v356, 128
    %866 = vxpose.xlu0.b32.cont [3/16] %v360, 128
    %867 = vxpose.xlu0.b32.cont [4/16] %v364, 128
    %868 = vxpose.xlu0.b32.cont [5/16] %v368, 128
    %869 = vxpose.xlu0.b32.cont [6/16] %v372, 128
    %870 = vxpose.xlu0.b32.cont [7/16] %v376, 128
    %871 = vxpose.xlu0.b32.cont [8/16] %v380, 128
    %872 = vxpose.xlu0.b32.cont [9/16] %v384, 128
    %873 = vxpose.xlu0.b32.cont [10/16] %v388, 128
    %874 = vxpose.xlu0.b32.cont [11/16] %v392, 128
    %875 = vxpose.xlu0.b32.cont [12/16] %v396, 128
    %876 = vxpose.xlu0.b32.cont [13/16] %v400, 128
    %877 = vxpose.xlu0.b32.cont [14/16] %v404, 128
    %878 = vxpose.xlu0.b32.cont [15/16] %v408, 128
    %879 = vxpose.xlu0.b32.end [16/16] %v412, 128
    %v880 = vpop.trf.xlu0
    %v881 = vpop.trf.xlu0
    %v882 = vpop.trf.xlu0
    %v883 = vpop.trf.xlu0
    %v884 = vpop.trf.xlu0
    %v885 = vpop.trf.xlu0
    %v886 = vpop.trf.xlu0
    %v887 = vpop.trf.xlu0
    %v888 = vpop.trf.xlu0
    %v889 = vpop.trf.xlu0
    %v890 = vpop.trf.xlu0
    %v891 = vpop.trf.xlu0
    %v892 = vpop.trf.xlu0
    %v893 = vpop.trf.xlu0
    %v894 = vpop.trf.xlu0
    %v895 = vpop.trf.xlu0
    %896 = vxpose.xlu0.b32.start [1/16] %v353, 128
    %897 = vxpose.xlu0.b32.cont [2/16] %v357, 128
    %898 = vxpose.xlu0.b32.cont [3/16] %v361, 128
    %899 = vxpose.xlu0.b32.cont [4/16] %v365, 128
    %900 = vxpose.xlu0.b32.cont [5/16] %v369, 128
    %901 = vxpose.xlu0.b32.cont [6/16] %v373, 128
    %902 = vxpose.xlu0.b32.cont [7/16] %v377, 128
    %903 = vxpose.xlu0.b32.cont [8/16] %v381, 128
    %904 = vxpose.xlu0.b32.cont [9/16] %v385, 128
    %905 = vxpose.xlu0.b32.cont [10/16] %v389, 128
    %906 = vxpose.xlu0.b32.cont [11/16] %v393, 128
    %907 = vxpose.xlu0.b32.cont [12/16] %v397, 128
    %908 = vxpose.xlu0.b32.cont [13/16] %v401, 128
    %909 = vxpose.xlu0.b32.cont [14/16] %v405, 128
    %910 = vxpose.xlu0.b32.cont [15/16] %v409, 128
    %911 = vxpose.xlu0.b32.end [16/16] %v413, 128
    %v912 = vpop.trf.xlu0
    %v913 = vpop.trf.xlu0
    %v914 = vpop.trf.xlu0
    %v915 = vpop.trf.xlu0
    %v916 = vpop.trf.xlu0
    %v917 = vpop.trf.xlu0
    %v918 = vpop.trf.xlu0
    %v919 = vpop.trf.xlu0
    %v920 = vpop.trf.xlu0
    %v921 = vpop.trf.xlu0
    %v922 = vpop.trf.xlu0
    %v923 = vpop.trf.xlu0
    %v924 = vpop.trf.xlu0
    %v925 = vpop.trf.xlu0
    %v926 = vpop.trf.xlu0
    %v927 = vpop.trf.xlu0
    %928 = vxpose.xlu0.b32.start [1/16] %v354, 128
    %929 = vxpose.xlu0.b32.cont [2/16] %v358, 128
    %930 = vxpose.xlu0.b32.cont [3/16] %v362, 128
    %931 = vxpose.xlu0.b32.cont [4/16] %v366, 128
    %932 = vxpose.xlu0.b32.cont [5/16] %v370, 128
    %933 = vxpose.xlu0.b32.cont [6/16] %v374, 128
    %934 = vxpose.xlu0.b32.cont [7/16] %v378, 128
    %935 = vxpose.xlu0.b32.cont [8/16] %v382, 128
    %936 = vxpose.xlu0.b32.cont [9/16] %v386, 128
    %937 = vxpose.xlu0.b32.cont [10/16] %v390, 128
    %938 = vxpose.xlu0.b32.cont [11/16] %v394, 128
    %939 = vxpose.xlu0.b32.cont [12/16] %v398, 128
    %940 = vxpose.xlu0.b32.cont [13/16] %v402, 128
    %941 = vxpose.xlu0.b32.cont [14/16] %v406, 128
    %942 = vxpose.xlu0.b32.cont [15/16] %v410, 128
    %943 = vxpose.xlu0.b32.end [16/16] %v414, 128
    %v944 = vpop.trf.xlu0
    %v945 = vpop.trf.xlu0
    %v946 = vpop.trf.xlu0
    %v947 = vpop.trf.xlu0
    %v948 = vpop.trf.xlu0
    %v949 = vpop.trf.xlu0
    %v950 = vpop.trf.xlu0
    %v951 = vpop.trf.xlu0
    %v952 = vpop.trf.xlu0
    %v953 = vpop.trf.xlu0
    %v954 = vpop.trf.xlu0
    %v955 = vpop.trf.xlu0
    %v956 = vpop.trf.xlu0
    %v957 = vpop.trf.xlu0
    %v958 = vpop.trf.xlu0
    %v959 = vpop.trf.xlu0
    %960 = vxpose.xlu0.b32.start [1/16] %v355, 128
    %961 = vxpose.xlu0.b32.cont [2/16] %v359, 128
    %962 = vxpose.xlu0.b32.cont [3/16] %v363, 128
    %963 = vxpose.xlu0.b32.cont [4/16] %v367, 128
    %964 = vxpose.xlu0.b32.cont [5/16] %v371, 128
    %965 = vxpose.xlu0.b32.cont [6/16] %v375, 128
    %966 = vxpose.xlu0.b32.cont [7/16] %v379, 128
    %967 = vxpose.xlu0.b32.cont [8/16] %v383, 128
    %968 = vxpose.xlu0.b32.cont [9/16] %v387, 128
    %969 = vxpose.xlu0.b32.cont [10/16] %v391, 128
    %970 = vxpose.xlu0.b32.cont [11/16] %v395, 128
    %971 = vxpose.xlu0.b32.cont [12/16] %v399, 128
    %972 = vxpose.xlu0.b32.cont [13/16] %v403, 128
    %973 = vxpose.xlu0.b32.cont [14/16] %v407, 128
    %974 = vxpose.xlu0.b32.cont [15/16] %v411, 128
    %975 = vxpose.xlu0.b32.end [16/16] %v415, 128
    %v976 = vpop.trf.xlu0
    %v977 = vpop.trf.xlu0
    %v978 = vpop.trf.xlu0
    %v979 = vpop.trf.xlu0
    %v980 = vpop.trf.xlu0
    %v981 = vpop.trf.xlu0
    %v982 = vpop.trf.xlu0
    %v983 = vpop.trf.xlu0
    %v984 = vpop.trf.xlu0
    %v985 = vpop.trf.xlu0
    %v986 = vpop.trf.xlu0
    %v987 = vpop.trf.xlu0
    %v988 = vpop.trf.xlu0
    %v989 = vpop.trf.xlu0
    %v990 = vpop.trf.xlu0
    %v991 = vpop.trf.xlu0
    %992 = vxpose.xlu0.b32.start [1/16] %v416, 128
    %993 = vxpose.xlu0.b32.cont [2/16] %v420, 128
    %994 = vxpose.xlu0.b32.cont [3/16] %v424, 128
    %995 = vxpose.xlu0.b32.cont [4/16] %v428, 128
    %996 = vxpose.xlu0.b32.cont [5/16] %v432, 128
    %997 = vxpose.xlu0.b32.cont [6/16] %v436, 128
    %998 = vxpose.xlu0.b32.cont [7/16] %v440, 128
    %999 = vxpose.xlu0.b32.cont [8/16] %v444, 128
    %1000 = vxpose.xlu0.b32.cont [9/16] %v448, 128
    %1001 = vxpose.xlu0.b32.cont [10/16] %v452, 128
    %1002 = vxpose.xlu0.b32.cont [11/16] %v456, 128
    %1003 = vxpose.xlu0.b32.cont [12/16] %v460, 128
    %1004 = vxpose.xlu0.b32.cont [13/16] %v464, 128
    %1005 = vxpose.xlu0.b32.cont [14/16] %v468, 128
    %1006 = vxpose.xlu0.b32.cont [15/16] %v472, 128
    %1007 = vxpose.xlu0.b32.end [16/16] %v476, 128
    %v1008 = vpop.trf.xlu0
    %v1009 = vpop.trf.xlu0
    %v1010 = vpop.trf.xlu0
    %v1011 = vpop.trf.xlu0
    %v1012 = vpop.trf.xlu0
    %v1013 = vpop.trf.xlu0
    %v1014 = vpop.trf.xlu0
    %v1015 = vpop.trf.xlu0
    %v1016 = vpop.trf.xlu0
    %v1017 = vpop.trf.xlu0
    %v1018 = vpop.trf.xlu0
    %v1019 = vpop.trf.xlu0
    %v1020 = vpop.trf.xlu0
    %v1021 = vpop.trf.xlu0
    %v1022 = vpop.trf.xlu0
    %v1023 = vpop.trf.xlu0
    %1024 = vxpose.xlu0.b32.start [1/16] %v417, 128
    %1025 = vxpose.xlu0.b32.cont [2/16] %v421, 128
    %1026 = vxpose.xlu0.b32.cont [3/16] %v425, 128
    %1027 = vxpose.xlu0.b32.cont [4/16] %v429, 128
    %1028 = vxpose.xlu0.b32.cont [5/16] %v433, 128
    %1029 = vxpose.xlu0.b32.cont [6/16] %v437, 128
    %1030 = vxpose.xlu0.b32.cont [7/16] %v441, 128
    %1031 = vxpose.xlu0.b32.cont [8/16] %v445, 128
    %1032 = vxpose.xlu0.b32.cont [9/16] %v449, 128
    %1033 = vxpose.xlu0.b32.cont [10/16] %v453, 128
    %1034 = vxpose.xlu0.b32.cont [11/16] %v457, 128
    %1035 = vxpose.xlu0.b32.cont [12/16] %v461, 128
    %1036 = vxpose.xlu0.b32.cont [13/16] %v465, 128
    %1037 = vxpose.xlu0.b32.cont [14/16] %v469, 128
    %1038 = vxpose.xlu0.b32.cont [15/16] %v473, 128
    %1039 = vxpose.xlu0.b32.end [16/16] %v477, 128
    %v1040 = vpop.trf.xlu0
    %v1041 = vpop.trf.xlu0
    %v1042 = vpop.trf.xlu0
    %v1043 = vpop.trf.xlu0
    %v1044 = vpop.trf.xlu0
    %v1045 = vpop.trf.xlu0
    %v1046 = vpop.trf.xlu0
    %v1047 = vpop.trf.xlu0
    %v1048 = vpop.trf.xlu0
    %v1049 = vpop.trf.xlu0
    %v1050 = vpop.trf.xlu0
    %v1051 = vpop.trf.xlu0
    %v1052 = vpop.trf.xlu0
    %v1053 = vpop.trf.xlu0
    %v1054 = vpop.trf.xlu0
    %v1055 = vpop.trf.xlu0
    %1056 = vxpose.xlu0.b32.start [1/16] %v418, 128
    %1057 = vxpose.xlu0.b32.cont [2/16] %v422, 128
    %1058 = vxpose.xlu0.b32.cont [3/16] %v426, 128
    %1059 = vxpose.xlu0.b32.cont [4/16] %v430, 128
    %1060 = vxpose.xlu0.b32.cont [5/16] %v434, 128
    %1061 = vxpose.xlu0.b32.cont [6/16] %v438, 128
    %1062 = vxpose.xlu0.b32.cont [7/16] %v442, 128
    %1063 = vxpose.xlu0.b32.cont [8/16] %v446, 128
    %1064 = vxpose.xlu0.b32.cont [9/16] %v450, 128
    %1065 = vxpose.xlu0.b32.cont [10/16] %v454, 128
    %1066 = vxpose.xlu0.b32.cont [11/16] %v458, 128
    %1067 = vxpose.xlu0.b32.cont [12/16] %v462, 128
    %1068 = vxpose.xlu0.b32.cont [13/16] %v466, 128
    %1069 = vxpose.xlu0.b32.cont [14/16] %v470, 128
    %1070 = vxpose.xlu0.b32.cont [15/16] %v474, 128
    %1071 = vxpose.xlu0.b32.end [16/16] %v478, 128
    %v1072 = vpop.trf.xlu0
    %v1073 = vpop.trf.xlu0
    %v1074 = vpop.trf.xlu0
    %v1075 = vpop.trf.xlu0
    %v1076 = vpop.trf.xlu0
    %v1077 = vpop.trf.xlu0
    %v1078 = vpop.trf.xlu0
    %v1079 = vpop.trf.xlu0
    %v1080 = vpop.trf.xlu0
    %v1081 = vpop.trf.xlu0
    %v1082 = vpop.trf.xlu0
    %v1083 = vpop.trf.xlu0
    %v1084 = vpop.trf.xlu0
    %v1085 = vpop.trf.xlu0
    %v1086 = vpop.trf.xlu0
    %v1087 = vpop.trf.xlu0
    %1088 = vxpose.xlu0.b32.start [1/16] %v419, 128
    %1089 = vxpose.xlu0.b32.cont [2/16] %v423, 128
    %1090 = vxpose.xlu0.b32.cont [3/16] %v427, 128
    %1091 = vxpose.xlu0.b32.cont [4/16] %v431, 128
    %1092 = vxpose.xlu0.b32.cont [5/16] %v435, 128
    %1093 = vxpose.xlu0.b32.cont [6/16] %v439, 128
    %1094 = vxpose.xlu0.b32.cont [7/16] %v443, 128
    %1095 = vxpose.xlu0.b32.cont [8/16] %v447, 128
    %1096 = vxpose.xlu0.b32.cont [9/16] %v451, 128
    %1097 = vxpose.xlu0.b32.cont [10/16] %v455, 128
    %1098 = vxpose.xlu0.b32.cont [11/16] %v459, 128
    %1099 = vxpose.xlu0.b32.cont [12/16] %v463, 128
    %1100 = vxpose.xlu0.b32.cont [13/16] %v467, 128
    %1101 = vxpose.xlu0.b32.cont [14/16] %v471, 128
    %1102 = vxpose.xlu0.b32.cont [15/16] %v475, 128
    %1103 = vxpose.xlu0.b32.end [16/16] %v479, 128
    %v1104 = vpop.trf.xlu0
    %v1105 = vpop.trf.xlu0
    %v1106 = vpop.trf.xlu0
    %v1107 = vpop.trf.xlu0
    %v1108 = vpop.trf.xlu0
    %v1109 = vpop.trf.xlu0
    %v1110 = vpop.trf.xlu0
    %v1111 = vpop.trf.xlu0
    %v1112 = vpop.trf.xlu0
    %v1113 = vpop.trf.xlu0
    %v1114 = vpop.trf.xlu0
    %v1115 = vpop.trf.xlu0
    %v1116 = vpop.trf.xlu0
    %v1117 = vpop.trf.xlu0
    %v1118 = vpop.trf.xlu0
    %v1119 = vpop.trf.xlu0
    %1120 = vmatprep.subr.mxu0 0.0
    %1121 = vmatpush1.msra.mxu0 %v544
    %1122 = vmatprep.subr.mxu0 0.0
    %1123 = vmatpush1.msra.mxu0 %v545
    %1124 = vmatprep.subr.mxu0 0.0
    %1125 = vmatpush1.msra.mxu0 %v546
    %1126 = vmatprep.subr.mxu0 0.0
    %1127 = vmatpush1.msra.mxu0 %v547
    %1128 = vmatprep.subr.mxu0 0.0
    %1129 = vmatpush1.msra.mxu0 %v548
    %1130 = vmatprep.subr.mxu0 0.0
    %1131 = vmatpush1.msra.mxu0 %v549
    %1132 = vmatprep.subr.mxu0 0.0
    %1133 = vmatpush1.msra.mxu0 %v550
    %1134 = vmatprep.subr.mxu0 0.0
    %1135 = vmatpush1.msra.mxu0 %v551
    %1136 = vmatprep.subr.mxu0 0.0
    %1137 = vmatpush1.msra.mxu0 %v552
    %1138 = vmatprep.subr.mxu0 0.0
    %1139 = vmatpush1.msra.mxu0 %v553
    %1140 = vmatprep.subr.mxu0 0.0
    %1141 = vmatpush1.msra.mxu0 %v554
    %1142 = vmatprep.subr.mxu0 0.0
    %1143 = vmatpush1.msra.mxu0 %v555
    %1144 = vmatprep.subr.mxu0 0.0
    %1145 = vmatpush1.msra.mxu0 %v556
    %1146 = vmatprep.subr.mxu0 0.0
    %1147 = vmatpush1.msra.mxu0 %v557
    %1148 = vmatprep.subr.mxu0 0.0
    %1149 = vmatpush1.msra.mxu0 %v558
    %1150 = vmatprep.subr.mxu0 0.0
    %1151 = vmatpush1.msra.mxu0 %v559
    %1152 = vmatprep.subr.mxu0 0.0
    %1153 = vmatpush1.msra.mxu0 %v560
    %1154 = vmatprep.subr.mxu0 0.0
    %1155 = vmatpush1.msra.mxu0 %v561
    %1156 = vmatprep.subr.mxu0 0.0
    %1157 = vmatpush1.msra.mxu0 %v562
    %1158 = vmatprep.subr.mxu0 0.0
    %1159 = vmatpush1.msra.mxu0 %v563
    %1160 = vmatprep.subr.mxu0 0.0
    %1161 = vmatpush1.msra.mxu0 %v564
    %1162 = vmatprep.subr.mxu0 0.0
    %1163 = vmatpush1.msra.mxu0 %v565
    %1164 = vmatprep.subr.mxu0 0.0
    %1165 = vmatpush1.msra.mxu0 %v566
    %1166 = vmatprep.subr.mxu0 0.0
    %1167 = vmatpush1.msra.mxu0 %v567
    %1168 = vmatprep.subr.mxu0 0.0
    %1169 = vmatpush1.msra.mxu0 %v568
    %1170 = vmatprep.subr.mxu0 0.0
    %1171 = vmatpush1.msra.mxu0 %v569
    %1172 = vmatprep.subr.mxu0 0.0
    %1173 = vmatpush1.msra.mxu0 %v570
    %1174 = vmatprep.subr.mxu0 0.0
    %1175 = vmatpush1.msra.mxu0 %v571
    %1176 = vmatprep.subr.mxu0 0.0
    %1177 = vmatpush1.msra.mxu0 %v572
    %1178 = vmatprep.subr.mxu0 0.0
    %1179 = vmatpush1.msra.mxu0 %v573
    %1180 = vmatprep.subr.mxu0 0.0
    %1181 = vmatpush1.msra.mxu0 %v574
    %1182 = vmatprep.subr.mxu0 0.0
    %1183 = vmatpush1.msra.mxu0 %v575
    %1184 = vmatprep.mubr.f32.mxu0 %v752
    %1185 = vmatmul.mubr.f32.gmra.mrb[0].mxu0 %v624
    %v1186 = vpop.f32.mrb[0].mxu0
    %v1187 = vadd.f32 0.0, %v1186
    %v1188 = vpop.f32.mrb[0].mxu0
    %1189 = vmatprep.mubr.f32.mxu0 %v753
    %1190 = vmatmul.mubr.f32.gmra.mrb[0].mxu0 %v625
    %v1191 = vpop.f32.mrb[0].mxu0
    %v1192 = vadd.f32 0.0, %v1191
    %v1193 = vpop.f32.mrb[0].mxu0
    %1194 = vmatprep.mubr.f32.mxu0 %v754
    %1195 = vmatmul.mubr.f32.gmra.mrb[0].mxu0 %v626
    %v1196 = vpop.f32.mrb[0].mxu0
    %v1197 = vadd.f32 0.0, %v1196
    %v1198 = vpop.f32.mrb[0].mxu0
    %1199 = vmatprep.mubr.f32.mxu0 %v755
    %1200 = vmatmul.mubr.f32.gmra.mrb[0].mxu0 %v627
    %v1201 = vpop.f32.mrb[0].mxu0
    %v1202 = vadd.f32 0.0, %v1201
    %v1203 = vpop.f32.mrb[0].mxu0
    %1204 = vmatprep.mubr.f32.mxu0 %v756
    %1205 = vmatmul.mubr.f32.gmra.mrb[0].mxu0 %v628
    %v1206 = vpop.f32.mrb[0].mxu0
    %v1207 = vadd.f32 0.0, %v1206
    %v1208 = vpop.f32.mrb[0].mxu0
    %1209 = vmatprep.mubr.f32.mxu0 %v757
    %1210 = vmatmul.mubr.f32.gmra.mrb[0].mxu0 %v629
    %v1211 = vpop.f32.mrb[0].mxu0
    %v1212 = vadd.f32 0.0, %v1211
    %v1213 = vpop.f32.mrb[0].mxu0
    %1214 = vmatprep.mubr.f32.mxu0 %v758
    %1215 = vmatmul.mubr.f32.gmra.mrb[0].mxu0 %v630
    %v1216 = vpop.f32.mrb[0].mxu0
    %v1217 = vadd.f32 0.0, %v1216
    %v1218 = vpop.f32.mrb[0].mxu0
    %1219 = vmatprep.mubr.f32.mxu0 %v759
    %1220 = vmatmul.mubr.f32.gmra.mrb[0].mxu0 %v631
    %v1221 = vpop.f32.mrb[0].mxu0
    %v1222 = vadd.f32 0.0, %v1221
    %v1223 = vpop.f32.mrb[0].mxu0
    %1224 = vmatprep.mubr.f32.mxu0 %v760
    %1225 = vmatmul.mubr.f32.gmra.mrb[0].mxu0 %v632
    %v1226 = vpop.f32.mrb[0].mxu0
    %v1227 = vadd.f32 0.0, %v1226
    %v1228 = vpop.f32.mrb[0].mxu0
    %1229 = vmatprep.mubr.f32.mxu0 %v761
    %1230 = vmatmul.mubr.f32.gmra.mrb[0].mxu0 %v633
    %v1231 = vpop.f32.mrb[0].mxu0
    %v1232 = vadd.f32 0.0, %v1231
    %v1233 = vpop.f32.mrb[0].mxu0
    %1234 = vmatprep.mubr.f32.mxu0 %v762
    %1235 = vmatmul.mubr.f32.gmra.mrb[0].mxu0 %v634
    %v1236 = vpop.f32.mrb[0].mxu0
    %v1237 = vadd.f32 0.0, %v1236
    %v1238 = vpop.f32.mrb[0].mxu0
    %1239 = vmatprep.mubr.f32.mxu0 %v763
    %1240 = vmatmul.mubr.f32.gmra.mrb[0].mxu0 %v635
    %v1241 = vpop.f32.mrb[0].mxu0
    %v1242 = vadd.f32 0.0, %v1241
    %v1243 = vpop.f32.mrb[0].mxu0
    %1244 = vmatprep.mubr.f32.mxu0 %v764
    %1245 = vmatmul.mubr.f32.gmra.mrb[0].mxu0 %v636
    %v1246 = vpop.f32.mrb[0].mxu0
    %v1247 = vadd.f32 0.0, %v1246
    %v1248 = vpop.f32.mrb[0].mxu0
    %1249 = vmatprep.mubr.f32.mxu0 %v765
    %1250 = vmatmul.mubr.f32.gmra.mrb[0].mxu0 %v637
    %v1251 = vpop.f32.mrb[0].mxu0
    %v1252 = vadd.f32 0.0, %v1251
    %v1253 = vpop.f32.mrb[0].mxu0
    %1254 = vmatprep.mubr.f32.mxu0 %v766
    %1255 = vmatmul.mubr.f32.gmra.mrb[0].mxu0 %v638
    %v1256 = vpop.f32.mrb[0].mxu0
    %v1257 = vadd.f32 0.0, %v1256
    %v1258 = vpop.f32.mrb[0].mxu0
    %1259 = vmatprep.mubr.f32.mxu0 %v767
    %1260 = vmatmul.mubr.f32.gmra.mrb[0].mxu0 %v639
    %v1261 = vpop.f32.mrb[0].mxu0
    %v1262 = vadd.f32 0.0, %v1261
    %v1263 = vpop.f32.mrb[0].mxu0
    %1264 = vmatprep.mubr.f32.mxu0 %v784
    %1265 = vmatmul.mubr.f32.gmra.mrb[0].mxu0 %v656
    %v1266 = vpop.f32.mrb[0].mxu0
    %v1267 = vadd.f32 0.0, %v1266
    %v1268 = vpop.f32.mrb[0].mxu0
    %1269 = vmatprep.mubr.f32.mxu0 %v785
    %1270 = vmatmul.mubr.f32.gmra.mrb[0].mxu0 %v657
    %v1271 = vpop.f32.mrb[0].mxu0
    %v1272 = vadd.f32 0.0, %v1271
    %v1273 = vpop.f32.mrb[0].mxu0
    %1274 = vmatprep.mubr.f32.mxu0 %v786
    %1275 = vmatmul.mubr.f32.gmra.mrb[0].mxu0 %v658
    %v1276 = vpop.f32.mrb[0].mxu0
    %v1277 = vadd.f32 0.0, %v1276
    %v1278 = vpop.f32.mrb[0].mxu0
    %1279 = vmatprep.mubr.f32.mxu0 %v787
    %1280 = vmatmul.mubr.f32.gmra.mrb[0].mxu0 %v659
    %v1281 = vpop.f32.mrb[0].mxu0
    %v1282 = vadd.f32 0.0, %v1281
    %v1283 = vpop.f32.mrb[0].mxu0
    %1284 = vmatprep.mubr.f32.mxu0 %v788
    %1285 = vmatmul.mubr.f32.gmra.mrb[0].mxu0 %v660
    %v1286 = vpop.f32.mrb[0].mxu0
    %v1287 = vadd.f32 0.0, %v1286
    %v1288 = vpop.f32.mrb[0].mxu0
    %1289 = vmatprep.mubr.f32.mxu0 %v789
    %1290 = vmatmul.mubr.f32.gmra.mrb[0].mxu0 %v661
    %v1291 = vpop.f32.mrb[0].mxu0
    %v1292 = vadd.f32 0.0, %v1291
    %v1293 = vpop.f32.mrb[0].mxu0
    %1294 = vmatprep.mubr.f32.mxu0 %v790
    %1295 = vmatmul.mubr.f32.gmra.mrb[0].mxu0 %v662
    %v1296 = vpop.f32.mrb[0].mxu0
    %v1297 = vadd.f32 0.0, %v1296
    %v1298 = vpop.f32.mrb[0].mxu0
    %1299 = vmatprep.mubr.f32.mxu0 %v791
    %1300 = vmatmul.mubr.f32.gmra.mrb[0].mxu0 %v663
    %v1301 = vpop.f32.mrb[0].mxu0
    %v1302 = vadd.f32 0.0, %v1301
    %v1303 = vpop.f32.mrb[0].mxu0
    %1304 = vmatprep.mubr.f32.mxu0 %v792
    %1305 = vmatmul.mubr.f32.gmra.mrb[0].mxu0 %v664
    %v1306 = vpop.f32.mrb[0].mxu0
    %v1307 = vadd.f32 0.0, %v1306
    %v1308 = vpop.f32.mrb[0].mxu0
    %1309 = vmatprep.mubr.f32.mxu0 %v793
    %1310 = vmatmul.mubr.f32.gmra.mrb[0].mxu0 %v665
    %v1311 = vpop.f32.mrb[0].mxu0
    %v1312 = vadd.f32 0.0, %v1311
    %v1313 = vpop.f32.mrb[0].mxu0
    %1314 = vmatprep.mubr.f32.mxu0 %v794
    %1315 = vmatmul.mubr.f32.gmra.mrb[0].mxu0 %v666
    %v1316 = vpop.f32.mrb[0].mxu0
    %v1317 = vadd.f32 0.0, %v1316
    %v1318 = vpop.f32.mrb[0].mxu0
    %1319 = vmatprep.mubr.f32.mxu0 %v795
    %1320 = vmatmul.mubr.f32.gmra.mrb[0].mxu0 %v667
    %v1321 = vpop.f32.mrb[0].mxu0
    %v1322 = vadd.f32 0.0, %v1321
    %v1323 = vpop.f32.mrb[0].mxu0
    %1324 = vmatprep.mubr.f32.mxu0 %v796
    %1325 = vmatmul.mubr.f32.gmra.mrb[0].mxu0 %v668
    %v1326 = vpop.f32.mrb[0].mxu0
    %v1327 = vadd.f32 0.0, %v1326
    %v1328 = vpop.f32.mrb[0].mxu0
    %1329 = vmatprep.mubr.f32.mxu0 %v797
    %1330 = vmatmul.mubr.f32.gmra.mrb[0].mxu0 %v669
    %v1331 = vpop.f32.mrb[0].mxu0
    %v1332 = vadd.f32 0.0, %v1331
    %v1333 = vpop.f32.mrb[0].mxu0
    %1334 = vmatprep.mubr.f32.mxu0 %v798
    %1335 = vmatmul.mubr.f32.gmra.mrb[0].mxu0 %v670
    %v1336 = vpop.f32.mrb[0].mxu0
    %v1337 = vadd.f32 0.0, %v1336
    %v1338 = vpop.f32.mrb[0].mxu0
    %1339 = vmatprep.mubr.f32.mxu0 %v799
    %1340 = vmatmul.mubr.f32.gmra.mrb[0].mxu0 %v671
    %v1341 = vpop.f32.mrb[0].mxu0
    %v1342 = vadd.f32 0.0, %v1341
    %v1343 = vpop.f32.mrb[0].mxu0
    %1344 = vmatprep.mubr.f32.mxu0 %v816
    %1345 = vmatmul.mubr.f32.gmra.mrb[0].mxu0 %v688
    %v1346 = vpop.f32.mrb[0].mxu0
    %v1347 = vadd.f32 0.0, %v1346
    %v1348 = vpop.f32.mrb[0].mxu0
    %1349 = vmatprep.mubr.f32.mxu0 %v817
    %1350 = vmatmul.mubr.f32.gmra.mrb[0].mxu0 %v689
    %v1351 = vpop.f32.mrb[0].mxu0
    %v1352 = vadd.f32 0.0, %v1351
    %v1353 = vpop.f32.mrb[0].mxu0
    %1354 = vmatprep.mubr.f32.mxu0 %v818
    %1355 = vmatmul.mubr.f32.gmra.mrb[0].mxu0 %v690
    %v1356 = vpop.f32.mrb[0].mxu0
    %v1357 = vadd.f32 0.0, %v1356
    %v1358 = vpop.f32.mrb[0].mxu0
    %1359 = vmatprep.mubr.f32.mxu0 %v819
    %1360 = vmatmul.mubr.f32.gmra.mrb[0].mxu0 %v691
    %v1361 = vpop.f32.mrb[0].mxu0
    %v1362 = vadd.f32 0.0, %v1361
    %v1363 = vpop.f32.mrb[0].mxu0
    %1364 = vmatprep.mubr.f32.mxu0 %v820
    %1365 = vmatmul.mubr.f32.gmra.mrb[0].mxu0 %v692
    %v1366 = vpop.f32.mrb[0].mxu0
    %v1367 = vadd.f32 0.0, %v1366
    %v1368 = vpop.f32.mrb[0].mxu0
    %1369 = vmatprep.mubr.f32.mxu0 %v821
    %1370 = vmatmul.mubr.f32.gmra.mrb[0].mxu0 %v693
    %v1371 = vpop.f32.mrb[0].mxu0
    %v1372 = vadd.f32 0.0, %v1371
    %v1373 = vpop.f32.mrb[0].mxu0
    %1374 = vmatprep.mubr.f32.mxu0 %v822
    %1375 = vmatmul.mubr.f32.gmra.mrb[0].mxu0 %v694
    %v1376 = vpop.f32.mrb[0].mxu0
    %v1377 = vadd.f32 0.0, %v1376
    %v1378 = vpop.f32.mrb[0].mxu0
    %1379 = vmatprep.mubr.f32.mxu0 %v823
    %1380 = vmatmul.mubr.f32.gmra.mrb[0].mxu0 %v695
    %v1381 = vpop.f32.mrb[0].mxu0
    %v1382 = vadd.f32 0.0, %v1381
    %v1383 = vpop.f32.mrb[0].mxu0
    %1384 = vmatprep.mubr.f32.mxu0 %v824
    %1385 = vmatmul.mubr.f32.gmra.mrb[0].mxu0 %v696
    %v1386 = vpop.f32.mrb[0].mxu0
    %v1387 = vadd.f32 0.0, %v1386
    %v1388 = vpop.f32.mrb[0].mxu0
    %1389 = vmatprep.mubr.f32.mxu0 %v825
    %1390 = vmatmul.mubr.f32.gmra.mrb[0].mxu0 %v697
    %v1391 = vpop.f32.mrb[0].mxu0
    %v1392 = vadd.f32 0.0, %v1391
    %v1393 = vpop.f32.mrb[0].mxu0
    %1394 = vmatprep.mubr.f32.mxu0 %v826
    %1395 = vmatmul.mubr.f32.gmra.mrb[0].mxu0 %v698
    %v1396 = vpop.f32.mrb[0].mxu0
    %v1397 = vadd.f32 0.0, %v1396
    %v1398 = vpop.f32.mrb[0].mxu0
    %1399 = vmatprep.mubr.f32.mxu0 %v827
    %1400 = vmatmul.mubr.f32.gmra.mrb[0].mxu0 %v699
    %v1401 = vpop.f32.mrb[0].mxu0
    %v1402 = vadd.f32 0.0, %v1401
    %v1403 = vpop.f32.mrb[0].mxu0
    %1404 = vmatprep.mubr.f32.mxu0 %v828
    %1405 = vmatmul.mubr.f32.gmra.mrb[0].mxu0 %v700
    %v1406 = vpop.f32.mrb[0].mxu0
    %v1407 = vadd.f32 0.0, %v1406
    %v1408 = vpop.f32.mrb[0].mxu0
    %1409 = vmatprep.mubr.f32.mxu0 %v829
    %1410 = vmatmul.mubr.f32.gmra.mrb[0].mxu0 %v701
    %v1411 = vpop.f32.mrb[0].mxu0
    %v1412 = vadd.f32 0.0, %v1411
    %v1413 = vpop.f32.mrb[0].mxu0
    %1414 = vmatprep.mubr.f32.mxu0 %v830
    %1415 = vmatmul.mubr.f32.gmra.mrb[0].mxu0 %v702
    %v1416 = vpop.f32.mrb[0].mxu0
    %v1417 = vadd.f32 0.0, %v1416
    %v1418 = vpop.f32.mrb[0].mxu0
    %1419 = vmatprep.mubr.f32.mxu0 %v831
    %1420 = vmatmul.mubr.f32.gmra.mrb[0].mxu0 %v703
    %v1421 = vpop.f32.mrb[0].mxu0
    %v1422 = vadd.f32 0.0, %v1421
    %v1423 = vpop.f32.mrb[0].mxu0
    %1424 = vmatprep.mubr.f32.mxu0 %v848
    %1425 = vmatmul.mubr.f32.gmra.mrb[0].mxu0 %v720
    %v1426 = vpop.f32.mrb[0].mxu0
    %v1427 = vadd.f32 0.0, %v1426
    %v1428 = vpop.f32.mrb[0].mxu0
    %1429 = vmatprep.mubr.f32.mxu0 %v849
    %1430 = vmatmul.mubr.f32.gmra.mrb[0].mxu0 %v721
    %v1431 = vpop.f32.mrb[0].mxu0
    %v1432 = vadd.f32 0.0, %v1431
    %v1433 = vpop.f32.mrb[0].mxu0
    %1434 = vmatprep.mubr.f32.mxu0 %v850
    %1435 = vmatmul.mubr.f32.gmra.mrb[0].mxu0 %v722
    %v1436 = vpop.f32.mrb[0].mxu0
    %v1437 = vadd.f32 0.0, %v1436
    %v1438 = vpop.f32.mrb[0].mxu0
    %1439 = vmatprep.mubr.f32.mxu0 %v851
    %1440 = vmatmul.mubr.f32.gmra.mrb[0].mxu0 %v723
    %v1441 = vpop.f32.mrb[0].mxu0
    %v1442 = vadd.f32 0.0, %v1441
    %v1443 = vpop.f32.mrb[0].mxu0
    %1444 = vmatprep.mubr.f32.mxu0 %v852
    %1445 = vmatmul.mubr.f32.gmra.mrb[0].mxu0 %v724
    %v1446 = vpop.f32.mrb[0].mxu0
    %v1447 = vadd.f32 0.0, %v1446
    %v1448 = vpop.f32.mrb[0].mxu0
    %1449 = vmatprep.mubr.f32.mxu0 %v853
    %1450 = vmatmul.mubr.f32.gmra.mrb[0].mxu0 %v725
    %v1451 = vpop.f32.mrb[0].mxu0
    %v1452 = vadd.f32 0.0, %v1451
    %v1453 = vpop.f32.mrb[0].mxu0
    %1454 = vmatprep.mubr.f32.mxu0 %v854
    %1455 = vmatmul.mubr.f32.gmra.mrb[0].mxu0 %v726
    %v1456 = vpop.f32.mrb[0].mxu0
    %v1457 = vadd.f32 0.0, %v1456
    %v1458 = vpop.f32.mrb[0].mxu0
    %1459 = vmatprep.mubr.f32.mxu0 %v855
    %1460 = vmatmul.mubr.f32.gmra.mrb[0].mxu0 %v727
    %v1461 = vpop.f32.mrb[0].mxu0
    %v1462 = vadd.f32 0.0, %v1461
    %v1463 = vpop.f32.mrb[0].mxu0
    %1464 = vmatprep.mubr.f32.mxu0 %v856
    %1465 = vmatmul.mubr.f32.gmra.mrb[0].mxu0 %v728
    %v1466 = vpop.f32.mrb[0].mxu0
    %v1467 = vadd.f32 0.0, %v1466
    %v1468 = vpop.f32.mrb[0].mxu0
    %1469 = vmatprep.mubr.f32.mxu0 %v857
    %1470 = vmatmul.mubr.f32.gmra.mrb[0].mxu0 %v729
    %v1471 = vpop.f32.mrb[0].mxu0
    %v1472 = vadd.f32 0.0, %v1471
    %v1473 = vpop.f32.mrb[0].mxu0
    %1474 = vmatprep.mubr.f32.mxu0 %v858
    %1475 = vmatmul.mubr.f32.gmra.mrb[0].mxu0 %v730
    %v1476 = vpop.f32.mrb[0].mxu0
    %v1477 = vadd.f32 0.0, %v1476
    %v1478 = vpop.f32.mrb[0].mxu0
    %1479 = vmatprep.mubr.f32.mxu0 %v859
    %1480 = vmatmul.mubr.f32.gmra.mrb[0].mxu0 %v731
    %v1481 = vpop.f32.mrb[0].mxu0
    %v1482 = vadd.f32 0.0, %v1481
    %v1483 = vpop.f32.mrb[0].mxu0
    %1484 = vmatprep.mubr.f32.mxu0 %v860
    %1485 = vmatmul.mubr.f32.gmra.mrb[0].mxu0 %v732
    %v1486 = vpop.f32.mrb[0].mxu0
    %v1487 = vadd.f32 0.0, %v1486
    %v1488 = vpop.f32.mrb[0].mxu0
    %1489 = vmatprep.mubr.f32.mxu0 %v861
    %1490 = vmatmul.mubr.f32.gmra.mrb[0].mxu0 %v733
    %v1491 = vpop.f32.mrb[0].mxu0
    %v1492 = vadd.f32 0.0, %v1491
    %v1493 = vpop.f32.mrb[0].mxu0
    %1494 = vmatprep.mubr.f32.mxu0 %v862
    %1495 = vmatmul.mubr.f32.gmra.mrb[0].mxu0 %v734
    %v1496 = vpop.f32.mrb[0].mxu0
    %v1497 = vadd.f32 0.0, %v1496
    %v1498 = vpop.f32.mrb[0].mxu0
    %1499 = vmatprep.mubr.f32.mxu0 %v863
    %1500 = vmatmul.mubr.f32.gmra.mrb[0].mxu0 %v735
    %v1501 = vpop.f32.mrb[0].mxu0
    %v1502 = vadd.f32 0.0, %v1501
    %v1503 = vpop.f32.mrb[0].mxu0
    %1504 = vdwg.mxu0
    %1505 = vmatprep.subr.mxu0 0.0
    %1506 = vmatpush1.msra.mxu0 %v576
    %1507 = vmatprep.subr.mxu0 0.0
    %1508 = vmatpush1.msra.mxu0 %v577
    %1509 = vmatprep.subr.mxu0 0.0
    %1510 = vmatpush1.msra.mxu0 %v578
    %1511 = vmatprep.subr.mxu0 0.0
    %1512 = vmatpush1.msra.mxu0 %v579
    %1513 = vmatprep.subr.mxu0 0.0
    %1514 = vmatpush1.msra.mxu0 %v580
    %1515 = vmatprep.subr.mxu0 0.0
    %1516 = vmatpush1.msra.mxu0 %v581
    %1517 = vmatprep.subr.mxu0 0.0
    %1518 = vmatpush1.msra.mxu0 %v582
    %1519 = vmatprep.subr.mxu0 0.0
    %1520 = vmatpush1.msra.mxu0 %v583
    %1521 = vmatprep.subr.mxu0 0.0
    %1522 = vmatpush1.msra.mxu0 %v584
    %1523 = vmatprep.subr.mxu0 0.0
    %1524 = vmatpush1.msra.mxu0 %v585
    %1525 = vmatprep.subr.mxu0 0.0
    %1526 = vmatpush1.msra.mxu0 %v586
    %1527 = vmatprep.subr.mxu0 0.0
    %1528 = vmatpush1.msra.mxu0 %v587
    %1529 = vmatprep.subr.mxu0 0.0
    %1530 = vmatpush1.msra.mxu0 %v588
    %1531 = vmatprep.subr.mxu0 0.0
    %1532 = vmatpush1.msra.mxu0 %v589
    %1533 = vmatprep.subr.mxu0 0.0
    %1534 = vmatpush1.msra.mxu0 %v590
    %1535 = vmatprep.subr.mxu0 0.0
    %1536 = vmatpush1.msra.mxu0 %v591
    %1537 = vmatprep.subr.mxu0 0.0
    %1538 = vmatpush1.msra.mxu0 %v592
    %1539 = vmatprep.subr.mxu0 0.0
    %1540 = vmatpush1.msra.mxu0 %v593
    %1541 = vmatprep.subr.mxu0 0.0
    %1542 = vmatpush1.msra.mxu0 %v594
    %1543 = vmatprep.subr.mxu0 0.0
    %1544 = vmatpush1.msra.mxu0 %v595
    %1545 = vmatprep.subr.mxu0 0.0
    %1546 = vmatpush1.msra.mxu0 %v596
    %1547 = vmatprep.subr.mxu0 0.0
    %1548 = vmatpush1.msra.mxu0 %v597
    %1549 = vmatprep.subr.mxu0 0.0
    %1550 = vmatpush1.msra.mxu0 %v598
    %1551 = vmatprep.subr.mxu0 0.0
    %1552 = vmatpush1.msra.mxu0 %v599
    %1553 = vmatprep.subr.mxu0 0.0
    %1554 = vmatpush1.msra.mxu0 %v600
    %1555 = vmatprep.subr.mxu0 0.0
    %1556 = vmatpush1.msra.mxu0 %v601
    %1557 = vmatprep.subr.mxu0 0.0
    %1558 = vmatpush1.msra.mxu0 %v602
    %1559 = vmatprep.subr.mxu0 0.0
    %1560 = vmatpush1.msra.mxu0 %v603
    %1561 = vmatprep.subr.mxu0 0.0
    %1562 = vmatpush1.msra.mxu0 %v604
    %1563 = vmatprep.subr.mxu0 0.0
    %1564 = vmatpush1.msra.mxu0 %v605
    %1565 = vmatprep.subr.mxu0 0.0
    %1566 = vmatpush1.msra.mxu0 %v606
    %1567 = vmatprep.subr.mxu0 0.0
    %1568 = vmatpush1.msra.mxu0 %v607
    %1569 = vmatprep.mubr.f32.mxu0 %v1008
    %1570 = vmatmul.mubr.f32.gmra.mrb[0].mxu0 %v880
    %v1571 = vpop.f32.mrb[0].mxu0
    %v1572 = vadd.f32 %v1187, %v1571
    %v1573 = vpop.f32.mrb[0].mxu0
    %1574 = vmatprep.mubr.f32.mxu0 %v1009
    %1575 = vmatmul.mubr.f32.gmra.mrb[0].mxu0 %v881
    %v1576 = vpop.f32.mrb[0].mxu0
    %v1577 = vadd.f32 %v1192, %v1576
    %v1578 = vpop.f32.mrb[0].mxu0
    %1579 = vmatprep.mubr.f32.mxu0 %v1010
    %1580 = vmatmul.mubr.f32.gmra.mrb[0].mxu0 %v882
    %v1581 = vpop.f32.mrb[0].mxu0
    %v1582 = vadd.f32 %v1197, %v1581
    %v1583 = vpop.f32.mrb[0].mxu0
    %1584 = vmatprep.mubr.f32.mxu0 %v1011
    %1585 = vmatmul.mubr.f32.gmra.mrb[0].mxu0 %v883
    %v1586 = vpop.f32.mrb[0].mxu0
    %v1587 = vadd.f32 %v1202, %v1586
    %v1588 = vpop.f32.mrb[0].mxu0
    %1589 = vmatprep.mubr.f32.mxu0 %v1012
    %1590 = vmatmul.mubr.f32.gmra.mrb[0].mxu0 %v884
    %v1591 = vpop.f32.mrb[0].mxu0
    %v1592 = vadd.f32 %v1207, %v1591
    %v1593 = vpop.f32.mrb[0].mxu0
    %1594 = vmatprep.mubr.f32.mxu0 %v1013
    %1595 = vmatmul.mubr.f32.gmra.mrb[0].mxu0 %v885
    %v1596 = vpop.f32.mrb[0].mxu0
    %v1597 = vadd.f32 %v1212, %v1596
    %v1598 = vpop.f32.mrb[0].mxu0
    %1599 = vmatprep.mubr.f32.mxu0 %v1014
    %1600 = vmatmul.mubr.f32.gmra.mrb[0].mxu0 %v886
    %v1601 = vpop.f32.mrb[0].mxu0
    %v1602 = vadd.f32 %v1217, %v1601
    %v1603 = vpop.f32.mrb[0].mxu0
    %1604 = vmatprep.mubr.f32.mxu0 %v1015
    %1605 = vmatmul.mubr.f32.gmra.mrb[0].mxu0 %v887
    %v1606 = vpop.f32.mrb[0].mxu0
    %v1607 = vadd.f32 %v1222, %v1606
    %v1608 = vpop.f32.mrb[0].mxu0
    %1609 = vmatprep.mubr.f32.mxu0 %v1016
    %1610 = vmatmul.mubr.f32.gmra.mrb[0].mxu0 %v888
    %v1611 = vpop.f32.mrb[0].mxu0
    %v1612 = vadd.f32 %v1227, %v1611
    %v1613 = vpop.f32.mrb[0].mxu0
    %1614 = vmatprep.mubr.f32.mxu0 %v1017
    %1615 = vmatmul.mubr.f32.gmra.mrb[0].mxu0 %v889
    %v1616 = vpop.f32.mrb[0].mxu0
    %v1617 = vadd.f32 %v1232, %v1616
    %v1618 = vpop.f32.mrb[0].mxu0
    %1619 = vmatprep.mubr.f32.mxu0 %v1018
    %1620 = vmatmul.mubr.f32.gmra.mrb[0].mxu0 %v890
    %v1621 = vpop.f32.mrb[0].mxu0
    %v1622 = vadd.f32 %v1237, %v1621
    %v1623 = vpop.f32.mrb[0].mxu0
    %1624 = vmatprep.mubr.f32.mxu0 %v1019
    %1625 = vmatmul.mubr.f32.gmra.mrb[0].mxu0 %v891
    %v1626 = vpop.f32.mrb[0].mxu0
    %v1627 = vadd.f32 %v1242, %v1626
    %v1628 = vpop.f32.mrb[0].mxu0
    %1629 = vmatprep.mubr.f32.mxu0 %v1020
    %1630 = vmatmul.mubr.f32.gmra.mrb[0].mxu0 %v892
    %v1631 = vpop.f32.mrb[0].mxu0
    %v1632 = vadd.f32 %v1247, %v1631
    %v1633 = vpop.f32.mrb[0].mxu0
    %1634 = vmatprep.mubr.f32.mxu0 %v1021
    %1635 = vmatmul.mubr.f32.gmra.mrb[0].mxu0 %v893
    %v1636 = vpop.f32.mrb[0].mxu0
    %v1637 = vadd.f32 %v1252, %v1636
    %v1638 = vpop.f32.mrb[0].mxu0
    %1639 = vmatprep.mubr.f32.mxu0 %v1022
    %1640 = vmatmul.mubr.f32.gmra.mrb[0].mxu0 %v894
    %v1641 = vpop.f32.mrb[0].mxu0
    %v1642 = vadd.f32 %v1257, %v1641
    %v1643 = vpop.f32.mrb[0].mxu0
    %1644 = vmatprep.mubr.f32.mxu0 %v1023
    %1645 = vmatmul.mubr.f32.gmra.mrb[0].mxu0 %v895
    %v1646 = vpop.f32.mrb[0].mxu0
    %v1647 = vadd.f32 %v1262, %v1646
    %v1648 = vpop.f32.mrb[0].mxu0
    %1649 = vmatprep.mubr.f32.mxu0 %v1040
    %1650 = vmatmul.mubr.f32.gmra.mrb[0].mxu0 %v912
    %v1651 = vpop.f32.mrb[0].mxu0
    %v1652 = vadd.f32 %v1267, %v1651
    %v1653 = vpop.f32.mrb[0].mxu0
    %1654 = vmatprep.mubr.f32.mxu0 %v1041
    %1655 = vmatmul.mubr.f32.gmra.mrb[0].mxu0 %v913
    %v1656 = vpop.f32.mrb[0].mxu0
    %v1657 = vadd.f32 %v1272, %v1656
    %v1658 = vpop.f32.mrb[0].mxu0
    %1659 = vmatprep.mubr.f32.mxu0 %v1042
    %1660 = vmatmul.mubr.f32.gmra.mrb[0].mxu0 %v914
    %v1661 = vpop.f32.mrb[0].mxu0
    %v1662 = vadd.f32 %v1277, %v1661
    %v1663 = vpop.f32.mrb[0].mxu0
    %1664 = vmatprep.mubr.f32.mxu0 %v1043
    %1665 = vmatmul.mubr.f32.gmra.mrb[0].mxu0 %v915
    %v1666 = vpop.f32.mrb[0].mxu0
    %v1667 = vadd.f32 %v1282, %v1666
    %v1668 = vpop.f32.mrb[0].mxu0
    %1669 = vmatprep.mubr.f32.mxu0 %v1044
    %1670 = vmatmul.mubr.f32.gmra.mrb[0].mxu0 %v916
    %v1671 = vpop.f32.mrb[0].mxu0
    %v1672 = vadd.f32 %v1287, %v1671
    %v1673 = vpop.f32.mrb[0].mxu0
    %1674 = vmatprep.mubr.f32.mxu0 %v1045
    %1675 = vmatmul.mubr.f32.gmra.mrb[0].mxu0 %v917
    %v1676 = vpop.f32.mrb[0].mxu0
    %v1677 = vadd.f32 %v1292, %v1676
    %v1678 = vpop.f32.mrb[0].mxu0
    %1679 = vmatprep.mubr.f32.mxu0 %v1046
    %1680 = vmatmul.mubr.f32.gmra.mrb[0].mxu0 %v918
    %v1681 = vpop.f32.mrb[0].mxu0
    %v1682 = vadd.f32 %v1297, %v1681
    %v1683 = vpop.f32.mrb[0].mxu0
    %1684 = vmatprep.mubr.f32.mxu0 %v1047
    %1685 = vmatmul.mubr.f32.gmra.mrb[0].mxu0 %v919
    %v1686 = vpop.f32.mrb[0].mxu0
    %v1687 = vadd.f32 %v1302, %v1686
    %v1688 = vpop.f32.mrb[0].mxu0
    %1689 = vmatprep.mubr.f32.mxu0 %v1048
    %1690 = vmatmul.mubr.f32.gmra.mrb[0].mxu0 %v920
    %v1691 = vpop.f32.mrb[0].mxu0
    %v1692 = vadd.f32 %v1307, %v1691
    %v1693 = vpop.f32.mrb[0].mxu0
    %1694 = vmatprep.mubr.f32.mxu0 %v1049
    %1695 = vmatmul.mubr.f32.gmra.mrb[0].mxu0 %v921
    %v1696 = vpop.f32.mrb[0].mxu0
    %v1697 = vadd.f32 %v1312, %v1696
    %v1698 = vpop.f32.mrb[0].mxu0
    %1699 = vmatprep.mubr.f32.mxu0 %v1050
    %1700 = vmatmul.mubr.f32.gmra.mrb[0].mxu0 %v922
    %v1701 = vpop.f32.mrb[0].mxu0
    %v1702 = vadd.f32 %v1317, %v1701
    %v1703 = vpop.f32.mrb[0].mxu0
    %1704 = vmatprep.mubr.f32.mxu0 %v1051
    %1705 = vmatmul.mubr.f32.gmra.mrb[0].mxu0 %v923
    %v1706 = vpop.f32.mrb[0].mxu0
    %v1707 = vadd.f32 %v1322, %v1706
    %v1708 = vpop.f32.mrb[0].mxu0
    %1709 = vmatprep.mubr.f32.mxu0 %v1052
    %1710 = vmatmul.mubr.f32.gmra.mrb[0].mxu0 %v924
    %v1711 = vpop.f32.mrb[0].mxu0
    %v1712 = vadd.f32 %v1327, %v1711
    %v1713 = vpop.f32.mrb[0].mxu0
    %1714 = vmatprep.mubr.f32.mxu0 %v1053
    %1715 = vmatmul.mubr.f32.gmra.mrb[0].mxu0 %v925
    %v1716 = vpop.f32.mrb[0].mxu0
    %v1717 = vadd.f32 %v1332, %v1716
    %v1718 = vpop.f32.mrb[0].mxu0
    %1719 = vmatprep.mubr.f32.mxu0 %v1054
    %1720 = vmatmul.mubr.f32.gmra.mrb[0].mxu0 %v926
    %v1721 = vpop.f32.mrb[0].mxu0
    %v1722 = vadd.f32 %v1337, %v1721
    %v1723 = vpop.f32.mrb[0].mxu0
    %1724 = vmatprep.mubr.f32.mxu0 %v1055
    %1725 = vmatmul.mubr.f32.gmra.mrb[0].mxu0 %v927
    %v1726 = vpop.f32.mrb[0].mxu0
    %v1727 = vadd.f32 %v1342, %v1726
    %v1728 = vpop.f32.mrb[0].mxu0
    %1729 = vmatprep.mubr.f32.mxu0 %v1072
    %1730 = vmatmul.mubr.f32.gmra.mrb[0].mxu0 %v944
    %v1731 = vpop.f32.mrb[0].mxu0
    %v1732 = vadd.f32 %v1347, %v1731
    %v1733 = vpop.f32.mrb[0].mxu0
    %1734 = vmatprep.mubr.f32.mxu0 %v1073
    %1735 = vmatmul.mubr.f32.gmra.mrb[0].mxu0 %v945
    %v1736 = vpop.f32.mrb[0].mxu0
    %v1737 = vadd.f32 %v1352, %v1736
    %v1738 = vpop.f32.mrb[0].mxu0
    %1739 = vmatprep.mubr.f32.mxu0 %v1074
    %1740 = vmatmul.mubr.f32.gmra.mrb[0].mxu0 %v946
    %v1741 = vpop.f32.mrb[0].mxu0
    %v1742 = vadd.f32 %v1357, %v1741
    %v1743 = vpop.f32.mrb[0].mxu0
    %1744 = vmatprep.mubr.f32.mxu0 %v1075
    %1745 = vmatmul.mubr.f32.gmra.mrb[0].mxu0 %v947
    %v1746 = vpop.f32.mrb[0].mxu0
    %v1747 = vadd.f32 %v1362, %v1746
    %v1748 = vpop.f32.mrb[0].mxu0
    %1749 = vmatprep.mubr.f32.mxu0 %v1076
    %1750 = vmatmul.mubr.f32.gmra.mrb[0].mxu0 %v948
    %v1751 = vpop.f32.mrb[0].mxu0
    %v1752 = vadd.f32 %v1367, %v1751
    %v1753 = vpop.f32.mrb[0].mxu0
    %1754 = vmatprep.mubr.f32.mxu0 %v1077
    %1755 = vmatmul.mubr.f32.gmra.mrb[0].mxu0 %v949
    %v1756 = vpop.f32.mrb[0].mxu0
    %v1757 = vadd.f32 %v1372, %v1756
    %v1758 = vpop.f32.mrb[0].mxu0
    %1759 = vmatprep.mubr.f32.mxu0 %v1078
    %1760 = vmatmul.mubr.f32.gmra.mrb[0].mxu0 %v950
    %v1761 = vpop.f32.mrb[0].mxu0
    %v1762 = vadd.f32 %v1377, %v1761
    %v1763 = vpop.f32.mrb[0].mxu0
    %1764 = vmatprep.mubr.f32.mxu0 %v1079
    %1765 = vmatmul.mubr.f32.gmra.mrb[0].mxu0 %v951
    %v1766 = vpop.f32.mrb[0].mxu0
    %v1767 = vadd.f32 %v1382, %v1766
    %v1768 = vpop.f32.mrb[0].mxu0
    %1769 = vmatprep.mubr.f32.mxu0 %v1080
    %1770 = vmatmul.mubr.f32.gmra.mrb[0].mxu0 %v952
    %v1771 = vpop.f32.mrb[0].mxu0
    %v1772 = vadd.f32 %v1387, %v1771
    %v1773 = vpop.f32.mrb[0].mxu0
    %1774 = vmatprep.mubr.f32.mxu0 %v1081
    %1775 = vmatmul.mubr.f32.gmra.mrb[0].mxu0 %v953
    %v1776 = vpop.f32.mrb[0].mxu0
    %v1777 = vadd.f32 %v1392, %v1776
    %v1778 = vpop.f32.mrb[0].mxu0
    %1779 = vmatprep.mubr.f32.mxu0 %v1082
    %1780 = vmatmul.mubr.f32.gmra.mrb[0].mxu0 %v954
    %v1781 = vpop.f32.mrb[0].mxu0
    %v1782 = vadd.f32 %v1397, %v1781
    %v1783 = vpop.f32.mrb[0].mxu0
    %1784 = vmatprep.mubr.f32.mxu0 %v1083
    %1785 = vmatmul.mubr.f32.gmra.mrb[0].mxu0 %v955
    %v1786 = vpop.f32.mrb[0].mxu0
    %v1787 = vadd.f32 %v1402, %v1786
    %v1788 = vpop.f32.mrb[0].mxu0
    %1789 = vmatprep.mubr.f32.mxu0 %v1084
    %1790 = vmatmul.mubr.f32.gmra.mrb[0].mxu0 %v956
    %v1791 = vpop.f32.mrb[0].mxu0
    %v1792 = vadd.f32 %v1407, %v1791
    %v1793 = vpop.f32.mrb[0].mxu0
    %1794 = vmatprep.mubr.f32.mxu0 %v1085
    %1795 = vmatmul.mubr.f32.gmra.mrb[0].mxu0 %v957
    %v1796 = vpop.f32.mrb[0].mxu0
    %v1797 = vadd.f32 %v1412, %v1796
    %v1798 = vpop.f32.mrb[0].mxu0
    %1799 = vmatprep.mubr.f32.mxu0 %v1086
    %1800 = vmatmul.mubr.f32.gmra.mrb[0].mxu0 %v958
    %v1801 = vpop.f32.mrb[0].mxu0
    %v1802 = vadd.f32 %v1417, %v1801
    %v1803 = vpop.f32.mrb[0].mxu0
    %1804 = vmatprep.mubr.f32.mxu0 %v1087
    %1805 = vmatmul.mubr.f32.gmra.mrb[0].mxu0 %v959
    %v1806 = vpop.f32.mrb[0].mxu0
    %v1807 = vadd.f32 %v1422, %v1806
    %v1808 = vpop.f32.mrb[0].mxu0
    %1809 = vmatprep.mubr.f32.mxu0 %v1104
    %1810 = vmatmul.mubr.f32.gmra.mrb[0].mxu0 %v976
    %v1811 = vpop.f32.mrb[0].mxu0
    %v1812 = vadd.f32 %v1427, %v1811
    %v1813 = vpop.f32.mrb[0].mxu0
    %1814 = vmatprep.mubr.f32.mxu0 %v1105
    %1815 = vmatmul.mubr.f32.gmra.mrb[0].mxu0 %v977
    %v1816 = vpop.f32.mrb[0].mxu0
    %v1817 = vadd.f32 %v1432, %v1816
    %v1818 = vpop.f32.mrb[0].mxu0
    %1819 = vmatprep.mubr.f32.mxu0 %v1106
    %1820 = vmatmul.mubr.f32.gmra.mrb[0].mxu0 %v978
    %v1821 = vpop.f32.mrb[0].mxu0
    %v1822 = vadd.f32 %v1437, %v1821
    %v1823 = vpop.f32.mrb[0].mxu0
    %1824 = vmatprep.mubr.f32.mxu0 %v1107
    %1825 = vmatmul.mubr.f32.gmra.mrb[0].mxu0 %v979
    %v1826 = vpop.f32.mrb[0].mxu0
    %v1827 = vadd.f32 %v1442, %v1826
    %v1828 = vpop.f32.mrb[0].mxu0
    %1829 = vmatprep.mubr.f32.mxu0 %v1108
    %1830 = vmatmul.mubr.f32.gmra.mrb[0].mxu0 %v980
    %v1831 = vpop.f32.mrb[0].mxu0
    %v1832 = vadd.f32 %v1447, %v1831
    %v1833 = vpop.f32.mrb[0].mxu0
    %1834 = vmatprep.mubr.f32.mxu0 %v1109
    %1835 = vmatmul.mubr.f32.gmra.mrb[0].mxu0 %v981
    %v1836 = vpop.f32.mrb[0].mxu0
    %v1837 = vadd.f32 %v1452, %v1836
    %v1838 = vpop.f32.mrb[0].mxu0
    %1839 = vmatprep.mubr.f32.mxu0 %v1110
    %1840 = vmatmul.mubr.f32.gmra.mrb[0].mxu0 %v982
    %v1841 = vpop.f32.mrb[0].mxu0
    %v1842 = vadd.f32 %v1457, %v1841
    %v1843 = vpop.f32.mrb[0].mxu0
    %1844 = vmatprep.mubr.f32.mxu0 %v1111
    %1845 = vmatmul.mubr.f32.gmra.mrb[0].mxu0 %v983
    %v1846 = vpop.f32.mrb[0].mxu0
    %v1847 = vadd.f32 %v1462, %v1846
    %v1848 = vpop.f32.mrb[0].mxu0
    %1849 = vmatprep.mubr.f32.mxu0 %v1112
    %1850 = vmatmul.mubr.f32.gmra.mrb[0].mxu0 %v984
    %v1851 = vpop.f32.mrb[0].mxu0
    %v1852 = vadd.f32 %v1467, %v1851
    %v1853 = vpop.f32.mrb[0].mxu0
    %1854 = vmatprep.mubr.f32.mxu0 %v1113
    %1855 = vmatmul.mubr.f32.gmra.mrb[0].mxu0 %v985
    %v1856 = vpop.f32.mrb[0].mxu0
    %v1857 = vadd.f32 %v1472, %v1856
    %v1858 = vpop.f32.mrb[0].mxu0
    %1859 = vmatprep.mubr.f32.mxu0 %v1114
    %1860 = vmatmul.mubr.f32.gmra.mrb[0].mxu0 %v986
    %v1861 = vpop.f32.mrb[0].mxu0
    %v1862 = vadd.f32 %v1477, %v1861
    %v1863 = vpop.f32.mrb[0].mxu0
    %1864 = vmatprep.mubr.f32.mxu0 %v1115
    %1865 = vmatmul.mubr.f32.gmra.mrb[0].mxu0 %v987
    %v1866 = vpop.f32.mrb[0].mxu0
    %v1867 = vadd.f32 %v1482, %v1866
    %v1868 = vpop.f32.mrb[0].mxu0
    %1869 = vmatprep.mubr.f32.mxu0 %v1116
    %1870 = vmatmul.mubr.f32.gmra.mrb[0].mxu0 %v988
    %v1871 = vpop.f32.mrb[0].mxu0
    %v1872 = vadd.f32 %v1487, %v1871
    %v1873 = vpop.f32.mrb[0].mxu0
    %1874 = vmatprep.mubr.f32.mxu0 %v1117
    %1875 = vmatmul.mubr.f32.gmra.mrb[0].mxu0 %v989
    %v1876 = vpop.f32.mrb[0].mxu0
    %v1877 = vadd.f32 %v1492, %v1876
    %v1878 = vpop.f32.mrb[0].mxu0
    %1879 = vmatprep.mubr.f32.mxu0 %v1118
    %1880 = vmatmul.mubr.f32.gmra.mrb[0].mxu0 %v990
    %v1881 = vpop.f32.mrb[0].mxu0
    %v1882 = vadd.f32 %v1497, %v1881
    %v1883 = vpop.f32.mrb[0].mxu0
    %1884 = vmatprep.mubr.f32.mxu0 %v1119
    %1885 = vmatmul.mubr.f32.gmra.mrb[0].mxu0 %v991
    %v1886 = vpop.f32.mrb[0].mxu0
    %v1887 = vadd.f32 %v1502, %v1886
    %v1888 = vpop.f32.mrb[0].mxu0
    %1889 = vdwg.mxu0
    %v1890 = vadd.f32 %v480, %v1572
    %v1891 = vadd.f32 %v481, %v1577
    %v1892 = vadd.f32 %v482, %v1582
    %v1893 = vadd.f32 %v483, %v1587
    %v1894 = vadd.f32 %v484, %v1592
    %v1895 = vadd.f32 %v485, %v1597
    %v1896 = vadd.f32 %v486, %v1602
    %v1897 = vadd.f32 %v487, %v1607
    %v1898 = vadd.f32 %v488, %v1612
    %v1899 = vadd.f32 %v489, %v1617
    %v1900 = vadd.f32 %v490, %v1622
    %v1901 = vadd.f32 %v491, %v1627
    %v1902 = vadd.f32 %v492, %v1632
    %v1903 = vadd.f32 %v493, %v1637
    %v1904 = vadd.f32 %v494, %v1642
    %v1905 = vadd.f32 %v495, %v1647
    %v1906 = vadd.f32 %v496, %v1652
    %v1907 = vadd.f32 %v497, %v1657
    %v1908 = vadd.f32 %v498, %v1662
    %v1909 = vadd.f32 %v499, %v1667
    %v1910 = vadd.f32 %v500, %v1672
    %v1911 = vadd.f32 %v501, %v1677
    %v1912 = vadd.f32 %v502, %v1682
    %v1913 = vadd.f32 %v503, %v1687
    %v1914 = vadd.f32 %v504, %v1692
    %v1915 = vadd.f32 %v505, %v1697
    %v1916 = vadd.f32 %v506, %v1702
    %v1917 = vadd.f32 %v507, %v1707
    %v1918 = vadd.f32 %v508, %v1712
    %v1919 = vadd.f32 %v509, %v1717
    %v1920 = vadd.f32 %v510, %v1722
    %v1921 = vadd.f32 %v511, %v1727
    %v1922 = vadd.f32 %v512, %v1732
    %v1923 = vadd.f32 %v513, %v1737
    %v1924 = vadd.f32 %v514, %v1742
    %v1925 = vadd.f32 %v515, %v1747
    %v1926 = vadd.f32 %v516, %v1752
    %v1927 = vadd.f32 %v517, %v1757
    %v1928 = vadd.f32 %v518, %v1762
    %v1929 = vadd.f32 %v519, %v1767
    %v1930 = vadd.f32 %v520, %v1772
    %v1931 = vadd.f32 %v521, %v1777
    %v1932 = vadd.f32 %v522, %v1782
    %v1933 = vadd.f32 %v523, %v1787
    %v1934 = vadd.f32 %v524, %v1792
    %v1935 = vadd.f32 %v525, %v1797
    %v1936 = vadd.f32 %v526, %v1802
    %v1937 = vadd.f32 %v527, %v1807
    %v1938 = vadd.f32 %v528, %v1812
    %v1939 = vadd.f32 %v529, %v1817
    %v1940 = vadd.f32 %v530, %v1822
    %v1941 = vadd.f32 %v531, %v1827
    %v1942 = vadd.f32 %v532, %v1832
    %v1943 = vadd.f32 %v533, %v1837
    %v1944 = vadd.f32 %v534, %v1842
    %v1945 = vadd.f32 %v535, %v1847
    %v1946 = vadd.f32 %v536, %v1852
    %v1947 = vadd.f32 %v537, %v1857
    %v1948 = vadd.f32 %v538, %v1862
    %v1949 = vadd.f32 %v539, %v1867
    %v1950 = vadd.f32 %v540, %v1872
    %v1951 = vadd.f32 %v541, %v1877
    %v1952 = vadd.f32 %v542, %v1882
    %v1953 = vadd.f32 %v543, %v1887
    %1954 = vst [vmem:[#allocation2] sm:$0xff] %v1890
    %1955 = vst [vmem:[#allocation2 + $0x8] sm:$0xff] %v1891
    %1956 = vst [vmem:[#allocation2 + $0x10] sm:$0xff] %v1892
    %1957 = vst [vmem:[#allocation2 + $0x18] sm:$0xff] %v1893
    %1958 = vst [vmem:[#allocation2 + $0x20] sm:$0xff] %v1894
    %1959 = vst [vmem:[#allocation2 + $0x28] sm:$0xff] %v1895
    %1960 = vst [vmem:[#allocation2 + $0x30] sm:$0xff] %v1896
    %1961 = vst [vmem:[#allocation2 + $0x38] sm:$0xff] %v1897
    %1962 = vst [vmem:[#allocation2 + $0x40] sm:$0xff] %v1898
    %1963 = vst [vmem:[#allocation2 + $0x48] sm:$0xff] %v1899
    %1964 = vst [vmem:[#allocation2 + $0x50] sm:$0xff] %v1900
    %1965 = vst [vmem:[#allocation2 + $0x58] sm:$0xff] %v1901
    %1966 = vst [vmem:[#allocation2 + $0x60] sm:$0xff] %v1902
    %1967 = vst [vmem:[#allocation2 + $0x68] sm:$0xff] %v1903
    %1968 = vst [vmem:[#allocation2 + $0x70] sm:$0xff] %v1904
    %1969 = vst [vmem:[#allocation2 + $0x78] sm:$0xff] %v1905
    %1970 = vst [vmem:[#allocation2 + $0x80] sm:$0xff] %v1906
    %1971 = vst [vmem:[#allocation2 + $0x88] sm:$0xff] %v1907
    %1972 = vst [vmem:[#allocation2 + $0x90] sm:$0xff] %v1908
    %1973 = vst [vmem:[#allocation2 + $0x98] sm:$0xff] %v1909
    %1974 = vst [vmem:[#allocation2 + $0xa0] sm:$0xff] %v1910
    %1975 = vst [vmem:[#allocation2 + $0xa8] sm:$0xff] %v1911
    %1976 = vst [vmem:[#allocation2 + $0xb0] sm:$0xff] %v1912
    %1977 = vst [vmem:[#allocation2 + $0xb8] sm:$0xff] %v1913
    %1978 = vst [vmem:[#allocation2 + $0xc0] sm:$0xff] %v1914
    %1979 = vst [vmem:[#allocation2 + $0xc8] sm:$0xff] %v1915
    %1980 = vst [vmem:[#allocation2 + $0xd0] sm:$0xff] %v1916
    %1981 = vst [vmem:[#allocation2 + $0xd8] sm:$0xff] %v1917
    %1982 = vst [vmem:[#allocation2 + $0xe0] sm:$0xff] %v1918
    %1983 = vst [vmem:[#allocation2 + $0xe8] sm:$0xff] %v1919
    %1984 = vst [vmem:[#allocation2 + $0xf0] sm:$0xff] %v1920
    %1985 = vst [vmem:[#allocation2 + $0xf8] sm:$0xff] %v1921
    %1986 = vst [vmem:[#allocation2 + $0x100] sm:$0xff] %v1922
    %1987 = vst [vmem:[#allocation2 + $0x108] sm:$0xff] %v1923
    %1988 = vst [vmem:[#allocation2 + $0x110] sm:$0xff] %v1924
    %1989 = vst [vmem:[#allocation2 + $0x118] sm:$0xff] %v1925
    %1990 = vst [vmem:[#allocation2 + $0x120] sm:$0xff] %v1926
    %1991 = vst [vmem:[#allocation2 + $0x128] sm:$0xff] %v1927
    %1992 = vst [vmem:[#allocation2 + $0x130] sm:$0xff] %v1928
    %1993 = vst [vmem:[#allocation2 + $0x138] sm:$0xff] %v1929
    %1994 = vst [vmem:[#allocation2 + $0x140] sm:$0xff] %v1930
    %1995 = vst [vmem:[#allocation2 + $0x148] sm:$0xff] %v1931
    %1996 = vst [vmem:[#allocation2 + $0x150] sm:$0xff] %v1932
    %1997 = vst [vmem:[#allocation2 + $0x158] sm:$0xff] %v1933
    %1998 = vst [vmem:[#allocation2 + $0x160] sm:$0xff] %v1934
    %1999 = vst [vmem:[#allocation2 + $0x168] sm:$0xff] %v1935
    %2000 = vst [vmem:[#allocation2 + $0x170] sm:$0xff] %v1936
    %2001 = vst [vmem:[#allocation2 + $0x178] sm:$0xff] %v1937
    %2002 = vst [vmem:[#allocation2 + $0x180] sm:$0xff] %v1938
    %2003 = vst [vmem:[#allocation2 + $0x188] sm:$0xff] %v1939
    %2004 = vst [vmem:[#allocation2 + $0x190] sm:$0xff] %v1940
    %2005 = vst [vmem:[#allocation2 + $0x198] sm:$0xff] %v1941
    %2006 = vst [vmem:[#allocation2 + $0x1a0] sm:$0xff] %v1942
    %2007 = vst [vmem:[#allocation2 + $0x1a8] sm:$0xff] %v1943
    %2008 = vst [vmem:[#allocation2 + $0x1b0] sm:$0xff] %v1944
    %2009 = vst [vmem:[#allocation2 + $0x1b8] sm:$0xff] %v1945
    %2010 = vst [vmem:[#allocation2 + $0x1c0] sm:$0xff] %v1946
    %2011 = vst [vmem:[#allocation2 + $0x1c8] sm:$0xff] %v1947
    %2012 = vst [vmem:[#allocation2 + $0x1d0] sm:$0xff] %v1948
    %2013 = vst [vmem:[#allocation2 + $0x1d8] sm:$0xff] %v1949
    %2014 = vst [vmem:[#allocation2 + $0x1e0] sm:$0xff] %v1950
    %2015 = vst [vmem:[#allocation2 + $0x1e8] sm:$0xff] %v1951
    %2016 = vst [vmem:[#allocation2 + $0x1f0] sm:$0xff] %v1952
    %2017 = vst [vmem:[#allocation2 + $0x1f8] sm:$0xff] %v1953
    // Predicated region
    $region22: #{_forward_impl.6} parent=1 // pred_check
      %p2018 = pneg %p28
    $region23: #{_forward_impl.6} parent=1 // pred_check_branch
      %2020 = sbr.rel (%p2018) target = $region25
    $region24: #{_forward_impl.6} parent=1 // pred_region
      %v2021 = vld [vmem:[#allocation2] sm:$0xff]
      %v2022 = vld [vmem:[#allocation2 + $0x8] sm:$0xff]
      %v2023 = vld [vmem:[#allocation2 + $0x10] sm:$0xff]
      %v2024 = vld [vmem:[#allocation2 + $0x18] sm:$0xff]
      %v2025 = vld [vmem:[#allocation2 + $0x20] sm:$0xff]
      %v2026 = vld [vmem:[#allocation2 + $0x28] sm:$0xff]
      %v2027 = vld [vmem:[#allocation2 + $0x30] sm:$0xff]
      %v2028 = vld [vmem:[#allocation2 + $0x38] sm:$0xff]
      %v2029 = vld [vmem:[#allocation2 + $0x40] sm:$0xff]
      %v2030 = vld [vmem:[#allocation2 + $0x48] sm:$0xff]
      %v2031 = vld [vmem:[#allocation2 + $0x50] sm:$0xff]
      %v2032 = vld [vmem:[#allocation2 + $0x58] sm:$0xff]
      %v2033 = vld [vmem:[#allocation2 + $0x60] sm:$0xff]
      %v2034 = vld [vmem:[#allocation2 + $0x68] sm:$0xff]
      %v2035 = vld [vmem:[#allocation2 + $0x70] sm:$0xff]
      %v2036 = vld [vmem:[#allocation2 + $0x78] sm:$0xff]
      %v2037 = vld [vmem:[#allocation2 + $0x80] sm:$0xff]
      %v2038 = vld [vmem:[#allocation2 + $0x88] sm:$0xff]
      %v2039 = vld [vmem:[#allocation2 + $0x90] sm:$0xff]
      %v2040 = vld [vmem:[#allocation2 + $0x98] sm:$0xff]
      %v2041 = vld [vmem:[#allocation2 + $0xa0] sm:$0xff]
      %v2042 = vld [vmem:[#allocation2 + $0xa8] sm:$0xff]
      %v2043 = vld [vmem:[#allocation2 + $0xb0] sm:$0xff]
      %v2044 = vld [vmem:[#allocation2 + $0xb8] sm:$0xff]
      %v2045 = vld [vmem:[#allocation2 + $0xc0] sm:$0xff]
      %v2046 = vld [vmem:[#allocation2 + $0xc8] sm:$0xff]
      %v2047 = vld [vmem:[#allocation2 + $0xd0] sm:$0xff]
      %v2048 = vld [vmem:[#allocation2 + $0xd8] sm:$0xff]
      %v2049 = vld [vmem:[#allocation2 + $0xe0] sm:$0xff]
      %v2050 = vld [vmem:[#allocation2 + $0xe8] sm:$0xff]
      %v2051 = vld [vmem:[#allocation2 + $0xf0] sm:$0xff]
      %v2052 = vld [vmem:[#allocation2 + $0xf8] sm:$0xff]
      %v2053 = vld [vmem:[#allocation2 + $0x100] sm:$0xff]
      %v2054 = vld [vmem:[#allocation2 + $0x108] sm:$0xff]
      %v2055 = vld [vmem:[#allocation2 + $0x110] sm:$0xff]
      %v2056 = vld [vmem:[#allocation2 + $0x118] sm:$0xff]
      %v2057 = vld [vmem:[#allocation2 + $0x120] sm:$0xff]
      %v2058 = vld [vmem:[#allocation2 + $0x128] sm:$0xff]
      %v2059 = vld [vmem:[#allocation2 + $0x130] sm:$0xff]
      %v2060 = vld [vmem:[#allocation2 + $0x138] sm:$0xff]
      %v2061 = vld [vmem:[#allocation2 + $0x140] sm:$0xff]
      %v2062 = vld [vmem:[#allocation2 + $0x148] sm:$0xff]
      %v2063 = vld [vmem:[#allocation2 + $0x150] sm:$0xff]
      %v2064 = vld [vmem:[#allocation2 + $0x158] sm:$0xff]
      %v2065 = vld [vmem:[#allocation2 + $0x160] sm:$0xff]
      %v2066 = vld [vmem:[#allocation2 + $0x168] sm:$0xff]
      %v2067 = vld [vmem:[#allocation2 + $0x170] sm:$0xff]
      %v2068 = vld [vmem:[#allocation2 + $0x178] sm:$0xff]
      %v2069 = vld [vmem:[#allocation2 + $0x180] sm:$0xff]
      %v2070 = vld [vmem:[#allocation2 + $0x188] sm:$0xff]
      %v2071 = vld [vmem:[#allocation2 + $0x190] sm:$0xff]
      %v2072 = vld [vmem:[#allocation2 + $0x198] sm:$0xff]
      %v2073 = vld [vmem:[#allocation2 + $0x1a0] sm:$0xff]
      %v2074 = vld [vmem:[#allocation2 + $0x1a8] sm:$0xff]
      %v2075 = vld [vmem:[#allocation2 + $0x1b0] sm:$0xff]
      %v2076 = vld [vmem:[#allocation2 + $0x1b8] sm:$0xff]
      %v2077 = vld [vmem:[#allocation2 + $0x1c0] sm:$0xff]
      %v2078 = vld [vmem:[#allocation2 + $0x1c8] sm:$0xff]
      %v2079 = vld [vmem:[#allocation2 + $0x1d0] sm:$0xff]
      %v2080 = vld [vmem:[#allocation2 + $0x1d8] sm:$0xff]
      %v2081 = vld [vmem:[#allocation2 + $0x1e0] sm:$0xff]
      %v2082 = vld [vmem:[#allocation2 + $0x1e8] sm:$0xff]
      %v2083 = vld [vmem:[#allocation2 + $0x1f0] sm:$0xff]
      %v2084 = vld [vmem:[#allocation2 + $0x1f8] sm:$0xff]
      %v2085 = vld [vmem:[%s2] sm:$0xff]
      %v2086 = vld [vmem:[%s2 + $0x8] sm:$0xff]
      %v2087 = vld [vmem:[%s2 + $0x10] sm:$0xff]
      %v2088 = vld [vmem:[%s2 + $0x18] sm:$0xff]
      %v2089 = vld [vmem:[%s2 + $0x20] sm:$0xff]
      %v2090 = vld [vmem:[%s2 + $0x28] sm:$0xff]
      %v2091 = vld [vmem:[%s2 + $0x30] sm:$0xff]
      %v2092 = vld [vmem:[%s2 + $0x38] sm:$0xff]
      %v2093 = vld [vmem:[%s2 + $0x40] sm:$0xff]
      %v2094 = vld [vmem:[%s2 + $0x48] sm:$0xff]
      %v2095 = vld [vmem:[%s2 + $0x50] sm:$0xff]
      %v2096 = vld [vmem:[%s2 + $0x58] sm:$0xff]
      %v2097 = vld [vmem:[%s2 + $0x60] sm:$0xff]
      %v2098 = vld [vmem:[%s2 + $0x68] sm:$0xff]
      %v2099 = vld [vmem:[%s2 + $0x70] sm:$0xff]
      %v2100 = vld [vmem:[%s2 + $0x78] sm:$0xff]
      %v2101 = vld [vmem:[%s2 + $0x80] sm:$0xff]
      %v2102 = vld [vmem:[%s2 + $0x88] sm:$0xff]
      %v2103 = vld [vmem:[%s2 + $0x90] sm:$0xff]
      %v2104 = vld [vmem:[%s2 + $0x98] sm:$0xff]
      %v2105 = vld [vmem:[%s2 + $0xa0] sm:$0xff]
      %v2106 = vld [vmem:[%s2 + $0xa8] sm:$0xff]
      %v2107 = vld [vmem:[%s2 + $0xb0] sm:$0xff]
      %v2108 = vld [vmem:[%s2 + $0xb8] sm:$0xff]
      %v2109 = vld [vmem:[%s2 + $0xc0] sm:$0xff]
      %v2110 = vld [vmem:[%s2 + $0xc8] sm:$0xff]
      %v2111 = vld [vmem:[%s2 + $0xd0] sm:$0xff]
      %v2112 = vld [vmem:[%s2 + $0xd8] sm:$0xff]
      %v2113 = vld [vmem:[%s2 + $0xe0] sm:$0xff]
      %v2114 = vld [vmem:[%s2 + $0xe8] sm:$0xff]
      %v2115 = vld [vmem:[%s2 + $0xf0] sm:$0xff]
      %v2116 = vld [vmem:[%s2 + $0xf8] sm:$0xff]
      %v2117 = vld [vmem:[%s2 + $0x100] sm:$0xff]
      %v2118 = vld [vmem:[%s2 + $0x108] sm:$0xff]
      %v2119 = vld [vmem:[%s2 + $0x110] sm:$0xff]
      %v2120 = vld [vmem:[%s2 + $0x118] sm:$0xff]
      %v2121 = vld [vmem:[%s2 + $0x120] sm:$0xff]
      %v2122 = vld [vmem:[%s2 + $0x128] sm:$0xff]
      %v2123 = vld [vmem:[%s2 + $0x130] sm:$0xff]
      %v2124 = vld [vmem:[%s2 + $0x138] sm:$0xff]
      %v2125 = vld [vmem:[%s2 + $0x140] sm:$0xff]
      %v2126 = vld [vmem:[%s2 + $0x148] sm:$0xff]
      %v2127 = vld [vmem:[%s2 + $0x150] sm:$0xff]
      %v2128 = vld [vmem:[%s2 + $0x158] sm:$0xff]
      %v2129 = vld [vmem:[%s2 + $0x160] sm:$0xff]
      %v2130 = vld [vmem:[%s2 + $0x168] sm:$0xff]
      %v2131 = vld [vmem:[%s2 + $0x170] sm:$0xff]
      %v2132 = vld [vmem:[%s2 + $0x178] sm:$0xff]
      %v2133 = vld [vmem:[%s2 + $0x180] sm:$0xff]
      %v2134 = vld [vmem:[%s2 + $0x188] sm:$0xff]
      %v2135 = vld [vmem:[%s2 + $0x190] sm:$0xff]
      %v2136 = vld [vmem:[%s2 + $0x198] sm:$0xff]
      %v2137 = vld [vmem:[%s2 + $0x1a0] sm:$0xff]
      %v2138 = vld [vmem:[%s2 + $0x1a8] sm:$0xff]
      %v2139 = vld [vmem:[%s2 + $0x1b0] sm:$0xff]
      %v2140 = vld [vmem:[%s2 + $0x1b8] sm:$0xff]
      %v2141 = vld [vmem:[%s2 + $0x1c0] sm:$0xff]
      %v2142 = vld [vmem:[%s2 + $0x1c8] sm:$0xff]
      %v2143 = vld [vmem:[%s2 + $0x1d0] sm:$0xff]
      %v2144 = vld [vmem:[%s2 + $0x1d8] sm:$0xff]
      %v2145 = vld [vmem:[%s2 + $0x1e0] sm:$0xff]
      %v2146 = vld [vmem:[%s2 + $0x1e8] sm:$0xff]
      %v2147 = vld [vmem:[%s2 + $0x1f0] sm:$0xff]
      %v2148 = vld [vmem:[%s2 + $0x1f8] sm:$0xff]
      %2150 = vset.pattern.permute.xlu0 0
      %2151 = vperm.xlu0 %2150, %v2085
      %v2152 = vpop.permute.xlu0 %2151
      %2155 = vset.pattern.permute.xlu0 0
      %2156 = vperm.xlu0 %2155, %v2086
      %v2157 = vpop.permute.xlu0 %2156
      %2160 = vset.pattern.permute.xlu0 0
      %2161 = vperm.xlu0 %2160, %v2087
      %v2162 = vpop.permute.xlu0 %2161
      %2165 = vset.pattern.permute.xlu0 0
      %2166 = vperm.xlu0 %2165, %v2088
      %v2167 = vpop.permute.xlu0 %2166
      %2170 = vset.pattern.permute.xlu0 0
      %2171 = vperm.xlu0 %2170, %v2089
      %v2172 = vpop.permute.xlu0 %2171
      %2175 = vset.pattern.permute.xlu0 0
      %2176 = vperm.xlu0 %2175, %v2090
      %v2177 = vpop.permute.xlu0 %2176
      %2180 = vset.pattern.permute.xlu0 0
      %2181 = vperm.xlu0 %2180, %v2091
      %v2182 = vpop.permute.xlu0 %2181
      %2185 = vset.pattern.permute.xlu0 0
      %2186 = vperm.xlu0 %2185, %v2092
      %v2187 = vpop.permute.xlu0 %2186
      %2190 = vset.pattern.permute.xlu0 0
      %2191 = vperm.xlu0 %2190, %v2093
      %v2192 = vpop.permute.xlu0 %2191
      %2195 = vset.pattern.permute.xlu0 0
      %2196 = vperm.xlu0 %2195, %v2094
      %v2197 = vpop.permute.xlu0 %2196
      %2200 = vset.pattern.permute.xlu0 0
      %2201 = vperm.xlu0 %2200, %v2095
      %v2202 = vpop.permute.xlu0 %2201
      %2205 = vset.pattern.permute.xlu0 0
      %2206 = vperm.xlu0 %2205, %v2096
      %v2207 = vpop.permute.xlu0 %2206
      %2210 = vset.pattern.permute.xlu0 0
      %2211 = vperm.xlu0 %2210, %v2097
      %v2212 = vpop.permute.xlu0 %2211
      %2215 = vset.pattern.permute.xlu0 0
      %2216 = vperm.xlu0 %2215, %v2098
      %v2217 = vpop.permute.xlu0 %2216
      %2220 = vset.pattern.permute.xlu0 0
      %2221 = vperm.xlu0 %2220, %v2099
      %v2222 = vpop.permute.xlu0 %2221
      %2225 = vset.pattern.permute.xlu0 0
      %2226 = vperm.xlu0 %2225, %v2100
      %v2227 = vpop.permute.xlu0 %2226
      %2230 = vset.pattern.permute.xlu0 0
      %2231 = vperm.xlu0 %2230, %v2101
      %v2232 = vpop.permute.xlu0 %2231
      %2235 = vset.pattern.permute.xlu0 0
      %2236 = vperm.xlu0 %2235, %v2102
      %v2237 = vpop.permute.xlu0 %2236
      %2240 = vset.pattern.permute.xlu0 0
      %2241 = vperm.xlu0 %2240, %v2103
      %v2242 = vpop.permute.xlu0 %2241
      %2245 = vset.pattern.permute.xlu0 0
      %2246 = vperm.xlu0 %2245, %v2104
      %v2247 = vpop.permute.xlu0 %2246
      %2250 = vset.pattern.permute.xlu0 0
      %2251 = vperm.xlu0 %2250, %v2105
      %v2252 = vpop.permute.xlu0 %2251
      %2255 = vset.pattern.permute.xlu0 0
      %2256 = vperm.xlu0 %2255, %v2106
      %v2257 = vpop.permute.xlu0 %2256
      %2260 = vset.pattern.permute.xlu0 0
      %2261 = vperm.xlu0 %2260, %v2107
      %v2262 = vpop.permute.xlu0 %2261
      %2265 = vset.pattern.permute.xlu0 0
      %2266 = vperm.xlu0 %2265, %v2108
      %v2267 = vpop.permute.xlu0 %2266
      %2270 = vset.pattern.permute.xlu0 0
      %2271 = vperm.xlu0 %2270, %v2109
      %v2272 = vpop.permute.xlu0 %2271
      %2275 = vset.pattern.permute.xlu0 0
      %2276 = vperm.xlu0 %2275, %v2110
      %v2277 = vpop.permute.xlu0 %2276
      %2280 = vset.pattern.permute.xlu0 0
      %2281 = vperm.xlu0 %2280, %v2111
      %v2282 = vpop.permute.xlu0 %2281
      %2285 = vset.pattern.permute.xlu0 0
      %2286 = vperm.xlu0 %2285, %v2112
      %v2287 = vpop.permute.xlu0 %2286
      %2290 = vset.pattern.permute.xlu0 0
      %2291 = vperm.xlu0 %2290, %v2113
      %v2292 = vpop.permute.xlu0 %2291
      %2295 = vset.pattern.permute.xlu0 0
      %2296 = vperm.xlu0 %2295, %v2114
      %v2297 = vpop.permute.xlu0 %2296
      %2300 = vset.pattern.permute.xlu0 0
      %2301 = vperm.xlu0 %2300, %v2115
      %v2302 = vpop.permute.xlu0 %2301
      %2305 = vset.pattern.permute.xlu0 0
      %2306 = vperm.xlu0 %2305, %v2116
      %v2307 = vpop.permute.xlu0 %2306
      %2310 = vset.pattern.permute.xlu0 0
      %2311 = vperm.xlu0 %2310, %v2117
      %v2312 = vpop.permute.xlu0 %2311
      %2315 = vset.pattern.permute.xlu0 0
      %2316 = vperm.xlu0 %2315, %v2118
      %v2317 = vpop.permute.xlu0 %2316
      %2320 = vset.pattern.permute.xlu0 0
      %2321 = vperm.xlu0 %2320, %v2119
      %v2322 = vpop.permute.xlu0 %2321
      %2325 = vset.pattern.permute.xlu0 0
      %2326 = vperm.xlu0 %2325, %v2120
      %v2327 = vpop.permute.xlu0 %2326
      %2330 = vset.pattern.permute.xlu0 0
      %2331 = vperm.xlu0 %2330, %v2121
      %v2332 = vpop.permute.xlu0 %2331
      %2335 = vset.pattern.permute.xlu0 0
      %2336 = vperm.xlu0 %2335, %v2122
      %v2337 = vpop.permute.xlu0 %2336
      %2340 = vset.pattern.permute.xlu0 0
      %2341 = vperm.xlu0 %2340, %v2123
      %v2342 = vpop.permute.xlu0 %2341
      %2345 = vset.pattern.permute.xlu0 0
      %2346 = vperm.xlu0 %2345, %v2124
      %v2347 = vpop.permute.xlu0 %2346
      %2350 = vset.pattern.permute.xlu0 0
      %2351 = vperm.xlu0 %2350, %v2125
      %v2352 = vpop.permute.xlu0 %2351
      %2355 = vset.pattern.permute.xlu0 0
      %2356 = vperm.xlu0 %2355, %v2126
      %v2357 = vpop.permute.xlu0 %2356
      %2360 = vset.pattern.permute.xlu0 0
      %2361 = vperm.xlu0 %2360, %v2127
      %v2362 = vpop.permute.xlu0 %2361
      %2365 = vset.pattern.permute.xlu0 0
      %2366 = vperm.xlu0 %2365, %v2128
      %v2367 = vpop.permute.xlu0 %2366
      %2370 = vset.pattern.permute.xlu0 0
      %2371 = vperm.xlu0 %2370, %v2129
      %v2372 = vpop.permute.xlu0 %2371
      %2375 = vset.pattern.permute.xlu0 0
      %2376 = vperm.xlu0 %2375, %v2130
      %v2377 = vpop.permute.xlu0 %2376
      %2380 = vset.pattern.permute.xlu0 0
      %2381 = vperm.xlu0 %2380, %v2131
      %v2382 = vpop.permute.xlu0 %2381
      %2385 = vset.pattern.permute.xlu0 0
      %2386 = vperm.xlu0 %2385, %v2132
      %v2387 = vpop.permute.xlu0 %2386
      %2390 = vset.pattern.permute.xlu0 0
      %2391 = vperm.xlu0 %2390, %v2133
      %v2392 = vpop.permute.xlu0 %2391
      %2395 = vset.pattern.permute.xlu0 0
      %2396 = vperm.xlu0 %2395, %v2134
      %v2397 = vpop.permute.xlu0 %2396
      %2400 = vset.pattern.permute.xlu0 0
      %2401 = vperm.xlu0 %2400, %v2135
      %v2402 = vpop.permute.xlu0 %2401
      %2405 = vset.pattern.permute.xlu0 0
      %2406 = vperm.xlu0 %2405, %v2136
      %v2407 = vpop.permute.xlu0 %2406
      %2410 = vset.pattern.permute.xlu0 0
      %2411 = vperm.xlu0 %2410, %v2137
      %v2412 = vpop.permute.xlu0 %2411
      %2415 = vset.pattern.permute.xlu0 0
      %2416 = vperm.xlu0 %2415, %v2138
      %v2417 = vpop.permute.xlu0 %2416
      %2420 = vset.pattern.permute.xlu0 0
      %2421 = vperm.xlu0 %2420, %v2139
      %v2422 = vpop.permute.xlu0 %2421
      %2425 = vset.pattern.permute.xlu0 0
      %2426 = vperm.xlu0 %2425, %v2140
      %v2427 = vpop.permute.xlu0 %2426
      %2430 = vset.pattern.permute.xlu0 0
      %2431 = vperm.xlu0 %2430, %v2141
      %v2432 = vpop.permute.xlu0 %2431
      %2435 = vset.pattern.permute.xlu0 0
      %2436 = vperm.xlu0 %2435, %v2142
      %v2437 = vpop.permute.xlu0 %2436
      %2440 = vset.pattern.permute.xlu0 0
      %2441 = vperm.xlu0 %2440, %v2143
      %v2442 = vpop.permute.xlu0 %2441
      %2445 = vset.pattern.permute.xlu0 0
      %2446 = vperm.xlu0 %2445, %v2144
      %v2447 = vpop.permute.xlu0 %2446
      %2450 = vset.pattern.permute.xlu0 0
      %2451 = vperm.xlu0 %2450, %v2145
      %v2452 = vpop.permute.xlu0 %2451
      %2455 = vset.pattern.permute.xlu0 0
      %2456 = vperm.xlu0 %2455, %v2146
      %v2457 = vpop.permute.xlu0 %2456
      %2460 = vset.pattern.permute.xlu0 0
      %2461 = vperm.xlu0 %2460, %v2147
      %v2462 = vpop.permute.xlu0 %2461
      %2465 = vset.pattern.permute.xlu0 0
      %2466 = vperm.xlu0 %2465, %v2148
      %v2467 = vpop.permute.xlu0 %2466
      %v2469 = vmul.f32 %v2021, %v2152
      %v2470 = vmul.f32 %v2022, %v2157
      %v2471 = vmul.f32 %v2023, %v2162
      %v2472 = vmul.f32 %v2024, %v2167
      %v2473 = vmul.f32 %v2025, %v2172
      %v2474 = vmul.f32 %v2026, %v2177
      %v2475 = vmul.f32 %v2027, %v2182
      %v2476 = vmul.f32 %v2028, %v2187
      %v2477 = vmul.f32 %v2029, %v2192
      %v2478 = vmul.f32 %v2030, %v2197
      %v2479 = vmul.f32 %v2031, %v2202
      %v2480 = vmul.f32 %v2032, %v2207
      %v2481 = vmul.f32 %v2033, %v2212
      %v2482 = vmul.f32 %v2034, %v2217
      %v2483 = vmul.f32 %v2035, %v2222
      %v2484 = vmul.f32 %v2036, %v2227
      %v2485 = vmul.f32 %v2037, %v2232
      %v2486 = vmul.f32 %v2038, %v2237
      %v2487 = vmul.f32 %v2039, %v2242
      %v2488 = vmul.f32 %v2040, %v2247
      %v2489 = vmul.f32 %v2041, %v2252
      %v2490 = vmul.f32 %v2042, %v2257
      %v2491 = vmul.f32 %v2043, %v2262
      %v2492 = vmul.f32 %v2044, %v2267
      %v2493 = vmul.f32 %v2045, %v2272
      %v2494 = vmul.f32 %v2046, %v2277
      %v2495 = vmul.f32 %v2047, %v2282
      %v2496 = vmul.f32 %v2048, %v2287
      %v2497 = vmul.f32 %v2049, %v2292
      %v2498 = vmul.f32 %v2050, %v2297
      %v2499 = vmul.f32 %v2051, %v2302
      %v2500 = vmul.f32 %v2052, %v2307
      %v2501 = vmul.f32 %v2053, %v2312
      %v2502 = vmul.f32 %v2054, %v2317
      %v2503 = vmul.f32 %v2055, %v2322
      %v2504 = vmul.f32 %v2056, %v2327
      %v2505 = vmul.f32 %v2057, %v2332
      %v2506 = vmul.f32 %v2058, %v2337
      %v2507 = vmul.f32 %v2059, %v2342
      %v2508 = vmul.f32 %v2060, %v2347
      %v2509 = vmul.f32 %v2061, %v2352
      %v2510 = vmul.f32 %v2062, %v2357
      %v2511 = vmul.f32 %v2063, %v2362
      %v2512 = vmul.f32 %v2064, %v2367
      %v2513 = vmul.f32 %v2065, %v2372
      %v2514 = vmul.f32 %v2066, %v2377
      %v2515 = vmul.f32 %v2067, %v2382
      %v2516 = vmul.f32 %v2068, %v2387
      %v2517 = vmul.f32 %v2069, %v2392
      %v2518 = vmul.f32 %v2070, %v2397
      %v2519 = vmul.f32 %v2071, %v2402
      %v2520 = vmul.f32 %v2072, %v2407
      %v2521 = vmul.f32 %v2073, %v2412
      %v2522 = vmul.f32 %v2074, %v2417
      %v2523 = vmul.f32 %v2075, %v2422
      %v2524 = vmul.f32 %v2076, %v2427
      %v2525 = vmul.f32 %v2077, %v2432
      %v2526 = vmul.f32 %v2078, %v2437
      %v2527 = vmul.f32 %v2079, %v2442
      %v2528 = vmul.f32 %v2080, %v2447
      %v2529 = vmul.f32 %v2081, %v2452
      %v2530 = vmul.f32 %v2082, %v2457
      %v2531 = vmul.f32 %v2083, %v2462
      %v2532 = vmul.f32 %v2084, %v2467
      %2533 = vst [vmem:[%s3] sm:$0xff] %v2469
      %2534 = vst [vmem:[%s3 + $0x8] sm:$0xff] %v2470
      %2535 = vst [vmem:[%s3 + $0x10] sm:$0xff] %v2471
      %2536 = vst [vmem:[%s3 + $0x18] sm:$0xff] %v2472
      %2537 = vst [vmem:[%s3 + $0x20] sm:$0xff] %v2473
      %2538 = vst [vmem:[%s3 + $0x28] sm:$0xff] %v2474
      %2539 = vst [vmem:[%s3 + $0x30] sm:$0xff] %v2475
      %2540 = vst [vmem:[%s3 + $0x38] sm:$0xff] %v2476
      %2541 = vst [vmem:[%s3 + $0x40] sm:$0xff] %v2477
      %2542 = vst [vmem:[%s3 + $0x48] sm:$0xff] %v2478
      %2543 = vst [vmem:[%s3 + $0x50] sm:$0xff] %v2479
      %2544 = vst [vmem:[%s3 + $0x58] sm:$0xff] %v2480
      %2545 = vst [vmem:[%s3 + $0x60] sm:$0xff] %v2481
      %2546 = vst [vmem:[%s3 + $0x68] sm:$0xff] %v2482
      %2547 = vst [vmem:[%s3 + $0x70] sm:$0xff] %v2483
      %2548 = vst [vmem:[%s3 + $0x78] sm:$0xff] %v2484
      %2549 = vst [vmem:[%s3 + $0x80] sm:$0xff] %v2485
      %2550 = vst [vmem:[%s3 + $0x88] sm:$0xff] %v2486
      %2551 = vst [vmem:[%s3 + $0x90] sm:$0xff] %v2487
      %2552 = vst [vmem:[%s3 + $0x98] sm:$0xff] %v2488
      %2553 = vst [vmem:[%s3 + $0xa0] sm:$0xff] %v2489
      %2554 = vst [vmem:[%s3 + $0xa8] sm:$0xff] %v2490
      %2555 = vst [vmem:[%s3 + $0xb0] sm:$0xff] %v2491
      %2556 = vst [vmem:[%s3 + $0xb8] sm:$0xff] %v2492
      %2557 = vst [vmem:[%s3 + $0xc0] sm:$0xff] %v2493
      %2558 = vst [vmem:[%s3 + $0xc8] sm:$0xff] %v2494
      %2559 = vst [vmem:[%s3 + $0xd0] sm:$0xff] %v2495
      %2560 = vst [vmem:[%s3 + $0xd8] sm:$0xff] %v2496
      %2561 = vst [vmem:[%s3 + $0xe0] sm:$0xff] %v2497
      %2562 = vst [vmem:[%s3 + $0xe8] sm:$0xff] %v2498
      %2563 = vst [vmem:[%s3 + $0xf0] sm:$0xff] %v2499
      %2564 = vst [vmem:[%s3 + $0xf8] sm:$0xff] %v2500
      %2565 = vst [vmem:[%s3 + $0x100] sm:$0xff] %v2501
      %2566 = vst [vmem:[%s3 + $0x108] sm:$0xff] %v2502
      %2567 = vst [vmem:[%s3 + $0x110] sm:$0xff] %v2503
      %2568 = vst [vmem:[%s3 + $0x118] sm:$0xff] %v2504
      %2569 = vst [vmem:[%s3 + $0x120] sm:$0xff] %v2505
      %2570 = vst [vmem:[%s3 + $0x128] sm:$0xff] %v2506
      %2571 = vst [vmem:[%s3 + $0x130] sm:$0xff] %v2507
      %2572 = vst [vmem:[%s3 + $0x138] sm:$0xff] %v2508
      %2573 = vst [vmem:[%s3 + $0x140] sm:$0xff] %v2509
      %2574 = vst [vmem:[%s3 + $0x148] sm:$0xff] %v2510
      %2575 = vst [vmem:[%s3 + $0x150] sm:$0xff] %v2511
      %2576 = vst [vmem:[%s3 + $0x158] sm:$0xff] %v2512
      %2577 = vst [vmem:[%s3 + $0x160] sm:$0xff] %v2513
      %2578 = vst [vmem:[%s3 + $0x168] sm:$0xff] %v2514
      %2579 = vst [vmem:[%s3 + $0x170] sm:$0xff] %v2515
      %2580 = vst [vmem:[%s3 + $0x178] sm:$0xff] %v2516
      %2581 = vst [vmem:[%s3 + $0x180] sm:$0xff] %v2517
      %2582 = vst [vmem:[%s3 + $0x188] sm:$0xff] %v2518
      %2583 = vst [vmem:[%s3 + $0x190] sm:$0xff] %v2519
      %2584 = vst [vmem:[%s3 + $0x198] sm:$0xff] %v2520
      %2585 = vst [vmem:[%s3 + $0x1a0] sm:$0xff] %v2521
      %2586 = vst [vmem:[%s3 + $0x1a8] sm:$0xff] %v2522
      %2587 = vst [vmem:[%s3 + $0x1b0] sm:$0xff] %v2523
      %2588 = vst [vmem:[%s3 + $0x1b8] sm:$0xff] %v2524
      %2589 = vst [vmem:[%s3 + $0x1c0] sm:$0xff] %v2525
      %2590 = vst [vmem:[%s3 + $0x1c8] sm:$0xff] %v2526
      %2591 = vst [vmem:[%s3 + $0x1d0] sm:$0xff] %v2527
      %2592 = vst [vmem:[%s3 + $0x1d8] sm:$0xff] %v2528
      %2593 = vst [vmem:[%s3 + $0x1e0] sm:$0xff] %v2529
      %2594 = vst [vmem:[%s3 + $0x1e8] sm:$0xff] %v2530
      %2595 = vst [vmem:[%s3 + $0x1f0] sm:$0xff] %v2531
      %2596 = vst [vmem:[%s3 + $0x1f8] sm:$0xff] %v2532
    $region25: #{_forward_impl.6} parent=1 // pred_fallthru
      _
    // Predicated region
    $region26: #{_forward_impl.6} parent=1 // pred_check
      _
    $region27: #{_forward_impl.6} parent=1 // pred_check_branch
      %2598 = sbr.rel (0) target = $region29
    $region28: #{_forward_impl.6} parent=1 // pred_region
      _
    $region29: #{_forward_impl.6} parent=1 // pred_fallthru
      _
    // Predicated region
    $region30: #{_forward_impl.6} parent=1 // pred_check
      _
    $region31: #{_forward_impl.6} parent=1 // pred_check_branch
      %2600 = sbr.rel (0) target = $region33
    $region32: #{_forward_impl.6} parent=1 // pred_region
      _
    $region33: #{_forward_impl.6} parent=1 // pred_fallthru
      _
    %2601 = vsyncpa [#allocation4], 1

// kernel: _forward_impl.8
$region0: #{_forward_impl.8}
  #allocation0 [shape = 'u32[]', space=smem, size = 0x4, offset = 0x4, fixed_abs, tag = 'smem constant byte address 0x4 - core index']
  #allocation1 [shape = 'u32[144,128]{1,0:T(1,128)}', space=vmem, size = 0x12000, scoped, tag = 'internal scratch']
  #allocation2 [shape = 'f32[512,128]{1,0:T(8,128)}', space=vmem, size = 0x40000, scoped, tag = 'scratch operand']
  %s0 = inlined_call_operand.vmem [shape: bf16[512,512], index: 0, kind: input, shape index: {}]
  %s1 = inlined_call_operand.vmem [shape: f32[512,128], index: 1, kind: input, shape index: {}]
  %s2 = inlined_call_operand.vmem [shape: f32[512,1], index: 2, kind: input, shape index: {}]
  %s3 = inlined_call_operand.vmem [shape: f32[512,128], index: 3, kind: output, shape index: {}]
  %s4 = sld [smem:[#allocation0]]
  $region30: #{_forward_impl.8} parent=0
    _
  %s6 = ssub.s32 1, %s4
  %s7 = scalar_select 0, %s6, %s4
  // Predicated region
  $region2: #{_forward_impl.8} parent=0 // pred_check
    _
  $region3: #{_forward_impl.8} parent=0 // pred_check_branch
    %9 = sbr.rel (0) target = $region5
  $region4: #{_forward_impl.8} parent=0 // pred_region
    _
  $region5: #{_forward_impl.8} parent=0 // pred_fallthru
    _
  // Predicated region
  $region6: #{_forward_impl.8} parent=0 // pred_check
    _
  $region7: #{_forward_impl.8} parent=0 // pred_check_branch
    %11 = sbr.rel (0) target = $region9
  $region8: #{_forward_impl.8} parent=0 // pred_region
    _
  $region9: #{_forward_impl.8} parent=0 // pred_fallthru
    _
  // Predicated region
  $region10: #{_forward_impl.8} parent=0 // pred_check
    _
  $region11: #{_forward_impl.8} parent=0 // pred_check_branch
    %13 = sbr.rel (0) target = $region13
  $region12: #{_forward_impl.8} parent=0 // pred_region
    _
  $region13: #{_forward_impl.8} parent=0 // pred_fallthru
    _
  %p14 = scmp.eq.s32.totalorder 0, 0
  // Predicated region
  $region14: #{_forward_impl.8} parent=0 // pred_check
    %p15 = pneg %p14
  $region15: #{_forward_impl.8} parent=0 // pred_check_branch
    %17 = sbr.rel (%p15) target = $region17
  $region16: #{_forward_impl.8} parent=0 // pred_region
    %18 = vst [vmem:[#allocation2] sm:$0xff] 0.0
    %19 = vst [vmem:[#allocation2 + $0x8] sm:$0xff] 0.0
    %20 = vst [vmem:[#allocation2 + $0x10] sm:$0xff] 0.0
    %21 = vst [vmem:[#allocation2 + $0x18] sm:$0xff] 0.0
    %22 = vst [vmem:[#allocation2 + $0x20] sm:$0xff] 0.0
    %23 = vst [vmem:[#allocation2 + $0x28] sm:$0xff] 0.0
    %24 = vst [vmem:[#allocation2 + $0x30] sm:$0xff] 0.0
    %25 = vst [vmem:[#allocation2 + $0x38] sm:$0xff] 0.0
    %26 = vst [vmem:[#allocation2 + $0x40] sm:$0xff] 0.0
    %27 = vst [vmem:[#allocation2 + $0x48] sm:$0xff] 0.0
    %28 = vst [vmem:[#allocation2 + $0x50] sm:$0xff] 0.0
    %29 = vst [vmem:[#allocation2 + $0x58] sm:$0xff] 0.0
    %30 = vst [vmem:[#allocation2 + $0x60] sm:$0xff] 0.0
    %31 = vst [vmem:[#allocation2 + $0x68] sm:$0xff] 0.0
    %32 = vst [vmem:[#allocation2 + $0x70] sm:$0xff] 0.0
    %33 = vst [vmem:[#allocation2 + $0x78] sm:$0xff] 0.0
    %34 = vst [vmem:[#allocation2 + $0x80] sm:$0xff] 0.0
    %35 = vst [vmem:[#allocation2 + $0x88] sm:$0xff] 0.0
    %36 = vst [vmem:[#allocation2 + $0x90] sm:$0xff] 0.0
    %37 = vst [vmem:[#allocation2 + $0x98] sm:$0xff] 0.0
    %38 = vst [vmem:[#allocation2 + $0xa0] sm:$0xff] 0.0
    %39 = vst [vmem:[#allocation2 + $0xa8] sm:$0xff] 0.0
    %40 = vst [vmem:[#allocation2 + $0xb0] sm:$0xff] 0.0
    %41 = vst [vmem:[#allocation2 + $0xb8] sm:$0xff] 0.0
    %42 = vst [vmem:[#allocation2 + $0xc0] sm:$0xff] 0.0
    %43 = vst [vmem:[#allocation2 + $0xc8] sm:$0xff] 0.0
    %44 = vst [vmem:[#allocation2 + $0xd0] sm:$0xff] 0.0
    %45 = vst [vmem:[#allocation2 + $0xd8] sm:$0xff] 0.0
    %46 = vst [vmem:[#allocation2 + $0xe0] sm:$0xff] 0.0
    %47 = vst [vmem:[#allocation2 + $0xe8] sm:$0xff] 0.0
    %48 = vst [vmem:[#allocation2 + $0xf0] sm:$0xff] 0.0
    %49 = vst [vmem:[#allocation2 + $0xf8] sm:$0xff] 0.0
    %50 = vst [vmem:[#allocation2 + $0x100] sm:$0xff] 0.0
    %51 = vst [vmem:[#allocation2 + $0x108] sm:$0xff] 0.0
    %52 = vst [vmem:[#allocation2 + $0x110] sm:$0xff] 0.0
    %53 = vst [vmem:[#allocation2 + $0x118] sm:$0xff] 0.0
    %54 = vst [vmem:[#allocation2 + $0x120] sm:$0xff] 0.0
    %55 = vst [vmem:[#allocation2 + $0x128] sm:$0xff] 0.0
    %56 = vst [vmem:[#allocation2 + $0x130] sm:$0xff] 0.0
    %57 = vst [vmem:[#allocation2 + $0x138] sm:$0xff] 0.0
    %58 = vst [vmem:[#allocation2 + $0x140] sm:$0xff] 0.0
    %59 = vst [vmem:[#allocation2 + $0x148] sm:$0xff] 0.0
    %60 = vst [vmem:[#allocation2 + $0x150] sm:$0xff] 0.0
    %61 = vst [vmem:[#allocation2 + $0x158] sm:$0xff] 0.0
    %62 = vst [vmem:[#allocation2 + $0x160] sm:$0xff] 0.0
    %63 = vst [vmem:[#allocation2 + $0x168] sm:$0xff] 0.0
    %64 = vst [vmem:[#allocation2 + $0x170] sm:$0xff] 0.0
    %65 = vst [vmem:[#allocation2 + $0x178] sm:$0xff] 0.0
    %66 = vst [vmem:[#allocation2 + $0x180] sm:$0xff] 0.0
    %67 = vst [vmem:[#allocation2 + $0x188] sm:$0xff] 0.0
    %68 = vst [vmem:[#allocation2 + $0x190] sm:$0xff] 0.0
    %69 = vst [vmem:[#allocation2 + $0x198] sm:$0xff] 0.0
    %70 = vst [vmem:[#allocation2 + $0x1a0] sm:$0xff] 0.0
    %71 = vst [vmem:[#allocation2 + $0x1a8] sm:$0xff] 0.0
    %72 = vst [vmem:[#allocation2 + $0x1b0] sm:$0xff] 0.0
    %73 = vst [vmem:[#allocation2 + $0x1b8] sm:$0xff] 0.0
    %74 = vst [vmem:[#allocation2 + $0x1c0] sm:$0xff] 0.0
    %75 = vst [vmem:[#allocation2 + $0x1c8] sm:$0xff] 0.0
    %76 = vst [vmem:[#allocation2 + $0x1d0] sm:$0xff] 0.0
    %77 = vst [vmem:[#allocation2 + $0x1d8] sm:$0xff] 0.0
    %78 = vst [vmem:[#allocation2 + $0x1e0] sm:$0xff] 0.0
    %79 = vst [vmem:[#allocation2 + $0x1e8] sm:$0xff] 0.0
    %80 = vst [vmem:[#allocation2 + $0x1f0] sm:$0xff] 0.0
    %81 = vst [vmem:[#allocation2 + $0x1f8] sm:$0xff] 0.0
  $region17: #{_forward_impl.8} parent=0 // pred_fallthru
    _
  %v82 = vld [vmem:[%s0] sm:$0xff]
  %v83 = vld [vmem:[%s0 + $0x8] sm:$0xff]
  %v84 = vld [vmem:[%s0 + $0x10] sm:$0xff]
  %v85 = vld [vmem:[%s0 + $0x18] sm:$0xff]
  %v86 = vld [vmem:[%s0 + $0x20] sm:$0xff]
  %v87 = vld [vmem:[%s0 + $0x28] sm:$0xff]
  %v88 = vld [vmem:[%s0 + $0x30] sm:$0xff]
  %v89 = vld [vmem:[%s0 + $0x38] sm:$0xff]
  %v90 = vld [vmem:[%s0 + $0x40] sm:$0xff]
  %v91 = vld [vmem:[%s0 + $0x48] sm:$0xff]
  %v92 = vld [vmem:[%s0 + $0x50] sm:$0xff]
  %v93 = vld [vmem:[%s0 + $0x58] sm:$0xff]
  %v94 = vld [vmem:[%s0 + $0x60] sm:$0xff]
  %v95 = vld [vmem:[%s0 + $0x68] sm:$0xff]
  %v96 = vld [vmem:[%s0 + $0x70] sm:$0xff]
  %v97 = vld [vmem:[%s0 + $0x78] sm:$0xff]
  %v98 = vld [vmem:[%s0 + $0x80] sm:$0xff]
  %v99 = vld [vmem:[%s0 + $0x88] sm:$0xff]
  %v100 = vld [vmem:[%s0 + $0x90] sm:$0xff]
  %v101 = vld [vmem:[%s0 + $0x98] sm:$0xff]
  %v102 = vld [vmem:[%s0 + $0xa0] sm:$0xff]
  %v103 = vld [vmem:[%s0 + $0xa8] sm:$0xff]
  %v104 = vld [vmem:[%s0 + $0xb0] sm:$0xff]
  %v105 = vld [vmem:[%s0 + $0xb8] sm:$0xff]
  %v106 = vld [vmem:[%s0 + $0xc0] sm:$0xff]
  %v107 = vld [vmem:[%s0 + $0xc8] sm:$0xff]
  %v108 = vld [vmem:[%s0 + $0xd0] sm:$0xff]
  %v109 = vld [vmem:[%s0 + $0xd8] sm:$0xff]
  %v110 = vld [vmem:[%s0 + $0xe0] sm:$0xff]
  %v111 = vld [vmem:[%s0 + $0xe8] sm:$0xff]
  %v112 = vld [vmem:[%s0 + $0xf0] sm:$0xff]
  %v113 = vld [vmem:[%s0 + $0xf8] sm:$0xff]
  %v114 = vld [vmem:[%s0 + $0x100] sm:$0xff]
  %v115 = vld [vmem:[%s0 + $0x108] sm:$0xff]
  %v116 = vld [vmem:[%s0 + $0x110] sm:$0xff]
  %v117 = vld [vmem:[%s0 + $0x118] sm:$0xff]
  %v118 = vld [vmem:[%s0 + $0x120] sm:$0xff]
  %v119 = vld [vmem:[%s0 + $0x128] sm:$0xff]
  %v120 = vld [vmem:[%s0 + $0x130] sm:$0xff]
  %v121 = vld [vmem:[%s0 + $0x138] sm:$0xff]
  %v122 = vld [vmem:[%s0 + $0x140] sm:$0xff]
  %v123 = vld [vmem:[%s0 + $0x148] sm:$0xff]
  %v124 = vld [vmem:[%s0 + $0x150] sm:$0xff]
  %v125 = vld [vmem:[%s0 + $0x158] sm:$0xff]
  %v126 = vld [vmem:[%s0 + $0x160] sm:$0xff]
  %v127 = vld [vmem:[%s0 + $0x168] sm:$0xff]
  %v128 = vld [vmem:[%s0 + $0x170] sm:$0xff]
  %v129 = vld [vmem:[%s0 + $0x178] sm:$0xff]
  %v130 = vld [vmem:[%s0 + $0x180] sm:$0xff]
  %v131 = vld [vmem:[%s0 + $0x188] sm:$0xff]
  %v132 = vld [vmem:[%s0 + $0x190] sm:$0xff]
  %v133 = vld [vmem:[%s0 + $0x198] sm:$0xff]
  %v134 = vld [vmem:[%s0 + $0x1a0] sm:$0xff]
  %v135 = vld [vmem:[%s0 + $0x1a8] sm:$0xff]
  %v136 = vld [vmem:[%s0 + $0x1b0] sm:$0xff]
  %v137 = vld [vmem:[%s0 + $0x1b8] sm:$0xff]
  %v138 = vld [vmem:[%s0 + $0x1c0] sm:$0xff]
  %v139 = vld [vmem:[%s0 + $0x1c8] sm:$0xff]
  %v140 = vld [vmem:[%s0 + $0x1d0] sm:$0xff]
  %v141 = vld [vmem:[%s0 + $0x1d8] sm:$0xff]
  %v142 = vld [vmem:[%s0 + $0x1e0] sm:$0xff]
  %v143 = vld [vmem:[%s0 + $0x1e8] sm:$0xff]
  %v144 = vld [vmem:[%s0 + $0x1f0] sm:$0xff]
  %v145 = vld [vmem:[%s0 + $0x1f8] sm:$0xff]
  %v146 = vld [vmem:[%s0 + $0x200] sm:$0xff]
  %v147 = vld [vmem:[%s0 + $0x208] sm:$0xff]
  %v148 = vld [vmem:[%s0 + $0x210] sm:$0xff]
  %v149 = vld [vmem:[%s0 + $0x218] sm:$0xff]
  %v150 = vld [vmem:[%s0 + $0x220] sm:$0xff]
  %v151 = vld [vmem:[%s0 + $0x228] sm:$0xff]
  %v152 = vld [vmem:[%s0 + $0x230] sm:$0xff]
  %v153 = vld [vmem:[%s0 + $0x238] sm:$0xff]
  %v154 = vld [vmem:[%s0 + $0x240] sm:$0xff]
  %v155 = vld [vmem:[%s0 + $0x248] sm:$0xff]
  %v156 = vld [vmem:[%s0 + $0x250] sm:$0xff]
  %v157 = vld [vmem:[%s0 + $0x258] sm:$0xff]
  %v158 = vld [vmem:[%s0 + $0x260] sm:$0xff]
  %v159 = vld [vmem:[%s0 + $0x268] sm:$0xff]
  %v160 = vld [vmem:[%s0 + $0x270] sm:$0xff]
  %v161 = vld [vmem:[%s0 + $0x278] sm:$0xff]
  %v162 = vld [vmem:[%s0 + $0x280] sm:$0xff]
  %v163 = vld [vmem:[%s0 + $0x288] sm:$0xff]
  %v164 = vld [vmem:[%s0 + $0x290] sm:$0xff]
  %v165 = vld [vmem:[%s0 + $0x298] sm:$0xff]
  %v166 = vld [vmem:[%s0 + $0x2a0] sm:$0xff]
  %v167 = vld [vmem:[%s0 + $0x2a8] sm:$0xff]
  %v168 = vld [vmem:[%s0 + $0x2b0] sm:$0xff]
  %v169 = vld [vmem:[%s0 + $0x2b8] sm:$0xff]
  %v170 = vld [vmem:[%s0 + $0x2c0] sm:$0xff]
  %v171 = vld [vmem:[%s0 + $0x2c8] sm:$0xff]
  %v172 = vld [vmem:[%s0 + $0x2d0] sm:$0xff]
  %v173 = vld [vmem:[%s0 + $0x2d8] sm:$0xff]
  %v174 = vld [vmem:[%s0 + $0x2e0] sm:$0xff]
  %v175 = vld [vmem:[%s0 + $0x2e8] sm:$0xff]
  %v176 = vld [vmem:[%s0 + $0x2f0] sm:$0xff]
  %v177 = vld [vmem:[%s0 + $0x2f8] sm:$0xff]
  %v178 = vld [vmem:[%s0 + $0x300] sm:$0xff]
  %v179 = vld [vmem:[%s0 + $0x308] sm:$0xff]
  %v180 = vld [vmem:[%s0 + $0x310] sm:$0xff]
  %v181 = vld [vmem:[%s0 + $0x318] sm:$0xff]
  %v182 = vld [vmem:[%s0 + $0x320] sm:$0xff]
  %v183 = vld [vmem:[%s0 + $0x328] sm:$0xff]
  %v184 = vld [vmem:[%s0 + $0x330] sm:$0xff]
  %v185 = vld [vmem:[%s0 + $0x338] sm:$0xff]
  %v186 = vld [vmem:[%s0 + $0x340] sm:$0xff]
  %v187 = vld [vmem:[%s0 + $0x348] sm:$0xff]
  %v188 = vld [vmem:[%s0 + $0x350] sm:$0xff]
  %v189 = vld [vmem:[%s0 + $0x358] sm:$0xff]
  %v190 = vld [vmem:[%s0 + $0x360] sm:$0xff]
  %v191 = vld [vmem:[%s0 + $0x368] sm:$0xff]
  %v192 = vld [vmem:[%s0 + $0x370] sm:$0xff]
  %v193 = vld [vmem:[%s0 + $0x378] sm:$0xff]
  %v194 = vld [vmem:[%s0 + $0x380] sm:$0xff]
  %v195 = vld [vmem:[%s0 + $0x388] sm:$0xff]
  %v196 = vld [vmem:[%s0 + $0x390] sm:$0xff]
  %v197 = vld [vmem:[%s0 + $0x398] sm:$0xff]
  %v198 = vld [vmem:[%s0 + $0x3a0] sm:$0xff]
  %v199 = vld [vmem:[%s0 + $0x3a8] sm:$0xff]
  %v200 = vld [vmem:[%s0 + $0x3b0] sm:$0xff]
  %v201 = vld [vmem:[%s0 + $0x3b8] sm:$0xff]
  %v202 = vld [vmem:[%s0 + $0x3c0] sm:$0xff]
  %v203 = vld [vmem:[%s0 + $0x3c8] sm:$0xff]
  %v204 = vld [vmem:[%s0 + $0x3d0] sm:$0xff]
  %v205 = vld [vmem:[%s0 + $0x3d8] sm:$0xff]
  %v206 = vld [vmem:[%s0 + $0x3e0] sm:$0xff]
  %v207 = vld [vmem:[%s0 + $0x3e8] sm:$0xff]
  %v208 = vld [vmem:[%s0 + $0x3f0] sm:$0xff]
  %v209 = vld [vmem:[%s0 + $0x3f8] sm:$0xff]
  %v210 = vunpack.c.l.bf16 %v82
  %v211 = vunpack.c.h.bf16 %v82
  %v212 = vunpack.c.l.bf16 %v83
  %v213 = vunpack.c.h.bf16 %v83
  %v214 = vunpack.c.l.bf16 %v84
  %v215 = vunpack.c.h.bf16 %v84
  %v216 = vunpack.c.l.bf16 %v85
  %v217 = vunpack.c.h.bf16 %v85
  %v218 = vunpack.c.l.bf16 %v86
  %v219 = vunpack.c.h.bf16 %v86
  %v220 = vunpack.c.l.bf16 %v87
  %v221 = vunpack.c.h.bf16 %v87
  %v222 = vunpack.c.l.bf16 %v88
  %v223 = vunpack.c.h.bf16 %v88
  %v224 = vunpack.c.l.bf16 %v89
  %v225 = vunpack.c.h.bf16 %v89
  %v226 = vunpack.c.l.bf16 %v90
  %v227 = vunpack.c.h.bf16 %v90
  %v228 = vunpack.c.l.bf16 %v91
  %v229 = vunpack.c.h.bf16 %v91
  %v230 = vunpack.c.l.bf16 %v92
  %v231 = vunpack.c.h.bf16 %v92
  %v232 = vunpack.c.l.bf16 %v93
  %v233 = vunpack.c.h.bf16 %v93
  %v234 = vunpack.c.l.bf16 %v94
  %v235 = vunpack.c.h.bf16 %v94
  %v236 = vunpack.c.l.bf16 %v95
  %v237 = vunpack.c.h.bf16 %v95
  %v238 = vunpack.c.l.bf16 %v96
  %v239 = vunpack.c.h.bf16 %v96
  %v240 = vunpack.c.l.bf16 %v97
  %v241 = vunpack.c.h.bf16 %v97
  %v242 = vunpack.c.l.bf16 %v98
  %v243 = vunpack.c.h.bf16 %v98
  %v244 = vunpack.c.l.bf16 %v99
  %v245 = vunpack.c.h.bf16 %v99
  %v246 = vunpack.c.l.bf16 %v100
  %v247 = vunpack.c.h.bf16 %v100
  %v248 = vunpack.c.l.bf16 %v101
  %v249 = vunpack.c.h.bf16 %v101
  %v250 = vunpack.c.l.bf16 %v102
  %v251 = vunpack.c.h.bf16 %v102
  %v252 = vunpack.c.l.bf16 %v103
  %v253 = vunpack.c.h.bf16 %v103
  %v254 = vunpack.c.l.bf16 %v104
  %v255 = vunpack.c.h.bf16 %v104
  %v256 = vunpack.c.l.bf16 %v105
  %v257 = vunpack.c.h.bf16 %v105
  %v258 = vunpack.c.l.bf16 %v106
  %v259 = vunpack.c.h.bf16 %v106
  %v260 = vunpack.c.l.bf16 %v107
  %v261 = vunpack.c.h.bf16 %v107
  %v262 = vunpack.c.l.bf16 %v108
  %v263 = vunpack.c.h.bf16 %v108
  %v264 = vunpack.c.l.bf16 %v109
  %v265 = vunpack.c.h.bf16 %v109
  %v266 = vunpack.c.l.bf16 %v110
  %v267 = vunpack.c.h.bf16 %v110
  %v268 = vunpack.c.l.bf16 %v111
  %v269 = vunpack.c.h.bf16 %v111
  %v270 = vunpack.c.l.bf16 %v112
  %v271 = vunpack.c.h.bf16 %v112
  %v272 = vunpack.c.l.bf16 %v113
  %v273 = vunpack.c.h.bf16 %v113
  %v274 = vunpack.c.l.bf16 %v114
  %v275 = vunpack.c.h.bf16 %v114
  %v276 = vunpack.c.l.bf16 %v115
  %v277 = vunpack.c.h.bf16 %v115
  %v278 = vunpack.c.l.bf16 %v116
  %v279 = vunpack.c.h.bf16 %v116
  %v280 = vunpack.c.l.bf16 %v117
  %v281 = vunpack.c.h.bf16 %v117
  %v282 = vunpack.c.l.bf16 %v118
  %v283 = vunpack.c.h.bf16 %v118
  %v284 = vunpack.c.l.bf16 %v119
  %v285 = vunpack.c.h.bf16 %v119
  %v286 = vunpack.c.l.bf16 %v120
  %v287 = vunpack.c.h.bf16 %v120
  %v288 = vunpack.c.l.bf16 %v121
  %v289 = vunpack.c.h.bf16 %v121
  %v290 = vunpack.c.l.bf16 %v122
  %v291 = vunpack.c.h.bf16 %v122
  %v292 = vunpack.c.l.bf16 %v123
  %v293 = vunpack.c.h.bf16 %v123
  %v294 = vunpack.c.l.bf16 %v124
  %v295 = vunpack.c.h.bf16 %v124
  %v296 = vunpack.c.l.bf16 %v125
  %v297 = vunpack.c.h.bf16 %v125
  %v298 = vunpack.c.l.bf16 %v126
  %v299 = vunpack.c.h.bf16 %v126
  %v300 = vunpack.c.l.bf16 %v127
  %v301 = vunpack.c.h.bf16 %v127
  %v302 = vunpack.c.l.bf16 %v128
  %v303 = vunpack.c.h.bf16 %v128
  %v304 = vunpack.c.l.bf16 %v129
  %v305 = vunpack.c.h.bf16 %v129
  %v306 = vunpack.c.l.bf16 %v130
  %v307 = vunpack.c.h.bf16 %v130
  %v308 = vunpack.c.l.bf16 %v131
  %v309 = vunpack.c.h.bf16 %v131
  %v310 = vunpack.c.l.bf16 %v132
  %v311 = vunpack.c.h.bf16 %v132
  %v312 = vunpack.c.l.bf16 %v133
  %v313 = vunpack.c.h.bf16 %v133
  %v314 = vunpack.c.l.bf16 %v134
  %v315 = vunpack.c.h.bf16 %v134
  %v316 = vunpack.c.l.bf16 %v135
  %v317 = vunpack.c.h.bf16 %v135
  %v318 = vunpack.c.l.bf16 %v136
  %v319 = vunpack.c.h.bf16 %v136
  %v320 = vunpack.c.l.bf16 %v137
  %v321 = vunpack.c.h.bf16 %v137
  %v322 = vunpack.c.l.bf16 %v138
  %v323 = vunpack.c.h.bf16 %v138
  %v324 = vunpack.c.l.bf16 %v139
  %v325 = vunpack.c.h.bf16 %v139
  %v326 = vunpack.c.l.bf16 %v140
  %v327 = vunpack.c.h.bf16 %v140
  %v328 = vunpack.c.l.bf16 %v141
  %v329 = vunpack.c.h.bf16 %v141
  %v330 = vunpack.c.l.bf16 %v142
  %v331 = vunpack.c.h.bf16 %v142
  %v332 = vunpack.c.l.bf16 %v143
  %v333 = vunpack.c.h.bf16 %v143
  %v334 = vunpack.c.l.bf16 %v144
  %v335 = vunpack.c.h.bf16 %v144
  %v336 = vunpack.c.l.bf16 %v145
  %v337 = vunpack.c.h.bf16 %v145
  %v338 = vunpack.c.l.bf16 %v146
  %v339 = vunpack.c.h.bf16 %v146
  %v340 = vunpack.c.l.bf16 %v147
  %v341 = vunpack.c.h.bf16 %v147
  %v342 = vunpack.c.l.bf16 %v148
  %v343 = vunpack.c.h.bf16 %v148
  %v344 = vunpack.c.l.bf16 %v149
  %v345 = vunpack.c.h.bf16 %v149
  %v346 = vunpack.c.l.bf16 %v150
  %v347 = vunpack.c.h.bf16 %v150
  %v348 = vunpack.c.l.bf16 %v151
  %v349 = vunpack.c.h.bf16 %v151
  %v350 = vunpack.c.l.bf16 %v152
  %v351 = vunpack.c.h.bf16 %v152
  %v352 = vunpack.c.l.bf16 %v153
  %v353 = vunpack.c.h.bf16 %v153
  %v354 = vunpack.c.l.bf16 %v154
  %v355 = vunpack.c.h.bf16 %v154
  %v356 = vunpack.c.l.bf16 %v155
  %v357 = vunpack.c.h.bf16 %v155
  %v358 = vunpack.c.l.bf16 %v156
  %v359 = vunpack.c.h.bf16 %v156
  %v360 = vunpack.c.l.bf16 %v157
  %v361 = vunpack.c.h.bf16 %v157
  %v362 = vunpack.c.l.bf16 %v158
  %v363 = vunpack.c.h.bf16 %v158
  %v364 = vunpack.c.l.bf16 %v159
  %v365 = vunpack.c.h.bf16 %v159
  %v366 = vunpack.c.l.bf16 %v160
  %v367 = vunpack.c.h.bf16 %v160
  %v368 = vunpack.c.l.bf16 %v161
  %v369 = vunpack.c.h.bf16 %v161
  %v370 = vunpack.c.l.bf16 %v162
  %v371 = vunpack.c.h.bf16 %v162
  %v372 = vunpack.c.l.bf16 %v163
  %v373 = vunpack.c.h.bf16 %v163
  %v374 = vunpack.c.l.bf16 %v164
  %v375 = vunpack.c.h.bf16 %v164
  %v376 = vunpack.c.l.bf16 %v165
  %v377 = vunpack.c.h.bf16 %v165
  %v378 = vunpack.c.l.bf16 %v166
  %v379 = vunpack.c.h.bf16 %v166
  %v380 = vunpack.c.l.bf16 %v167
  %v381 = vunpack.c.h.bf16 %v167
  %v382 = vunpack.c.l.bf16 %v168
  %v383 = vunpack.c.h.bf16 %v168
  %v384 = vunpack.c.l.bf16 %v169
  %v385 = vunpack.c.h.bf16 %v169
  %v386 = vunpack.c.l.bf16 %v170
  %v387 = vunpack.c.h.bf16 %v170
  %v388 = vunpack.c.l.bf16 %v171
  %v389 = vunpack.c.h.bf16 %v171
  %v390 = vunpack.c.l.bf16 %v172
  %v391 = vunpack.c.h.bf16 %v172
  %v392 = vunpack.c.l.bf16 %v173
  %v393 = vunpack.c.h.bf16 %v173
  %v394 = vunpack.c.l.bf16 %v174
  %v395 = vunpack.c.h.bf16 %v174
  %v396 = vunpack.c.l.bf16 %v175
  %v397 = vunpack.c.h.bf16 %v175
  %v398 = vunpack.c.l.bf16 %v176
  %v399 = vunpack.c.h.bf16 %v176
  %v400 = vunpack.c.l.bf16 %v177
  %v401 = vunpack.c.h.bf16 %v177
  %v402 = vunpack.c.l.bf16 %v178
  %v403 = vunpack.c.h.bf16 %v178
  %v404 = vunpack.c.l.bf16 %v179
  %v405 = vunpack.c.h.bf16 %v179
  %v406 = vunpack.c.l.bf16 %v180
  %v407 = vunpack.c.h.bf16 %v180
  %v408 = vunpack.c.l.bf16 %v181
  %v409 = vunpack.c.h.bf16 %v181
  %v410 = vunpack.c.l.bf16 %v182
  %v411 = vunpack.c.h.bf16 %v182
  %v412 = vunpack.c.l.bf16 %v183
  %v413 = vunpack.c.h.bf16 %v183
  %v414 = vunpack.c.l.bf16 %v184
  %v415 = vunpack.c.h.bf16 %v184
  %v416 = vunpack.c.l.bf16 %v185
  %v417 = vunpack.c.h.bf16 %v185
  %v418 = vunpack.c.l.bf16 %v186
  %v419 = vunpack.c.h.bf16 %v186
  %v420 = vunpack.c.l.bf16 %v187
  %v421 = vunpack.c.h.bf16 %v187
  %v422 = vunpack.c.l.bf16 %v188
  %v423 = vunpack.c.h.bf16 %v188
  %v424 = vunpack.c.l.bf16 %v189
  %v425 = vunpack.c.h.bf16 %v189
  %v426 = vunpack.c.l.bf16 %v190
  %v427 = vunpack.c.h.bf16 %v190
  %v428 = vunpack.c.l.bf16 %v191
  %v429 = vunpack.c.h.bf16 %v191
  %v430 = vunpack.c.l.bf16 %v192
  %v431 = vunpack.c.h.bf16 %v192
  %v432 = vunpack.c.l.bf16 %v193
  %v433 = vunpack.c.h.bf16 %v193
  %v434 = vunpack.c.l.bf16 %v194
  %v435 = vunpack.c.h.bf16 %v194
  %v436 = vunpack.c.l.bf16 %v195
  %v437 = vunpack.c.h.bf16 %v195
  %v438 = vunpack.c.l.bf16 %v196
  %v439 = vunpack.c.h.bf16 %v196
  %v440 = vunpack.c.l.bf16 %v197
  %v441 = vunpack.c.h.bf16 %v197
  %v442 = vunpack.c.l.bf16 %v198
  %v443 = vunpack.c.h.bf16 %v198
  %v444 = vunpack.c.l.bf16 %v199
  %v445 = vunpack.c.h.bf16 %v199
  %v446 = vunpack.c.l.bf16 %v200
  %v447 = vunpack.c.h.bf16 %v200
  %v448 = vunpack.c.l.bf16 %v201
  %v449 = vunpack.c.h.bf16 %v201
  %v450 = vunpack.c.l.bf16 %v202
  %v451 = vunpack.c.h.bf16 %v202
  %v452 = vunpack.c.l.bf16 %v203
  %v453 = vunpack.c.h.bf16 %v203
  %v454 = vunpack.c.l.bf16 %v204
  %v455 = vunpack.c.h.bf16 %v204
  %v456 = vunpack.c.l.bf16 %v205
  %v457 = vunpack.c.h.bf16 %v205
  %v458 = vunpack.c.l.bf16 %v206
  %v459 = vunpack.c.h.bf16 %v206
  %v460 = vunpack.c.l.bf16 %v207
  %v461 = vunpack.c.h.bf16 %v207
  %v462 = vunpack.c.l.bf16 %v208
  %v463 = vunpack.c.h.bf16 %v208
  %v464 = vunpack.c.l.bf16 %v209
  %v465 = vunpack.c.h.bf16 %v209
  %v466 = vld [vmem:[#allocation2] sm:$0xff]
  %v467 = vld [vmem:[#allocation2 + $0x8] sm:$0xff]
  %v468 = vld [vmem:[#allocation2 + $0x10] sm:$0xff]
  %v469 = vld [vmem:[#allocation2 + $0x18] sm:$0xff]
  %v470 = vld [vmem:[#allocation2 + $0x20] sm:$0xff]
  %v471 = vld [vmem:[#allocation2 + $0x28] sm:$0xff]
  %v472 = vld [vmem:[#allocation2 + $0x30] sm:$0xff]
  %v473 = vld [vmem:[#allocation2 + $0x38] sm:$0xff]
  %v474 = vld [vmem:[#allocation2 + $0x40] sm:$0xff]
  %v475 = vld [vmem:[#allocation2 + $0x48] sm:$0xff]
  %v476 = vld [vmem:[#allocation2 + $0x50] sm:$0xff]
  %v477 = vld [vmem:[#allocation2 + $0x58] sm:$0xff]
  %v478 = vld [vmem:[#allocation2 + $0x60] sm:$0xff]
  %v479 = vld [vmem:[#allocation2 + $0x68] sm:$0xff]
  %v480 = vld [vmem:[#allocation2 + $0x70] sm:$0xff]
  %v481 = vld [vmem:[#allocation2 + $0x78] sm:$0xff]
  %v482 = vld [vmem:[#allocation2 + $0x80] sm:$0xff]
  %v483 = vld [vmem:[#allocation2 + $0x88] sm:$0xff]
  %v484 = vld [vmem:[#allocation2 + $0x90] sm:$0xff]
  %v485 = vld [vmem:[#allocation2 + $0x98] sm:$0xff]
  %v486 = vld [vmem:[#allocation2 + $0xa0] sm:$0xff]
  %v487 = vld [vmem:[#allocation2 + $0xa8] sm:$0xff]
  %v488 = vld [vmem:[#allocation2 + $0xb0] sm:$0xff]
  %v489 = vld [vmem:[#allocation2 + $0xb8] sm:$0xff]
  %v490 = vld [vmem:[#allocation2 + $0xc0] sm:$0xff]
  %v491 = vld [vmem:[#allocation2 + $0xc8] sm:$0xff]
  %v492 = vld [vmem:[#allocation2 + $0xd0] sm:$0xff]
  %v493 = vld [vmem:[#allocation2 + $0xd8] sm:$0xff]
  %v494 = vld [vmem:[#allocation2 + $0xe0] sm:$0xff]
  %v495 = vld [vmem:[#allocation2 + $0xe8] sm:$0xff]
  %v496 = vld [vmem:[#allocation2 + $0xf0] sm:$0xff]
  %v497 = vld [vmem:[#allocation2 + $0xf8] sm:$0xff]
  %v498 = vld [vmem:[#allocation2 + $0x100] sm:$0xff]
  %v499 = vld [vmem:[#allocation2 + $0x108] sm:$0xff]
  %v500 = vld [vmem:[#allocation2 + $0x110] sm:$0xff]
  %v501 = vld [vmem:[#allocation2 + $0x118] sm:$0xff]
  %v502 = vld [vmem:[#allocation2 + $0x120] sm:$0xff]
  %v503 = vld [vmem:[#allocation2 + $0x128] sm:$0xff]
  %v504 = vld [vmem:[#allocation2 + $0x130] sm:$0xff]
  %v505 = vld [vmem:[#allocation2 + $0x138] sm:$0xff]
  %v506 = vld [vmem:[#allocation2 + $0x140] sm:$0xff]
  %v507 = vld [vmem:[#allocation2 + $0x148] sm:$0xff]
  %v508 = vld [vmem:[#allocation2 + $0x150] sm:$0xff]
  %v509 = vld [vmem:[#allocation2 + $0x158] sm:$0xff]
  %v510 = vld [vmem:[#allocation2 + $0x160] sm:$0xff]
  %v511 = vld [vmem:[#allocation2 + $0x168] sm:$0xff]
  %v512 = vld [vmem:[#allocation2 + $0x170] sm:$0xff]
  %v513 = vld [vmem:[#allocation2 + $0x178] sm:$0xff]
  %v514 = vld [vmem:[#allocation2 + $0x180] sm:$0xff]
  %v515 = vld [vmem:[#allocation2 + $0x188] sm:$0xff]
  %v516 = vld [vmem:[#allocation2 + $0x190] sm:$0xff]
  %v517 = vld [vmem:[#allocation2 + $0x198] sm:$0xff]
  %v518 = vld [vmem:[#allocation2 + $0x1a0] sm:$0xff]
  %v519 = vld [vmem:[#allocation2 + $0x1a8] sm:$0xff]
  %v520 = vld [vmem:[#allocation2 + $0x1b0] sm:$0xff]
  %v521 = vld [vmem:[#allocation2 + $0x1b8] sm:$0xff]
  %v522 = vld [vmem:[#allocation2 + $0x1c0] sm:$0xff]
  %v523 = vld [vmem:[#allocation2 + $0x1c8] sm:$0xff]
  %v524 = vld [vmem:[#allocation2 + $0x1d0] sm:$0xff]
  %v525 = vld [vmem:[#allocation2 + $0x1d8] sm:$0xff]
  %v526 = vld [vmem:[#allocation2 + $0x1e0] sm:$0xff]
  %v527 = vld [vmem:[#allocation2 + $0x1e8] sm:$0xff]
  %v528 = vld [vmem:[#allocation2 + $0x1f0] sm:$0xff]
  %v529 = vld [vmem:[#allocation2 + $0x1f8] sm:$0xff]
  %v530 = vld [vmem:[%s1] sm:$0xff]
  %v531 = vld [vmem:[%s1 + $0x8] sm:$0xff]
  %v532 = vld [vmem:[%s1 + $0x10] sm:$0xff]
  %v533 = vld [vmem:[%s1 + $0x18] sm:$0xff]
  %v534 = vld [vmem:[%s1 + $0x20] sm:$0xff]
  %v535 = vld [vmem:[%s1 + $0x28] sm:$0xff]
  %v536 = vld [vmem:[%s1 + $0x30] sm:$0xff]
  %v537 = vld [vmem:[%s1 + $0x38] sm:$0xff]
  %v538 = vld [vmem:[%s1 + $0x40] sm:$0xff]
  %v539 = vld [vmem:[%s1 + $0x48] sm:$0xff]
  %v540 = vld [vmem:[%s1 + $0x50] sm:$0xff]
  %v541 = vld [vmem:[%s1 + $0x58] sm:$0xff]
  %v542 = vld [vmem:[%s1 + $0x60] sm:$0xff]
  %v543 = vld [vmem:[%s1 + $0x68] sm:$0xff]
  %v544 = vld [vmem:[%s1 + $0x70] sm:$0xff]
  %v545 = vld [vmem:[%s1 + $0x78] sm:$0xff]
  %v546 = vld [vmem:[%s1 + $0x80] sm:$0xff]
  %v547 = vld [vmem:[%s1 + $0x88] sm:$0xff]
  %v548 = vld [vmem:[%s1 + $0x90] sm:$0xff]
  %v549 = vld [vmem:[%s1 + $0x98] sm:$0xff]
  %v550 = vld [vmem:[%s1 + $0xa0] sm:$0xff]
  %v551 = vld [vmem:[%s1 + $0xa8] sm:$0xff]
  %v552 = vld [vmem:[%s1 + $0xb0] sm:$0xff]
  %v553 = vld [vmem:[%s1 + $0xb8] sm:$0xff]
  %v554 = vld [vmem:[%s1 + $0xc0] sm:$0xff]
  %v555 = vld [vmem:[%s1 + $0xc8] sm:$0xff]
  %v556 = vld [vmem:[%s1 + $0xd0] sm:$0xff]
  %v557 = vld [vmem:[%s1 + $0xd8] sm:$0xff]
  %v558 = vld [vmem:[%s1 + $0xe0] sm:$0xff]
  %v559 = vld [vmem:[%s1 + $0xe8] sm:$0xff]
  %v560 = vld [vmem:[%s1 + $0xf0] sm:$0xff]
  %v561 = vld [vmem:[%s1 + $0xf8] sm:$0xff]
  %v562 = vld [vmem:[%s1 + $0x100] sm:$0xff]
  %v563 = vld [vmem:[%s1 + $0x108] sm:$0xff]
  %v564 = vld [vmem:[%s1 + $0x110] sm:$0xff]
  %v565 = vld [vmem:[%s1 + $0x118] sm:$0xff]
  %v566 = vld [vmem:[%s1 + $0x120] sm:$0xff]
  %v567 = vld [vmem:[%s1 + $0x128] sm:$0xff]
  %v568 = vld [vmem:[%s1 + $0x130] sm:$0xff]
  %v569 = vld [vmem:[%s1 + $0x138] sm:$0xff]
  %v570 = vld [vmem:[%s1 + $0x140] sm:$0xff]
  %v571 = vld [vmem:[%s1 + $0x148] sm:$0xff]
  %v572 = vld [vmem:[%s1 + $0x150] sm:$0xff]
  %v573 = vld [vmem:[%s1 + $0x158] sm:$0xff]
  %v574 = vld [vmem:[%s1 + $0x160] sm:$0xff]
  %v575 = vld [vmem:[%s1 + $0x168] sm:$0xff]
  %v576 = vld [vmem:[%s1 + $0x170] sm:$0xff]
  %v577 = vld [vmem:[%s1 + $0x178] sm:$0xff]
  %v578 = vld [vmem:[%s1 + $0x180] sm:$0xff]
  %v579 = vld [vmem:[%s1 + $0x188] sm:$0xff]
  %v580 = vld [vmem:[%s1 + $0x190] sm:$0xff]
  %v581 = vld [vmem:[%s1 + $0x198] sm:$0xff]
  %v582 = vld [vmem:[%s1 + $0x1a0] sm:$0xff]
  %v583 = vld [vmem:[%s1 + $0x1a8] sm:$0xff]
  %v584 = vld [vmem:[%s1 + $0x1b0] sm:$0xff]
  %v585 = vld [vmem:[%s1 + $0x1b8] sm:$0xff]
  %v586 = vld [vmem:[%s1 + $0x1c0] sm:$0xff]
  %v587 = vld [vmem:[%s1 + $0x1c8] sm:$0xff]
  %v588 = vld [vmem:[%s1 + $0x1d0] sm:$0xff]
  %v589 = vld [vmem:[%s1 + $0x1d8] sm:$0xff]
  %v590 = vld [vmem:[%s1 + $0x1e0] sm:$0xff]
  %v591 = vld [vmem:[%s1 + $0x1e8] sm:$0xff]
  %v592 = vld [vmem:[%s1 + $0x1f0] sm:$0xff]
  %v593 = vld [vmem:[%s1 + $0x1f8] sm:$0xff]
  %594 = vxpose.xlu0.b32.start [1/16] %v210, 128
  %595 = vxpose.xlu0.b32.cont [2/16] %v214, 128
  %596 = vxpose.xlu0.b32.cont [3/16] %v218, 128
  %597 = vxpose.xlu0.b32.cont [4/16] %v222, 128
  %598 = vxpose.xlu0.b32.cont [5/16] %v226, 128
  %599 = vxpose.xlu0.b32.cont [6/16] %v230, 128
  %600 = vxpose.xlu0.b32.cont [7/16] %v234, 128
  %601 = vxpose.xlu0.b32.cont [8/16] %v238, 128
  %602 = vxpose.xlu0.b32.cont [9/16] %v242, 128
  %603 = vxpose.xlu0.b32.cont [10/16] %v246, 128
  %604 = vxpose.xlu0.b32.cont [11/16] %v250, 128
  %605 = vxpose.xlu0.b32.cont [12/16] %v254, 128
  %606 = vxpose.xlu0.b32.cont [13/16] %v258, 128
  %607 = vxpose.xlu0.b32.cont [14/16] %v262, 128
  %608 = vxpose.xlu0.b32.cont [15/16] %v266, 128
  %609 = vxpose.xlu0.b32.end [16/16] %v270, 128
  %v610 = vpop.trf.xlu0
  %v611 = vpop.trf.xlu0
  %v612 = vpop.trf.xlu0
  %v613 = vpop.trf.xlu0
  %v614 = vpop.trf.xlu0
  %v615 = vpop.trf.xlu0
  %v616 = vpop.trf.xlu0
  %v617 = vpop.trf.xlu0
  %v618 = vpop.trf.xlu0
  %v619 = vpop.trf.xlu0
  %v620 = vpop.trf.xlu0
  %v621 = vpop.trf.xlu0
  %v622 = vpop.trf.xlu0
  %v623 = vpop.trf.xlu0
  %v624 = vpop.trf.xlu0
  %v625 = vpop.trf.xlu0
  %626 = vxpose.xlu0.b32.start [1/16] %v211, 128
  %627 = vxpose.xlu0.b32.cont [2/16] %v215, 128
  %628 = vxpose.xlu0.b32.cont [3/16] %v219, 128
  %629 = vxpose.xlu0.b32.cont [4/16] %v223, 128
  %630 = vxpose.xlu0.b32.cont [5/16] %v227, 128
  %631 = vxpose.xlu0.b32.cont [6/16] %v231, 128
  %632 = vxpose.xlu0.b32.cont [7/16] %v235, 128
  %633 = vxpose.xlu0.b32.cont [8/16] %v239, 128
  %634 = vxpose.xlu0.b32.cont [9/16] %v243, 128
  %635 = vxpose.xlu0.b32.cont [10/16] %v247, 128
  %636 = vxpose.xlu0.b32.cont [11/16] %v251, 128
  %637 = vxpose.xlu0.b32.cont [12/16] %v255, 128
  %638 = vxpose.xlu0.b32.cont [13/16] %v259, 128
  %639 = vxpose.xlu0.b32.cont [14/16] %v263, 128
  %640 = vxpose.xlu0.b32.cont [15/16] %v267, 128
  %641 = vxpose.xlu0.b32.end [16/16] %v271, 128
  %v642 = vpop.trf.xlu0
  %v643 = vpop.trf.xlu0
  %v644 = vpop.trf.xlu0
  %v645 = vpop.trf.xlu0
  %v646 = vpop.trf.xlu0
  %v647 = vpop.trf.xlu0
  %v648 = vpop.trf.xlu0
  %v649 = vpop.trf.xlu0
  %v650 = vpop.trf.xlu0
  %v651 = vpop.trf.xlu0
  %v652 = vpop.trf.xlu0
  %v653 = vpop.trf.xlu0
  %v654 = vpop.trf.xlu0
  %v655 = vpop.trf.xlu0
  %v656 = vpop.trf.xlu0
  %v657 = vpop.trf.xlu0
  %658 = vxpose.xlu0.b32.start [1/16] %v212, 128
  %659 = vxpose.xlu0.b32.cont [2/16] %v216, 128
  %660 = vxpose.xlu0.b32.cont [3/16] %v220, 128
  %661 = vxpose.xlu0.b32.cont [4/16] %v224, 128
  %662 = vxpose.xlu0.b32.cont [5/16] %v228, 128
  %663 = vxpose.xlu0.b32.cont [6/16] %v232, 128
  %664 = vxpose.xlu0.b32.cont [7/16] %v236, 128
  %665 = vxpose.xlu0.b32.cont [8/16] %v240, 128
  %666 = vxpose.xlu0.b32.cont [9/16] %v244, 128
  %667 = vxpose.xlu0.b32.cont [10/16] %v248, 128
  %668 = vxpose.xlu0.b32.cont [11/16] %v252, 128
  %669 = vxpose.xlu0.b32.cont [12/16] %v256, 128
  %670 = vxpose.xlu0.b32.cont [13/16] %v260, 128
  %671 = vxpose.xlu0.b32.cont [14/16] %v264, 128
  %672 = vxpose.xlu0.b32.cont [15/16] %v268, 128
  %673 = vxpose.xlu0.b32.end [16/16] %v272, 128
  %v674 = vpop.trf.xlu0
  %v675 = vpop.trf.xlu0
  %v676 = vpop.trf.xlu0
  %v677 = vpop.trf.xlu0
  %v678 = vpop.trf.xlu0
  %v679 = vpop.trf.xlu0
  %v680 = vpop.trf.xlu0
  %v681 = vpop.trf.xlu0
  %v682 = vpop.trf.xlu0
  %v683 = vpop.trf.xlu0
  %v684 = vpop.trf.xlu0
  %v685 = vpop.trf.xlu0
  %v686 = vpop.trf.xlu0
  %v687 = vpop.trf.xlu0
  %v688 = vpop.trf.xlu0
  %v689 = vpop.trf.xlu0
  %690 = vxpose.xlu0.b32.start [1/16] %v213, 128
  %691 = vxpose.xlu0.b32.cont [2/16] %v217, 128
  %692 = vxpose.xlu0.b32.cont [3/16] %v221, 128
  %693 = vxpose.xlu0.b32.cont [4/16] %v225, 128
  %694 = vxpose.xlu0.b32.cont [5/16] %v229, 128
  %695 = vxpose.xlu0.b32.cont [6/16] %v233, 128
  %696 = vxpose.xlu0.b32.cont [7/16] %v237, 128
  %697 = vxpose.xlu0.b32.cont [8/16] %v241, 128
  %698 = vxpose.xlu0.b32.cont [9/16] %v245, 128
  %699 = vxpose.xlu0.b32.cont [10/16] %v249, 128
  %700 = vxpose.xlu0.b32.cont [11/16] %v253, 128
  %701 = vxpose.xlu0.b32.cont [12/16] %v257, 128
  %702 = vxpose.xlu0.b32.cont [13/16] %v261, 128
  %703 = vxpose.xlu0.b32.cont [14/16] %v265, 128
  %704 = vxpose.xlu0.b32.cont [15/16] %v269, 128
  %705 = vxpose.xlu0.b32.end [16/16] %v273, 128
  %v706 = vpop.trf.xlu0
  %v707 = vpop.trf.xlu0
  %v708 = vpop.trf.xlu0
  %v709 = vpop.trf.xlu0
  %v710 = vpop.trf.xlu0
  %v711 = vpop.trf.xlu0
  %v712 = vpop.trf.xlu0
  %v713 = vpop.trf.xlu0
  %v714 = vpop.trf.xlu0
  %v715 = vpop.trf.xlu0
  %v716 = vpop.trf.xlu0
  %v717 = vpop.trf.xlu0
  %v718 = vpop.trf.xlu0
  %v719 = vpop.trf.xlu0
  %v720 = vpop.trf.xlu0
  %v721 = vpop.trf.xlu0
  %722 = vxpose.xlu0.b32.start [1/16] %v274, 128
  %723 = vxpose.xlu0.b32.cont [2/16] %v278, 128
  %724 = vxpose.xlu0.b32.cont [3/16] %v282, 128
  %725 = vxpose.xlu0.b32.cont [4/16] %v286, 128
  %726 = vxpose.xlu0.b32.cont [5/16] %v290, 128
  %727 = vxpose.xlu0.b32.cont [6/16] %v294, 128
  %728 = vxpose.xlu0.b32.cont [7/16] %v298, 128
  %729 = vxpose.xlu0.b32.cont [8/16] %v302, 128
  %730 = vxpose.xlu0.b32.cont [9/16] %v306, 128
  %731 = vxpose.xlu0.b32.cont [10/16] %v310, 128
  %732 = vxpose.xlu0.b32.cont [11/16] %v314, 128
  %733 = vxpose.xlu0.b32.cont [12/16] %v318, 128
  %734 = vxpose.xlu0.b32.cont [13/16] %v322, 128
  %735 = vxpose.xlu0.b32.cont [14/16] %v326, 128
  %736 = vxpose.xlu0.b32.cont [15/16] %v330, 128
  %737 = vxpose.xlu0.b32.end [16/16] %v334, 128
  %v738 = vpop.trf.xlu0
  %v739 = vpop.trf.xlu0
  %v740 = vpop.trf.xlu0
  %v741 = vpop.trf.xlu0
  %v742 = vpop.trf.xlu0
  %v743 = vpop.trf.xlu0
  %v744 = vpop.trf.xlu0
  %v745 = vpop.trf.xlu0
  %v746 = vpop.trf.xlu0
  %v747 = vpop.trf.xlu0
  %v748 = vpop.trf.xlu0
  %v749 = vpop.trf.xlu0
  %v750 = vpop.trf.xlu0
  %v751 = vpop.trf.xlu0
  %v752 = vpop.trf.xlu0
  %v753 = vpop.trf.xlu0
  %754 = vxpose.xlu0.b32.start [1/16] %v275, 128
  %755 = vxpose.xlu0.b32.cont [2/16] %v279, 128
  %756 = vxpose.xlu0.b32.cont [3/16] %v283, 128
  %757 = vxpose.xlu0.b32.cont [4/16] %v287, 128
  %758 = vxpose.xlu0.b32.cont [5/16] %v291, 128
  %759 = vxpose.xlu0.b32.cont [6/16] %v295, 128
  %760 = vxpose.xlu0.b32.cont [7/16] %v299, 128
  %761 = vxpose.xlu0.b32.cont [8/16] %v303, 128
  %762 = vxpose.xlu0.b32.cont [9/16] %v307, 128
  %763 = vxpose.xlu0.b32.cont [10/16] %v311, 128
  %764 = vxpose.xlu0.b32.cont [11/16] %v315, 128
  %765 = vxpose.xlu0.b32.cont [12/16] %v319, 128
  %766 = vxpose.xlu0.b32.cont [13/16] %v323, 128
  %767 = vxpose.xlu0.b32.cont [14/16] %v327, 128
  %768 = vxpose.xlu0.b32.cont [15/16] %v331, 128
  %769 = vxpose.xlu0.b32.end [16/16] %v335, 128
  %v770 = vpop.trf.xlu0
  %v771 = vpop.trf.xlu0
  %v772 = vpop.trf.xlu0
  %v773 = vpop.trf.xlu0
  %v774 = vpop.trf.xlu0
  %v775 = vpop.trf.xlu0
  %v776 = vpop.trf.xlu0
  %v777 = vpop.trf.xlu0
  %v778 = vpop.trf.xlu0
  %v779 = vpop.trf.xlu0
  %v780 = vpop.trf.xlu0
  %v781 = vpop.trf.xlu0
  %v782 = vpop.trf.xlu0
  %v783 = vpop.trf.xlu0
  %v784 = vpop.trf.xlu0
  %v785 = vpop.trf.xlu0
  %786 = vxpose.xlu0.b32.start [1/16] %v276, 128
  %787 = vxpose.xlu0.b32.cont [2/16] %v280, 128
  %788 = vxpose.xlu0.b32.cont [3/16] %v284, 128
  %789 = vxpose.xlu0.b32.cont [4/16] %v288, 128
  %790 = vxpose.xlu0.b32.cont [5/16] %v292, 128
  %791 = vxpose.xlu0.b32.cont [6/16] %v296, 128
  %792 = vxpose.xlu0.b32.cont [7/16] %v300, 128
  %793 = vxpose.xlu0.b32.cont [8/16] %v304, 128
  %794 = vxpose.xlu0.b32.cont [9/16] %v308, 128
  %795 = vxpose.xlu0.b32.cont [10/16] %v312, 128
  %796 = vxpose.xlu0.b32.cont [11/16] %v316, 128
  %797 = vxpose.xlu0.b32.cont [12/16] %v320, 128
  %798 = vxpose.xlu0.b32.cont [13/16] %v324, 128
  %799 = vxpose.xlu0.b32.cont [14/16] %v328, 128
  %800 = vxpose.xlu0.b32.cont [15/16] %v332, 128
  %801 = vxpose.xlu0.b32.end [16/16] %v336, 128
  %v802 = vpop.trf.xlu0
  %v803 = vpop.trf.xlu0
  %v804 = vpop.trf.xlu0
  %v805 = vpop.trf.xlu0
  %v806 = vpop.trf.xlu0
  %v807 = vpop.trf.xlu0
  %v808 = vpop.trf.xlu0
  %v809 = vpop.trf.xlu0
  %v810 = vpop.trf.xlu0
  %v811 = vpop.trf.xlu0
  %v812 = vpop.trf.xlu0
  %v813 = vpop.trf.xlu0
  %v814 = vpop.trf.xlu0
  %v815 = vpop.trf.xlu0
  %v816 = vpop.trf.xlu0
  %v817 = vpop.trf.xlu0
  %818 = vxpose.xlu0.b32.start [1/16] %v277, 128
  %819 = vxpose.xlu0.b32.cont [2/16] %v281, 128
  %820 = vxpose.xlu0.b32.cont [3/16] %v285, 128
  %821 = vxpose.xlu0.b32.cont [4/16] %v289, 128
  %822 = vxpose.xlu0.b32.cont [5/16] %v293, 128
  %823 = vxpose.xlu0.b32.cont [6/16] %v297, 128
  %824 = vxpose.xlu0.b32.cont [7/16] %v301, 128
  %825 = vxpose.xlu0.b32.cont [8/16] %v305, 128
  %826 = vxpose.xlu0.b32.cont [9/16] %v309, 128
  %827 = vxpose.xlu0.b32.cont [10/16] %v313, 128
  %828 = vxpose.xlu0.b32.cont [11/16] %v317, 128
  %829 = vxpose.xlu0.b32.cont [12/16] %v321, 128
  %830 = vxpose.xlu0.b32.cont [13/16] %v325, 128
  %831 = vxpose.xlu0.b32.cont [14/16] %v329, 128
  %832 = vxpose.xlu0.b32.cont [15/16] %v333, 128
  %833 = vxpose.xlu0.b32.end [16/16] %v337, 128
  %v834 = vpop.trf.xlu0
  %v835 = vpop.trf.xlu0
  %v836 = vpop.trf.xlu0
  %v837 = vpop.trf.xlu0
  %v838 = vpop.trf.xlu0
  %v839 = vpop.trf.xlu0
  %v840 = vpop.trf.xlu0
  %v841 = vpop.trf.xlu0
  %v842 = vpop.trf.xlu0
  %v843 = vpop.trf.xlu0
  %v844 = vpop.trf.xlu0
  %v845 = vpop.trf.xlu0
  %v846 = vpop.trf.xlu0
  %v847 = vpop.trf.xlu0
  %v848 = vpop.trf.xlu0
  %v849 = vpop.trf.xlu0
  %850 = vxpose.xlu0.b32.start [1/16] %v338, 128
  %851 = vxpose.xlu0.b32.cont [2/16] %v342, 128
  %852 = vxpose.xlu0.b32.cont [3/16] %v346, 128
  %853 = vxpose.xlu0.b32.cont [4/16] %v350, 128
  %854 = vxpose.xlu0.b32.cont [5/16] %v354, 128
  %855 = vxpose.xlu0.b32.cont [6/16] %v358, 128
  %856 = vxpose.xlu0.b32.cont [7/16] %v362, 128
  %857 = vxpose.xlu0.b32.cont [8/16] %v366, 128
  %858 = vxpose.xlu0.b32.cont [9/16] %v370, 128
  %859 = vxpose.xlu0.b32.cont [10/16] %v374, 128
  %860 = vxpose.xlu0.b32.cont [11/16] %v378, 128
  %861 = vxpose.xlu0.b32.cont [12/16] %v382, 128
  %862 = vxpose.xlu0.b32.cont [13/16] %v386, 128
  %863 = vxpose.xlu0.b32.cont [14/16] %v390, 128
  %864 = vxpose.xlu0.b32.cont [15/16] %v394, 128
  %865 = vxpose.xlu0.b32.end [16/16] %v398, 128
  %v866 = vpop.trf.xlu0
  %v867 = vpop.trf.xlu0
  %v868 = vpop.trf.xlu0
  %v869 = vpop.trf.xlu0
  %v870 = vpop.trf.xlu0
  %v871 = vpop.trf.xlu0
  %v872 = vpop.trf.xlu0
  %v873 = vpop.trf.xlu0
  %v874 = vpop.trf.xlu0
  %v875 = vpop.trf.xlu0
  %v876 = vpop.trf.xlu0
  %v877 = vpop.trf.xlu0
  %v878 = vpop.trf.xlu0
  %v879 = vpop.trf.xlu0
  %v880 = vpop.trf.xlu0
  %v881 = vpop.trf.xlu0
  %882 = vxpose.xlu0.b32.start [1/16] %v339, 128
  %883 = vxpose.xlu0.b32.cont [2/16] %v343, 128
  %884 = vxpose.xlu0.b32.cont [3/16] %v347, 128
  %885 = vxpose.xlu0.b32.cont [4/16] %v351, 128
  %886 = vxpose.xlu0.b32.cont [5/16] %v355, 128
  %887 = vxpose.xlu0.b32.cont [6/16] %v359, 128
  %888 = vxpose.xlu0.b32.cont [7/16] %v363, 128
  %889 = vxpose.xlu0.b32.cont [8/16] %v367, 128
  %890 = vxpose.xlu0.b32.cont [9/16] %v371, 128
  %891 = vxpose.xlu0.b32.cont [10/16] %v375, 128
  %892 = vxpose.xlu0.b32.cont [11/16] %v379, 128
  %893 = vxpose.xlu0.b32.cont [12/16] %v383, 128
  %894 = vxpose.xlu0.b32.cont [13/16] %v387, 128
  %895 = vxpose.xlu0.b32.cont [14/16] %v391, 128
  %896 = vxpose.xlu0.b32.cont [15/16] %v395, 128
  %897 = vxpose.xlu0.b32.end [16/16] %v399, 128
  %v898 = vpop.trf.xlu0
  %v899 = vpop.trf.xlu0
  %v900 = vpop.trf.xlu0
  %v901 = vpop.trf.xlu0
  %v902 = vpop.trf.xlu0
  %v903 = vpop.trf.xlu0
  %v904 = vpop.trf.xlu0
  %v905 = vpop.trf.xlu0
  %v906 = vpop.trf.xlu0
  %v907 = vpop.trf.xlu0
  %v908 = vpop.trf.xlu0
  %v909 = vpop.trf.xlu0
  %v910 = vpop.trf.xlu0
  %v911 = vpop.trf.xlu0
  %v912 = vpop.trf.xlu0
  %v913 = vpop.trf.xlu0
  %914 = vxpose.xlu0.b32.start [1/16] %v340, 128
  %915 = vxpose.xlu0.b32.cont [2/16] %v344, 128
  %916 = vxpose.xlu0.b32.cont [3/16] %v348, 128
  %917 = vxpose.xlu0.b32.cont [4/16] %v352, 128
  %918 = vxpose.xlu0.b32.cont [5/16] %v356, 128
  %919 = vxpose.xlu0.b32.cont [6/16] %v360, 128
  %920 = vxpose.xlu0.b32.cont [7/16] %v364, 128
  %921 = vxpose.xlu0.b32.cont [8/16] %v368, 128
  %922 = vxpose.xlu0.b32.cont [9/16] %v372, 128
  %923 = vxpose.xlu0.b32.cont [10/16] %v376, 128
  %924 = vxpose.xlu0.b32.cont [11/16] %v380, 128
  %925 = vxpose.xlu0.b32.cont [12/16] %v384, 128
  %926 = vxpose.xlu0.b32.cont [13/16] %v388, 128
  %927 = vxpose.xlu0.b32.cont [14/16] %v392, 128
  %928 = vxpose.xlu0.b32.cont [15/16] %v396, 128
  %929 = vxpose.xlu0.b32.end [16/16] %v400, 128
  %v930 = vpop.trf.xlu0
  %v931 = vpop.trf.xlu0
  %v932 = vpop.trf.xlu0
  %v933 = vpop.trf.xlu0
  %v934 = vpop.trf.xlu0
  %v935 = vpop.trf.xlu0
  %v936 = vpop.trf.xlu0
  %v937 = vpop.trf.xlu0
  %v938 = vpop.trf.xlu0
  %v939 = vpop.trf.xlu0
  %v940 = vpop.trf.xlu0
  %v941 = vpop.trf.xlu0
  %v942 = vpop.trf.xlu0
  %v943 = vpop.trf.xlu0
  %v944 = vpop.trf.xlu0
  %v945 = vpop.trf.xlu0
  %946 = vxpose.xlu0.b32.start [1/16] %v341, 128
  %947 = vxpose.xlu0.b32.cont [2/16] %v345, 128
  %948 = vxpose.xlu0.b32.cont [3/16] %v349, 128
  %949 = vxpose.xlu0.b32.cont [4/16] %v353, 128
  %950 = vxpose.xlu0.b32.cont [5/16] %v357, 128
  %951 = vxpose.xlu0.b32.cont [6/16] %v361, 128
  %952 = vxpose.xlu0.b32.cont [7/16] %v365, 128
  %953 = vxpose.xlu0.b32.cont [8/16] %v369, 128
  %954 = vxpose.xlu0.b32.cont [9/16] %v373, 128
  %955 = vxpose.xlu0.b32.cont [10/16] %v377, 128
  %956 = vxpose.xlu0.b32.cont [11/16] %v381, 128
  %957 = vxpose.xlu0.b32.cont [12/16] %v385, 128
  %958 = vxpose.xlu0.b32.cont [13/16] %v389, 128
  %959 = vxpose.xlu0.b32.cont [14/16] %v393, 128
  %960 = vxpose.xlu0.b32.cont [15/16] %v397, 128
  %961 = vxpose.xlu0.b32.end [16/16] %v401, 128
  %v962 = vpop.trf.xlu0
  %v963 = vpop.trf.xlu0
  %v964 = vpop.trf.xlu0
  %v965 = vpop.trf.xlu0
  %v966 = vpop.trf.xlu0
  %v967 = vpop.trf.xlu0
  %v968 = vpop.trf.xlu0
  %v969 = vpop.trf.xlu0
  %v970 = vpop.trf.xlu0
  %v971 = vpop.trf.xlu0
  %v972 = vpop.trf.xlu0
  %v973 = vpop.trf.xlu0
  %v974 = vpop.trf.xlu0
  %v975 = vpop.trf.xlu0
  %v976 = vpop.trf.xlu0
  %v977 = vpop.trf.xlu0
  %978 = vxpose.xlu0.b32.start [1/16] %v402, 128
  %979 = vxpose.xlu0.b32.cont [2/16] %v406, 128
  %980 = vxpose.xlu0.b32.cont [3/16] %v410, 128
  %981 = vxpose.xlu0.b32.cont [4/16] %v414, 128
  %982 = vxpose.xlu0.b32.cont [5/16] %v418, 128
  %983 = vxpose.xlu0.b32.cont [6/16] %v422, 128
  %984 = vxpose.xlu0.b32.cont [7/16] %v426, 128
  %985 = vxpose.xlu0.b32.cont [8/16] %v430, 128
  %986 = vxpose.xlu0.b32.cont [9/16] %v434, 128
  %987 = vxpose.xlu0.b32.cont [10/16] %v438, 128
  %988 = vxpose.xlu0.b32.cont [11/16] %v442, 128
  %989 = vxpose.xlu0.b32.cont [12/16] %v446, 128
  %990 = vxpose.xlu0.b32.cont [13/16] %v450, 128
  %991 = vxpose.xlu0.b32.cont [14/16] %v454, 128
  %992 = vxpose.xlu0.b32.cont [15/16] %v458, 128
  %993 = vxpose.xlu0.b32.end [16/16] %v462, 128
  %v994 = vpop.trf.xlu0
  %v995 = vpop.trf.xlu0
  %v996 = vpop.trf.xlu0
  %v997 = vpop.trf.xlu0
  %v998 = vpop.trf.xlu0
  %v999 = vpop.trf.xlu0
  %v1000 = vpop.trf.xlu0
  %v1001 = vpop.trf.xlu0
  %v1002 = vpop.trf.xlu0
  %v1003 = vpop.trf.xlu0
  %v1004 = vpop.trf.xlu0
  %v1005 = vpop.trf.xlu0
  %v1006 = vpop.trf.xlu0
  %v1007 = vpop.trf.xlu0
  %v1008 = vpop.trf.xlu0
  %v1009 = vpop.trf.xlu0
  %1010 = vxpose.xlu0.b32.start [1/16] %v403, 128
  %1011 = vxpose.xlu0.b32.cont [2/16] %v407, 128
  %1012 = vxpose.xlu0.b32.cont [3/16] %v411, 128
  %1013 = vxpose.xlu0.b32.cont [4/16] %v415, 128
  %1014 = vxpose.xlu0.b32.cont [5/16] %v419, 128
  %1015 = vxpose.xlu0.b32.cont [6/16] %v423, 128
  %1016 = vxpose.xlu0.b32.cont [7/16] %v427, 128
  %1017 = vxpose.xlu0.b32.cont [8/16] %v431, 128
  %1018 = vxpose.xlu0.b32.cont [9/16] %v435, 128
  %1019 = vxpose.xlu0.b32.cont [10/16] %v439, 128
  %1020 = vxpose.xlu0.b32.cont [11/16] %v443, 128
  %1021 = vxpose.xlu0.b32.cont [12/16] %v447, 128
  %1022 = vxpose.xlu0.b32.cont [13/16] %v451, 128
  %1023 = vxpose.xlu0.b32.cont [14/16] %v455, 128
  %1024 = vxpose.xlu0.b32.cont [15/16] %v459, 128
  %1025 = vxpose.xlu0.b32.end [16/16] %v463, 128
  %v1026 = vpop.trf.xlu0
  %v1027 = vpop.trf.xlu0
  %v1028 = vpop.trf.xlu0
  %v1029 = vpop.trf.xlu0
  %v1030 = vpop.trf.xlu0
  %v1031 = vpop.trf.xlu0
  %v1032 = vpop.trf.xlu0
  %v1033 = vpop.trf.xlu0
  %v1034 = vpop.trf.xlu0
  %v1035 = vpop.trf.xlu0
  %v1036 = vpop.trf.xlu0
  %v1037 = vpop.trf.xlu0
  %v1038 = vpop.trf.xlu0
  %v1039 = vpop.trf.xlu0
  %v1040 = vpop.trf.xlu0
  %v1041 = vpop.trf.xlu0
  %1042 = vxpose.xlu0.b32.start [1/16] %v404, 128
  %1043 = vxpose.xlu0.b32.cont [2/16] %v408, 128
  %1044 = vxpose.xlu0.b32.cont [3/16] %v412, 128
  %1045 = vxpose.xlu0.b32.cont [4/16] %v416, 128
  %1046 = vxpose.xlu0.b32.cont [5/16] %v420, 128
  %1047 = vxpose.xlu0.b32.cont [6/16] %v424, 128
  %1048 = vxpose.xlu0.b32.cont [7/16] %v428, 128
  %1049 = vxpose.xlu0.b32.cont [8/16] %v432, 128
  %1050 = vxpose.xlu0.b32.cont [9/16] %v436, 128
  %1051 = vxpose.xlu0.b32.cont [10/16] %v440, 128
  %1052 = vxpose.xlu0.b32.cont [11/16] %v444, 128
  %1053 = vxpose.xlu0.b32.cont [12/16] %v448, 128
  %1054 = vxpose.xlu0.b32.cont [13/16] %v452, 128
  %1055 = vxpose.xlu0.b32.cont [14/16] %v456, 128
  %1056 = vxpose.xlu0.b32.cont [15/16] %v460, 128
  %1057 = vxpose.xlu0.b32.end [16/16] %v464, 128
  %v1058 = vpop.trf.xlu0
  %v1059 = vpop.trf.xlu0
  %v1060 = vpop.trf.xlu0
  %v1061 = vpop.trf.xlu0
  %v1062 = vpop.trf.xlu0
  %v1063 = vpop.trf.xlu0
  %v1064 = vpop.trf.xlu0
  %v1065 = vpop.trf.xlu0
  %v1066 = vpop.trf.xlu0
  %v1067 = vpop.trf.xlu0
  %v1068 = vpop.trf.xlu0
  %v1069 = vpop.trf.xlu0
  %v1070 = vpop.trf.xlu0
  %v1071 = vpop.trf.xlu0
  %v1072 = vpop.trf.xlu0
  %v1073 = vpop.trf.xlu0
  %1074 = vxpose.xlu0.b32.start [1/16] %v405, 128
  %1075 = vxpose.xlu0.b32.cont [2/16] %v409, 128
  %1076 = vxpose.xlu0.b32.cont [3/16] %v413, 128
  %1077 = vxpose.xlu0.b32.cont [4/16] %v417, 128
  %1078 = vxpose.xlu0.b32.cont [5/16] %v421, 128
  %1079 = vxpose.xlu0.b32.cont [6/16] %v425, 128
  %1080 = vxpose.xlu0.b32.cont [7/16] %v429, 128
  %1081 = vxpose.xlu0.b32.cont [8/16] %v433, 128
  %1082 = vxpose.xlu0.b32.cont [9/16] %v437, 128
  %1083 = vxpose.xlu0.b32.cont [10/16] %v441, 128
  %1084 = vxpose.xlu0.b32.cont [11/16] %v445, 128
  %1085 = vxpose.xlu0.b32.cont [12/16] %v449, 128
  %1086 = vxpose.xlu0.b32.cont [13/16] %v453, 128
  %1087 = vxpose.xlu0.b32.cont [14/16] %v457, 128
  %1088 = vxpose.xlu0.b32.cont [15/16] %v461, 128
  %1089 = vxpose.xlu0.b32.end [16/16] %v465, 128
  %v1090 = vpop.trf.xlu0
  %v1091 = vpop.trf.xlu0
  %v1092 = vpop.trf.xlu0
  %v1093 = vpop.trf.xlu0
  %v1094 = vpop.trf.xlu0
  %v1095 = vpop.trf.xlu0
  %v1096 = vpop.trf.xlu0
  %v1097 = vpop.trf.xlu0
  %v1098 = vpop.trf.xlu0
  %v1099 = vpop.trf.xlu0
  %v1100 = vpop.trf.xlu0
  %v1101 = vpop.trf.xlu0
  %v1102 = vpop.trf.xlu0
  %v1103 = vpop.trf.xlu0
  %v1104 = vpop.trf.xlu0
  %v1105 = vpop.trf.xlu0
  %1106 = vmatprep.subr.mxu0 0.0
  %1107 = vmatpush1.msra.mxu0 %v530
  %1108 = vmatprep.subr.mxu0 0.0
  %1109 = vmatpush1.msra.mxu0 %v531
  %1110 = vmatprep.subr.mxu0 0.0
  %1111 = vmatpush1.msra.mxu0 %v532
  %1112 = vmatprep.subr.mxu0 0.0
  %1113 = vmatpush1.msra.mxu0 %v533
  %1114 = vmatprep.subr.mxu0 0.0
  %1115 = vmatpush1.msra.mxu0 %v534
  %1116 = vmatprep.subr.mxu0 0.0
  %1117 = vmatpush1.msra.mxu0 %v535
  %1118 = vmatprep.subr.mxu0 0.0
  %1119 = vmatpush1.msra.mxu0 %v536
  %1120 = vmatprep.subr.mxu0 0.0
  %1121 = vmatpush1.msra.mxu0 %v537
  %1122 = vmatprep.subr.mxu0 0.0
  %1123 = vmatpush1.msra.mxu0 %v538
  %1124 = vmatprep.subr.mxu0 0.0
  %1125 = vmatpush1.msra.mxu0 %v539
  %1126 = vmatprep.subr.mxu0 0.0
  %1127 = vmatpush1.msra.mxu0 %v540
  %1128 = vmatprep.subr.mxu0 0.0
  %1129 = vmatpush1.msra.mxu0 %v541
  %1130 = vmatprep.subr.mxu0 0.0
  %1131 = vmatpush1.msra.mxu0 %v542
  %1132 = vmatprep.subr.mxu0 0.0
  %1133 = vmatpush1.msra.mxu0 %v543
  %1134 = vmatprep.subr.mxu0 0.0
  %1135 = vmatpush1.msra.mxu0 %v544
  %1136 = vmatprep.subr.mxu0 0.0
  %1137 = vmatpush1.msra.mxu0 %v545
  %1138 = vmatprep.subr.mxu0 0.0
  %1139 = vmatpush1.msra.mxu0 %v546
  %1140 = vmatprep.subr.mxu0 0.0
  %1141 = vmatpush1.msra.mxu0 %v547
  %1142 = vmatprep.subr.mxu0 0.0
  %1143 = vmatpush1.msra.mxu0 %v548
  %1144 = vmatprep.subr.mxu0 0.0
  %1145 = vmatpush1.msra.mxu0 %v549
  %1146 = vmatprep.subr.mxu0 0.0
  %1147 = vmatpush1.msra.mxu0 %v550
  %1148 = vmatprep.subr.mxu0 0.0
  %1149 = vmatpush1.msra.mxu0 %v551
  %1150 = vmatprep.subr.mxu0 0.0
  %1151 = vmatpush1.msra.mxu0 %v552
  %1152 = vmatprep.subr.mxu0 0.0
  %1153 = vmatpush1.msra.mxu0 %v553
  %1154 = vmatprep.subr.mxu0 0.0
  %1155 = vmatpush1.msra.mxu0 %v554
  %1156 = vmatprep.subr.mxu0 0.0
  %1157 = vmatpush1.msra.mxu0 %v555
  %1158 = vmatprep.subr.mxu0 0.0
  %1159 = vmatpush1.msra.mxu0 %v556
  %1160 = vmatprep.subr.mxu0 0.0
  %1161 = vmatpush1.msra.mxu0 %v557
  %1162 = vmatprep.subr.mxu0 0.0
  %1163 = vmatpush1.msra.mxu0 %v558
  %1164 = vmatprep.subr.mxu0 0.0
  %1165 = vmatpush1.msra.mxu0 %v559
  %1166 = vmatprep.subr.mxu0 0.0
  %1167 = vmatpush1.msra.mxu0 %v560
  %1168 = vmatprep.subr.mxu0 0.0
  %1169 = vmatpush1.msra.mxu0 %v561
  %1170 = vmatprep.mubr.f32.mxu0 %v738
  %1171 = vmatmul.mubr.f32.gmra.mrb[0].mxu0 %v610
  %v1172 = vpop.f32.mrb[0].mxu0
  %v1173 = vadd.f32 0.0, %v1172
  %v1174 = vpop.f32.mrb[0].mxu0
  %1175 = vmatprep.mubr.f32.mxu0 %v739
  %1176 = vmatmul.mubr.f32.gmra.mrb[0].mxu0 %v611
  %v1177 = vpop.f32.mrb[0].mxu0
  %v1178 = vadd.f32 0.0, %v1177
  %v1179 = vpop.f32.mrb[0].mxu0
  %1180 = vmatprep.mubr.f32.mxu0 %v740
  %1181 = vmatmul.mubr.f32.gmra.mrb[0].mxu0 %v612
  %v1182 = vpop.f32.mrb[0].mxu0
  %v1183 = vadd.f32 0.0, %v1182
  %v1184 = vpop.f32.mrb[0].mxu0
  %1185 = vmatprep.mubr.f32.mxu0 %v741
  %1186 = vmatmul.mubr.f32.gmra.mrb[0].mxu0 %v613
  %v1187 = vpop.f32.mrb[0].mxu0
  %v1188 = vadd.f32 0.0, %v1187
  %v1189 = vpop.f32.mrb[0].mxu0
  %1190 = vmatprep.mubr.f32.mxu0 %v742
  %1191 = vmatmul.mubr.f32.gmra.mrb[0].mxu0 %v614
  %v1192 = vpop.f32.mrb[0].mxu0
  %v1193 = vadd.f32 0.0, %v1192
  %v1194 = vpop.f32.mrb[0].mxu0
  %1195 = vmatprep.mubr.f32.mxu0 %v743
  %1196 = vmatmul.mubr.f32.gmra.mrb[0].mxu0 %v615
  %v1197 = vpop.f32.mrb[0].mxu0
  %v1198 = vadd.f32 0.0, %v1197
  %v1199 = vpop.f32.mrb[0].mxu0
  %1200 = vmatprep.mubr.f32.mxu0 %v744
  %1201 = vmatmul.mubr.f32.gmra.mrb[0].mxu0 %v616
  %v1202 = vpop.f32.mrb[0].mxu0
  %v1203 = vadd.f32 0.0, %v1202
  %v1204 = vpop.f32.mrb[0].mxu0
  %1205 = vmatprep.mubr.f32.mxu0 %v745
  %1206 = vmatmul.mubr.f32.gmra.mrb[0].mxu0 %v617
  %v1207 = vpop.f32.mrb[0].mxu0
  %v1208 = vadd.f32 0.0, %v1207
  %v1209 = vpop.f32.mrb[0].mxu0
  %1210 = vmatprep.mubr.f32.mxu0 %v746
  %1211 = vmatmul.mubr.f32.gmra.mrb[0].mxu0 %v618
  %v1212 = vpop.f32.mrb[0].mxu0
  %v1213 = vadd.f32 0.0, %v1212
  %v1214 = vpop.f32.mrb[0].mxu0
  %1215 = vmatprep.mubr.f32.mxu0 %v747
  %1216 = vmatmul.mubr.f32.gmra.mrb[0].mxu0 %v619
  %v1217 = vpop.f32.mrb[0].mxu0
  %v1218 = vadd.f32 0.0, %v1217
  %v1219 = vpop.f32.mrb[0].mxu0
  %1220 = vmatprep.mubr.f32.mxu0 %v748
  %1221 = vmatmul.mubr.f32.gmra.mrb[0].mxu0 %v620
  %v1222 = vpop.f32.mrb[0].mxu0
  %v1223 = vadd.f32 0.0, %v1222
  %v1224 = vpop.f32.mrb[0].mxu0
  %1225 = vmatprep.mubr.f32.mxu0 %v749
  %1226 = vmatmul.mubr.f32.gmra.mrb[0].mxu0 %v621
  %v1227 = vpop.f32.mrb[0].mxu0
  %v1228 = vadd.f32 0.0, %v1227
  %v1229 = vpop.f32.mrb[0].mxu0
  %1230 = vmatprep.mubr.f32.mxu0 %v750
  %1231 = vmatmul.mubr.f32.gmra.mrb[0].mxu0 %v622
  %v1232 = vpop.f32.mrb[0].mxu0
  %v1233 = vadd.f32 0.0, %v1232
  %v1234 = vpop.f32.mrb[0].mxu0
  %1235 = vmatprep.mubr.f32.mxu0 %v751
  %1236 = vmatmul.mubr.f32.gmra.mrb[0].mxu0 %v623
  %v1237 = vpop.f32.mrb[0].mxu0
  %v1238 = vadd.f32 0.0, %v1237
  %v1239 = vpop.f32.mrb[0].mxu0
  %1240 = vmatprep.mubr.f32.mxu0 %v752
  %1241 = vmatmul.mubr.f32.gmra.mrb[0].mxu0 %v624
  %v1242 = vpop.f32.mrb[0].mxu0
  %v1243 = vadd.f32 0.0, %v1242
  %v1244 = vpop.f32.mrb[0].mxu0
  %1245 = vmatprep.mubr.f32.mxu0 %v753
  %1246 = vmatmul.mubr.f32.gmra.mrb[0].mxu0 %v625
  %v1247 = vpop.f32.mrb[0].mxu0
  %v1248 = vadd.f32 0.0, %v1247
  %v1249 = vpop.f32.mrb[0].mxu0
  %1250 = vmatprep.mubr.f32.mxu0 %v770
  %1251 = vmatmul.mubr.f32.gmra.mrb[0].mxu0 %v642
  %v1252 = vpop.f32.mrb[0].mxu0
  %v1253 = vadd.f32 0.0, %v1252
  %v1254 = vpop.f32.mrb[0].mxu0
  %1255 = vmatprep.mubr.f32.mxu0 %v771
  %1256 = vmatmul.mubr.f32.gmra.mrb[0].mxu0 %v643
  %v1257 = vpop.f32.mrb[0].mxu0
  %v1258 = vadd.f32 0.0, %v1257
  %v1259 = vpop.f32.mrb[0].mxu0
  %1260 = vmatprep.mubr.f32.mxu0 %v772
  %1261 = vmatmul.mubr.f32.gmra.mrb[0].mxu0 %v644
  %v1262 = vpop.f32.mrb[0].mxu0
  %v1263 = vadd.f32 0.0, %v1262
  %v1264 = vpop.f32.mrb[0].mxu0
  %1265 = vmatprep.mubr.f32.mxu0 %v773
  %1266 = vmatmul.mubr.f32.gmra.mrb[0].mxu0 %v645
  %v1267 = vpop.f32.mrb[0].mxu0
  %v1268 = vadd.f32 0.0, %v1267
  %v1269 = vpop.f32.mrb[0].mxu0
  %1270 = vmatprep.mubr.f32.mxu0 %v774
  %1271 = vmatmul.mubr.f32.gmra.mrb[0].mxu0 %v646
  %v1272 = vpop.f32.mrb[0].mxu0
  %v1273 = vadd.f32 0.0, %v1272
  %v1274 = vpop.f32.mrb[0].mxu0
  %1275 = vmatprep.mubr.f32.mxu0 %v775
  %1276 = vmatmul.mubr.f32.gmra.mrb[0].mxu0 %v647
  %v1277 = vpop.f32.mrb[0].mxu0
  %v1278 = vadd.f32 0.0, %v1277
  %v1279 = vpop.f32.mrb[0].mxu0
  %1280 = vmatprep.mubr.f32.mxu0 %v776
  %1281 = vmatmul.mubr.f32.gmra.mrb[0].mxu0 %v648
  %v1282 = vpop.f32.mrb[0].mxu0
  %v1283 = vadd.f32 0.0, %v1282
  %v1284 = vpop.f32.mrb[0].mxu0
  %1285 = vmatprep.mubr.f32.mxu0 %v777
  %1286 = vmatmul.mubr.f32.gmra.mrb[0].mxu0 %v649
  %v1287 = vpop.f32.mrb[0].mxu0
  %v1288 = vadd.f32 0.0, %v1287
  %v1289 = vpop.f32.mrb[0].mxu0
  %1290 = vmatprep.mubr.f32.mxu0 %v778
  %1291 = vmatmul.mubr.f32.gmra.mrb[0].mxu0 %v650
  %v1292 = vpop.f32.mrb[0].mxu0
  %v1293 = vadd.f32 0.0, %v1292
  %v1294 = vpop.f32.mrb[0].mxu0
  %1295 = vmatprep.mubr.f32.mxu0 %v779
  %1296 = vmatmul.mubr.f32.gmra.mrb[0].mxu0 %v651
  %v1297 = vpop.f32.mrb[0].mxu0
  %v1298 = vadd.f32 0.0, %v1297
  %v1299 = vpop.f32.mrb[0].mxu0
  %1300 = vmatprep.mubr.f32.mxu0 %v780
  %1301 = vmatmul.mubr.f32.gmra.mrb[0].mxu0 %v652
  %v1302 = vpop.f32.mrb[0].mxu0
  %v1303 = vadd.f32 0.0, %v1302
  %v1304 = vpop.f32.mrb[0].mxu0
  %1305 = vmatprep.mubr.f32.mxu0 %v781
  %1306 = vmatmul.mubr.f32.gmra.mrb[0].mxu0 %v653
  %v1307 = vpop.f32.mrb[0].mxu0
  %v1308 = vadd.f32 0.0, %v1307
  %v1309 = vpop.f32.mrb[0].mxu0
  %1310 = vmatprep.mubr.f32.mxu0 %v782
  %1311 = vmatmul.mubr.f32.gmra.mrb[0].mxu0 %v654
  %v1312 = vpop.f32.mrb[0].mxu0
  %v1313 = vadd.f32 0.0, %v1312
  %v1314 = vpop.f32.mrb[0].mxu0
  %1315 = vmatprep.mubr.f32.mxu0 %v783
  %1316 = vmatmul.mubr.f32.gmra.mrb[0].mxu0 %v655
  %v1317 = vpop.f32.mrb[0].mxu0
  %v1318 = vadd.f32 0.0, %v1317
  %v1319 = vpop.f32.mrb[0].mxu0
  %1320 = vmatprep.mubr.f32.mxu0 %v784
  %1321 = vmatmul.mubr.f32.gmra.mrb[0].mxu0 %v656
  %v1322 = vpop.f32.mrb[0].mxu0
  %v1323 = vadd.f32 0.0, %v1322
  %v1324 = vpop.f32.mrb[0].mxu0
  %1325 = vmatprep.mubr.f32.mxu0 %v785
  %1326 = vmatmul.mubr.f32.gmra.mrb[0].mxu0 %v657
  %v1327 = vpop.f32.mrb[0].mxu0
  %v1328 = vadd.f32 0.0, %v1327
  %v1329 = vpop.f32.mrb[0].mxu0
  %1330 = vmatprep.mubr.f32.mxu0 %v802
  %1331 = vmatmul.mubr.f32.gmra.mrb[0].mxu0 %v674
  %v1332 = vpop.f32.mrb[0].mxu0
  %v1333 = vadd.f32 0.0, %v1332
  %v1334 = vpop.f32.mrb[0].mxu0
  %1335 = vmatprep.mubr.f32.mxu0 %v803
  %1336 = vmatmul.mubr.f32.gmra.mrb[0].mxu0 %v675
  %v1337 = vpop.f32.mrb[0].mxu0
  %v1338 = vadd.f32 0.0, %v1337
  %v1339 = vpop.f32.mrb[0].mxu0
  %1340 = vmatprep.mubr.f32.mxu0 %v804
  %1341 = vmatmul.mubr.f32.gmra.mrb[0].mxu0 %v676
  %v1342 = vpop.f32.mrb[0].mxu0
  %v1343 = vadd.f32 0.0, %v1342
  %v1344 = vpop.f32.mrb[0].mxu0
  %1345 = vmatprep.mubr.f32.mxu0 %v805
  %1346 = vmatmul.mubr.f32.gmra.mrb[0].mxu0 %v677
  %v1347 = vpop.f32.mrb[0].mxu0
  %v1348 = vadd.f32 0.0, %v1347
  %v1349 = vpop.f32.mrb[0].mxu0
  %1350 = vmatprep.mubr.f32.mxu0 %v806
  %1351 = vmatmul.mubr.f32.gmra.mrb[0].mxu0 %v678
  %v1352 = vpop.f32.mrb[0].mxu0
  %v1353 = vadd.f32 0.0, %v1352
  %v1354 = vpop.f32.mrb[0].mxu0
  %1355 = vmatprep.mubr.f32.mxu0 %v807
  %1356 = vmatmul.mubr.f32.gmra.mrb[0].mxu0 %v679
  %v1357 = vpop.f32.mrb[0].mxu0
  %v1358 = vadd.f32 0.0, %v1357
  %v1359 = vpop.f32.mrb[0].mxu0
  %1360 = vmatprep.mubr.f32.mxu0 %v808
  %1361 = vmatmul.mubr.f32.gmra.mrb[0].mxu0 %v680
  %v1362 = vpop.f32.mrb[0].mxu0
  %v1363 = vadd.f32 0.0, %v1362
  %v1364 = vpop.f32.mrb[0].mxu0
  %1365 = vmatprep.mubr.f32.mxu0 %v809
  %1366 = vmatmul.mubr.f32.gmra.mrb[0].mxu0 %v681
  %v1367 = vpop.f32.mrb[0].mxu0
  %v1368 = vadd.f32 0.0, %v1367
  %v1369 = vpop.f32.mrb[0].mxu0
  %1370 = vmatprep.mubr.f32.mxu0 %v810
  %1371 = vmatmul.mubr.f32.gmra.mrb[0].mxu0 %v682
  %v1372 = vpop.f32.mrb[0].mxu0
  %v1373 = vadd.f32 0.0, %v1372
  %v1374 = vpop.f32.mrb[0].mxu0
  %1375 = vmatprep.mubr.f32.mxu0 %v811
  %1376 = vmatmul.mubr.f32.gmra.mrb[0].mxu0 %v683
  %v1377 = vpop.f32.mrb[0].mxu0
  %v1378 = vadd.f32 0.0, %v1377
  %v1379 = vpop.f32.mrb[0].mxu0
  %1380 = vmatprep.mubr.f32.mxu0 %v812
  %1381 = vmatmul.mubr.f32.gmra.mrb[0].mxu0 %v684
  %v1382 = vpop.f32.mrb[0].mxu0
  %v1383 = vadd.f32 0.0, %v1382
  %v1384 = vpop.f32.mrb[0].mxu0
  %1385 = vmatprep.mubr.f32.mxu0 %v813
  %1386 = vmatmul.mubr.f32.gmra.mrb[0].mxu0 %v685
  %v1387 = vpop.f32.mrb[0].mxu0
  %v1388 = vadd.f32 0.0, %v1387
  %v1389 = vpop.f32.mrb[0].mxu0
  %1390 = vmatprep.mubr.f32.mxu0 %v814
  %1391 = vmatmul.mubr.f32.gmra.mrb[0].mxu0 %v686
  %v1392 = vpop.f32.mrb[0].mxu0
  %v1393 = vadd.f32 0.0, %v1392
  %v1394 = vpop.f32.mrb[0].mxu0
  %1395 = vmatprep.mubr.f32.mxu0 %v815
  %1396 = vmatmul.mubr.f32.gmra.mrb[0].mxu0 %v687
  %v1397 = vpop.f32.mrb[0].mxu0
  %v1398 = vadd.f32 0.0, %v1397
  %v1399 = vpop.f32.mrb[0].mxu0
  %1400 = vmatprep.mubr.f32.mxu0 %v816
  %1401 = vmatmul.mubr.f32.gmra.mrb[0].mxu0 %v688
  %v1402 = vpop.f32.mrb[0].mxu0
  %v1403 = vadd.f32 0.0, %v1402
  %v1404 = vpop.f32.mrb[0].mxu0
  %1405 = vmatprep.mubr.f32.mxu0 %v817
  %1406 = vmatmul.mubr.f32.gmra.mrb[0].mxu0 %v689
  %v1407 = vpop.f32.mrb[0].mxu0
  %v1408 = vadd.f32 0.0, %v1407
  %v1409 = vpop.f32.mrb[0].mxu0
  %1410 = vmatprep.mubr.f32.mxu0 %v834
  %1411 = vmatmul.mubr.f32.gmra.mrb[0].mxu0 %v706
  %v1412 = vpop.f32.mrb[0].mxu0
  %v1413 = vadd.f32 0.0, %v1412
  %v1414 = vpop.f32.mrb[0].mxu0
  %1415 = vmatprep.mubr.f32.mxu0 %v835
  %1416 = vmatmul.mubr.f32.gmra.mrb[0].mxu0 %v707
  %v1417 = vpop.f32.mrb[0].mxu0
  %v1418 = vadd.f32 0.0, %v1417
  %v1419 = vpop.f32.mrb[0].mxu0
  %1420 = vmatprep.mubr.f32.mxu0 %v836
  %1421 = vmatmul.mubr.f32.gmra.mrb[0].mxu0 %v708
  %v1422 = vpop.f32.mrb[0].mxu0
  %v1423 = vadd.f32 0.0, %v1422
  %v1424 = vpop.f32.mrb[0].mxu0
  %1425 = vmatprep.mubr.f32.mxu0 %v837
  %1426 = vmatmul.mubr.f32.gmra.mrb[0].mxu0 %v709
  %v1427 = vpop.f32.mrb[0].mxu0
  %v1428 = vadd.f32 0.0, %v1427
  %v1429 = vpop.f32.mrb[0].mxu0
  %1430 = vmatprep.mubr.f32.mxu0 %v838
  %1431 = vmatmul.mubr.f32.gmra.mrb[0].mxu0 %v710
  %v1432 = vpop.f32.mrb[0].mxu0
  %v1433 = vadd.f32 0.0, %v1432
  %v1434 = vpop.f32.mrb[0].mxu0
  %1435 = vmatprep.mubr.f32.mxu0 %v839
  %1436 = vmatmul.mubr.f32.gmra.mrb[0].mxu0 %v711
  %v1437 = vpop.f32.mrb[0].mxu0
  %v1438 = vadd.f32 0.0, %v1437
  %v1439 = vpop.f32.mrb[0].mxu0
  %1440 = vmatprep.mubr.f32.mxu0 %v840
  %1441 = vmatmul.mubr.f32.gmra.mrb[0].mxu0 %v712
  %v1442 = vpop.f32.mrb[0].mxu0
  %v1443 = vadd.f32 0.0, %v1442
  %v1444 = vpop.f32.mrb[0].mxu0
  %1445 = vmatprep.mubr.f32.mxu0 %v841
  %1446 = vmatmul.mubr.f32.gmra.mrb[0].mxu0 %v713
  %v1447 = vpop.f32.mrb[0].mxu0
  %v1448 = vadd.f32 0.0, %v1447
  %v1449 = vpop.f32.mrb[0].mxu0
  %1450 = vmatprep.mubr.f32.mxu0 %v842
  %1451 = vmatmul.mubr.f32.gmra.mrb[0].mxu0 %v714
  %v1452 = vpop.f32.mrb[0].mxu0
  %v1453 = vadd.f32 0.0, %v1452
  %v1454 = vpop.f32.mrb[0].mxu0
  %1455 = vmatprep.mubr.f32.mxu0 %v843
  %1456 = vmatmul.mubr.f32.gmra.mrb[0].mxu0 %v715
  %v1457 = vpop.f32.mrb[0].mxu0
  %v1458 = vadd.f32 0.0, %v1457
  %v1459 = vpop.f32.mrb[0].mxu0
  %1460 = vmatprep.mubr.f32.mxu0 %v844
  %1461 = vmatmul.mubr.f32.gmra.mrb[0].mxu0 %v716
  %v1462 = vpop.f32.mrb[0].mxu0
  %v1463 = vadd.f32 0.0, %v1462
  %v1464 = vpop.f32.mrb[0].mxu0
  %1465 = vmatprep.mubr.f32.mxu0 %v845
  %1466 = vmatmul.mubr.f32.gmra.mrb[0].mxu0 %v717
  %v1467 = vpop.f32.mrb[0].mxu0
  %v1468 = vadd.f32 0.0, %v1467
  %v1469 = vpop.f32.mrb[0].mxu0
  %1470 = vmatprep.mubr.f32.mxu0 %v846
  %1471 = vmatmul.mubr.f32.gmra.mrb[0].mxu0 %v718
  %v1472 = vpop.f32.mrb[0].mxu0
  %v1473 = vadd.f32 0.0, %v1472
  %v1474 = vpop.f32.mrb[0].mxu0
  %1475 = vmatprep.mubr.f32.mxu0 %v847
  %1476 = vmatmul.mubr.f32.gmra.mrb[0].mxu0 %v719
  %v1477 = vpop.f32.mrb[0].mxu0
  %v1478 = vadd.f32 0.0, %v1477
  %v1479 = vpop.f32.mrb[0].mxu0
  %1480 = vmatprep.mubr.f32.mxu0 %v848
  %1481 = vmatmul.mubr.f32.gmra.mrb[0].mxu0 %v720
  %v1482 = vpop.f32.mrb[0].mxu0
  %v1483 = vadd.f32 0.0, %v1482
  %v1484 = vpop.f32.mrb[0].mxu0
  %1485 = vmatprep.mubr.f32.mxu0 %v849
  %1486 = vmatmul.mubr.f32.gmra.mrb[0].mxu0 %v721
  %v1487 = vpop.f32.mrb[0].mxu0
  %v1488 = vadd.f32 0.0, %v1487
  %v1489 = vpop.f32.mrb[0].mxu0
  %1490 = vdwg.mxu0
  %1491 = vmatprep.subr.mxu0 0.0
  %1492 = vmatpush1.msra.mxu0 %v562
  %1493 = vmatprep.subr.mxu0 0.0
  %1494 = vmatpush1.msra.mxu0 %v563
  %1495 = vmatprep.subr.mxu0 0.0
  %1496 = vmatpush1.msra.mxu0 %v564
  %1497 = vmatprep.subr.mxu0 0.0
  %1498 = vmatpush1.msra.mxu0 %v565
  %1499 = vmatprep.subr.mxu0 0.0
  %1500 = vmatpush1.msra.mxu0 %v566
  %1501 = vmatprep.subr.mxu0 0.0
  %1502 = vmatpush1.msra.mxu0 %v567
  %1503 = vmatprep.subr.mxu0 0.0
  %1504 = vmatpush1.msra.mxu0 %v568
  %1505 = vmatprep.subr.mxu0 0.0
  %1506 = vmatpush1.msra.mxu0 %v569
  %1507 = vmatprep.subr.mxu0 0.0
  %1508 = vmatpush1.msra.mxu0 %v570
  %1509 = vmatprep.subr.mxu0 0.0
  %1510 = vmatpush1.msra.mxu0 %v571
  %1511 = vmatprep.subr.mxu0 0.0
  %1512 = vmatpush1.msra.mxu0 %v572
  %1513 = vmatprep.subr.mxu0 0.0
  %1514 = vmatpush1.msra.mxu0 %v573
  %1515 = vmatprep.subr.mxu0 0.0
  %1516 = vmatpush1.msra.mxu0 %v574
  %1517 = vmatprep.subr.mxu0 0.0
  %1518 = vmatpush1.msra.mxu0 %v575
  %1519 = vmatprep.subr.mxu0 0.0
  %1520 = vmatpush1.msra.mxu0 %v576
  %1521 = vmatprep.subr.mxu0 0.0
  %1522 = vmatpush1.msra.mxu0 %v577
  %1523 = vmatprep.subr.mxu0 0.0
  %1524 = vmatpush1.msra.mxu0 %v578
  %1525 = vmatprep.subr.mxu0 0.0
  %1526 = vmatpush1.msra.mxu0 %v579
  %1527 = vmatprep.subr.mxu0 0.0
  %1528 = vmatpush1.msra.mxu0 %v580
  %1529 = vmatprep.subr.mxu0 0.0
  %1530 = vmatpush1.msra.mxu0 %v581
  %1531 = vmatprep.subr.mxu0 0.0
  %1532 = vmatpush1.msra.mxu0 %v582
  %1533 = vmatprep.subr.mxu0 0.0
  %1534 = vmatpush1.msra.mxu0 %v583
  %1535 = vmatprep.subr.mxu0 0.0
  %1536 = vmatpush1.msra.mxu0 %v584
  %1537 = vmatprep.subr.mxu0 0.0
  %1538 = vmatpush1.msra.mxu0 %v585
  %1539 = vmatprep.subr.mxu0 0.0
  %1540 = vmatpush1.msra.mxu0 %v586
  %1541 = vmatprep.subr.mxu0 0.0
  %1542 = vmatpush1.msra.mxu0 %v587
  %1543 = vmatprep.subr.mxu0 0.0
  %1544 = vmatpush1.msra.mxu0 %v588
  %1545 = vmatprep.subr.mxu0 0.0
  %1546 = vmatpush1.msra.mxu0 %v589
  %1547 = vmatprep.subr.mxu0 0.0
  %1548 = vmatpush1.msra.mxu0 %v590
  %1549 = vmatprep.subr.mxu0 0.0
  %1550 = vmatpush1.msra.mxu0 %v591
  %1551 = vmatprep.subr.mxu0 0.0
  %1552 = vmatpush1.msra.mxu0 %v592
  %1553 = vmatprep.subr.mxu0 0.0
  %1554 = vmatpush1.msra.mxu0 %v593
  %1555 = vmatprep.mubr.f32.mxu0 %v994
  %1556 = vmatmul.mubr.f32.gmra.mrb[0].mxu0 %v866
  %v1557 = vpop.f32.mrb[0].mxu0
  %v1558 = vadd.f32 %v1173, %v1557
  %v1559 = vpop.f32.mrb[0].mxu0
  %1560 = vmatprep.mubr.f32.mxu0 %v995
  %1561 = vmatmul.mubr.f32.gmra.mrb[0].mxu0 %v867
  %v1562 = vpop.f32.mrb[0].mxu0
  %v1563 = vadd.f32 %v1178, %v1562
  %v1564 = vpop.f32.mrb[0].mxu0
  %1565 = vmatprep.mubr.f32.mxu0 %v996
  %1566 = vmatmul.mubr.f32.gmra.mrb[0].mxu0 %v868
  %v1567 = vpop.f32.mrb[0].mxu0
  %v1568 = vadd.f32 %v1183, %v1567
  %v1569 = vpop.f32.mrb[0].mxu0
  %1570 = vmatprep.mubr.f32.mxu0 %v997
  %1571 = vmatmul.mubr.f32.gmra.mrb[0].mxu0 %v869
  %v1572 = vpop.f32.mrb[0].mxu0
  %v1573 = vadd.f32 %v1188, %v1572
  %v1574 = vpop.f32.mrb[0].mxu0
  %1575 = vmatprep.mubr.f32.mxu0 %v998
  %1576 = vmatmul.mubr.f32.gmra.mrb[0].mxu0 %v870
  %v1577 = vpop.f32.mrb[0].mxu0
  %v1578 = vadd.f32 %v1193, %v1577
  %v1579 = vpop.f32.mrb[0].mxu0
  %1580 = vmatprep.mubr.f32.mxu0 %v999
  %1581 = vmatmul.mubr.f32.gmra.mrb[0].mxu0 %v871
  %v1582 = vpop.f32.mrb[0].mxu0
  %v1583 = vadd.f32 %v1198, %v1582
  %v1584 = vpop.f32.mrb[0].mxu0
  %1585 = vmatprep.mubr.f32.mxu0 %v1000
  %1586 = vmatmul.mubr.f32.gmra.mrb[0].mxu0 %v872
  %v1587 = vpop.f32.mrb[0].mxu0
  %v1588 = vadd.f32 %v1203, %v1587
  %v1589 = vpop.f32.mrb[0].mxu0
  %1590 = vmatprep.mubr.f32.mxu0 %v1001
  %1591 = vmatmul.mubr.f32.gmra.mrb[0].mxu0 %v873
  %v1592 = vpop.f32.mrb[0].mxu0
  %v1593 = vadd.f32 %v1208, %v1592
  %v1594 = vpop.f32.mrb[0].mxu0
  %1595 = vmatprep.mubr.f32.mxu0 %v1002
  %1596 = vmatmul.mubr.f32.gmra.mrb[0].mxu0 %v874
  %v1597 = vpop.f32.mrb[0].mxu0
  %v1598 = vadd.f32 %v1213, %v1597
  %v1599 = vpop.f32.mrb[0].mxu0
  %1600 = vmatprep.mubr.f32.mxu0 %v1003
  %1601 = vmatmul.mubr.f32.gmra.mrb[0].mxu0 %v875
  %v1602 = vpop.f32.mrb[0].mxu0
  %v1603 = vadd.f32 %v1218, %v1602
  %v1604 = vpop.f32.mrb[0].mxu0
  %1605 = vmatprep.mubr.f32.mxu0 %v1004
  %1606 = vmatmul.mubr.f32.gmra.mrb[0].mxu0 %v876
  %v1607 = vpop.f32.mrb[0].mxu0
  %v1608 = vadd.f32 %v1223, %v1607
  %v1609 = vpop.f32.mrb[0].mxu0
  %1610 = vmatprep.mubr.f32.mxu0 %v1005
  %1611 = vmatmul.mubr.f32.gmra.mrb[0].mxu0 %v877
  %v1612 = vpop.f32.mrb[0].mxu0
  %v1613 = vadd.f32 %v1228, %v1612
  %v1614 = vpop.f32.mrb[0].mxu0
  %1615 = vmatprep.mubr.f32.mxu0 %v1006
  %1616 = vmatmul.mubr.f32.gmra.mrb[0].mxu0 %v878
  %v1617 = vpop.f32.mrb[0].mxu0
  %v1618 = vadd.f32 %v1233, %v1617
  %v1619 = vpop.f32.mrb[0].mxu0
  %1620 = vmatprep.mubr.f32.mxu0 %v1007
  %1621 = vmatmul.mubr.f32.gmra.mrb[0].mxu0 %v879
  %v1622 = vpop.f32.mrb[0].mxu0
  %v1623 = vadd.f32 %v1238, %v1622
  %v1624 = vpop.f32.mrb[0].mxu0
  %1625 = vmatprep.mubr.f32.mxu0 %v1008
  %1626 = vmatmul.mubr.f32.gmra.mrb[0].mxu0 %v880
  %v1627 = vpop.f32.mrb[0].mxu0
  %v1628 = vadd.f32 %v1243, %v1627
  %v1629 = vpop.f32.mrb[0].mxu0
  %1630 = vmatprep.mubr.f32.mxu0 %v1009
  %1631 = vmatmul.mubr.f32.gmra.mrb[0].mxu0 %v881
  %v1632 = vpop.f32.mrb[0].mxu0
  %v1633 = vadd.f32 %v1248, %v1632
  %v1634 = vpop.f32.mrb[0].mxu0
  %1635 = vmatprep.mubr.f32.mxu0 %v1026
  %1636 = vmatmul.mubr.f32.gmra.mrb[0].mxu0 %v898
  %v1637 = vpop.f32.mrb[0].mxu0
  %v1638 = vadd.f32 %v1253, %v1637
  %v1639 = vpop.f32.mrb[0].mxu0
  %1640 = vmatprep.mubr.f32.mxu0 %v1027
  %1641 = vmatmul.mubr.f32.gmra.mrb[0].mxu0 %v899
  %v1642 = vpop.f32.mrb[0].mxu0
  %v1643 = vadd.f32 %v1258, %v1642
  %v1644 = vpop.f32.mrb[0].mxu0
  %1645 = vmatprep.mubr.f32.mxu0 %v1028
  %1646 = vmatmul.mubr.f32.gmra.mrb[0].mxu0 %v900
  %v1647 = vpop.f32.mrb[0].mxu0
  %v1648 = vadd.f32 %v1263, %v1647
  %v1649 = vpop.f32.mrb[0].mxu0
  %1650 = vmatprep.mubr.f32.mxu0 %v1029
  %1651 = vmatmul.mubr.f32.gmra.mrb[0].mxu0 %v901
  %v1652 = vpop.f32.mrb[0].mxu0
  %v1653 = vadd.f32 %v1268, %v1652
  %v1654 = vpop.f32.mrb[0].mxu0
  %1655 = vmatprep.mubr.f32.mxu0 %v1030
  %1656 = vmatmul.mubr.f32.gmra.mrb[0].mxu0 %v902
  %v1657 = vpop.f32.mrb[0].mxu0
  %v1658 = vadd.f32 %v1273, %v1657
  %v1659 = vpop.f32.mrb[0].mxu0
  %1660 = vmatprep.mubr.f32.mxu0 %v1031
  %1661 = vmatmul.mubr.f32.gmra.mrb[0].mxu0 %v903
  %v1662 = vpop.f32.mrb[0].mxu0
  %v1663 = vadd.f32 %v1278, %v1662
  %v1664 = vpop.f32.mrb[0].mxu0
  %1665 = vmatprep.mubr.f32.mxu0 %v1032
  %1666 = vmatmul.mubr.f32.gmra.mrb[0].mxu0 %v904
  %v1667 = vpop.f32.mrb[0].mxu0
  %v1668 = vadd.f32 %v1283, %v1667
  %v1669 = vpop.f32.mrb[0].mxu0
  %1670 = vmatprep.mubr.f32.mxu0 %v1033
  %1671 = vmatmul.mubr.f32.gmra.mrb[0].mxu0 %v905
  %v1672 = vpop.f32.mrb[0].mxu0
  %v1673 = vadd.f32 %v1288, %v1672
  %v1674 = vpop.f32.mrb[0].mxu0
  %1675 = vmatprep.mubr.f32.mxu0 %v1034
  %1676 = vmatmul.mubr.f32.gmra.mrb[0].mxu0 %v906
  %v1677 = vpop.f32.mrb[0].mxu0
  %v1678 = vadd.f32 %v1293, %v1677
  %v1679 = vpop.f32.mrb[0].mxu0
  %1680 = vmatprep.mubr.f32.mxu0 %v1035
  %1681 = vmatmul.mubr.f32.gmra.mrb[0].mxu0 %v907
  %v1682 = vpop.f32.mrb[0].mxu0
  %v1683 = vadd.f32 %v1298, %v1682
  %v1684 = vpop.f32.mrb[0].mxu0
  %1685 = vmatprep.mubr.f32.mxu0 %v1036
  %1686 = vmatmul.mubr.f32.gmra.mrb[0].mxu0 %v908
  %v1687 = vpop.f32.mrb[0].mxu0
  %v1688 = vadd.f32 %v1303, %v1687
  %v1689 = vpop.f32.mrb[0].mxu0
  %1690 = vmatprep.mubr.f32.mxu0 %v1037
  %1691 = vmatmul.mubr.f32.gmra.mrb[0].mxu0 %v909
  %v1692 = vpop.f32.mrb[0].mxu0
  %v1693 = vadd.f32 %v1308, %v1692
  %v1694 = vpop.f32.mrb[0].mxu0
  %1695 = vmatprep.mubr.f32.mxu0 %v1038
  %1696 = vmatmul.mubr.f32.gmra.mrb[0].mxu0 %v910
  %v1697 = vpop.f32.mrb[0].mxu0
  %v1698 = vadd.f32 %v1313, %v1697
  %v1699 = vpop.f32.mrb[0].mxu0
  %1700 = vmatprep.mubr.f32.mxu0 %v1039
  %1701 = vmatmul.mubr.f32.gmra.mrb[0].mxu0 %v911
  %v1702 = vpop.f32.mrb[0].mxu0
  %v1703 = vadd.f32 %v1318, %v1702
  %v1704 = vpop.f32.mrb[0].mxu0
  %1705 = vmatprep.mubr.f32.mxu0 %v1040
  %1706 = vmatmul.mubr.f32.gmra.mrb[0].mxu0 %v912
  %v1707 = vpop.f32.mrb[0].mxu0
  %v1708 = vadd.f32 %v1323, %v1707
  %v1709 = vpop.f32.mrb[0].mxu0
  %1710 = vmatprep.mubr.f32.mxu0 %v1041
  %1711 = vmatmul.mubr.f32.gmra.mrb[0].mxu0 %v913
  %v1712 = vpop.f32.mrb[0].mxu0
  %v1713 = vadd.f32 %v1328, %v1712
  %v1714 = vpop.f32.mrb[0].mxu0
  %1715 = vmatprep.mubr.f32.mxu0 %v1058
  %1716 = vmatmul.mubr.f32.gmra.mrb[0].mxu0 %v930
  %v1717 = vpop.f32.mrb[0].mxu0
  %v1718 = vadd.f32 %v1333, %v1717
  %v1719 = vpop.f32.mrb[0].mxu0
  %1720 = vmatprep.mubr.f32.mxu0 %v1059
  %1721 = vmatmul.mubr.f32.gmra.mrb[0].mxu0 %v931
  %v1722 = vpop.f32.mrb[0].mxu0
  %v1723 = vadd.f32 %v1338, %v1722
  %v1724 = vpop.f32.mrb[0].mxu0
  %1725 = vmatprep.mubr.f32.mxu0 %v1060
  %1726 = vmatmul.mubr.f32.gmra.mrb[0].mxu0 %v932
  %v1727 = vpop.f32.mrb[0].mxu0
  %v1728 = vadd.f32 %v1343, %v1727
  %v1729 = vpop.f32.mrb[0].mxu0
  %1730 = vmatprep.mubr.f32.mxu0 %v1061
  %1731 = vmatmul.mubr.f32.gmra.mrb[0].mxu0 %v933
  %v1732 = vpop.f32.mrb[0].mxu0
  %v1733 = vadd.f32 %v1348, %v1732
  %v1734 = vpop.f32.mrb[0].mxu0
  %1735 = vmatprep.mubr.f32.mxu0 %v1062
  %1736 = vmatmul.mubr.f32.gmra.mrb[0].mxu0 %v934
  %v1737 = vpop.f32.mrb[0].mxu0
  %v1738 = vadd.f32 %v1353, %v1737
  %v1739 = vpop.f32.mrb[0].mxu0
  %1740 = vmatprep.mubr.f32.mxu0 %v1063
  %1741 = vmatmul.mubr.f32.gmra.mrb[0].mxu0 %v935
  %v1742 = vpop.f32.mrb[0].mxu0
  %v1743 = vadd.f32 %v1358, %v1742
  %v1744 = vpop.f32.mrb[0].mxu0
  %1745 = vmatprep.mubr.f32.mxu0 %v1064
  %1746 = vmatmul.mubr.f32.gmra.mrb[0].mxu0 %v936
  %v1747 = vpop.f32.mrb[0].mxu0
  %v1748 = vadd.f32 %v1363, %v1747
  %v1749 = vpop.f32.mrb[0].mxu0
  %1750 = vmatprep.mubr.f32.mxu0 %v1065
  %1751 = vmatmul.mubr.f32.gmra.mrb[0].mxu0 %v937
  %v1752 = vpop.f32.mrb[0].mxu0
  %v1753 = vadd.f32 %v1368, %v1752
  %v1754 = vpop.f32.mrb[0].mxu0
  %1755 = vmatprep.mubr.f32.mxu0 %v1066
  %1756 = vmatmul.mubr.f32.gmra.mrb[0].mxu0 %v938
  %v1757 = vpop.f32.mrb[0].mxu0
  %v1758 = vadd.f32 %v1373, %v1757
  %v1759 = vpop.f32.mrb[0].mxu0
  %1760 = vmatprep.mubr.f32.mxu0 %v1067
  %1761 = vmatmul.mubr.f32.gmra.mrb[0].mxu0 %v939
  %v1762 = vpop.f32.mrb[0].mxu0
  %v1763 = vadd.f32 %v1378, %v1762
  %v1764 = vpop.f32.mrb[0].mxu0
  %1765 = vmatprep.mubr.f32.mxu0 %v1068
  %1766 = vmatmul.mubr.f32.gmra.mrb[0].mxu0 %v940
  %v1767 = vpop.f32.mrb[0].mxu0
  %v1768 = vadd.f32 %v1383, %v1767
  %v1769 = vpop.f32.mrb[0].mxu0
  %1770 = vmatprep.mubr.f32.mxu0 %v1069
  %1771 = vmatmul.mubr.f32.gmra.mrb[0].mxu0 %v941
  %v1772 = vpop.f32.mrb[0].mxu0
  %v1773 = vadd.f32 %v1388, %v1772
  %v1774 = vpop.f32.mrb[0].mxu0
  %1775 = vmatprep.mubr.f32.mxu0 %v1070
  %1776 = vmatmul.mubr.f32.gmra.mrb[0].mxu0 %v942
  %v1777 = vpop.f32.mrb[0].mxu0
  %v1778 = vadd.f32 %v1393, %v1777
  %v1779 = vpop.f32.mrb[0].mxu0
  %1780 = vmatprep.mubr.f32.mxu0 %v1071
  %1781 = vmatmul.mubr.f32.gmra.mrb[0].mxu0 %v943
  %v1782 = vpop.f32.mrb[0].mxu0
  %v1783 = vadd.f32 %v1398, %v1782
  %v1784 = vpop.f32.mrb[0].mxu0
  %1785 = vmatprep.mubr.f32.mxu0 %v1072
  %1786 = vmatmul.mubr.f32.gmra.mrb[0].mxu0 %v944
  %v1787 = vpop.f32.mrb[0].mxu0
  %v1788 = vadd.f32 %v1403, %v1787
  %v1789 = vpop.f32.mrb[0].mxu0
  %1790 = vmatprep.mubr.f32.mxu0 %v1073
  %1791 = vmatmul.mubr.f32.gmra.mrb[0].mxu0 %v945
  %v1792 = vpop.f32.mrb[0].mxu0
  %v1793 = vadd.f32 %v1408, %v1792
  %v1794 = vpop.f32.mrb[0].mxu0
  %1795 = vmatprep.mubr.f32.mxu0 %v1090
  %1796 = vmatmul.mubr.f32.gmra.mrb[0].mxu0 %v962
  %v1797 = vpop.f32.mrb[0].mxu0
  %v1798 = vadd.f32 %v1413, %v1797
  %v1799 = vpop.f32.mrb[0].mxu0
  %1800 = vmatprep.mubr.f32.mxu0 %v1091
  %1801 = vmatmul.mubr.f32.gmra.mrb[0].mxu0 %v963
  %v1802 = vpop.f32.mrb[0].mxu0
  %v1803 = vadd.f32 %v1418, %v1802
  %v1804 = vpop.f32.mrb[0].mxu0
  %1805 = vmatprep.mubr.f32.mxu0 %v1092
  %1806 = vmatmul.mubr.f32.gmra.mrb[0].mxu0 %v964
  %v1807 = vpop.f32.mrb[0].mxu0
  %v1808 = vadd.f32 %v1423, %v1807
  %v1809 = vpop.f32.mrb[0].mxu0
  %1810 = vmatprep.mubr.f32.mxu0 %v1093
  %1811 = vmatmul.mubr.f32.gmra.mrb[0].mxu0 %v965
  %v1812 = vpop.f32.mrb[0].mxu0
  %v1813 = vadd.f32 %v1428, %v1812
  %v1814 = vpop.f32.mrb[0].mxu0
  %1815 = vmatprep.mubr.f32.mxu0 %v1094
  %1816 = vmatmul.mubr.f32.gmra.mrb[0].mxu0 %v966
  %v1817 = vpop.f32.mrb[0].mxu0
  %v1818 = vadd.f32 %v1433, %v1817
  %v1819 = vpop.f32.mrb[0].mxu0
  %1820 = vmatprep.mubr.f32.mxu0 %v1095
  %1821 = vmatmul.mubr.f32.gmra.mrb[0].mxu0 %v967
  %v1822 = vpop.f32.mrb[0].mxu0
  %v1823 = vadd.f32 %v1438, %v1822
  %v1824 = vpop.f32.mrb[0].mxu0
  %1825 = vmatprep.mubr.f32.mxu0 %v1096
  %1826 = vmatmul.mubr.f32.gmra.mrb[0].mxu0 %v968
  %v1827 = vpop.f32.mrb[0].mxu0
  %v1828 = vadd.f32 %v1443, %v1827
  %v1829 = vpop.f32.mrb[0].mxu0
  %1830 = vmatprep.mubr.f32.mxu0 %v1097
  %1831 = vmatmul.mubr.f32.gmra.mrb[0].mxu0 %v969
  %v1832 = vpop.f32.mrb[0].mxu0
  %v1833 = vadd.f32 %v1448, %v1832
  %v1834 = vpop.f32.mrb[0].mxu0
  %1835 = vmatprep.mubr.f32.mxu0 %v1098
  %1836 = vmatmul.mubr.f32.gmra.mrb[0].mxu0 %v970
  %v1837 = vpop.f32.mrb[0].mxu0
  %v1838 = vadd.f32 %v1453, %v1837
  %v1839 = vpop.f32.mrb[0].mxu0
  %1840 = vmatprep.mubr.f32.mxu0 %v1099
  %1841 = vmatmul.mubr.f32.gmra.mrb[0].mxu0 %v971
  %v1842 = vpop.f32.mrb[0].mxu0
  %v1843 = vadd.f32 %v1458, %v1842
  %v1844 = vpop.f32.mrb[0].mxu0
  %1845 = vmatprep.mubr.f32.mxu0 %v1100
  %1846 = vmatmul.mubr.f32.gmra.mrb[0].mxu0 %v972
  %v1847 = vpop.f32.mrb[0].mxu0
  %v1848 = vadd.f32 %v1463, %v1847
  %v1849 = vpop.f32.mrb[0].mxu0
  %1850 = vmatprep.mubr.f32.mxu0 %v1101
  %1851 = vmatmul.mubr.f32.gmra.mrb[0].mxu0 %v973
  %v1852 = vpop.f32.mrb[0].mxu0
  %v1853 = vadd.f32 %v1468, %v1852
  %v1854 = vpop.f32.mrb[0].mxu0
  %1855 = vmatprep.mubr.f32.mxu0 %v1102
  %1856 = vmatmul.mubr.f32.gmra.mrb[0].mxu0 %v974
  %v1857 = vpop.f32.mrb[0].mxu0
  %v1858 = vadd.f32 %v1473, %v1857
  %v1859 = vpop.f32.mrb[0].mxu0
  %1860 = vmatprep.mubr.f32.mxu0 %v1103
  %1861 = vmatmul.mubr.f32.gmra.mrb[0].mxu0 %v975
  %v1862 = vpop.f32.mrb[0].mxu0
  %v1863 = vadd.f32 %v1478, %v1862
  %v1864 = vpop.f32.mrb[0].mxu0
  %1865 = vmatprep.mubr.f32.mxu0 %v1104
  %1866 = vmatmul.mubr.f32.gmra.mrb[0].mxu0 %v976
  %v1867 = vpop.f32.mrb[0].mxu0
  %v1868 = vadd.f32 %v1483, %v1867
  %v1869 = vpop.f32.mrb[0].mxu0
  %1870 = vmatprep.mubr.f32.mxu0 %v1105
  %1871 = vmatmul.mubr.f32.gmra.mrb[0].mxu0 %v977
  %v1872 = vpop.f32.mrb[0].mxu0
  %v1873 = vadd.f32 %v1488, %v1872
  %v1874 = vpop.f32.mrb[0].mxu0
  %1875 = vdwg.mxu0
  %v1876 = vadd.f32 %v466, %v1558
  %v1877 = vadd.f32 %v467, %v1563
  %v1878 = vadd.f32 %v468, %v1568
  %v1879 = vadd.f32 %v469, %v1573
  %v1880 = vadd.f32 %v470, %v1578
  %v1881 = vadd.f32 %v471, %v1583
  %v1882 = vadd.f32 %v472, %v1588
  %v1883 = vadd.f32 %v473, %v1593
  %v1884 = vadd.f32 %v474, %v1598
  %v1885 = vadd.f32 %v475, %v1603
  %v1886 = vadd.f32 %v476, %v1608
  %v1887 = vadd.f32 %v477, %v1613
  %v1888 = vadd.f32 %v478, %v1618
  %v1889 = vadd.f32 %v479, %v1623
  %v1890 = vadd.f32 %v480, %v1628
  %v1891 = vadd.f32 %v481, %v1633
  %v1892 = vadd.f32 %v482, %v1638
  %v1893 = vadd.f32 %v483, %v1643
  %v1894 = vadd.f32 %v484, %v1648
  %v1895 = vadd.f32 %v485, %v1653
  %v1896 = vadd.f32 %v486, %v1658
  %v1897 = vadd.f32 %v487, %v1663
  %v1898 = vadd.f32 %v488, %v1668
  %v1899 = vadd.f32 %v489, %v1673
  %v1900 = vadd.f32 %v490, %v1678
  %v1901 = vadd.f32 %v491, %v1683
  %v1902 = vadd.f32 %v492, %v1688
  %v1903 = vadd.f32 %v493, %v1693
  %v1904 = vadd.f32 %v494, %v1698
  %v1905 = vadd.f32 %v495, %v1703
  %v1906 = vadd.f32 %v496, %v1708
  %v1907 = vadd.f32 %v497, %v1713
  %v1908 = vadd.f32 %v498, %v1718
  %v1909 = vadd.f32 %v499, %v1723
  %v1910 = vadd.f32 %v500, %v1728
  %v1911 = vadd.f32 %v501, %v1733
  %v1912 = vadd.f32 %v502, %v1738
  %v1913 = vadd.f32 %v503, %v1743
  %v1914 = vadd.f32 %v504, %v1748
  %v1915 = vadd.f32 %v505, %v1753
  %v1916 = vadd.f32 %v506, %v1758
  %v1917 = vadd.f32 %v507, %v1763
  %v1918 = vadd.f32 %v508, %v1768
  %v1919 = vadd.f32 %v509, %v1773
  %v1920 = vadd.f32 %v510, %v1778
  %v1921 = vadd.f32 %v511, %v1783
  %v1922 = vadd.f32 %v512, %v1788
  %v1923 = vadd.f32 %v513, %v1793
  %v1924 = vadd.f32 %v514, %v1798
  %v1925 = vadd.f32 %v515, %v1803
  %v1926 = vadd.f32 %v516, %v1808
  %v1927 = vadd.f32 %v517, %v1813
  %v1928 = vadd.f32 %v518, %v1818
  %v1929 = vadd.f32 %v519, %v1823
  %v1930 = vadd.f32 %v520, %v1828
  %v1931 = vadd.f32 %v521, %v1833
  %v1932 = vadd.f32 %v522, %v1838
  %v1933 = vadd.f32 %v523, %v1843
  %v1934 = vadd.f32 %v524, %v1848
  %v1935 = vadd.f32 %v525, %v1853
  %v1936 = vadd.f32 %v526, %v1858
  %v1937 = vadd.f32 %v527, %v1863
  %v1938 = vadd.f32 %v528, %v1868
  %v1939 = vadd.f32 %v529, %v1873
  %1940 = vst [vmem:[#allocation2] sm:$0xff] %v1876
  %1941 = vst [vmem:[#allocation2 + $0x8] sm:$0xff] %v1877
  %1942 = vst [vmem:[#allocation2 + $0x10] sm:$0xff] %v1878
  %1943 = vst [vmem:[#allocation2 + $0x18] sm:$0xff] %v1879
  %1944 = vst [vmem:[#allocation2 + $0x20] sm:$0xff] %v1880
  %1945 = vst [vmem:[#allocation2 + $0x28] sm:$0xff] %v1881
  %1946 = vst [vmem:[#allocation2 + $0x30] sm:$0xff] %v1882
  %1947 = vst [vmem:[#allocation2 + $0x38] sm:$0xff] %v1883
  %1948 = vst [vmem:[#allocation2 + $0x40] sm:$0xff] %v1884
  %1949 = vst [vmem:[#allocation2 + $0x48] sm:$0xff] %v1885
  %1950 = vst [vmem:[#allocation2 + $0x50] sm:$0xff] %v1886
  %1951 = vst [vmem:[#allocation2 + $0x58] sm:$0xff] %v1887
  %1952 = vst [vmem:[#allocation2 + $0x60] sm:$0xff] %v1888
  %1953 = vst [vmem:[#allocation2 + $0x68] sm:$0xff] %v1889
  %1954 = vst [vmem:[#allocation2 + $0x70] sm:$0xff] %v1890
  %1955 = vst [vmem:[#allocation2 + $0x78] sm:$0xff] %v1891
  %1956 = vst [vmem:[#allocation2 + $0x80] sm:$0xff] %v1892
  %1957 = vst [vmem:[#allocation2 + $0x88] sm:$0xff] %v1893
  %1958 = vst [vmem:[#allocation2 + $0x90] sm:$0xff] %v1894
  %1959 = vst [vmem:[#allocation2 + $0x98] sm:$0xff] %v1895
  %1960 = vst [vmem:[#allocation2 + $0xa0] sm:$0xff] %v1896
  %1961 = vst [vmem:[#allocation2 + $0xa8] sm:$0xff] %v1897
  %1962 = vst [vmem:[#allocation2 + $0xb0] sm:$0xff] %v1898
  %1963 = vst [vmem:[#allocation2 + $0xb8] sm:$0xff] %v1899
  %1964 = vst [vmem:[#allocation2 + $0xc0] sm:$0xff] %v1900
  %1965 = vst [vmem:[#allocation2 + $0xc8] sm:$0xff] %v1901
  %1966 = vst [vmem:[#allocation2 + $0xd0] sm:$0xff] %v1902
  %1967 = vst [vmem:[#allocation2 + $0xd8] sm:$0xff] %v1903
  %1968 = vst [vmem:[#allocation2 + $0xe0] sm:$0xff] %v1904
  %1969 = vst [vmem:[#allocation2 + $0xe8] sm:$0xff] %v1905
  %1970 = vst [vmem:[#allocation2 + $0xf0] sm:$0xff] %v1906
  %1971 = vst [vmem:[#allocation2 + $0xf8] sm:$0xff] %v1907
  %1972 = vst [vmem:[#allocation2 + $0x100] sm:$0xff] %v1908
  %1973 = vst [vmem:[#allocation2 + $0x108] sm:$0xff] %v1909
  %1974 = vst [vmem:[#allocation2 + $0x110] sm:$0xff] %v1910
  %1975 = vst [vmem:[#allocation2 + $0x118] sm:$0xff] %v1911
  %1976 = vst [vmem:[#allocation2 + $0x120] sm:$0xff] %v1912
  %1977 = vst [vmem:[#allocation2 + $0x128] sm:$0xff] %v1913
  %1978 = vst [vmem:[#allocation2 + $0x130] sm:$0xff] %v1914
  %1979 = vst [vmem:[#allocation2 + $0x138] sm:$0xff] %v1915
  %1980 = vst [vmem:[#allocation2 + $0x140] sm:$0xff] %v1916
  %1981 = vst [vmem:[#allocation2 + $0x148] sm:$0xff] %v1917
  %1982 = vst [vmem:[#allocation2 + $0x150] sm:$0xff] %v1918
  %1983 = vst [vmem:[#allocation2 + $0x158] sm:$0xff] %v1919
  %1984 = vst [vmem:[#allocation2 + $0x160] sm:$0xff] %v1920
  %1985 = vst [vmem:[#allocation2 + $0x168] sm:$0xff] %v1921
  %1986 = vst [vmem:[#allocation2 + $0x170] sm:$0xff] %v1922
  %1987 = vst [vmem:[#allocation2 + $0x178] sm:$0xff] %v1923
  %1988 = vst [vmem:[#allocation2 + $0x180] sm:$0xff] %v1924
  %1989 = vst [vmem:[#allocation2 + $0x188] sm:$0xff] %v1925
  %1990 = vst [vmem:[#allocation2 + $0x190] sm:$0xff] %v1926
  %1991 = vst [vmem:[#allocation2 + $0x198] sm:$0xff] %v1927
  %1992 = vst [vmem:[#allocation2 + $0x1a0] sm:$0xff] %v1928
  %1993 = vst [vmem:[#allocation2 + $0x1a8] sm:$0xff] %v1929
  %1994 = vst [vmem:[#allocation2 + $0x1b0] sm:$0xff] %v1930
  %1995 = vst [vmem:[#allocation2 + $0x1b8] sm:$0xff] %v1931
  %1996 = vst [vmem:[#allocation2 + $0x1c0] sm:$0xff] %v1932
  %1997 = vst [vmem:[#allocation2 + $0x1c8] sm:$0xff] %v1933
  %1998 = vst [vmem:[#allocation2 + $0x1d0] sm:$0xff] %v1934
  %1999 = vst [vmem:[#allocation2 + $0x1d8] sm:$0xff] %v1935
  %2000 = vst [vmem:[#allocation2 + $0x1e0] sm:$0xff] %v1936
  %2001 = vst [vmem:[#allocation2 + $0x1e8] sm:$0xff] %v1937
  %2002 = vst [vmem:[#allocation2 + $0x1f0] sm:$0xff] %v1938
  %2003 = vst [vmem:[#allocation2 + $0x1f8] sm:$0xff] %v1939
  // Predicated region
  $region18: #{_forward_impl.8} parent=0 // pred_check
    %p2004 = pneg %p14
  $region19: #{_forward_impl.8} parent=0 // pred_check_branch
    %2006 = sbr.rel (%p2004) target = $region21
  $region20: #{_forward_impl.8} parent=0 // pred_region
    %v2007 = vld [vmem:[#allocation2] sm:$0xff]
    %v2008 = vld [vmem:[#allocation2 + $0x8] sm:$0xff]
    %v2009 = vld [vmem:[#allocation2 + $0x10] sm:$0xff]
    %v2010 = vld [vmem:[#allocation2 + $0x18] sm:$0xff]
    %v2011 = vld [vmem:[#allocation2 + $0x20] sm:$0xff]
    %v2012 = vld [vmem:[#allocation2 + $0x28] sm:$0xff]
    %v2013 = vld [vmem:[#allocation2 + $0x30] sm:$0xff]
    %v2014 = vld [vmem:[#allocation2 + $0x38] sm:$0xff]
    %v2015 = vld [vmem:[#allocation2 + $0x40] sm:$0xff]
    %v2016 = vld [vmem:[#allocation2 + $0x48] sm:$0xff]
    %v2017 = vld [vmem:[#allocation2 + $0x50] sm:$0xff]
    %v2018 = vld [vmem:[#allocation2 + $0x58] sm:$0xff]
    %v2019 = vld [vmem:[#allocation2 + $0x60] sm:$0xff]
    %v2020 = vld [vmem:[#allocation2 + $0x68] sm:$0xff]
    %v2021 = vld [vmem:[#allocation2 + $0x70] sm:$0xff]
    %v2022 = vld [vmem:[#allocation2 + $0x78] sm:$0xff]
    %v2023 = vld [vmem:[#allocation2 + $0x80] sm:$0xff]
    %v2024 = vld [vmem:[#allocation2 + $0x88] sm:$0xff]
    %v2025 = vld [vmem:[#allocation2 + $0x90] sm:$0xff]
    %v2026 = vld [vmem:[#allocation2 + $0x98] sm:$0xff]
    %v2027 = vld [vmem:[#allocation2 + $0xa0] sm:$0xff]
    %v2028 = vld [vmem:[#allocation2 + $0xa8] sm:$0xff]
    %v2029 = vld [vmem:[#allocation2 + $0xb0] sm:$0xff]
    %v2030 = vld [vmem:[#allocation2 + $0xb8] sm:$0xff]
    %v2031 = vld [vmem:[#allocation2 + $0xc0] sm:$0xff]
    %v2032 = vld [vmem:[#allocation2 + $0xc8] sm:$0xff]
    %v2033 = vld [vmem:[#allocation2 + $0xd0] sm:$0xff]
    %v2034 = vld [vmem:[#allocation2 + $0xd8] sm:$0xff]
    %v2035 = vld [vmem:[#allocation2 + $0xe0] sm:$0xff]
    %v2036 = vld [vmem:[#allocation2 + $0xe8] sm:$0xff]
    %v2037 = vld [vmem:[#allocation2 + $0xf0] sm:$0xff]
    %v2038 = vld [vmem:[#allocation2 + $0xf8] sm:$0xff]
    %v2039 = vld [vmem:[#allocation2 + $0x100] sm:$0xff]
    %v2040 = vld [vmem:[#allocation2 + $0x108] sm:$0xff]
    %v2041 = vld [vmem:[#allocation2 + $0x110] sm:$0xff]
    %v2042 = vld [vmem:[#allocation2 + $0x118] sm:$0xff]
    %v2043 = vld [vmem:[#allocation2 + $0x120] sm:$0xff]
    %v2044 = vld [vmem:[#allocation2 + $0x128] sm:$0xff]
    %v2045 = vld [vmem:[#allocation2 + $0x130] sm:$0xff]
    %v2046 = vld [vmem:[#allocation2 + $0x138] sm:$0xff]
    %v2047 = vld [vmem:[#allocation2 + $0x140] sm:$0xff]
    %v2048 = vld [vmem:[#allocation2 + $0x148] sm:$0xff]
    %v2049 = vld [vmem:[#allocation2 + $0x150] sm:$0xff]
    %v2050 = vld [vmem:[#allocation2 + $0x158] sm:$0xff]
    %v2051 = vld [vmem:[#allocation2 + $0x160] sm:$0xff]
    %v2052 = vld [vmem:[#allocation2 + $0x168] sm:$0xff]
    %v2053 = vld [vmem:[#allocation2 + $0x170] sm:$0xff]
    %v2054 = vld [vmem:[#allocation2 + $0x178] sm:$0xff]
    %v2055 = vld [vmem:[#allocation2 + $0x180] sm:$0xff]
    %v2056 = vld [vmem:[#allocation2 + $0x188] sm:$0xff]
    %v2057 = vld [vmem:[#allocation2 + $0x190] sm:$0xff]
    %v2058 = vld [vmem:[#allocation2 + $0x198] sm:$0xff]
    %v2059 = vld [vmem:[#allocation2 + $0x1a0] sm:$0xff]
    %v2060 = vld [vmem:[#allocation2 + $0x1a8] sm:$0xff]
    %v2061 = vld [vmem:[#allocation2 + $0x1b0] sm:$0xff]
    %v2062 = vld [vmem:[#allocation2 + $0x1b8] sm:$0xff]
    %v2063 = vld [vmem:[#allocation2 + $0x1c0] sm:$0xff]
    %v2064 = vld [vmem:[#allocation2 + $0x1c8] sm:$0xff]
    %v2065 = vld [vmem:[#allocation2 + $0x1d0] sm:$0xff]
    %v2066 = vld [vmem:[#allocation2 + $0x1d8] sm:$0xff]
    %v2067 = vld [vmem:[#allocation2 + $0x1e0] sm:$0xff]
    %v2068 = vld [vmem:[#allocation2 + $0x1e8] sm:$0xff]
    %v2069 = vld [vmem:[#allocation2 + $0x1f0] sm:$0xff]
    %v2070 = vld [vmem:[#allocation2 + $0x1f8] sm:$0xff]
    %v2071 = vld [vmem:[%s2] sm:$0xff]
    %v2072 = vld [vmem:[%s2 + $0x8] sm:$0xff]
    %v2073 = vld [vmem:[%s2 + $0x10] sm:$0xff]
    %v2074 = vld [vmem:[%s2 + $0x18] sm:$0xff]
    %v2075 = vld [vmem:[%s2 + $0x20] sm:$0xff]
    %v2076 = vld [vmem:[%s2 + $0x28] sm:$0xff]
    %v2077 = vld [vmem:[%s2 + $0x30] sm:$0xff]
    %v2078 = vld [vmem:[%s2 + $0x38] sm:$0xff]
    %v2079 = vld [vmem:[%s2 + $0x40] sm:$0xff]
    %v2080 = vld [vmem:[%s2 + $0x48] sm:$0xff]
    %v2081 = vld [vmem:[%s2 + $0x50] sm:$0xff]
    %v2082 = vld [vmem:[%s2 + $0x58] sm:$0xff]
    %v2083 = vld [vmem:[%s2 + $0x60] sm:$0xff]
    %v2084 = vld [vmem:[%s2 + $0x68] sm:$0xff]
    %v2085 = vld [vmem:[%s2 + $0x70] sm:$0xff]
    %v2086 = vld [vmem:[%s2 + $0x78] sm:$0xff]
    %v2087 = vld [vmem:[%s2 + $0x80] sm:$0xff]
    %v2088 = vld [vmem:[%s2 + $0x88] sm:$0xff]
    %v2089 = vld [vmem:[%s2 + $0x90] sm:$0xff]
    %v2090 = vld [vmem:[%s2 + $0x98] sm:$0xff]
    %v2091 = vld [vmem:[%s2 + $0xa0] sm:$0xff]
    %v2092 = vld [vmem:[%s2 + $0xa8] sm:$0xff]
    %v2093 = vld [vmem:[%s2 + $0xb0] sm:$0xff]
    %v2094 = vld [vmem:[%s2 + $0xb8] sm:$0xff]
    %v2095 = vld [vmem:[%s2 + $0xc0] sm:$0xff]
    %v2096 = vld [vmem:[%s2 + $0xc8] sm:$0xff]
    %v2097 = vld [vmem:[%s2 + $0xd0] sm:$0xff]
    %v2098 = vld [vmem:[%s2 + $0xd8] sm:$0xff]
    %v2099 = vld [vmem:[%s2 + $0xe0] sm:$0xff]
    %v2100 = vld [vmem:[%s2 + $0xe8] sm:$0xff]
    %v2101 = vld [vmem:[%s2 + $0xf0] sm:$0xff]
    %v2102 = vld [vmem:[%s2 + $0xf8] sm:$0xff]
    %v2103 = vld [vmem:[%s2 + $0x100] sm:$0xff]
    %v2104 = vld [vmem:[%s2 + $0x108] sm:$0xff]
    %v2105 = vld [vmem:[%s2 + $0x110] sm:$0xff]
    %v2106 = vld [vmem:[%s2 + $0x118] sm:$0xff]
    %v2107 = vld [vmem:[%s2 + $0x120] sm:$0xff]
    %v2108 = vld [vmem:[%s2 + $0x128] sm:$0xff]
    %v2109 = vld [vmem:[%s2 + $0x130] sm:$0xff]
    %v2110 = vld [vmem:[%s2 + $0x138] sm:$0xff]
    %v2111 = vld [vmem:[%s2 + $0x140] sm:$0xff]
    %v2112 = vld [vmem:[%s2 + $0x148] sm:$0xff]
    %v2113 = vld [vmem:[%s2 + $0x150] sm:$0xff]
    %v2114 = vld [vmem:[%s2 + $0x158] sm:$0xff]
    %v2115 = vld [vmem:[%s2 + $0x160] sm:$0xff]
    %v2116 = vld [vmem:[%s2 + $0x168] sm:$0xff]
    %v2117 = vld [vmem:[%s2 + $0x170] sm:$0xff]
    %v2118 = vld [vmem:[%s2 + $0x178] sm:$0xff]
    %v2119 = vld [vmem:[%s2 + $0x180] sm:$0xff]
    %v2120 = vld [vmem:[%s2 + $0x188] sm:$0xff]
    %v2121 = vld [vmem:[%s2 + $0x190] sm:$0xff]
    %v2122 = vld [vmem:[%s2 + $0x198] sm:$0xff]
    %v2123 = vld [vmem:[%s2 + $0x1a0] sm:$0xff]
    %v2124 = vld [vmem:[%s2 + $0x1a8] sm:$0xff]
    %v2125 = vld [vmem:[%s2 + $0x1b0] sm:$0xff]
    %v2126 = vld [vmem:[%s2 + $0x1b8] sm:$0xff]
    %v2127 = vld [vmem:[%s2 + $0x1c0] sm:$0xff]
    %v2128 = vld [vmem:[%s2 + $0x1c8] sm:$0xff]
    %v2129 = vld [vmem:[%s2 + $0x1d0] sm:$0xff]
    %v2130 = vld [vmem:[%s2 + $0x1d8] sm:$0xff]
    %v2131 = vld [vmem:[%s2 + $0x1e0] sm:$0xff]
    %v2132 = vld [vmem:[%s2 + $0x1e8] sm:$0xff]
    %v2133 = vld [vmem:[%s2 + $0x1f0] sm:$0xff]
    %v2134 = vld [vmem:[%s2 + $0x1f8] sm:$0xff]
    %2136 = vset.pattern.permute.xlu0 0
    %2137 = vperm.xlu0 %2136, %v2071
    %v2138 = vpop.permute.xlu0 %2137
    %2141 = vset.pattern.permute.xlu0 0
    %2142 = vperm.xlu0 %2141, %v2072
    %v2143 = vpop.permute.xlu0 %2142
    %2146 = vset.pattern.permute.xlu0 0
    %2147 = vperm.xlu0 %2146, %v2073
    %v2148 = vpop.permute.xlu0 %2147
    %2151 = vset.pattern.permute.xlu0 0
    %2152 = vperm.xlu0 %2151, %v2074
    %v2153 = vpop.permute.xlu0 %2152
    %2156 = vset.pattern.permute.xlu0 0
    %2157 = vperm.xlu0 %2156, %v2075
    %v2158 = vpop.permute.xlu0 %2157
    %2161 = vset.pattern.permute.xlu0 0
    %2162 = vperm.xlu0 %2161, %v2076
    %v2163 = vpop.permute.xlu0 %2162
    %2166 = vset.pattern.permute.xlu0 0
    %2167 = vperm.xlu0 %2166, %v2077
    %v2168 = vpop.permute.xlu0 %2167
    %2171 = vset.pattern.permute.xlu0 0
    %2172 = vperm.xlu0 %2171, %v2078
    %v2173 = vpop.permute.xlu0 %2172
    %2176 = vset.pattern.permute.xlu0 0
    %2177 = vperm.xlu0 %2176, %v2079
    %v2178 = vpop.permute.xlu0 %2177
    %2181 = vset.pattern.permute.xlu0 0
    %2182 = vperm.xlu0 %2181, %v2080
    %v2183 = vpop.permute.xlu0 %2182
    %2186 = vset.pattern.permute.xlu0 0
    %2187 = vperm.xlu0 %2186, %v2081
    %v2188 = vpop.permute.xlu0 %2187
    %2191 = vset.pattern.permute.xlu0 0
    %2192 = vperm.xlu0 %2191, %v2082
    %v2193 = vpop.permute.xlu0 %2192
    %2196 = vset.pattern.permute.xlu0 0
    %2197 = vperm.xlu0 %2196, %v2083
    %v2198 = vpop.permute.xlu0 %2197
    %2201 = vset.pattern.permute.xlu0 0
    %2202 = vperm.xlu0 %2201, %v2084
    %v2203 = vpop.permute.xlu0 %2202
    %2206 = vset.pattern.permute.xlu0 0
    %2207 = vperm.xlu0 %2206, %v2085
    %v2208 = vpop.permute.xlu0 %2207
    %2211 = vset.pattern.permute.xlu0 0
    %2212 = vperm.xlu0 %2211, %v2086
    %v2213 = vpop.permute.xlu0 %2212
    %2216 = vset.pattern.permute.xlu0 0
    %2217 = vperm.xlu0 %2216, %v2087
    %v2218 = vpop.permute.xlu0 %2217
    %2221 = vset.pattern.permute.xlu0 0
    %2222 = vperm.xlu0 %2221, %v2088
    %v2223 = vpop.permute.xlu0 %2222
    %2226 = vset.pattern.permute.xlu0 0
    %2227 = vperm.xlu0 %2226, %v2089
    %v2228 = vpop.permute.xlu0 %2227
    %2231 = vset.pattern.permute.xlu0 0
    %2232 = vperm.xlu0 %2231, %v2090
    %v2233 = vpop.permute.xlu0 %2232
    %2236 = vset.pattern.permute.xlu0 0
    %2237 = vperm.xlu0 %2236, %v2091
    %v2238 = vpop.permute.xlu0 %2237
    %2241 = vset.pattern.permute.xlu0 0
    %2242 = vperm.xlu0 %2241, %v2092
    %v2243 = vpop.permute.xlu0 %2242
    %2246 = vset.pattern.permute.xlu0 0
    %2247 = vperm.xlu0 %2246, %v2093
    %v2248 = vpop.permute.xlu0 %2247
    %2251 = vset.pattern.permute.xlu0 0
    %2252 = vperm.xlu0 %2251, %v2094
    %v2253 = vpop.permute.xlu0 %2252
    %2256 = vset.pattern.permute.xlu0 0
    %2257 = vperm.xlu0 %2256, %v2095
    %v2258 = vpop.permute.xlu0 %2257
    %2261 = vset.pattern.permute.xlu0 0
    %2262 = vperm.xlu0 %2261, %v2096
    %v2263 = vpop.permute.xlu0 %2262
    %2266 = vset.pattern.permute.xlu0 0
    %2267 = vperm.xlu0 %2266, %v2097
    %v2268 = vpop.permute.xlu0 %2267
    %2271 = vset.pattern.permute.xlu0 0
    %2272 = vperm.xlu0 %2271, %v2098
    %v2273 = vpop.permute.xlu0 %2272
    %2276 = vset.pattern.permute.xlu0 0
    %2277 = vperm.xlu0 %2276, %v2099
    %v2278 = vpop.permute.xlu0 %2277
    %2281 = vset.pattern.permute.xlu0 0
    %2282 = vperm.xlu0 %2281, %v2100
    %v2283 = vpop.permute.xlu0 %2282
    %2286 = vset.pattern.permute.xlu0 0
    %2287 = vperm.xlu0 %2286, %v2101
    %v2288 = vpop.permute.xlu0 %2287
    %2291 = vset.pattern.permute.xlu0 0
    %2292 = vperm.xlu0 %2291, %v2102
    %v2293 = vpop.permute.xlu0 %2292
    %2296 = vset.pattern.permute.xlu0 0
    %2297 = vperm.xlu0 %2296, %v2103
    %v2298 = vpop.permute.xlu0 %2297
    %2301 = vset.pattern.permute.xlu0 0
    %2302 = vperm.xlu0 %2301, %v2104
    %v2303 = vpop.permute.xlu0 %2302
    %2306 = vset.pattern.permute.xlu0 0
    %2307 = vperm.xlu0 %2306, %v2105
    %v2308 = vpop.permute.xlu0 %2307
    %2311 = vset.pattern.permute.xlu0 0
    %2312 = vperm.xlu0 %2311, %v2106
    %v2313 = vpop.permute.xlu0 %2312
    %2316 = vset.pattern.permute.xlu0 0
    %2317 = vperm.xlu0 %2316, %v2107
    %v2318 = vpop.permute.xlu0 %2317
    %2321 = vset.pattern.permute.xlu0 0
    %2322 = vperm.xlu0 %2321, %v2108
    %v2323 = vpop.permute.xlu0 %2322
    %2326 = vset.pattern.permute.xlu0 0
    %2327 = vperm.xlu0 %2326, %v2109
    %v2328 = vpop.permute.xlu0 %2327
    %2331 = vset.pattern.permute.xlu0 0
    %2332 = vperm.xlu0 %2331, %v2110
    %v2333 = vpop.permute.xlu0 %2332
    %2336 = vset.pattern.permute.xlu0 0
    %2337 = vperm.xlu0 %2336, %v2111
    %v2338 = vpop.permute.xlu0 %2337
    %2341 = vset.pattern.permute.xlu0 0
    %2342 = vperm.xlu0 %2341, %v2112
    %v2343 = vpop.permute.xlu0 %2342
    %2346 = vset.pattern.permute.xlu0 0
    %2347 = vperm.xlu0 %2346, %v2113
    %v2348 = vpop.permute.xlu0 %2347
    %2351 = vset.pattern.permute.xlu0 0
    %2352 = vperm.xlu0 %2351, %v2114
    %v2353 = vpop.permute.xlu0 %2352
    %2356 = vset.pattern.permute.xlu0 0
    %2357 = vperm.xlu0 %2356, %v2115
    %v2358 = vpop.permute.xlu0 %2357
    %2361 = vset.pattern.permute.xlu0 0
    %2362 = vperm.xlu0 %2361, %v2116
    %v2363 = vpop.permute.xlu0 %2362
    %2366 = vset.pattern.permute.xlu0 0
    %2367 = vperm.xlu0 %2366, %v2117
    %v2368 = vpop.permute.xlu0 %2367
    %2371 = vset.pattern.permute.xlu0 0
    %2372 = vperm.xlu0 %2371, %v2118
    %v2373 = vpop.permute.xlu0 %2372
    %2376 = vset.pattern.permute.xlu0 0
    %2377 = vperm.xlu0 %2376, %v2119
    %v2378 = vpop.permute.xlu0 %2377
    %2381 = vset.pattern.permute.xlu0 0
    %2382 = vperm.xlu0 %2381, %v2120
    %v2383 = vpop.permute.xlu0 %2382
    %2386 = vset.pattern.permute.xlu0 0
    %2387 = vperm.xlu0 %2386, %v2121
    %v2388 = vpop.permute.xlu0 %2387
    %2391 = vset.pattern.permute.xlu0 0
    %2392 = vperm.xlu0 %2391, %v2122
    %v2393 = vpop.permute.xlu0 %2392
    %2396 = vset.pattern.permute.xlu0 0
    %2397 = vperm.xlu0 %2396, %v2123
    %v2398 = vpop.permute.xlu0 %2397
    %2401 = vset.pattern.permute.xlu0 0
    %2402 = vperm.xlu0 %2401, %v2124
    %v2403 = vpop.permute.xlu0 %2402
    %2406 = vset.pattern.permute.xlu0 0
    %2407 = vperm.xlu0 %2406, %v2125
    %v2408 = vpop.permute.xlu0 %2407
    %2411 = vset.pattern.permute.xlu0 0
    %2412 = vperm.xlu0 %2411, %v2126
    %v2413 = vpop.permute.xlu0 %2412
    %2416 = vset.pattern.permute.xlu0 0
    %2417 = vperm.xlu0 %2416, %v2127
    %v2418 = vpop.permute.xlu0 %2417
    %2421 = vset.pattern.permute.xlu0 0
    %2422 = vperm.xlu0 %2421, %v2128
    %v2423 = vpop.permute.xlu0 %2422
    %2426 = vset.pattern.permute.xlu0 0
    %2427 = vperm.xlu0 %2426, %v2129
    %v2428 = vpop.permute.xlu0 %2427
    %2431 = vset.pattern.permute.xlu0 0
    %2432 = vperm.xlu0 %2431, %v2130
    %v2433 = vpop.permute.xlu0 %2432
    %2436 = vset.pattern.permute.xlu0 0
    %2437 = vperm.xlu0 %2436, %v2131
    %v2438 = vpop.permute.xlu0 %2437
    %2441 = vset.pattern.permute.xlu0 0
    %2442 = vperm.xlu0 %2441, %v2132
    %v2443 = vpop.permute.xlu0 %2442
    %2446 = vset.pattern.permute.xlu0 0
    %2447 = vperm.xlu0 %2446, %v2133
    %v2448 = vpop.permute.xlu0 %2447
    %2451 = vset.pattern.permute.xlu0 0
    %2452 = vperm.xlu0 %2451, %v2134
    %v2453 = vpop.permute.xlu0 %2452
    %v2455 = vmul.f32 %v2007, %v2138
    %v2456 = vmul.f32 %v2008, %v2143
    %v2457 = vmul.f32 %v2009, %v2148
    %v2458 = vmul.f32 %v2010, %v2153
    %v2459 = vmul.f32 %v2011, %v2158
    %v2460 = vmul.f32 %v2012, %v2163
    %v2461 = vmul.f32 %v2013, %v2168
    %v2462 = vmul.f32 %v2014, %v2173
    %v2463 = vmul.f32 %v2015, %v2178
    %v2464 = vmul.f32 %v2016, %v2183
    %v2465 = vmul.f32 %v2017, %v2188
    %v2466 = vmul.f32 %v2018, %v2193
    %v2467 = vmul.f32 %v2019, %v2198
    %v2468 = vmul.f32 %v2020, %v2203
    %v2469 = vmul.f32 %v2021, %v2208
    %v2470 = vmul.f32 %v2022, %v2213
    %v2471 = vmul.f32 %v2023, %v2218
    %v2472 = vmul.f32 %v2024, %v2223
    %v2473 = vmul.f32 %v2025, %v2228
    %v2474 = vmul.f32 %v2026, %v2233
    %v2475 = vmul.f32 %v2027, %v2238
    %v2476 = vmul.f32 %v2028, %v2243
    %v2477 = vmul.f32 %v2029, %v2248
    %v2478 = vmul.f32 %v2030, %v2253
    %v2479 = vmul.f32 %v2031, %v2258
    %v2480 = vmul.f32 %v2032, %v2263
    %v2481 = vmul.f32 %v2033, %v2268
    %v2482 = vmul.f32 %v2034, %v2273
    %v2483 = vmul.f32 %v2035, %v2278
    %v2484 = vmul.f32 %v2036, %v2283
    %v2485 = vmul.f32 %v2037, %v2288
    %v2486 = vmul.f32 %v2038, %v2293
    %v2487 = vmul.f32 %v2039, %v2298
    %v2488 = vmul.f32 %v2040, %v2303
    %v2489 = vmul.f32 %v2041, %v2308
    %v2490 = vmul.f32 %v2042, %v2313
    %v2491 = vmul.f32 %v2043, %v2318
    %v2492 = vmul.f32 %v2044, %v2323
    %v2493 = vmul.f32 %v2045, %v2328
    %v2494 = vmul.f32 %v2046, %v2333
    %v2495 = vmul.f32 %v2047, %v2338
    %v2496 = vmul.f32 %v2048, %v2343
    %v2497 = vmul.f32 %v2049, %v2348
    %v2498 = vmul.f32 %v2050, %v2353
    %v2499 = vmul.f32 %v2051, %v2358
    %v2500 = vmul.f32 %v2052, %v2363
    %v2501 = vmul.f32 %v2053, %v2368
    %v2502 = vmul.f32 %v2054, %v2373
    %v2503 = vmul.f32 %v2055, %v2378
    %v2504 = vmul.f32 %v2056, %v2383
    %v2505 = vmul.f32 %v2057, %v2388
    %v2506 = vmul.f32 %v2058, %v2393
    %v2507 = vmul.f32 %v2059, %v2398
    %v2508 = vmul.f32 %v2060, %v2403
    %v2509 = vmul.f32 %v2061, %v2408
    %v2510 = vmul.f32 %v2062, %v2413
    %v2511 = vmul.f32 %v2063, %v2418
    %v2512 = vmul.f32 %v2064, %v2423
    %v2513 = vmul.f32 %v2065, %v2428
    %v2514 = vmul.f32 %v2066, %v2433
    %v2515 = vmul.f32 %v2067, %v2438
    %v2516 = vmul.f32 %v2068, %v2443
    %v2517 = vmul.f32 %v2069, %v2448
    %v2518 = vmul.f32 %v2070, %v2453
    %2519 = vst [vmem:[%s3] sm:$0xff] %v2455
    %2520 = vst [vmem:[%s3 + $0x8] sm:$0xff] %v2456
    %2521 = vst [vmem:[%s3 + $0x10] sm:$0xff] %v2457
    %2522 = vst [vmem:[%s3 + $0x18] sm:$0xff] %v2458
    %2523 = vst [vmem:[%s3 + $0x20] sm:$0xff] %v2459
    %2524 = vst [vmem:[%s3 + $0x28] sm:$0xff] %v2460
    %2525 = vst [vmem:[%s3 + $0x30] sm:$0xff] %v2461
    %2526 = vst [vmem:[%s3 + $0x38] sm:$0xff] %v2462
    %2527 = vst [vmem:[%s3 + $0x40] sm:$0xff] %v2463
    %2528 = vst [vmem:[%s3 + $0x48] sm:$0xff] %v2464
    %2529 = vst [vmem:[%s3 + $0x50] sm:$0xff] %v2465
    %2530 = vst [vmem:[%s3 + $0x58] sm:$0xff] %v2466
    %2531 = vst [vmem:[%s3 + $0x60] sm:$0xff] %v2467
    %2532 = vst [vmem:[%s3 + $0x68] sm:$0xff] %v2468
    %2533 = vst [vmem:[%s3 + $0x70] sm:$0xff] %v2469
    %2534 = vst [vmem:[%s3 + $0x78] sm:$0xff] %v2470
    %2535 = vst [vmem:[%s3 + $0x80] sm:$0xff] %v2471
    %2536 = vst [vmem:[%s3 + $0x88] sm:$0xff] %v2472
    %2537 = vst [vmem:[%s3 + $0x90] sm:$0xff] %v2473
    %2538 = vst [vmem:[%s3 + $0x98] sm:$0xff] %v2474
    %2539 = vst [vmem:[%s3 + $0xa0] sm:$0xff] %v2475
    %2540 = vst [vmem:[%s3 + $0xa8] sm:$0xff] %v2476
    %2541 = vst [vmem:[%s3 + $0xb0] sm:$0xff] %v2477
    %2542 = vst [vmem:[%s3 + $0xb8] sm:$0xff] %v2478
    %2543 = vst [vmem:[%s3 + $0xc0] sm:$0xff] %v2479
    %2544 = vst [vmem:[%s3 + $0xc8] sm:$0xff] %v2480
    %2545 = vst [vmem:[%s3 + $0xd0] sm:$0xff] %v2481
    %2546 = vst [vmem:[%s3 + $0xd8] sm:$0xff] %v2482
    %2547 = vst [vmem:[%s3 + $0xe0] sm:$0xff] %v2483
    %2548 = vst [vmem:[%s3 + $0xe8] sm:$0xff] %v2484
    %2549 = vst [vmem:[%s3 + $0xf0] sm:$0xff] %v2485
    %2550 = vst [vmem:[%s3 + $0xf8] sm:$0xff] %v2486
    %2551 = vst [vmem:[%s3 + $0x100] sm:$0xff] %v2487
    %2552 = vst [vmem:[%s3 + $0x108] sm:$0xff] %v2488
    %2553 = vst [vmem:[%s3 + $0x110] sm:$0xff] %v2489
    %2554 = vst [vmem:[%s3 + $0x118] sm:$0xff] %v2490
    %2555 = vst [vmem:[%s3 + $0x120] sm:$0xff] %v2491
    %2556 = vst [vmem:[%s3 + $0x128] sm:$0xff] %v2492
    %2557 = vst [vmem:[%s3 + $0x130] sm:$0xff] %v2493
    %2558 = vst [vmem:[%s3 + $0x138] sm:$0xff] %v2494
    %2559 = vst [vmem:[%s3 + $0x140] sm:$0xff] %v2495
    %2560 = vst [vmem:[%s3 + $0x148] sm:$0xff] %v2496
    %2561 = vst [vmem:[%s3 + $0x150] sm:$0xff] %v2497
    %2562 = vst [vmem:[%s3 + $0x158] sm:$0xff] %v2498
    %2563 = vst [vmem:[%s3 + $0x160] sm:$0xff] %v2499
    %2564 = vst [vmem:[%s3 + $0x168] sm:$0xff] %v2500
    %2565 = vst [vmem:[%s3 + $0x170] sm:$0xff] %v2501
    %2566 = vst [vmem:[%s3 + $0x178] sm:$0xff] %v2502
    %2567 = vst [vmem:[%s3 + $0x180] sm:$0xff] %v2503
    %2568 = vst [vmem:[%s3 + $0x188] sm:$0xff] %v2504
    %2569 = vst [vmem:[%s3 + $0x190] sm:$0xff] %v2505
    %2570 = vst [vmem:[%s3 + $0x198] sm:$0xff] %v2506
    %2571 = vst [vmem:[%s3 + $0x1a0] sm:$0xff] %v2507
    %2572 = vst [vmem:[%s3 + $0x1a8] sm:$0xff] %v2508
    %2573 = vst [vmem:[%s3 + $0x1b0] sm:$0xff] %v2509
    %2574 = vst [vmem:[%s3 + $0x1b8] sm:$0xff] %v2510
    %2575 = vst [vmem:[%s3 + $0x1c0] sm:$0xff] %v2511
    %2576 = vst [vmem:[%s3 + $0x1c8] sm:$0xff] %v2512
    %2577 = vst [vmem:[%s3 + $0x1d0] sm:$0xff] %v2513
    %2578 = vst [vmem:[%s3 + $0x1d8] sm:$0xff] %v2514
    %2579 = vst [vmem:[%s3 + $0x1e0] sm:$0xff] %v2515
    %2580 = vst [vmem:[%s3 + $0x1e8] sm:$0xff] %v2516
    %2581 = vst [vmem:[%s3 + $0x1f0] sm:$0xff] %v2517
    %2582 = vst [vmem:[%s3 + $0x1f8] sm:$0xff] %v2518
  $region21: #{_forward_impl.8} parent=0 // pred_fallthru
    _
  // Predicated region
  $region22: #{_forward_impl.8} parent=0 // pred_check
    _
  $region23: #{_forward_impl.8} parent=0 // pred_check_branch
    %2584 = sbr.rel (0) target = $region25
  $region24: #{_forward_impl.8} parent=0 // pred_region
    _
  $region25: #{_forward_impl.8} parent=0 // pred_fallthru
    _
  // Predicated region
  $region26: #{_forward_impl.8} parent=0 // pred_check
    _
  $region27: #{_forward_impl.8} parent=0 // pred_check_branch
    %2586 = sbr.rel (0) target = $region29
  $region28: #{_forward_impl.8} parent=0 // pred_region
    _
  $region29: #{_forward_impl.8} parent=0 // pred_fallthru
    _

</llo_original>
